<compile_context>
chip_gen: v5e
topology: v5e:2x2
jax: 0.10.0
libtpu: 0.0.40
codegen_flags: <defaults>
</compile_context>

<pallas_src>
import functools

import jax
import jax.numpy as jnp
from jax.experimental import pallas as pl
from jax.experimental.pallas import tpu as pltpu

BN_EPS = 1e-5

# Set to jnp.bfloat16 on v6e/v7x for MXU-native-rate operands (accumulation via
# preferred_element_type and all epilogue math stay float32).  Default float32 keeps
# close numerical parity with a float32 PyTorch reference.
MM_DTYPE = jnp.float32

# ----- static network geometry (fixed by the module: 3x32x32 input, fc = Linear(32*8*8, .)) -----
CH0, CH1, CH2 = 3, 16, 32          # channels: input, conv1, conv2
H1 = W1 = 32                       # conv1 spatial
WP1 = W1 + 2                       # padded width, stage 1 (34)
R1 = H1 * WP1                      # "wide" conv1 output rows per sample (1088)
XROWS = WP1 * WP1 + 4              # flattened padded input rows (+ slack) (1160)
K1P = 32                           # conv1 im2col K (9*3 = 27) padded to 32
H2 = W2 = 16                       # conv2 spatial (after pool1)
WP2 = W2 + 2                       # padded width, stage 2 (18)
R2 = H2 * WP2                      # "wide" conv2 output rows per sample (288)
XP2ROWS = WP2 * WP2 + 4            # padded stage-2 input rows (+ slack) per sample (328)
K2 = 9 * CH1                       # conv2 im2col K (144)
HO1 = WO1 = 16                     # pool1 output spatial
HO2 = WO2 = 8                      # pool2 output spatial
S2 = HO2 * WO2                     # flattened spatial after pool2 (64)
NPAD = 128                         # lane-padded fc output width

OFFS1 = tuple(kh * WP1 + kw for kh in range(3) for kw in range(3))
OFFS2 = tuple(kh * WP2 + kw for kh in range(3) for kw in range(3))


# --------------------------------- fused kernel --------------------------------- #

def _fused_cnn_kernel(x_ref, w1_ref, sh1_ref, w2_ref, sh2_ref, wfc_ref, bfc_ref,
                      o_ref,
                      conv1_ref, xp2_ref, conv2_ref, pool2_ref, *, bt):
    f32 = jnp.float32

    # ---- stage 1: conv1 (3->16, 3x3, pad 1), BN scale folded: ONE K-concatenated matmul ----
    conv1_ref[...] = jnp.dot(x_ref[...], w1_ref[...], preferred_element_type=f32)

    # ---- pool1 (2x2/2) fused with BN shift + ReLU and zero-padded stage-2 repack ----
    # Halo re-zeroed every step: a program_id==0-only init is unsafe with megacore
    # "parallel" sharding (per-core scratch); interior rows are fully overwritten below.
    xp2_ref[...] = jnp.zeros_like(xp2_ref)
    sh1b = jnp.broadcast_to(sh1_ref[...], (WO1, CH1))
    for s in range(bt):
        cbase = s * R1
        pbase = s * XP2ROWS
        for yo in range(HO1):
            top = cbase + (2 * yo) * WP1
            bot = top + WP1
            # strided sublane reads pick even/odd columns directly (no selector matmul);
            # garbage wide-row positions (x >= 32) are never touched.
            m = jnp.maximum(
                jnp.maximum(conv1_ref[pl.ds(top, WO1, stride=2), :],
                            conv1_ref[pl.ds(top + 1, WO1, stride=2), :]),
                jnp.maximum(conv1_ref[pl.ds(bot, WO1, stride=2), :],
                            conv1_ref[pl.ds(bot + 1, WO1, stride=2), :]))
            r = pbase + (yo + 1) * WP2 + 1
            # pool commutes with the per-channel shift; ReLU is monotone -> apply to the
            # 4x smaller pooled tile instead of the full conv slab.
            xp2_ref[r:r + WO1, :] = jnp.maximum(m + sh1b, 0.0)

    # ---- stage 2: conv2 (16->32, 3x3, pad 1): lane-concatenated im2col, ONE matmul/sample ----
    for s in range(bt):
        base = s * XP2ROWS
        taps = [xp2_ref[base + off:base + off + R2, :] for off in OFFS2]
        im2 = jnp.concatenate(taps, axis=-1).astype(MM_DTYPE)          # (R2, 144)
        conv2_ref[s * R2:(s + 1) * R2, :] = jnp.dot(
            im2, w2_ref[...], preferred_element_type=f32)

    # ---- pool2 (2x2/2) fused with BN shift + ReLU ----
    sh2b = jnp.broadcast_to(sh2_ref[...], (WO2, CH2))
    for s in range(bt):
        cbase = s * R2
        obase = s * S2
        for yo in range(HO2):
            top = cbase + (2 * yo) * WP2
            bot = top + WP2
            m = jnp.maximum(
                jnp.maximum(conv2_ref[pl.ds(top, WO2, stride=2), :],
                            conv2_ref[pl.ds(top + 1, WO2, stride=2), :]),
                jnp.maximum(conv2_ref[pl.ds(bot, WO2, stride=2), :],
                            conv2_ref[pl.ds(bot + 1, WO2, stride=2), :]))
            pool2_ref[obase + yo * WO2:obase + (yo + 1) * WO2, :] = (
                jnp.maximum(m + sh2b, 0.0))

    # ---- fc on the MXU: out(bt,128) = sum_yx pool[:, yx, :](bt,32) @ Wfc[yx](32,128) ----
    acc = jnp.zeros((bt, NPAD), f32)
    for yx in range(S2):
        prow = pool2_ref[pl.ds(yx, bt, stride=S2), :].astype(MM_DTYPE)   # (bt, 32)
        acc = acc + jnp.dot(prow, wfc_ref[yx], preferred_element_type=f32)
    o_ref[...] = acc + bfc_ref[...]


# ----------------------------------- wrapper ------------------------------------ #

def _pick_block_batch(batch):
    # ~8 samples per grid step when possible (amortizes per-step overhead, bigger DMAs);
    # block == full batch is always legal for the (8,128) block rule at small batches.
    if batch % 8 == 0 and batch > 8:
        return 8
    if batch <= 8:
        return batch
    return 1


def basic_cnn_forward(x_nchw, params, *, block_batch=None):
    p = params
    B = x_nchw.shape[0]
    num_classes = p["fc_b"].shape[0]
    assert x_nchw.shape[1:] == (CH0, H1, W1), x_nchw.shape
    assert num_classes <= NPAD
    bt = _pick_block_batch(B) if block_batch is None else block_batch
    assert B % bt == 0

    # input: NCHW -> NHWC -> zero-pad -> flatten padded rows -> host-side 9-tap im2col
    x = jnp.transpose(x_nchw, (0, 2, 3, 1)).astype(jnp.float32)            # (B,32,32,3)
    xp = jnp.pad(x, ((0, 0), (1, 1), (1, 1), (0, 0)))                      # (B,34,34,3)
    xf = jnp.pad(xp.reshape(B, WP1 * WP1, CH0),
                 ((0, 0), (0, XROWS - WP1 * WP1), (0, 0)))                 # (B,1160,3)
    xim = jnp.concatenate([xf[:, o:o + R1, :] for o in OFFS1], axis=-1)    # (B,1088,27)
    xim = jnp.pad(xim, ((0, 0), (0, 0), (0, K1P - 9 * CH0)))               # (B,1088,32)
    xim = xim.reshape(B * R1, K1P).astype(MM_DTYPE)

    # fold BN (inference running-stats form) into conv weights + a per-channel shift
    sc1 = p["bn1_g"] / jnp.sqrt(p["bn1_v"] + BN_EPS)
    sh1 = ((p["conv1_b"] - p["bn1_m"]) * sc1 + p["bn1_b"]).reshape(1, CH1).astype(jnp.float32)
    w1 = jnp.transpose(p["conv1_w"], (2, 3, 1, 0)).reshape(9 * CH0, CH1) * sc1
    w1 = jnp.pad(w1, ((0, K1P - 9 * CH0), (0, 0))).astype(MM_DTYPE)        # (32,16)

    sc2 = p["bn2_g"] / jnp.sqrt(p["bn2_v"] + BN_EPS)
    sh2 = ((p["conv2_b"] - p["bn2_m"]) * sc2 + p["bn2_b"]).reshape(1, CH2).astype(jnp.float32)
    w2 = (jnp.transpose(p["conv2_w"], (2, 3, 1, 0)).reshape(K2, CH2) * sc2).astype(MM_DTYPE)

    # fc: torch flatten index is c*64 + y*8 + x; pre-permute to [yx, c, n], pad n to 128
    wfc = jnp.transpose(p["fc_w"].reshape(CH2, S2, num_classes), (1, 0, 2))
    wfc = jnp.pad(wfc, ((0, 0), (0, 0), (0, NPAD - num_classes))).astype(MM_DTYPE)
    bfc = jnp.pad(p["fc_b"], (0, NPAD - num_classes)).reshape(1, NPAD).astype(jnp.float32)

    flops = 2 * B * (R1 * K1P * CH1 + R2 * K2 * CH2 + S2 * CH2 * NPAD)
    bytes_accessed = int(sum(int(a.size) * a.dtype.itemsize
                             for a in (xim, w1, sh1, w2, sh2, wfc, bfc)) + B * NPAD * 4)

    out = pl.pallas_call(
        functools.partial(_fused_cnn_kernel, bt=bt),
        out_shape=jax.ShapeDtypeStruct((B, NPAD), jnp.float32),
        grid=(B // bt,),
        in_specs=[
            pl.BlockSpec((bt * R1, K1P), lambda i: (i, 0)),      # im2col'd input
            pl.BlockSpec((K1P, CH1), lambda i: (0, 0)),          # conv1 weights (K-concat)
            pl.BlockSpec((1, CH1), lambda i: (0, 0)),            # conv1/bn1 shift
            pl.BlockSpec((K2, CH2), lambda i: (0, 0)),           # conv2 weights (K-concat)
            pl.BlockSpec((1, CH2), lambda i: (0, 0)),            # conv2/bn2 shift
            pl.BlockSpec((S2, CH2, NPAD), lambda i: (0, 0, 0)),  # fc weights [yx, c, n]
            pl.BlockSpec((1, NPAD), lambda i: (0, 0)),           # fc bias
        ],
        out_specs=pl.BlockSpec((bt, NPAD), lambda i: (i, 0)),
        scratch_shapes=[
            pltpu.VMEM((bt * R1, CH1), jnp.float32),        # wide conv1 output
            pltpu.VMEM((bt * XP2ROWS, CH1), jnp.float32),   # zero-padded stage-2 input
            pltpu.VMEM((bt * R2, CH2), jnp.float32),        # wide conv2 output
            pltpu.VMEM((bt * S2, CH2), jnp.float32),        # pooled stage-2 activations
        ],
        compiler_params=pltpu.CompilerParams(
            dimension_semantics=("parallel",),
            vmem_limit_bytes=48 * 1024 * 1024),
        cost_estimate=pl.CostEstimate(
            flops=flops, transcendentals=0, bytes_accessed=bytes_accessed),
    )(xim, w1, sh1, w2, sh2, wfc, bfc)
    return out[:, :num_classes]


def init_params(key, num_classes):
    # conv*_w are torch OIHW; fc_w is fc.weight.T, i.e. (32*8*8, num_classes).
    ks = jax.random.split(key, 6)
    return {
        "conv1_w": 0.1 * jax.random.normal(ks[0], (16, 3, 3, 3), jnp.float32),
        "conv1_b": 0.1 * jax.random.normal(ks[1], (16,), jnp.float32),
        "bn1_g": jnp.ones((16,), jnp.float32),
        "bn1_b": jnp.zeros((16,), jnp.float32),
        "bn1_m": jnp.zeros((16,), jnp.float32),
        "bn1_v": jnp.ones((16,), jnp.float32),
        "conv2_w": 0.1 * jax.random.normal(ks[2], (32, 16, 3, 3), jnp.float32),
        "conv2_b": 0.1 * jax.random.normal(ks[3], (32,), jnp.float32),
        "bn2_g": jnp.ones((32,), jnp.float32),
        "bn2_b": jnp.zeros((32,), jnp.float32),
        "bn2_m": jnp.zeros((32,), jnp.float32),
        "bn2_v": jnp.ones((32,), jnp.float32),
        "fc_w": 0.02 * jax.random.normal(ks[4], (32 * 8 * 8, num_classes), jnp.float32),
        "fc_b": 0.02 * jax.random.normal(ks[5], (num_classes,), jnp.float32),
    }


if __name__ == "__main__":
    num_classes = 10
    key = jax.random.PRNGKey(0)
    k_params, k_x = jax.random.split(key)
    params = init_params(k_params, num_classes)
    # 32x32 RGB images, NCHW (fc = Linear(32*8*8, num_classes) fixes the spatial size)
    x = jax.random.normal(k_x, (2, 3, 32, 32), jnp.float32)

    logits = jax.jit(basic_cnn_forward)(x, params)
    jax.block_until_ready(logits)
    assert logits.shape == (2, num_classes) and logits.dtype == jnp.float32
    print("KERNEL_OK")
</pallas_src>

<mosaic_0001>
module attributes {stable_mosaic.version = 11 : i64} {
  func.func @_fused_cnn_kernel(%arg0: i32, %arg1: memref<2176x32xf32, #tpu.memory_space<vmem>>, %arg2: memref<32x16xf32, #tpu.memory_space<vmem>>, %arg3: memref<1x16xf32, #tpu.memory_space<vmem>>, %arg4: memref<144x32xf32, #tpu.memory_space<vmem>>, %arg5: memref<1x32xf32, #tpu.memory_space<vmem>>, %arg6: memref<64x32x128xf32, #tpu.memory_space<vmem>>, %arg7: memref<1x128xf32, #tpu.memory_space<vmem>>, %arg8: memref<2x128xf32, #tpu.memory_space<vmem>>, %arg9: memref<2176x16xf32, #tpu.memory_space<vmem>>, %arg10: memref<656x16xf32, #tpu.memory_space<vmem>>, %arg11: memref<576x32xf32, #tpu.memory_space<vmem>>, %arg12: memref<128x32xf32, #tpu.memory_space<vmem>>) attributes {dimension_semantics = [#tpu.dimension_semantics<parallel>], iteration_bounds = array<i64: 1>, scalar_prefetch = 0 : i64, scratch_operands = 4 : i64, tpu.core_type = #tpu.core_type<tc>, window_params = [{transform_indices = @transform_0, window_bounds = array<i64: 2176, 32>}, {pipeline_mode = #tpu.pipeline_mode<synchronous>, transform_indices = @transform_1, window_bounds = array<i64: 32, 16>}, {pipeline_mode = #tpu.pipeline_mode<synchronous>, transform_indices = @transform_2, window_bounds = array<i64: 1, 16>}, {pipeline_mode = #tpu.pipeline_mode<synchronous>, transform_indices = @transform_3, window_bounds = array<i64: 144, 32>}, {pipeline_mode = #tpu.pipeline_mode<synchronous>, transform_indices = @transform_4, window_bounds = array<i64: 1, 32>}, {pipeline_mode = #tpu.pipeline_mode<synchronous>, transform_indices = @transform_5, window_bounds = array<i64: 64, 32, 128>}, {pipeline_mode = #tpu.pipeline_mode<synchronous>, transform_indices = @transform_6, window_bounds = array<i64: 1, 128>}, {transform_indices = @transform_7, window_bounds = array<i64: 2, 128>}]} {
    %c0 = arith.constant 0 : index
    %c0_0 = arith.constant 0 : index
    %0 = vector.load %arg1[%c0, %c0_0] : memref<2176x32xf32, #tpu.memory_space<vmem>>, vector<2176x32xf32>
    %c0_1 = arith.constant 0 : index
    %c0_2 = arith.constant 0 : index
    %1 = vector.load %arg2[%c0_1, %c0_2] : memref<32x16xf32, #tpu.memory_space<vmem>>, vector<32x16xf32>
    %cst = arith.constant dense<0.000000e+00> : vector<2176x16xf32>
    %2 = tpu.matmul %0, %1, %cst {dimension_numbers = #tpu.dot_dimension_numbers<[1], [0], [0], [1], [0, 0, 1, 1], [], []>} : vector<2176x32xf32>, vector<32x16xf32>, vector<2176x16xf32> -> vector<2176x16xf32>
    %c0_3 = arith.constant 0 : index
    %c0_4 = arith.constant 0 : index
    %3 = vector.load %arg9[%c0_3, %c0_4] : memref<2176x16xf32, #tpu.memory_space<vmem>>, vector<2176x16xf32>
    tpu.vector_store %arg9[%c0_3, %c0_4], %2 {strides = array<i32>} : memref<2176x16xf32, #tpu.memory_space<vmem>>, vector<2176x16xf32>,
    %cst_5 = arith.constant 0.000000e+00 : f32
    %4 = vector.broadcast %cst_5 : f32 to vector<656x16xf32>
    %c0_6 = arith.constant 0 : index
    %c0_7 = arith.constant 0 : index
    %5 = vector.load %arg10[%c0_6, %c0_7] : memref<656x16xf32, #tpu.memory_space<vmem>>, vector<656x16xf32>
    tpu.vector_store %arg10[%c0_6, %c0_7], %4 {strides = array<i32>} : memref<656x16xf32, #tpu.memory_space<vmem>>, vector<656x16xf32>,
    %c0_8 = arith.constant 0 : index
    %c0_9 = arith.constant 0 : index
    %6 = vector.load %arg3[%c0_8, %c0_9] : memref<1x16xf32, #tpu.memory_space<vmem>>, vector<1x16xf32>
    %7 = vector.shape_cast %6 : vector<1x16xf32> to vector<1x16xf32>
    %8 = vector.broadcast %7 : vector<1x16xf32> to vector<16x16xf32>
    %c0_10 = arith.constant 0 : index
    %c0_11 = arith.constant 0 : index
    %9 = tpu.strided_load %arg9[%c0_10, %c0_11] {strides = array<i32: 2, 1>} : memref<2176x16xf32, #tpu.memory_space<vmem>>, vector<16x16xf32>
    %c1 = arith.constant 1 : index
    %c0_12 = arith.constant 0 : index
    %10 = tpu.strided_load %arg9[%c1, %c0_12] {strides = array<i32: 2, 1>} : memref<2176x16xf32, #tpu.memory_space<vmem>>, vector<16x16xf32>
    %11 = arith.maximumf %9, %10 : vector<16x16xf32>
    %c34 = arith.constant 34 : index
    %c0_13 = arith.constant 0 : index
    %12 = tpu.strided_load %arg9[%c34, %c0_13] {strides = array<i32: 2, 1>} : memref<2176x16xf32, #tpu.memory_space<vmem>>, vector<16x16xf32>
    %c35 = arith.constant 35 : index
    %c0_14 = arith.constant 0 : index
    %13 = tpu.strided_load %arg9[%c35, %c0_14] {strides = array<i32: 2, 1>} : memref<2176x16xf32, #tpu.memory_space<vmem>>, vector<16x16xf32>
    %14 = arith.maximumf %12, %13 : vector<16x16xf32>
    %15 = arith.maximumf %11, %14 : vector<16x16xf32>
    %16 = arith.addf %15, %8 : vector<16x16xf32>
    %cst_15 = arith.constant 0.000000e+00 : f32
    %17 = vector.broadcast %cst_15 : f32 to vector<16x16xf32>
    %18 = arith.maximumf %16, %17 : vector<16x16xf32>
    %c19 = arith.constant 19 : index
    %c0_16 = arith.constant 0 : index
    %19 = vector.load %arg10[%c19, %c0_16] : memref<656x16xf32, #tpu.memory_space<vmem>>, vector<16x16xf32>
    tpu.vector_store %arg10[%c19, %c0_16], %18 {strides = array<i32>} : memref<656x16xf32, #tpu.memory_space<vmem>>, vector<16x16xf32>,
    %c68 = arith.constant 68 : index
    %c0_17 = arith.constant 0 : index
    %20 = tpu.strided_load %arg9[%c68, %c0_17] {strides = array<i32: 2, 1>} : memref<2176x16xf32, #tpu.memory_space<vmem>>, vector<16x16xf32>
    %c69 = arith.constant 69 : index
    %c0_18 = arith.constant 0 : index
    %21 = tpu.strided_load %arg9[%c69, %c0_18] {strides = array<i32: 2, 1>} : memref<2176x16xf32, #tpu.memory_space<vmem>>, vector<16x16xf32>
    %22 = arith.maximumf %20, %21 : vector<16x16xf32>
    %c102 = arith.constant 102 : index
    %c0_19 = arith.constant 0 : index
    %23 = tpu.strided_load %arg9[%c102, %c0_19] {strides = array<i32: 2, 1>} : memref<2176x16xf32, #tpu.memory_space<vmem>>, vector<16x16xf32>
    %c103 = arith.constant 103 : index
    %c0_20 = arith.constant 0 : index
    %24 = tpu.strided_load %arg9[%c103, %c0_20] {strides = array<i32: 2, 1>} : memref<2176x16xf32, #tpu.memory_space<vmem>>, vector<16x16xf32>
    %25 = arith.maximumf %23, %24 : vector<16x16xf32>
    %26 = arith.maximumf %22, %25 : vector<16x16xf32>
    %27 = arith.addf %26, %8 : vector<16x16xf32>
    %cst_21 = arith.constant 0.000000e+00 : f32
    %28 = vector.broadcast %cst_21 : f32 to vector<16x16xf32>
    %29 = arith.maximumf %27, %28 : vector<16x16xf32>
    %c37 = arith.constant 37 : index
    %c0_22 = arith.constant 0 : index
    %30 = vector.load %arg10[%c37, %c0_22] : memref<656x16xf32, #tpu.memory_space<vmem>>, vector<16x16xf32>
    tpu.vector_store %arg10[%c37, %c0_22], %29 {strides = array<i32>} : memref<656x16xf32, #tpu.memory_space<vmem>>, vector<16x16xf32>,
    %c136 = arith.constant 136 : index
    %c0_23 = arith.constant 0 : index
    %31 = tpu.strided_load %arg9[%c136, %c0_23] {strides = array<i32: 2, 1>} : memref<2176x16xf32, #tpu.memory_space<vmem>>, vector<16x16xf32>
    %c137 = arith.constant 137 : index
    %c0_24 = arith.constant 0 : index
    %32 = tpu.strided_load %arg9[%c137, %c0_24] {strides = array<i32: 2, 1>} : memref<2176x16xf32, #tpu.memory_space<vmem>>, vector<16x16xf32>
    %33 = arith.maximumf %31, %32 : vector<16x16xf32>
    %c170 = arith.constant 170 : index
    %c0_25 = arith.constant 0 : index
    %34 = tpu.strided_load %arg9[%c170, %c0_25] {strides = array<i32: 2, 1>} : memref<2176x16xf32, #tpu.memory_space<vmem>>, vector<16x16xf32>
    %c171 = arith.constant 171 : index
    %c0_26 = arith.constant 0 : index
    %35 = tpu.strided_load %arg9[%c171, %c0_26] {strides = array<i32: 2, 1>} : memref<2176x16xf32, #tpu.memory_space<vmem>>, vector<16x16xf32>
    %36 = arith.maximumf %34, %35 : vector<16x16xf32>
    %37 = arith.maximumf %33, %36 : vector<16x16xf32>
    %38 = arith.addf %37, %8 : vector<16x16xf32>
    %cst_27 = arith.constant 0.000000e+00 : f32
    %39 = vector.broadcast %cst_27 : f32 to vector<16x16xf32>
    %40 = arith.maximumf %38, %39 : vector<16x16xf32>
    %c55 = arith.constant 55 : index
    %c0_28 = arith.constant 0 : index
    %41 = vector.load %arg10[%c55, %c0_28] : memref<656x16xf32, #tpu.memory_space<vmem>>, vector<16x16xf32>
    tpu.vector_store %arg10[%c55, %c0_28], %40 {strides = array<i32>} : memref<656x16xf32, #tpu.memory_space<vmem>>, vector<16x16xf32>,
    %c204 = arith.constant 204 : index
    %c0_29 = arith.constant 0 : index
    %42 = tpu.strided_load %arg9[%c204, %c0_29] {strides = array<i32: 2, 1>} : memref<2176x16xf32, #tpu.memory_space<vmem>>, vector<16x16xf32>
    %c205 = arith.constant 205 : index
    %c0_30 = arith.constant 0 : index
    %43 = tpu.strided_load %arg9[%c205, %c0_30] {strides = array<i32: 2, 1>} : memref<2176x16xf32, #tpu.memory_space<vmem>>, vector<16x16xf32>
    %44 = arith.maximumf %42, %43 : vector<16x16xf32>
    %c238 = arith.constant 238 : index
    %c0_31 = arith.constant 0 : index
    %45 = tpu.strided_load %arg9[%c238, %c0_31] {strides = array<i32: 2, 1>} : memref<2176x16xf32, #tpu.memory_space<vmem>>, vector<16x16xf32>
    %c239 = arith.constant 239 : index
    %c0_32 = arith.constant 0 : index
    %46 = tpu.strided_load %arg9[%c239, %c0_32] {strides = array<i32: 2, 1>} : memref<2176x16xf32, #tpu.memory_space<vmem>>, vector<16x16xf32>
    %47 = arith.maximumf %45, %46 : vector<16x16xf32>
    %48 = arith.maximumf %44, %47 : vector<16x16xf32>
    %49 = arith.addf %48, %8 : vector<16x16xf32>
    %cst_33 = arith.constant 0.000000e+00 : f32
    %50 = vector.broadcast %cst_33 : f32 to vector<16x16xf32>
    %51 = arith.maximumf %49, %50 : vector<16x16xf32>
    %c73 = arith.constant 73 : index
    %c0_34 = arith.constant 0 : index
    %52 = vector.load %arg10[%c73, %c0_34] : memref<656x16xf32, #tpu.memory_space<vmem>>, vector<16x16xf32>
    tpu.vector_store %arg10[%c73, %c0_34], %51 {strides = array<i32>} : memref<656x16xf32, #tpu.memory_space<vmem>>, vector<16x16xf32>,
    %c272 = arith.constant 272 : index
    %c0_35 = arith.constant 0 : index
    %53 = tpu.strided_load %arg9[%c272, %c0_35] {strides = array<i32: 2, 1>} : memref<2176x16xf32, #tpu.memory_space<vmem>>, vector<16x16xf32>
    %c273 = arith.constant 273 : index
    %c0_36 = arith.constant 0 : index
    %54 = tpu.strided_load %arg9[%c273, %c0_36] {strides = array<i32: 2, 1>} : memref<2176x16xf32, #tpu.memory_space<vmem>>, vector<16x16xf32>
    %55 = arith.maximumf %53, %54 : vector<16x16xf32>
    %c306 = arith.constant 306 : index
    %c0_37 = arith.constant 0 : index
    %56 = tpu.strided_load %arg9[%c306, %c0_37] {strides = array<i32: 2, 1>} : memref<2176x16xf32, #tpu.memory_space<vmem>>, vector<16x16xf32>
    %c307 = arith.constant 307 : index
    %c0_38 = arith.constant 0 : index
    %57 = tpu.strided_load %arg9[%c307, %c0_38] {strides = array<i32: 2, 1>} : memref<2176x16xf32, #tpu.memory_space<vmem>>, vector<16x16xf32>
    %58 = arith.maximumf %56, %57 : vector<16x16xf32>
    %59 = arith.maximumf %55, %58 : vector<16x16xf32>
    %60 = arith.addf %59, %8 : vector<16x16xf32>
    %cst_39 = arith.constant 0.000000e+00 : f32
    %61 = vector.broadcast %cst_39 : f32 to vector<16x16xf32>
    %62 = arith.maximumf %60, %61 : vector<16x16xf32>
    %c91 = arith.constant 91 : index
    %c0_40 = arith.constant 0 : index
    %63 = vector.load %arg10[%c91, %c0_40] : memref<656x16xf32, #tpu.memory_space<vmem>>, vector<16x16xf32>
    tpu.vector_store %arg10[%c91, %c0_40], %62 {strides = array<i32>} : memref<656x16xf32, #tpu.memory_space<vmem>>, vector<16x16xf32>,
    %c340 = arith.constant 340 : index
    %c0_41 = arith.constant 0 : index
    %64 = tpu.strided_load %arg9[%c340, %c0_41] {strides = array<i32: 2, 1>} : memref<2176x16xf32, #tpu.memory_space<vmem>>, vector<16x16xf32>
    %c341 = arith.constant 341 : index
    %c0_42 = arith.constant 0 : index
    %65 = tpu.strided_load %arg9[%c341, %c0_42] {strides = array<i32: 2, 1>} : memref<2176x16xf32, #tpu.memory_space<vmem>>, vector<16x16xf32>
    %66 = arith.maximumf %64, %65 : vector<16x16xf32>
    %c374 = arith.constant 374 : index
    %c0_43 = arith.constant 0 : index
    %67 = tpu.strided_load %arg9[%c374, %c0_43] {strides = array<i32: 2, 1>} : memref<2176x16xf32, #tpu.memory_space<vmem>>, vector<16x16xf32>
    %c375 = arith.constant 375 : index
    %c0_44 = arith.constant 0 : index
    %68 = tpu.strided_load %arg9[%c375, %c0_44] {strides = array<i32: 2, 1>} : memref<2176x16xf32, #tpu.memory_space<vmem>>, vector<16x16xf32>
    %69 = arith.maximumf %67, %68 : vector<16x16xf32>
    %70 = arith.maximumf %66, %69 : vector<16x16xf32>
    %71 = arith.addf %70, %8 : vector<16x16xf32>
    %cst_45 = arith.constant 0.000000e+00 : f32
    %72 = vector.broadcast %cst_45 : f32 to vector<16x16xf32>
    %73 = arith.maximumf %71, %72 : vector<16x16xf32>
    %c109 = arith.constant 109 : index
    %c0_46 = arith.constant 0 : index
    %74 = vector.load %arg10[%c109, %c0_46] : memref<656x16xf32, #tpu.memory_space<vmem>>, vector<16x16xf32>
    tpu.vector_store %arg10[%c109, %c0_46], %73 {strides = array<i32>} : memref<656x16xf32, #tpu.memory_space<vmem>>, vector<16x16xf32>,
    %c408 = arith.constant 408 : index
    %c0_47 = arith.constant 0 : index
    %75 = tpu.strided_load %arg9[%c408, %c0_47] {strides = array<i32: 2, 1>} : memref<2176x16xf32, #tpu.memory_space<vmem>>, vector<16x16xf32>
    %c409 = arith.constant 409 : index
    %c0_48 = arith.constant 0 : index
    %76 = tpu.strided_load %arg9[%c409, %c0_48] {strides = array<i32: 2, 1>} : memref<2176x16xf32, #tpu.memory_space<vmem>>, vector<16x16xf32>
    %77 = arith.maximumf %75, %76 : vector<16x16xf32>
    %c442 = arith.constant 442 : index
    %c0_49 = arith.constant 0 : index
    %78 = tpu.strided_load %arg9[%c442, %c0_49] {strides = array<i32: 2, 1>} : memref<2176x16xf32, #tpu.memory_space<vmem>>, vector<16x16xf32>
    %c443 = arith.constant 443 : index
    %c0_50 = arith.constant 0 : index
    %79 = tpu.strided_load %arg9[%c443, %c0_50] {strides = array<i32: 2, 1>} : memref<2176x16xf32, #tpu.memory_space<vmem>>, vector<16x16xf32>
    %80 = arith.maximumf %78, %79 : vector<16x16xf32>
    %81 = arith.maximumf %77, %80 : vector<16x16xf32>
    %82 = arith.addf %81, %8 : vector<16x16xf32>
    %cst_51 = arith.constant 0.000000e+00 : f32
    %83 = vector.broadcast %cst_51 : f32 to vector<16x16xf32>
    %84 = arith.maximumf %82, %83 : vector<16x16xf32>
    %c127 = arith.constant 127 : index
    %c0_52 = arith.constant 0 : index
    %85 = vector.load %arg10[%c127, %c0_52] : memref<656x16xf32, #tpu.memory_space<vmem>>, vector<16x16xf32>
    tpu.vector_store %arg10[%c127, %c0_52], %84 {strides = array<i32>} : memref<656x16xf32, #tpu.memory_space<vmem>>, vector<16x16xf32>,
    %c476 = arith.constant 476 : index
    %c0_53 = arith.constant 0 : index
    %86 = tpu.strided_load %arg9[%c476, %c0_53] {strides = array<i32: 2, 1>} : memref<2176x16xf32, #tpu.memory_space<vmem>>, vector<16x16xf32>
    %c477 = arith.constant 477 : index
    %c0_54 = arith.constant 0 : index
    %87 = tpu.strided_load %arg9[%c477, %c0_54] {strides = array<i32: 2, 1>} : memref<2176x16xf32, #tpu.memory_space<vmem>>, vector<16x16xf32>
    %88 = arith.maximumf %86, %87 : vector<16x16xf32>
    %c510 = arith.constant 510 : index
    %c0_55 = arith.constant 0 : index
    %89 = tpu.strided_load %arg9[%c510, %c0_55] {strides = array<i32: 2, 1>} : memref<2176x16xf32, #tpu.memory_space<vmem>>, vector<16x16xf32>
    %c511 = arith.constant 511 : index
    %c0_56 = arith.constant 0 : index
    %90 = tpu.strided_load %arg9[%c511, %c0_56] {strides = array<i32: 2, 1>} : memref<2176x16xf32, #tpu.memory_space<vmem>>, vector<16x16xf32>
    %91 = arith.maximumf %89, %90 : vector<16x16xf32>
    %92 = arith.maximumf %88, %91 : vector<16x16xf32>
    %93 = arith.addf %92, %8 : vector<16x16xf32>
    %cst_57 = arith.constant 0.000000e+00 : f32
    %94 = vector.broadcast %cst_57 : f32 to vector<16x16xf32>
    %95 = arith.maximumf %93, %94 : vector<16x16xf32>
    %c145 = arith.constant 145 : index
    %c0_58 = arith.constant 0 : index
    %96 = vector.load %arg10[%c145, %c0_58] : memref<656x16xf32, #tpu.memory_space<vmem>>, vector<16x16xf32>
    tpu.vector_store %arg10[%c145, %c0_58], %95 {strides = array<i32>} : memref<656x16xf32, #tpu.memory_space<vmem>>, vector<16x16xf32>,
    %c544 = arith.constant 544 : index
    %c0_59 = arith.constant 0 : index
    %97 = tpu.strided_load %arg9[%c544, %c0_59] {strides = array<i32: 2, 1>} : memref<2176x16xf32, #tpu.memory_space<vmem>>, vector<16x16xf32>
    %c545 = arith.constant 545 : index
    %c0_60 = arith.constant 0 : index
    %98 = tpu.strided_load %arg9[%c545, %c0_60] {strides = array<i32: 2, 1>} : memref<2176x16xf32, #tpu.memory_space<vmem>>, vector<16x16xf32>
    %99 = arith.maximumf %97, %98 : vector<16x16xf32>
    %c578 = arith.constant 578 : index
    %c0_61 = arith.constant 0 : index
    %100 = tpu.strided_load %arg9[%c578, %c0_61] {strides = array<i32: 2, 1>} : memref<2176x16xf32, #tpu.memory_space<vmem>>, vector<16x16xf32>
    %c579 = arith.constant 579 : index
    %c0_62 = arith.constant 0 : index
    %101 = tpu.strided_load %arg9[%c579, %c0_62] {strides = array<i32: 2, 1>} : memref<2176x16xf32, #tpu.memory_space<vmem>>, vector<16x16xf32>
    %102 = arith.maximumf %100, %101 : vector<16x16xf32>
    %103 = arith.maximumf %99, %102 : vector<16x16xf32>
    %104 = arith.addf %103, %8 : vector<16x16xf32>
    %cst_63 = arith.constant 0.000000e+00 : f32
    %105 = vector.broadcast %cst_63 : f32 to vector<16x16xf32>
    %106 = arith.maximumf %104, %105 : vector<16x16xf32>
    %c163 = arith.constant 163 : index
    %c0_64 = arith.constant 0 : index
    %107 = vector.load %arg10[%c163, %c0_64] : memref<656x16xf32, #tpu.memory_space<vmem>>, vector<16x16xf32>
    tpu.vector_store %arg10[%c163, %c0_64], %106 {strides = array<i32>} : memref<656x16xf32, #tpu.memory_space<vmem>>, vector<16x16xf32>,
    %c612 = arith.constant 612 : index
    %c0_65 = arith.constant 0 : index
    %108 = tpu.strided_load %arg9[%c612, %c0_65] {strides = array<i32: 2, 1>} : memref<2176x16xf32, #tpu.memory_space<vmem>>, vector<16x16xf32>
    %c613 = arith.constant 613 : index
    %c0_66 = arith.constant 0 : index
    %109 = tpu.strided_load %arg9[%c613, %c0_66] {strides = array<i32: 2, 1>} : memref<2176x16xf32, #tpu.memory_space<vmem>>, vector<16x16xf32>
    %110 = arith.maximumf %108, %109 : vector<16x16xf32>
    %c646 = arith.constant 646 : index
    %c0_67 = arith.constant 0 : index
    %111 = tpu.strided_load %arg9[%c646, %c0_67] {strides = array<i32: 2, 1>} : memref<2176x16xf32, #tpu.memory_space<vmem>>, vector<16x16xf32>
    %c647 = arith.constant 647 : index
    %c0_68 = arith.constant 0 : index
    %112 = tpu.strided_load %arg9[%c647, %c0_68] {strides = array<i32: 2, 1>} : memref<2176x16xf32, #tpu.memory_space<vmem>>, vector<16x16xf32>
    %113 = arith.maximumf %111, %112 : vector<16x16xf32>
    %114 = arith.maximumf %110, %113 : vector<16x16xf32>
    %115 = arith.addf %114, %8 : vector<16x16xf32>
    %cst_69 = arith.constant 0.000000e+00 : f32
    %116 = vector.broadcast %cst_69 : f32 to vector<16x16xf32>
    %117 = arith.maximumf %115, %116 : vector<16x16xf32>
    %c181 = arith.constant 181 : index
    %c0_70 = arith.constant 0 : index
    %118 = vector.load %arg10[%c181, %c0_70] : memref<656x16xf32, #tpu.memory_space<vmem>>, vector<16x16xf32>
    tpu.vector_store %arg10[%c181, %c0_70], %117 {strides = array<i32>} : memref<656x16xf32, #tpu.memory_space<vmem>>, vector<16x16xf32>,
    %c680 = arith.constant 680 : index
    %c0_71 = arith.constant 0 : index
    %119 = tpu.strided_load %arg9[%c680, %c0_71] {strides = array<i32: 2, 1>} : memref<2176x16xf32, #tpu.memory_space<vmem>>, vector<16x16xf32>
    %c681 = arith.constant 681 : index
    %c0_72 = arith.constant 0 : index
    %120 = tpu.strided_load %arg9[%c681, %c0_72] {strides = array<i32: 2, 1>} : memref<2176x16xf32, #tpu.memory_space<vmem>>, vector<16x16xf32>
    %121 = arith.maximumf %119, %120 : vector<16x16xf32>
    %c714 = arith.constant 714 : index
    %c0_73 = arith.constant 0 : index
    %122 = tpu.strided_load %arg9[%c714, %c0_73] {strides = array<i32: 2, 1>} : memref<2176x16xf32, #tpu.memory_space<vmem>>, vector<16x16xf32>
    %c715 = arith.constant 715 : index
    %c0_74 = arith.constant 0 : index
    %123 = tpu.strided_load %arg9[%c715, %c0_74] {strides = array<i32: 2, 1>} : memref<2176x16xf32, #tpu.memory_space<vmem>>, vector<16x16xf32>
    %124 = arith.maximumf %122, %123 : vector<16x16xf32>
    %125 = arith.maximumf %121, %124 : vector<16x16xf32>
    %126 = arith.addf %125, %8 : vector<16x16xf32>
    %cst_75 = arith.constant 0.000000e+00 : f32
    %127 = vector.broadcast %cst_75 : f32 to vector<16x16xf32>
    %128 = arith.maximumf %126, %127 : vector<16x16xf32>
    %c199 = arith.constant 199 : index
    %c0_76 = arith.constant 0 : index
    %129 = vector.load %arg10[%c199, %c0_76] : memref<656x16xf32, #tpu.memory_space<vmem>>, vector<16x16xf32>
    tpu.vector_store %arg10[%c199, %c0_76], %128 {strides = array<i32>} : memref<656x16xf32, #tpu.memory_space<vmem>>, vector<16x16xf32>,
    %c748 = arith.constant 748 : index
    %c0_77 = arith.constant 0 : index
    %130 = tpu.strided_load %arg9[%c748, %c0_77] {strides = array<i32: 2, 1>} : memref<2176x16xf32, #tpu.memory_space<vmem>>, vector<16x16xf32>
    %c749 = arith.constant 749 : index
    %c0_78 = arith.constant 0 : index
    %131 = tpu.strided_load %arg9[%c749, %c0_78] {strides = array<i32: 2, 1>} : memref<2176x16xf32, #tpu.memory_space<vmem>>, vector<16x16xf32>
    %132 = arith.maximumf %130, %131 : vector<16x16xf32>
    %c782 = arith.constant 782 : index
    %c0_79 = arith.constant 0 : index
    %133 = tpu.strided_load %arg9[%c782, %c0_79] {strides = array<i32: 2, 1>} : memref<2176x16xf32, #tpu.memory_space<vmem>>, vector<16x16xf32>
    %c783 = arith.constant 783 : index
    %c0_80 = arith.constant 0 : index
    %134 = tpu.strided_load %arg9[%c783, %c0_80] {strides = array<i32: 2, 1>} : memref<2176x16xf32, #tpu.memory_space<vmem>>, vector<16x16xf32>
    %135 = arith.maximumf %133, %134 : vector<16x16xf32>
    %136 = arith.maximumf %132, %135 : vector<16x16xf32>
    %137 = arith.addf %136, %8 : vector<16x16xf32>
    %cst_81 = arith.constant 0.000000e+00 : f32
    %138 = vector.broadcast %cst_81 : f32 to vector<16x16xf32>
    %139 = arith.maximumf %137, %138 : vector<16x16xf32>
    %c217 = arith.constant 217 : index
    %c0_82 = arith.constant 0 : index
    %140 = vector.load %arg10[%c217, %c0_82] : memref<656x16xf32, #tpu.memory_space<vmem>>, vector<16x16xf32>
    tpu.vector_store %arg10[%c217, %c0_82], %139 {strides = array<i32>} : memref<656x16xf32, #tpu.memory_space<vmem>>, vector<16x16xf32>,
    %c816 = arith.constant 816 : index
    %c0_83 = arith.constant 0 : index
    %141 = tpu.strided_load %arg9[%c816, %c0_83] {strides = array<i32: 2, 1>} : memref<2176x16xf32, #tpu.memory_space<vmem>>, vector<16x16xf32>
    %c817 = arith.constant 817 : index
    %c0_84 = arith.constant 0 : index
    %142 = tpu.strided_load %arg9[%c817, %c0_84] {strides = array<i32: 2, 1>} : memref<2176x16xf32, #tpu.memory_space<vmem>>, vector<16x16xf32>
    %143 = arith.maximumf %141, %142 : vector<16x16xf32>
    %c850 = arith.constant 850 : index
    %c0_85 = arith.constant 0 : index
    %144 = tpu.strided_load %arg9[%c850, %c0_85] {strides = array<i32: 2, 1>} : memref<2176x16xf32, #tpu.memory_space<vmem>>, vector<16x16xf32>
    %c851 = arith.constant 851 : index
    %c0_86 = arith.constant 0 : index
    %145 = tpu.strided_load %arg9[%c851, %c0_86] {strides = array<i32: 2, 1>} : memref<2176x16xf32, #tpu.memory_space<vmem>>, vector<16x16xf32>
    %146 = arith.maximumf %144, %145 : vector<16x16xf32>
    %147 = arith.maximumf %143, %146 : vector<16x16xf32>
    %148 = arith.addf %147, %8 : vector<16x16xf32>
    %cst_87 = arith.constant 0.000000e+00 : f32
    %149 = vector.broadcast %cst_87 : f32 to vector<16x16xf32>
    %150 = arith.maximumf %148, %149 : vector<16x16xf32>
    %c235 = arith.constant 235 : index
    %c0_88 = arith.constant 0 : index
    %151 = vector.load %arg10[%c235, %c0_88] : memref<656x16xf32, #tpu.memory_space<vmem>>, vector<16x16xf32>
    tpu.vector_store %arg10[%c235, %c0_88], %150 {strides = array<i32>} : memref<656x16xf32, #tpu.memory_space<vmem>>, vector<16x16xf32>,
    %c884 = arith.constant 884 : index
    %c0_89 = arith.constant 0 : index
    %152 = tpu.strided_load %arg9[%c884, %c0_89] {strides = array<i32: 2, 1>} : memref<2176x16xf32, #tpu.memory_space<vmem>>, vector<16x16xf32>
    %c885 = arith.constant 885 : index
    %c0_90 = arith.constant 0 : index
    %153 = tpu.strided_load %arg9[%c885, %c0_90] {strides = array<i32: 2, 1>} : memref<2176x16xf32, #tpu.memory_space<vmem>>, vector<16x16xf32>
    %154 = arith.maximumf %152, %153 : vector<16x16xf32>
    %c918 = arith.constant 918 : index
    %c0_91 = arith.constant 0 : index
    %155 = tpu.strided_load %arg9[%c918, %c0_91] {strides = array<i32: 2, 1>} : memref<2176x16xf32, #tpu.memory_space<vmem>>, vector<16x16xf32>
    %c919 = arith.constant 919 : index
    %c0_92 = arith.constant 0 : index
    %156 = tpu.strided_load %arg9[%c919, %c0_92] {strides = array<i32: 2, 1>} : memref<2176x16xf32, #tpu.memory_space<vmem>>, vector<16x16xf32>
    %157 = arith.maximumf %155, %156 : vector<16x16xf32>
    %158 = arith.maximumf %154, %157 : vector<16x16xf32>
    %159 = arith.addf %158, %8 : vector<16x16xf32>
    %cst_93 = arith.constant 0.000000e+00 : f32
    %160 = vector.broadcast %cst_93 : f32 to vector<16x16xf32>
    %161 = arith.maximumf %159, %160 : vector<16x16xf32>
    %c253 = arith.constant 253 : index
    %c0_94 = arith.constant 0 : index
    %162 = vector.load %arg10[%c253, %c0_94] : memref<656x16xf32, #tpu.memory_space<vmem>>, vector<16x16xf32>
    tpu.vector_store %arg10[%c253, %c0_94], %161 {strides = array<i32>} : memref<656x16xf32, #tpu.memory_space<vmem>>, vector<16x16xf32>,
    %c952 = arith.constant 952 : index
    %c0_95 = arith.constant 0 : index
    %163 = tpu.strided_load %arg9[%c952, %c0_95] {strides = array<i32: 2, 1>} : memref<2176x16xf32, #tpu.memory_space<vmem>>, vector<16x16xf32>
    %c953 = arith.constant 953 : index
    %c0_96 = arith.constant 0 : index
    %164 = tpu.strided_load %arg9[%c953, %c0_96] {strides = array<i32: 2, 1>} : memref<2176x16xf32, #tpu.memory_space<vmem>>, vector<16x16xf32>
    %165 = arith.maximumf %163, %164 : vector<16x16xf32>
    %c986 = arith.constant 986 : index
    %c0_97 = arith.constant 0 : index
    %166 = tpu.strided_load %arg9[%c986, %c0_97] {strides = array<i32: 2, 1>} : memref<2176x16xf32, #tpu.memory_space<vmem>>, vector<16x16xf32>
    %c987 = arith.constant 987 : index
    %c0_98 = arith.constant 0 : index
    %167 = tpu.strided_load %arg9[%c987, %c0_98] {strides = array<i32: 2, 1>} : memref<2176x16xf32, #tpu.memory_space<vmem>>, vector<16x16xf32>
    %168 = arith.maximumf %166, %167 : vector<16x16xf32>
    %169 = arith.maximumf %165, %168 : vector<16x16xf32>
    %170 = arith.addf %169, %8 : vector<16x16xf32>
    %cst_99 = arith.constant 0.000000e+00 : f32
    %171 = vector.broadcast %cst_99 : f32 to vector<16x16xf32>
    %172 = arith.maximumf %170, %171 : vector<16x16xf32>
    %c271 = arith.constant 271 : index
    %c0_100 = arith.constant 0 : index
    %173 = vector.load %arg10[%c271, %c0_100] : memref<656x16xf32, #tpu.memory_space<vmem>>, vector<16x16xf32>
    tpu.vector_store %arg10[%c271, %c0_100], %172 {strides = array<i32>} : memref<656x16xf32, #tpu.memory_space<vmem>>, vector<16x16xf32>,
    %c1020 = arith.constant 1020 : index
    %c0_101 = arith.constant 0 : index
    %174 = tpu.strided_load %arg9[%c1020, %c0_101] {strides = array<i32: 2, 1>} : memref<2176x16xf32, #tpu.memory_space<vmem>>, vector<16x16xf32>
    %c1021 = arith.constant 1021 : index
    %c0_102 = arith.constant 0 : index
    %175 = tpu.strided_load %arg9[%c1021, %c0_102] {strides = array<i32: 2, 1>} : memref<2176x16xf32, #tpu.memory_space<vmem>>, vector<16x16xf32>
    %176 = arith.maximumf %174, %175 : vector<16x16xf32>
    %c1054 = arith.constant 1054 : index
    %c0_103 = arith.constant 0 : index
    %177 = tpu.strided_load %arg9[%c1054, %c0_103] {strides = array<i32: 2, 1>} : memref<2176x16xf32, #tpu.memory_space<vmem>>, vector<16x16xf32>
    %c1055 = arith.constant 1055 : index
    %c0_104 = arith.constant 0 : index
    %178 = tpu.strided_load %arg9[%c1055, %c0_104] {strides = array<i32: 2, 1>} : memref<2176x16xf32, #tpu.memory_space<vmem>>, vector<16x16xf32>
    %179 = arith.maximumf %177, %178 : vector<16x16xf32>
    %180 = arith.maximumf %176, %179 : vector<16x16xf32>
    %181 = arith.addf %180, %8 : vector<16x16xf32>
    %cst_105 = arith.constant 0.000000e+00 : f32
    %182 = vector.broadcast %cst_105 : f32 to vector<16x16xf32>
    %183 = arith.maximumf %181, %182 : vector<16x16xf32>
    %c289 = arith.constant 289 : index
    %c0_106 = arith.constant 0 : index
    %184 = vector.load %arg10[%c289, %c0_106] : memref<656x16xf32, #tpu.memory_space<vmem>>, vector<16x16xf32>
    tpu.vector_store %arg10[%c289, %c0_106], %183 {strides = array<i32>} : memref<656x16xf32, #tpu.memory_space<vmem>>, vector<16x16xf32>,
    %c1088 = arith.constant 1088 : index
    %c0_107 = arith.constant 0 : index
    %185 = tpu.strided_load %arg9[%c1088, %c0_107] {strides = array<i32: 2, 1>} : memref<2176x16xf32, #tpu.memory_space<vmem>>, vector<16x16xf32>
    %c1089 = arith.constant 1089 : index
    %c0_108 = arith.constant 0 : index
    %186 = tpu.strided_load %arg9[%c1089, %c0_108] {strides = array<i32: 2, 1>} : memref<2176x16xf32, #tpu.memory_space<vmem>>, vector<16x16xf32>
    %187 = arith.maximumf %185, %186 : vector<16x16xf32>
    %c1122 = arith.constant 1122 : index
    %c0_109 = arith.constant 0 : index
    %188 = tpu.strided_load %arg9[%c1122, %c0_109] {strides = array<i32: 2, 1>} : memref<2176x16xf32, #tpu.memory_space<vmem>>, vector<16x16xf32>
    %c1123 = arith.constant 1123 : index
    %c0_110 = arith.constant 0 : index
    %189 = tpu.strided_load %arg9[%c1123, %c0_110] {strides = array<i32: 2, 1>} : memref<2176x16xf32, #tpu.memory_space<vmem>>, vector<16x16xf32>
    %190 = arith.maximumf %188, %189 : vector<16x16xf32>
    %191 = arith.maximumf %187, %190 : vector<16x16xf32>
    %192 = arith.addf %191, %8 : vector<16x16xf32>
    %cst_111 = arith.constant 0.000000e+00 : f32
    %193 = vector.broadcast %cst_111 : f32 to vector<16x16xf32>
    %194 = arith.maximumf %192, %193 : vector<16x16xf32>
    %c347 = arith.constant 347 : index
    %c0_112 = arith.constant 0 : index
    %195 = vector.load %arg10[%c347, %c0_112] : memref<656x16xf32, #tpu.memory_space<vmem>>, vector<16x16xf32>
    tpu.vector_store %arg10[%c347, %c0_112], %194 {strides = array<i32>} : memref<656x16xf32, #tpu.memory_space<vmem>>, vector<16x16xf32>,
    %c1156 = arith.constant 1156 : index
    %c0_113 = arith.constant 0 : index
    %196 = tpu.strided_load %arg9[%c1156, %c0_113] {strides = array<i32: 2, 1>} : memref<2176x16xf32, #tpu.memory_space<vmem>>, vector<16x16xf32>
    %c1157 = arith.constant 1157 : index
    %c0_114 = arith.constant 0 : index
    %197 = tpu.strided_load %arg9[%c1157, %c0_114] {strides = array<i32: 2, 1>} : memref<2176x16xf32, #tpu.memory_space<vmem>>, vector<16x16xf32>
    %198 = arith.maximumf %196, %197 : vector<16x16xf32>
    %c1190 = arith.constant 1190 : index
    %c0_115 = arith.constant 0 : index
    %199 = tpu.strided_load %arg9[%c1190, %c0_115] {strides = array<i32: 2, 1>} : memref<2176x16xf32, #tpu.memory_space<vmem>>, vector<16x16xf32>
    %c1191 = arith.constant 1191 : index
    %c0_116 = arith.constant 0 : index
    %200 = tpu.strided_load %arg9[%c1191, %c0_116] {strides = array<i32: 2, 1>} : memref<2176x16xf32, #tpu.memory_space<vmem>>, vector<16x16xf32>
    %201 = arith.maximumf %199, %200 : vector<16x16xf32>
    %202 = arith.maximumf %198, %201 : vector<16x16xf32>
    %203 = arith.addf %202, %8 : vector<16x16xf32>
    %cst_117 = arith.constant 0.000000e+00 : f32
    %204 = vector.broadcast %cst_117 : f32 to vector<16x16xf32>
    %205 = arith.maximumf %203, %204 : vector<16x16xf32>
    %c365 = arith.constant 365 : index
    %c0_118 = arith.constant 0 : index
    %206 = vector.load %arg10[%c365, %c0_118] : memref<656x16xf32, #tpu.memory_space<vmem>>, vector<16x16xf32>
    tpu.vector_store %arg10[%c365, %c0_118], %205 {strides = array<i32>} : memref<656x16xf32, #tpu.memory_space<vmem>>, vector<16x16xf32>,
    %c1224 = arith.constant 1224 : index
    %c0_119 = arith.constant 0 : index
    %207 = tpu.strided_load %arg9[%c1224, %c0_119] {strides = array<i32: 2, 1>} : memref<2176x16xf32, #tpu.memory_space<vmem>>, vector<16x16xf32>
    %c1225 = arith.constant 1225 : index
    %c0_120 = arith.constant 0 : index
    %208 = tpu.strided_load %arg9[%c1225, %c0_120] {strides = array<i32: 2, 1>} : memref<2176x16xf32, #tpu.memory_space<vmem>>, vector<16x16xf32>
    %209 = arith.maximumf %207, %208 : vector<16x16xf32>
    %c1258 = arith.constant 1258 : index
    %c0_121 = arith.constant 0 : index
    %210 = tpu.strided_load %arg9[%c1258, %c0_121] {strides = array<i32: 2, 1>} : memref<2176x16xf32, #tpu.memory_space<vmem>>, vector<16x16xf32>
    %c1259 = arith.constant 1259 : index
    %c0_122 = arith.constant 0 : index
    %211 = tpu.strided_load %arg9[%c1259, %c0_122] {strides = array<i32: 2, 1>} : memref<2176x16xf32, #tpu.memory_space<vmem>>, vector<16x16xf32>
    %212 = arith.maximumf %210, %211 : vector<16x16xf32>
    %213 = arith.maximumf %209, %212 : vector<16x16xf32>
    %214 = arith.addf %213, %8 : vector<16x16xf32>
    %cst_123 = arith.constant 0.000000e+00 : f32
    %215 = vector.broadcast %cst_123 : f32 to vector<16x16xf32>
    %216 = arith.maximumf %214, %215 : vector<16x16xf32>
    %c383 = arith.constant 383 : index
    %c0_124 = arith.constant 0 : index
    %217 = vector.load %arg10[%c383, %c0_124] : memref<656x16xf32, #tpu.memory_space<vmem>>, vector<16x16xf32>
    tpu.vector_store %arg10[%c383, %c0_124], %216 {strides = array<i32>} : memref<656x16xf32, #tpu.memory_space<vmem>>, vector<16x16xf32>,
    %c1292 = arith.constant 1292 : index
    %c0_125 = arith.constant 0 : index
    %218 = tpu.strided_load %arg9[%c1292, %c0_125] {strides = array<i32: 2, 1>} : memref<2176x16xf32, #tpu.memory_space<vmem>>, vector<16x16xf32>
    %c1293 = arith.constant 1293 : index
    %c0_126 = arith.constant 0 : index
    %219 = tpu.strided_load %arg9[%c1293, %c0_126] {strides = array<i32: 2, 1>} : memref<2176x16xf32, #tpu.memory_space<vmem>>, vector<16x16xf32>
    %220 = arith.maximumf %218, %219 : vector<16x16xf32>
    %c1326 = arith.constant 1326 : index
    %c0_127 = arith.constant 0 : index
    %221 = tpu.strided_load %arg9[%c1326, %c0_127] {strides = array<i32: 2, 1>} : memref<2176x16xf32, #tpu.memory_space<vmem>>, vector<16x16xf32>
    %c1327 = arith.constant 1327 : index
    %c0_128 = arith.constant 0 : index
    %222 = tpu.strided_load %arg9[%c1327, %c0_128] {strides = array<i32: 2, 1>} : memref<2176x16xf32, #tpu.memory_space<vmem>>, vector<16x16xf32>
    %223 = arith.maximumf %221, %222 : vector<16x16xf32>
    %224 = arith.maximumf %220, %223 : vector<16x16xf32>
    %225 = arith.addf %224, %8 : vector<16x16xf32>
    %cst_129 = arith.constant 0.000000e+00 : f32
    %226 = vector.broadcast %cst_129 : f32 to vector<16x16xf32>
    %227 = arith.maximumf %225, %226 : vector<16x16xf32>
    %c401 = arith.constant 401 : index
    %c0_130 = arith.constant 0 : index
    %228 = vector.load %arg10[%c401, %c0_130] : memref<656x16xf32, #tpu.memory_space<vmem>>, vector<16x16xf32>
    tpu.vector_store %arg10[%c401, %c0_130], %227 {strides = array<i32>} : memref<656x16xf32, #tpu.memory_space<vmem>>, vector<16x16xf32>,
    %c1360 = arith.constant 1360 : index
    %c0_131 = arith.constant 0 : index
    %229 = tpu.strided_load %arg9[%c1360, %c0_131] {strides = array<i32: 2, 1>} : memref<2176x16xf32, #tpu.memory_space<vmem>>, vector<16x16xf32>
    %c1361 = arith.constant 1361 : index
    %c0_132 = arith.constant 0 : index
    %230 = tpu.strided_load %arg9[%c1361, %c0_132] {strides = array<i32: 2, 1>} : memref<2176x16xf32, #tpu.memory_space<vmem>>, vector<16x16xf32>
    %231 = arith.maximumf %229, %230 : vector<16x16xf32>
    %c1394 = arith.constant 1394 : index
    %c0_133 = arith.constant 0 : index
    %232 = tpu.strided_load %arg9[%c1394, %c0_133] {strides = array<i32: 2, 1>} : memref<2176x16xf32, #tpu.memory_space<vmem>>, vector<16x16xf32>
    %c1395 = arith.constant 1395 : index
    %c0_134 = arith.constant 0 : index
    %233 = tpu.strided_load %arg9[%c1395, %c0_134] {strides = array<i32: 2, 1>} : memref<2176x16xf32, #tpu.memory_space<vmem>>, vector<16x16xf32>
    %234 = arith.maximumf %232, %233 : vector<16x16xf32>
    %235 = arith.maximumf %231, %234 : vector<16x16xf32>
    %236 = arith.addf %235, %8 : vector<16x16xf32>
    %cst_135 = arith.constant 0.000000e+00 : f32
    %237 = vector.broadcast %cst_135 : f32 to vector<16x16xf32>
    %238 = arith.maximumf %236, %237 : vector<16x16xf32>
    %c419 = arith.constant 419 : index
    %c0_136 = arith.constant 0 : index
    %239 = vector.load %arg10[%c419, %c0_136] : memref<656x16xf32, #tpu.memory_space<vmem>>, vector<16x16xf32>
    tpu.vector_store %arg10[%c419, %c0_136], %238 {strides = array<i32>} : memref<656x16xf32, #tpu.memory_space<vmem>>, vector<16x16xf32>,
    %c1428 = arith.constant 1428 : index
    %c0_137 = arith.constant 0 : index
    %240 = tpu.strided_load %arg9[%c1428, %c0_137] {strides = array<i32: 2, 1>} : memref<2176x16xf32, #tpu.memory_space<vmem>>, vector<16x16xf32>
    %c1429 = arith.constant 1429 : index
    %c0_138 = arith.constant 0 : index
    %241 = tpu.strided_load %arg9[%c1429, %c0_138] {strides = array<i32: 2, 1>} : memref<2176x16xf32, #tpu.memory_space<vmem>>, vector<16x16xf32>
    %242 = arith.maximumf %240, %241 : vector<16x16xf32>
    %c1462 = arith.constant 1462 : index
    %c0_139 = arith.constant 0 : index
    %243 = tpu.strided_load %arg9[%c1462, %c0_139] {strides = array<i32: 2, 1>} : memref<2176x16xf32, #tpu.memory_space<vmem>>, vector<16x16xf32>
    %c1463 = arith.constant 1463 : index
    %c0_140 = arith.constant 0 : index
    %244 = tpu.strided_load %arg9[%c1463, %c0_140] {strides = array<i32: 2, 1>} : memref<2176x16xf32, #tpu.memory_space<vmem>>, vector<16x16xf32>
    %245 = arith.maximumf %243, %244 : vector<16x16xf32>
    %246 = arith.maximumf %242, %245 : vector<16x16xf32>
    %247 = arith.addf %246, %8 : vector<16x16xf32>
    %cst_141 = arith.constant 0.000000e+00 : f32
    %248 = vector.broadcast %cst_141 : f32 to vector<16x16xf32>
    %249 = arith.maximumf %247, %248 : vector<16x16xf32>
    %c437 = arith.constant 437 : index
    %c0_142 = arith.constant 0 : index
    %250 = vector.load %arg10[%c437, %c0_142] : memref<656x16xf32, #tpu.memory_space<vmem>>, vector<16x16xf32>
    tpu.vector_store %arg10[%c437, %c0_142], %249 {strides = array<i32>} : memref<656x16xf32, #tpu.memory_space<vmem>>, vector<16x16xf32>,
    %c1496 = arith.constant 1496 : index
    %c0_143 = arith.constant 0 : index
    %251 = tpu.strided_load %arg9[%c1496, %c0_143] {strides = array<i32: 2, 1>} : memref<2176x16xf32, #tpu.memory_space<vmem>>, vector<16x16xf32>
    %c1497 = arith.constant 1497 : index
    %c0_144 = arith.constant 0 : index
    %252 = tpu.strided_load %arg9[%c1497, %c0_144] {strides = array<i32: 2, 1>} : memref<2176x16xf32, #tpu.memory_space<vmem>>, vector<16x16xf32>
    %253 = arith.maximumf %251, %252 : vector<16x16xf32>
    %c1530 = arith.constant 1530 : index
    %c0_145 = arith.constant 0 : index
    %254 = tpu.strided_load %arg9[%c1530, %c0_145] {strides = array<i32: 2, 1>} : memref<2176x16xf32, #tpu.memory_space<vmem>>, vector<16x16xf32>
    %c1531 = arith.constant 1531 : index
    %c0_146 = arith.constant 0 : index
    %255 = tpu.strided_load %arg9[%c1531, %c0_146] {strides = array<i32: 2, 1>} : memref<2176x16xf32, #tpu.memory_space<vmem>>, vector<16x16xf32>
    %256 = arith.maximumf %254, %255 : vector<16x16xf32>
    %257 = arith.maximumf %253, %256 : vector<16x16xf32>
    %258 = arith.addf %257, %8 : vector<16x16xf32>
    %cst_147 = arith.constant 0.000000e+00 : f32
    %259 = vector.broadcast %cst_147 : f32 to vector<16x16xf32>
    %260 = arith.maximumf %258, %259 : vector<16x16xf32>
    %c455 = arith.constant 455 : index
    %c0_148 = arith.constant 0 : index
    %261 = vector.load %arg10[%c455, %c0_148] : memref<656x16xf32, #tpu.memory_space<vmem>>, vector<16x16xf32>
    tpu.vector_store %arg10[%c455, %c0_148], %260 {strides = array<i32>} : memref<656x16xf32, #tpu.memory_space<vmem>>, vector<16x16xf32>,
    %c1564 = arith.constant 1564 : index
    %c0_149 = arith.constant 0 : index
    %262 = tpu.strided_load %arg9[%c1564, %c0_149] {strides = array<i32: 2, 1>} : memref<2176x16xf32, #tpu.memory_space<vmem>>, vector<16x16xf32>
    %c1565 = arith.constant 1565 : index
    %c0_150 = arith.constant 0 : index
    %263 = tpu.strided_load %arg9[%c1565, %c0_150] {strides = array<i32: 2, 1>} : memref<2176x16xf32, #tpu.memory_space<vmem>>, vector<16x16xf32>
    %264 = arith.maximumf %262, %263 : vector<16x16xf32>
    %c1598 = arith.constant 1598 : index
    %c0_151 = arith.constant 0 : index
    %265 = tpu.strided_load %arg9[%c1598, %c0_151] {strides = array<i32: 2, 1>} : memref<2176x16xf32, #tpu.memory_space<vmem>>, vector<16x16xf32>
    %c1599 = arith.constant 1599 : index
    %c0_152 = arith.constant 0 : index
    %266 = tpu.strided_load %arg9[%c1599, %c0_152] {strides = array<i32: 2, 1>} : memref<2176x16xf32, #tpu.memory_space<vmem>>, vector<16x16xf32>
    %267 = arith.maximumf %265, %266 : vector<16x16xf32>
    %268 = arith.maximumf %264, %267 : vector<16x16xf32>
    %269 = arith.addf %268, %8 : vector<16x16xf32>
    %cst_153 = arith.constant 0.000000e+00 : f32
    %270 = vector.broadcast %cst_153 : f32 to vector<16x16xf32>
    %271 = arith.maximumf %269, %270 : vector<16x16xf32>
    %c473 = arith.constant 473 : index
    %c0_154 = arith.constant 0 : index
    %272 = vector.load %arg10[%c473, %c0_154] : memref<656x16xf32, #tpu.memory_space<vmem>>, vector<16x16xf32>
    tpu.vector_store %arg10[%c473, %c0_154], %271 {strides = array<i32>} : memref<656x16xf32, #tpu.memory_space<vmem>>, vector<16x16xf32>,
    %c1632 = arith.constant 1632 : index
    %c0_155 = arith.constant 0 : index
    %273 = tpu.strided_load %arg9[%c1632, %c0_155] {strides = array<i32: 2, 1>} : memref<2176x16xf32, #tpu.memory_space<vmem>>, vector<16x16xf32>
    %c1633 = arith.constant 1633 : index
    %c0_156 = arith.constant 0 : index
    %274 = tpu.strided_load %arg9[%c1633, %c0_156] {strides = array<i32: 2, 1>} : memref<2176x16xf32, #tpu.memory_space<vmem>>, vector<16x16xf32>
    %275 = arith.maximumf %273, %274 : vector<16x16xf32>
    %c1666 = arith.constant 1666 : index
    %c0_157 = arith.constant 0 : index
    %276 = tpu.strided_load %arg9[%c1666, %c0_157] {strides = array<i32: 2, 1>} : memref<2176x16xf32, #tpu.memory_space<vmem>>, vector<16x16xf32>
    %c1667 = arith.constant 1667 : index
    %c0_158 = arith.constant 0 : index
    %277 = tpu.strided_load %arg9[%c1667, %c0_158] {strides = array<i32: 2, 1>} : memref<2176x16xf32, #tpu.memory_space<vmem>>, vector<16x16xf32>
    %278 = arith.maximumf %276, %277 : vector<16x16xf32>
    %279 = arith.maximumf %275, %278 : vector<16x16xf32>
    %280 = arith.addf %279, %8 : vector<16x16xf32>
    %cst_159 = arith.constant 0.000000e+00 : f32
    %281 = vector.broadcast %cst_159 : f32 to vector<16x16xf32>
    %282 = arith.maximumf %280, %281 : vector<16x16xf32>
    %c491 = arith.constant 491 : index
    %c0_160 = arith.constant 0 : index
    %283 = vector.load %arg10[%c491, %c0_160] : memref<656x16xf32, #tpu.memory_space<vmem>>, vector<16x16xf32>
    tpu.vector_store %arg10[%c491, %c0_160], %282 {strides = array<i32>} : memref<656x16xf32, #tpu.memory_space<vmem>>, vector<16x16xf32>,
    %c1700 = arith.constant 1700 : index
    %c0_161 = arith.constant 0 : index
    %284 = tpu.strided_load %arg9[%c1700, %c0_161] {strides = array<i32: 2, 1>} : memref<2176x16xf32, #tpu.memory_space<vmem>>, vector<16x16xf32>
    %c1701 = arith.constant 1701 : index
    %c0_162 = arith.constant 0 : index
    %285 = tpu.strided_load %arg9[%c1701, %c0_162] {strides = array<i32: 2, 1>} : memref<2176x16xf32, #tpu.memory_space<vmem>>, vector<16x16xf32>
    %286 = arith.maximumf %284, %285 : vector<16x16xf32>
    %c1734 = arith.constant 1734 : index
    %c0_163 = arith.constant 0 : index
    %287 = tpu.strided_load %arg9[%c1734, %c0_163] {strides = array<i32: 2, 1>} : memref<2176x16xf32, #tpu.memory_space<vmem>>, vector<16x16xf32>
    %c1735 = arith.constant 1735 : index
    %c0_164 = arith.constant 0 : index
    %288 = tpu.strided_load %arg9[%c1735, %c0_164] {strides = array<i32: 2, 1>} : memref<2176x16xf32, #tpu.memory_space<vmem>>, vector<16x16xf32>
    %289 = arith.maximumf %287, %288 : vector<16x16xf32>
    %290 = arith.maximumf %286, %289 : vector<16x16xf32>
    %291 = arith.addf %290, %8 : vector<16x16xf32>
    %cst_165 = arith.constant 0.000000e+00 : f32
    %292 = vector.broadcast %cst_165 : f32 to vector<16x16xf32>
    %293 = arith.maximumf %291, %292 : vector<16x16xf32>
    %c509 = arith.constant 509 : index
    %c0_166 = arith.constant 0 : index
    %294 = vector.load %arg10[%c509, %c0_166] : memref<656x16xf32, #tpu.memory_space<vmem>>, vector<16x16xf32>
    tpu.vector_store %arg10[%c509, %c0_166], %293 {strides = array<i32>} : memref<656x16xf32, #tpu.memory_space<vmem>>, vector<16x16xf32>,
    %c1768 = arith.constant 1768 : index
    %c0_167 = arith.constant 0 : index
    %295 = tpu.strided_load %arg9[%c1768, %c0_167] {strides = array<i32: 2, 1>} : memref<2176x16xf32, #tpu.memory_space<vmem>>, vector<16x16xf32>
    %c1769 = arith.constant 1769 : index
    %c0_168 = arith.constant 0 : index
    %296 = tpu.strided_load %arg9[%c1769, %c0_168] {strides = array<i32: 2, 1>} : memref<2176x16xf32, #tpu.memory_space<vmem>>, vector<16x16xf32>
    %297 = arith.maximumf %295, %296 : vector<16x16xf32>
    %c1802 = arith.constant 1802 : index
    %c0_169 = arith.constant 0 : index
    %298 = tpu.strided_load %arg9[%c1802, %c0_169] {strides = array<i32: 2, 1>} : memref<2176x16xf32, #tpu.memory_space<vmem>>, vector<16x16xf32>
    %c1803 = arith.constant 1803 : index
    %c0_170 = arith.constant 0 : index
    %299 = tpu.strided_load %arg9[%c1803, %c0_170] {strides = array<i32: 2, 1>} : memref<2176x16xf32, #tpu.memory_space<vmem>>, vector<16x16xf32>
    %300 = arith.maximumf %298, %299 : vector<16x16xf32>
    %301 = arith.maximumf %297, %300 : vector<16x16xf32>
    %302 = arith.addf %301, %8 : vector<16x16xf32>
    %cst_171 = arith.constant 0.000000e+00 : f32
    %303 = vector.broadcast %cst_171 : f32 to vector<16x16xf32>
    %304 = arith.maximumf %302, %303 : vector<16x16xf32>
    %c527 = arith.constant 527 : index
    %c0_172 = arith.constant 0 : index
    %305 = vector.load %arg10[%c527, %c0_172] : memref<656x16xf32, #tpu.memory_space<vmem>>, vector<16x16xf32>
    tpu.vector_store %arg10[%c527, %c0_172], %304 {strides = array<i32>} : memref<656x16xf32, #tpu.memory_space<vmem>>, vector<16x16xf32>,
    %c1836 = arith.constant 1836 : index
    %c0_173 = arith.constant 0 : index
    %306 = tpu.strided_load %arg9[%c1836, %c0_173] {strides = array<i32: 2, 1>} : memref<2176x16xf32, #tpu.memory_space<vmem>>, vector<16x16xf32>
    %c1837 = arith.constant 1837 : index
    %c0_174 = arith.constant 0 : index
    %307 = tpu.strided_load %arg9[%c1837, %c0_174] {strides = array<i32: 2, 1>} : memref<2176x16xf32, #tpu.memory_space<vmem>>, vector<16x16xf32>
    %308 = arith.maximumf %306, %307 : vector<16x16xf32>
    %c1870 = arith.constant 1870 : index
    %c0_175 = arith.constant 0 : index
    %309 = tpu.strided_load %arg9[%c1870, %c0_175] {strides = array<i32: 2, 1>} : memref<2176x16xf32, #tpu.memory_space<vmem>>, vector<16x16xf32>
    %c1871 = arith.constant 1871 : index
    %c0_176 = arith.constant 0 : index
    %310 = tpu.strided_load %arg9[%c1871, %c0_176] {strides = array<i32: 2, 1>} : memref<2176x16xf32, #tpu.memory_space<vmem>>, vector<16x16xf32>
    %311 = arith.maximumf %309, %310 : vector<16x16xf32>
    %312 = arith.maximumf %308, %311 : vector<16x16xf32>
    %313 = arith.addf %312, %8 : vector<16x16xf32>
    %cst_177 = arith.constant 0.000000e+00 : f32
    %314 = vector.broadcast %cst_177 : f32 to vector<16x16xf32>
    %315 = arith.maximumf %313, %314 : vector<16x16xf32>
    %c545_178 = arith.constant 545 : index
    %c0_179 = arith.constant 0 : index
    %316 = vector.load %arg10[%c545_178, %c0_179] : memref<656x16xf32, #tpu.memory_space<vmem>>, vector<16x16xf32>
    tpu.vector_store %arg10[%c545_178, %c0_179], %315 {strides = array<i32>} : memref<656x16xf32, #tpu.memory_space<vmem>>, vector<16x16xf32>,
    %c1904 = arith.constant 1904 : index
    %c0_180 = arith.constant 0 : index
    %317 = tpu.strided_load %arg9[%c1904, %c0_180] {strides = array<i32: 2, 1>} : memref<2176x16xf32, #tpu.memory_space<vmem>>, vector<16x16xf32>
    %c1905 = arith.constant 1905 : index
    %c0_181 = arith.constant 0 : index
    %318 = tpu.strided_load %arg9[%c1905, %c0_181] {strides = array<i32: 2, 1>} : memref<2176x16xf32, #tpu.memory_space<vmem>>, vector<16x16xf32>
    %319 = arith.maximumf %317, %318 : vector<16x16xf32>
    %c1938 = arith.constant 1938 : index
    %c0_182 = arith.constant 0 : index
    %320 = tpu.strided_load %arg9[%c1938, %c0_182] {strides = array<i32: 2, 1>} : memref<2176x16xf32, #tpu.memory_space<vmem>>, vector<16x16xf32>
    %c1939 = arith.constant 1939 : index
    %c0_183 = arith.constant 0 : index
    %321 = tpu.strided_load %arg9[%c1939, %c0_183] {strides = array<i32: 2, 1>} : memref<2176x16xf32, #tpu.memory_space<vmem>>, vector<16x16xf32>
    %322 = arith.maximumf %320, %321 : vector<16x16xf32>
    %323 = arith.maximumf %319, %322 : vector<16x16xf32>
    %324 = arith.addf %323, %8 : vector<16x16xf32>
    %cst_184 = arith.constant 0.000000e+00 : f32
    %325 = vector.broadcast %cst_184 : f32 to vector<16x16xf32>
    %326 = arith.maximumf %324, %325 : vector<16x16xf32>
    %c563 = arith.constant 563 : index
    %c0_185 = arith.constant 0 : index
    %327 = vector.load %arg10[%c563, %c0_185] : memref<656x16xf32, #tpu.memory_space<vmem>>, vector<16x16xf32>
    tpu.vector_store %arg10[%c563, %c0_185], %326 {strides = array<i32>} : memref<656x16xf32, #tpu.memory_space<vmem>>, vector<16x16xf32>,
    %c1972 = arith.constant 1972 : index
    %c0_186 = arith.constant 0 : index
    %328 = tpu.strided_load %arg9[%c1972, %c0_186] {strides = array<i32: 2, 1>} : memref<2176x16xf32, #tpu.memory_space<vmem>>, vector<16x16xf32>
    %c1973 = arith.constant 1973 : index
    %c0_187 = arith.constant 0 : index
    %329 = tpu.strided_load %arg9[%c1973, %c0_187] {strides = array<i32: 2, 1>} : memref<2176x16xf32, #tpu.memory_space<vmem>>, vector<16x16xf32>
    %330 = arith.maximumf %328, %329 : vector<16x16xf32>
    %c2006 = arith.constant 2006 : index
    %c0_188 = arith.constant 0 : index
    %331 = tpu.strided_load %arg9[%c2006, %c0_188] {strides = array<i32: 2, 1>} : memref<2176x16xf32, #tpu.memory_space<vmem>>, vector<16x16xf32>
    %c2007 = arith.constant 2007 : index
    %c0_189 = arith.constant 0 : index
    %332 = tpu.strided_load %arg9[%c2007, %c0_189] {strides = array<i32: 2, 1>} : memref<2176x16xf32, #tpu.memory_space<vmem>>, vector<16x16xf32>
    %333 = arith.maximumf %331, %332 : vector<16x16xf32>
    %334 = arith.maximumf %330, %333 : vector<16x16xf32>
    %335 = arith.addf %334, %8 : vector<16x16xf32>
    %cst_190 = arith.constant 0.000000e+00 : f32
    %336 = vector.broadcast %cst_190 : f32 to vector<16x16xf32>
    %337 = arith.maximumf %335, %336 : vector<16x16xf32>
    %c581 = arith.constant 581 : index
    %c0_191 = arith.constant 0 : index
    %338 = vector.load %arg10[%c581, %c0_191] : memref<656x16xf32, #tpu.memory_space<vmem>>, vector<16x16xf32>
    tpu.vector_store %arg10[%c581, %c0_191], %337 {strides = array<i32>} : memref<656x16xf32, #tpu.memory_space<vmem>>, vector<16x16xf32>,
    %c2040 = arith.constant 2040 : index
    %c0_192 = arith.constant 0 : index
    %339 = tpu.strided_load %arg9[%c2040, %c0_192] {strides = array<i32: 2, 1>} : memref<2176x16xf32, #tpu.memory_space<vmem>>, vector<16x16xf32>
    %c2041 = arith.constant 2041 : index
    %c0_193 = arith.constant 0 : index
    %340 = tpu.strided_load %arg9[%c2041, %c0_193] {strides = array<i32: 2, 1>} : memref<2176x16xf32, #tpu.memory_space<vmem>>, vector<16x16xf32>
    %341 = arith.maximumf %339, %340 : vector<16x16xf32>
    %c2074 = arith.constant 2074 : index
    %c0_194 = arith.constant 0 : index
    %342 = tpu.strided_load %arg9[%c2074, %c0_194] {strides = array<i32: 2, 1>} : memref<2176x16xf32, #tpu.memory_space<vmem>>, vector<16x16xf32>
    %c2075 = arith.constant 2075 : index
    %c0_195 = arith.constant 0 : index
    %343 = tpu.strided_load %arg9[%c2075, %c0_195] {strides = array<i32: 2, 1>} : memref<2176x16xf32, #tpu.memory_space<vmem>>, vector<16x16xf32>
    %344 = arith.maximumf %342, %343 : vector<16x16xf32>
    %345 = arith.maximumf %341, %344 : vector<16x16xf32>
    %346 = arith.addf %345, %8 : vector<16x16xf32>
    %cst_196 = arith.constant 0.000000e+00 : f32
    %347 = vector.broadcast %cst_196 : f32 to vector<16x16xf32>
    %348 = arith.maximumf %346, %347 : vector<16x16xf32>
    %c599 = arith.constant 599 : index
    %c0_197 = arith.constant 0 : index
    %349 = vector.load %arg10[%c599, %c0_197] : memref<656x16xf32, #tpu.memory_space<vmem>>, vector<16x16xf32>
    tpu.vector_store %arg10[%c599, %c0_197], %348 {strides = array<i32>} : memref<656x16xf32, #tpu.memory_space<vmem>>, vector<16x16xf32>,
    %c2108 = arith.constant 2108 : index
    %c0_198 = arith.constant 0 : index
    %350 = tpu.strided_load %arg9[%c2108, %c0_198] {strides = array<i32: 2, 1>} : memref<2176x16xf32, #tpu.memory_space<vmem>>, vector<16x16xf32>
    %c2109 = arith.constant 2109 : index
    %c0_199 = arith.constant 0 : index
    %351 = tpu.strided_load %arg9[%c2109, %c0_199] {strides = array<i32: 2, 1>} : memref<2176x16xf32, #tpu.memory_space<vmem>>, vector<16x16xf32>
    %352 = arith.maximumf %350, %351 : vector<16x16xf32>
    %c2142 = arith.constant 2142 : index
    %c0_200 = arith.constant 0 : index
    %353 = tpu.strided_load %arg9[%c2142, %c0_200] {strides = array<i32: 2, 1>} : memref<2176x16xf32, #tpu.memory_space<vmem>>, vector<16x16xf32>
    %c2143 = arith.constant 2143 : index
    %c0_201 = arith.constant 0 : index
    %354 = tpu.strided_load %arg9[%c2143, %c0_201] {strides = array<i32: 2, 1>} : memref<2176x16xf32, #tpu.memory_space<vmem>>, vector<16x16xf32>
    %355 = arith.maximumf %353, %354 : vector<16x16xf32>
    %356 = arith.maximumf %352, %355 : vector<16x16xf32>
    %357 = arith.addf %356, %8 : vector<16x16xf32>
    %cst_202 = arith.constant 0.000000e+00 : f32
    %358 = vector.broadcast %cst_202 : f32 to vector<16x16xf32>
    %359 = arith.maximumf %357, %358 : vector<16x16xf32>
    %c617 = arith.constant 617 : index
    %c0_203 = arith.constant 0 : index
    %360 = vector.load %arg10[%c617, %c0_203] : memref<656x16xf32, #tpu.memory_space<vmem>>, vector<16x16xf32>
    tpu.vector_store %arg10[%c617, %c0_203], %359 {strides = array<i32>} : memref<656x16xf32, #tpu.memory_space<vmem>>, vector<16x16xf32>,
    %c0_204 = arith.constant 0 : index
    %c0_205 = arith.constant 0 : index
    %361 = vector.load %arg10[%c0_204, %c0_205] : memref<656x16xf32, #tpu.memory_space<vmem>>, vector<288x16xf32>
    %c1_206 = arith.constant 1 : index
    %c0_207 = arith.constant 0 : index
    %362 = vector.load %arg10[%c1_206, %c0_207] : memref<656x16xf32, #tpu.memory_space<vmem>>, vector<288x16xf32>
    %c2 = arith.constant 2 : index
    %c0_208 = arith.constant 0 : index
    %363 = vector.load %arg10[%c2, %c0_208] : memref<656x16xf32, #tpu.memory_space<vmem>>, vector<288x16xf32>
    %c18 = arith.constant 18 : index
    %c0_209 = arith.constant 0 : index
    %364 = vector.load %arg10[%c18, %c0_209] : memref<656x16xf32, #tpu.memory_space<vmem>>, vector<288x16xf32>
    %c19_210 = arith.constant 19 : index
    %c0_211 = arith.constant 0 : index
    %365 = vector.load %arg10[%c19_210, %c0_211] : memref<656x16xf32, #tpu.memory_space<vmem>>, vector<288x16xf32>
    %c20 = arith.constant 20 : index
    %c0_212 = arith.constant 0 : index
    %366 = vector.load %arg10[%c20, %c0_212] : memref<656x16xf32, #tpu.memory_space<vmem>>, vector<288x16xf32>
    %c36 = arith.constant 36 : index
    %c0_213 = arith.constant 0 : index
    %367 = vector.load %arg10[%c36, %c0_213] : memref<656x16xf32, #tpu.memory_space<vmem>>, vector<288x16xf32>
    %c37_214 = arith.constant 37 : index
    %c0_215 = arith.constant 0 : index
    %368 = vector.load %arg10[%c37_214, %c0_215] : memref<656x16xf32, #tpu.memory_space<vmem>>, vector<288x16xf32>
    %c38 = arith.constant 38 : index
    %c0_216 = arith.constant 0 : index
    %369 = vector.load %arg10[%c38, %c0_216] : memref<656x16xf32, #tpu.memory_space<vmem>>, vector<288x16xf32>
    %370 = tpu.concatenate %361, %362, %363, %364, %365, %366, %367, %368, %369 in 1 : vector<288x16xf32>, vector<288x16xf32>, vector<288x16xf32>, vector<288x16xf32>, vector<288x16xf32>, vector<288x16xf32>, vector<288x16xf32>, vector<288x16xf32>, vector<288x16xf32> -> vector<288x144xf32>
    %c0_217 = arith.constant 0 : index
    %c0_218 = arith.constant 0 : index
    %371 = vector.load %arg4[%c0_217, %c0_218] : memref<144x32xf32, #tpu.memory_space<vmem>>, vector<144x32xf32>
    %cst_219 = arith.constant dense<0.000000e+00> : vector<288x32xf32>
    %372 = tpu.matmul %370, %371, %cst_219 {dimension_numbers = #tpu.dot_dimension_numbers<[1], [0], [0], [1], [0, 0, 1, 1], [], []>} : vector<288x144xf32>, vector<144x32xf32>, vector<288x32xf32> -> vector<288x32xf32>
    %c0_220 = arith.constant 0 : index
    %c0_221 = arith.constant 0 : index
    %373 = vector.load %arg11[%c0_220, %c0_221] : memref<576x32xf32, #tpu.memory_space<vmem>>, vector<288x32xf32>
    tpu.vector_store %arg11[%c0_220, %c0_221], %372 {strides = array<i32>} : memref<576x32xf32, #tpu.memory_space<vmem>>, vector<288x32xf32>,
    %c328 = arith.constant 328 : index
    %c0_222 = arith.constant 0 : index
    %374 = vector.load %arg10[%c328, %c0_222] : memref<656x16xf32, #tpu.memory_space<vmem>>, vector<288x16xf32>
    %c329 = arith.constant 329 : index
    %c0_223 = arith.constant 0 : index
    %375 = vector.load %arg10[%c329, %c0_223] : memref<656x16xf32, #tpu.memory_space<vmem>>, vector<288x16xf32>
    %c330 = arith.constant 330 : index
    %c0_224 = arith.constant 0 : index
    %376 = vector.load %arg10[%c330, %c0_224] : memref<656x16xf32, #tpu.memory_space<vmem>>, vector<288x16xf32>
    %c346 = arith.constant 346 : index
    %c0_225 = arith.constant 0 : index
    %377 = vector.load %arg10[%c346, %c0_225] : memref<656x16xf32, #tpu.memory_space<vmem>>, vector<288x16xf32>
    %c347_226 = arith.constant 347 : index
    %c0_227 = arith.constant 0 : index
    %378 = vector.load %arg10[%c347_226, %c0_227] : memref<656x16xf32, #tpu.memory_space<vmem>>, vector<288x16xf32>
    %c348 = arith.constant 348 : index
    %c0_228 = arith.constant 0 : index
    %379 = vector.load %arg10[%c348, %c0_228] : memref<656x16xf32, #tpu.memory_space<vmem>>, vector<288x16xf32>
    %c364 = arith.constant 364 : index
    %c0_229 = arith.constant 0 : index
    %380 = vector.load %arg10[%c364, %c0_229] : memref<656x16xf32, #tpu.memory_space<vmem>>, vector<288x16xf32>
    %c365_230 = arith.constant 365 : index
    %c0_231 = arith.constant 0 : index
    %381 = vector.load %arg10[%c365_230, %c0_231] : memref<656x16xf32, #tpu.memory_space<vmem>>, vector<288x16xf32>
    %c366 = arith.constant 366 : index
    %c0_232 = arith.constant 0 : index
    %382 = vector.load %arg10[%c366, %c0_232] : memref<656x16xf32, #tpu.memory_space<vmem>>, vector<288x16xf32>
    %383 = tpu.concatenate %374, %375, %376, %377, %378, %379, %380, %381, %382 in 1 : vector<288x16xf32>, vector<288x16xf32>, vector<288x16xf32>, vector<288x16xf32>, vector<288x16xf32>, vector<288x16xf32>, vector<288x16xf32>, vector<288x16xf32>, vector<288x16xf32> -> vector<288x144xf32>
    %c0_233 = arith.constant 0 : index
    %c0_234 = arith.constant 0 : index
    %384 = vector.load %arg4[%c0_233, %c0_234] : memref<144x32xf32, #tpu.memory_space<vmem>>, vector<144x32xf32>
    %cst_235 = arith.constant dense<0.000000e+00> : vector<288x32xf32>
    %385 = tpu.matmul %383, %384, %cst_235 {dimension_numbers = #tpu.dot_dimension_numbers<[1], [0], [0], [1], [0, 0, 1, 1], [], []>} : vector<288x144xf32>, vector<144x32xf32>, vector<288x32xf32> -> vector<288x32xf32>
    %c288 = arith.constant 288 : index
    %c0_236 = arith.constant 0 : index
    %386 = vector.load %arg11[%c288, %c0_236] : memref<576x32xf32, #tpu.memory_space<vmem>>, vector<288x32xf32>
    tpu.vector_store %arg11[%c288, %c0_236], %385 {strides = array<i32>} : memref<576x32xf32, #tpu.memory_space<vmem>>, vector<288x32xf32>,
    %c0_237 = arith.constant 0 : index
    %c0_238 = arith.constant 0 : index
    %387 = vector.load %arg5[%c0_237, %c0_238] : memref<1x32xf32, #tpu.memory_space<vmem>>, vector<1x32xf32>
    %388 = vector.shape_cast %387 : vector<1x32xf32> to vector<1x32xf32>
    %389 = vector.broadcast %388 : vector<1x32xf32> to vector<8x32xf32>
    %c0_239 = arith.constant 0 : index
    %c0_240 = arith.constant 0 : index
    %390 = tpu.strided_load %arg11[%c0_239, %c0_240] {strides = array<i32: 2, 1>} : memref<576x32xf32, #tpu.memory_space<vmem>>, vector<8x32xf32>
    %c1_241 = arith.constant 1 : index
    %c0_242 = arith.constant 0 : index
    %391 = tpu.strided_load %arg11[%c1_241, %c0_242] {strides = array<i32: 2, 1>} : memref<576x32xf32, #tpu.memory_space<vmem>>, vector<8x32xf32>
    %392 = arith.maximumf %390, %391 : vector<8x32xf32>
    %c18_243 = arith.constant 18 : index
    %c0_244 = arith.constant 0 : index
    %393 = tpu.strided_load %arg11[%c18_243, %c0_244] {strides = array<i32: 2, 1>} : memref<576x32xf32, #tpu.memory_space<vmem>>, vector<8x32xf32>
    %c19_245 = arith.constant 19 : index
    %c0_246 = arith.constant 0 : index
    %394 = tpu.strided_load %arg11[%c19_245, %c0_246] {strides = array<i32: 2, 1>} : memref<576x32xf32, #tpu.memory_space<vmem>>, vector<8x32xf32>
    %395 = arith.maximumf %393, %394 : vector<8x32xf32>
    %396 = arith.maximumf %392, %395 : vector<8x32xf32>
    %397 = arith.addf %396, %389 : vector<8x32xf32>
    %cst_247 = arith.constant 0.000000e+00 : f32
    %398 = vector.broadcast %cst_247 : f32 to vector<8x32xf32>
    %399 = arith.maximumf %397, %398 : vector<8x32xf32>
    %c0_248 = arith.constant 0 : index
    %c0_249 = arith.constant 0 : index
    %400 = vector.load %arg12[%c0_248, %c0_249] : memref<128x32xf32, #tpu.memory_space<vmem>>, vector<8x32xf32>
    tpu.vector_store %arg12[%c0_248, %c0_249], %399 {strides = array<i32>} : memref<128x32xf32, #tpu.memory_space<vmem>>, vector<8x32xf32>,
    %c36_250 = arith.constant 36 : index
    %c0_251 = arith.constant 0 : index
    %401 = tpu.strided_load %arg11[%c36_250, %c0_251] {strides = array<i32: 2, 1>} : memref<576x32xf32, #tpu.memory_space<vmem>>, vector<8x32xf32>
    %c37_252 = arith.constant 37 : index
    %c0_253 = arith.constant 0 : index
    %402 = tpu.strided_load %arg11[%c37_252, %c0_253] {strides = array<i32: 2, 1>} : memref<576x32xf32, #tpu.memory_space<vmem>>, vector<8x32xf32>
    %403 = arith.maximumf %401, %402 : vector<8x32xf32>
    %c54 = arith.constant 54 : index
    %c0_254 = arith.constant 0 : index
    %404 = tpu.strided_load %arg11[%c54, %c0_254] {strides = array<i32: 2, 1>} : memref<576x32xf32, #tpu.memory_space<vmem>>, vector<8x32xf32>
    %c55_255 = arith.constant 55 : index
    %c0_256 = arith.constant 0 : index
    %405 = tpu.strided_load %arg11[%c55_255, %c0_256] {strides = array<i32: 2, 1>} : memref<576x32xf32, #tpu.memory_space<vmem>>, vector<8x32xf32>
    %406 = arith.maximumf %404, %405 : vector<8x32xf32>
    %407 = arith.maximumf %403, %406 : vector<8x32xf32>
    %408 = arith.addf %407, %389 : vector<8x32xf32>
    %cst_257 = arith.constant 0.000000e+00 : f32
    %409 = vector.broadcast %cst_257 : f32 to vector<8x32xf32>
    %410 = arith.maximumf %408, %409 : vector<8x32xf32>
    %c8 = arith.constant 8 : index
    %c0_258 = arith.constant 0 : index
    %411 = vector.load %arg12[%c8, %c0_258] : memref<128x32xf32, #tpu.memory_space<vmem>>, vector<8x32xf32>
    tpu.vector_store %arg12[%c8, %c0_258], %410 {strides = array<i32>} : memref<128x32xf32, #tpu.memory_space<vmem>>, vector<8x32xf32>,
    %c72 = arith.constant 72 : index
    %c0_259 = arith.constant 0 : index
    %412 = tpu.strided_load %arg11[%c72, %c0_259] {strides = array<i32: 2, 1>} : memref<576x32xf32, #tpu.memory_space<vmem>>, vector<8x32xf32>
    %c73_260 = arith.constant 73 : index
    %c0_261 = arith.constant 0 : index
    %413 = tpu.strided_load %arg11[%c73_260, %c0_261] {strides = array<i32: 2, 1>} : memref<576x32xf32, #tpu.memory_space<vmem>>, vector<8x32xf32>
    %414 = arith.maximumf %412, %413 : vector<8x32xf32>
    %c90 = arith.constant 90 : index
    %c0_262 = arith.constant 0 : index
    %415 = tpu.strided_load %arg11[%c90, %c0_262] {strides = array<i32: 2, 1>} : memref<576x32xf32, #tpu.memory_space<vmem>>, vector<8x32xf32>
    %c91_263 = arith.constant 91 : index
    %c0_264 = arith.constant 0 : index
    %416 = tpu.strided_load %arg11[%c91_263, %c0_264] {strides = array<i32: 2, 1>} : memref<576x32xf32, #tpu.memory_space<vmem>>, vector<8x32xf32>
    %417 = arith.maximumf %415, %416 : vector<8x32xf32>
    %418 = arith.maximumf %414, %417 : vector<8x32xf32>
    %419 = arith.addf %418, %389 : vector<8x32xf32>
    %cst_265 = arith.constant 0.000000e+00 : f32
    %420 = vector.broadcast %cst_265 : f32 to vector<8x32xf32>
    %421 = arith.maximumf %419, %420 : vector<8x32xf32>
    %c16 = arith.constant 16 : index
    %c0_266 = arith.constant 0 : index
    %422 = vector.load %arg12[%c16, %c0_266] : memref<128x32xf32, #tpu.memory_space<vmem>>, vector<8x32xf32>
    tpu.vector_store %arg12[%c16, %c0_266], %421 {strides = array<i32>} : memref<128x32xf32, #tpu.memory_space<vmem>>, vector<8x32xf32>,
    %c108 = arith.constant 108 : index
    %c0_267 = arith.constant 0 : index
    %423 = tpu.strided_load %arg11[%c108, %c0_267] {strides = array<i32: 2, 1>} : memref<576x32xf32, #tpu.memory_space<vmem>>, vector<8x32xf32>
    %c109_268 = arith.constant 109 : index
    %c0_269 = arith.constant 0 : index
    %424 = tpu.strided_load %arg11[%c109_268, %c0_269] {strides = array<i32: 2, 1>} : memref<576x32xf32, #tpu.memory_space<vmem>>, vector<8x32xf32>
    %425 = arith.maximumf %423, %424 : vector<8x32xf32>
    %c126 = arith.constant 126 : index
    %c0_270 = arith.constant 0 : index
    %426 = tpu.strided_load %arg11[%c126, %c0_270] {strides = array<i32: 2, 1>} : memref<576x32xf32, #tpu.memory_space<vmem>>, vector<8x32xf32>
    %c127_271 = arith.constant 127 : index
    %c0_272 = arith.constant 0 : index
    %427 = tpu.strided_load %arg11[%c127_271, %c0_272] {strides = array<i32: 2, 1>} : memref<576x32xf32, #tpu.memory_space<vmem>>, vector<8x32xf32>
    %428 = arith.maximumf %426, %427 : vector<8x32xf32>
    %429 = arith.maximumf %425, %428 : vector<8x32xf32>
    %430 = arith.addf %429, %389 : vector<8x32xf32>
    %cst_273 = arith.constant 0.000000e+00 : f32
    %431 = vector.broadcast %cst_273 : f32 to vector<8x32xf32>
    %432 = arith.maximumf %430, %431 : vector<8x32xf32>
    %c24 = arith.constant 24 : index
    %c0_274 = arith.constant 0 : index
    %433 = vector.load %arg12[%c24, %c0_274] : memref<128x32xf32, #tpu.memory_space<vmem>>, vector<8x32xf32>
    tpu.vector_store %arg12[%c24, %c0_274], %432 {strides = array<i32>} : memref<128x32xf32, #tpu.memory_space<vmem>>, vector<8x32xf32>,
    %c144 = arith.constant 144 : index
    %c0_275 = arith.constant 0 : index
    %434 = tpu.strided_load %arg11[%c144, %c0_275] {strides = array<i32: 2, 1>} : memref<576x32xf32, #tpu.memory_space<vmem>>, vector<8x32xf32>
    %c145_276 = arith.constant 145 : index
    %c0_277 = arith.constant 0 : index
    %435 = tpu.strided_load %arg11[%c145_276, %c0_277] {strides = array<i32: 2, 1>} : memref<576x32xf32, #tpu.memory_space<vmem>>, vector<8x32xf32>
    %436 = arith.maximumf %434, %435 : vector<8x32xf32>
    %c162 = arith.constant 162 : index
    %c0_278 = arith.constant 0 : index
    %437 = tpu.strided_load %arg11[%c162, %c0_278] {strides = array<i32: 2, 1>} : memref<576x32xf32, #tpu.memory_space<vmem>>, vector<8x32xf32>
    %c163_279 = arith.constant 163 : index
    %c0_280 = arith.constant 0 : index
    %438 = tpu.strided_load %arg11[%c163_279, %c0_280] {strides = array<i32: 2, 1>} : memref<576x32xf32, #tpu.memory_space<vmem>>, vector<8x32xf32>
    %439 = arith.maximumf %437, %438 : vector<8x32xf32>
    %440 = arith.maximumf %436, %439 : vector<8x32xf32>
    %441 = arith.addf %440, %389 : vector<8x32xf32>
    %cst_281 = arith.constant 0.000000e+00 : f32
    %442 = vector.broadcast %cst_281 : f32 to vector<8x32xf32>
    %443 = arith.maximumf %441, %442 : vector<8x32xf32>
    %c32 = arith.constant 32 : index
    %c0_282 = arith.constant 0 : index
    %444 = vector.load %arg12[%c32, %c0_282] : memref<128x32xf32, #tpu.memory_space<vmem>>, vector<8x32xf32>
    tpu.vector_store %arg12[%c32, %c0_282], %443 {strides = array<i32>} : memref<128x32xf32, #tpu.memory_space<vmem>>, vector<8x32xf32>,
    %c180 = arith.constant 180 : index
    %c0_283 = arith.constant 0 : index
    %445 = tpu.strided_load %arg11[%c180, %c0_283] {strides = array<i32: 2, 1>} : memref<576x32xf32, #tpu.memory_space<vmem>>, vector<8x32xf32>
    %c181_284 = arith.constant 181 : index
    %c0_285 = arith.constant 0 : index
    %446 = tpu.strided_load %arg11[%c181_284, %c0_285] {strides = array<i32: 2, 1>} : memref<576x32xf32, #tpu.memory_space<vmem>>, vector<8x32xf32>
    %447 = arith.maximumf %445, %446 : vector<8x32xf32>
    %c198 = arith.constant 198 : index
    %c0_286 = arith.constant 0 : index
    %448 = tpu.strided_load %arg11[%c198, %c0_286] {strides = array<i32: 2, 1>} : memref<576x32xf32, #tpu.memory_space<vmem>>, vector<8x32xf32>
    %c199_287 = arith.constant 199 : index
    %c0_288 = arith.constant 0 : index
    %449 = tpu.strided_load %arg11[%c199_287, %c0_288] {strides = array<i32: 2, 1>} : memref<576x32xf32, #tpu.memory_space<vmem>>, vector<8x32xf32>
    %450 = arith.maximumf %448, %449 : vector<8x32xf32>
    %451 = arith.maximumf %447, %450 : vector<8x32xf32>
    %452 = arith.addf %451, %389 : vector<8x32xf32>
    %cst_289 = arith.constant 0.000000e+00 : f32
    %453 = vector.broadcast %cst_289 : f32 to vector<8x32xf32>
    %454 = arith.maximumf %452, %453 : vector<8x32xf32>
    %c40 = arith.constant 40 : index
    %c0_290 = arith.constant 0 : index
    %455 = vector.load %arg12[%c40, %c0_290] : memref<128x32xf32, #tpu.memory_space<vmem>>, vector<8x32xf32>
    tpu.vector_store %arg12[%c40, %c0_290], %454 {strides = array<i32>} : memref<128x32xf32, #tpu.memory_space<vmem>>, vector<8x32xf32>,
    %c216 = arith.constant 216 : index
    %c0_291 = arith.constant 0 : index
    %456 = tpu.strided_load %arg11[%c216, %c0_291] {strides = array<i32: 2, 1>} : memref<576x32xf32, #tpu.memory_space<vmem>>, vector<8x32xf32>
    %c217_292 = arith.constant 217 : index
    %c0_293 = arith.constant 0 : index
    %457 = tpu.strided_load %arg11[%c217_292, %c0_293] {strides = array<i32: 2, 1>} : memref<576x32xf32, #tpu.memory_space<vmem>>, vector<8x32xf32>
    %458 = arith.maximumf %456, %457 : vector<8x32xf32>
    %c234 = arith.constant 234 : index
    %c0_294 = arith.constant 0 : index
    %459 = tpu.strided_load %arg11[%c234, %c0_294] {strides = array<i32: 2, 1>} : memref<576x32xf32, #tpu.memory_space<vmem>>, vector<8x32xf32>
    %c235_295 = arith.constant 235 : index
    %c0_296 = arith.constant 0 : index
    %460 = tpu.strided_load %arg11[%c235_295, %c0_296] {strides = array<i32: 2, 1>} : memref<576x32xf32, #tpu.memory_space<vmem>>, vector<8x32xf32>
    %461 = arith.maximumf %459, %460 : vector<8x32xf32>
    %462 = arith.maximumf %458, %461 : vector<8x32xf32>
    %463 = arith.addf %462, %389 : vector<8x32xf32>
    %cst_297 = arith.constant 0.000000e+00 : f32
    %464 = vector.broadcast %cst_297 : f32 to vector<8x32xf32>
    %465 = arith.maximumf %463, %464 : vector<8x32xf32>
    %c48 = arith.constant 48 : index
    %c0_298 = arith.constant 0 : index
    %466 = vector.load %arg12[%c48, %c0_298] : memref<128x32xf32, #tpu.memory_space<vmem>>, vector<8x32xf32>
    tpu.vector_store %arg12[%c48, %c0_298], %465 {strides = array<i32>} : memref<128x32xf32, #tpu.memory_space<vmem>>, vector<8x32xf32>,
    %c252 = arith.constant 252 : index
    %c0_299 = arith.constant 0 : index
    %467 = tpu.strided_load %arg11[%c252, %c0_299] {strides = array<i32: 2, 1>} : memref<576x32xf32, #tpu.memory_space<vmem>>, vector<8x32xf32>
    %c253_300 = arith.constant 253 : index
    %c0_301 = arith.constant 0 : index
    %468 = tpu.strided_load %arg11[%c253_300, %c0_301] {strides = array<i32: 2, 1>} : memref<576x32xf32, #tpu.memory_space<vmem>>, vector<8x32xf32>
    %469 = arith.maximumf %467, %468 : vector<8x32xf32>
    %c270 = arith.constant 270 : index
    %c0_302 = arith.constant 0 : index
    %470 = tpu.strided_load %arg11[%c270, %c0_302] {strides = array<i32: 2, 1>} : memref<576x32xf32, #tpu.memory_space<vmem>>, vector<8x32xf32>
    %c271_303 = arith.constant 271 : index
    %c0_304 = arith.constant 0 : index
    %471 = tpu.strided_load %arg11[%c271_303, %c0_304] {strides = array<i32: 2, 1>} : memref<576x32xf32, #tpu.memory_space<vmem>>, vector<8x32xf32>
    %472 = arith.maximumf %470, %471 : vector<8x32xf32>
    %473 = arith.maximumf %469, %472 : vector<8x32xf32>
    %474 = arith.addf %473, %389 : vector<8x32xf32>
    %cst_305 = arith.constant 0.000000e+00 : f32
    %475 = vector.broadcast %cst_305 : f32 to vector<8x32xf32>
    %476 = arith.maximumf %474, %475 : vector<8x32xf32>
    %c56 = arith.constant 56 : index
    %c0_306 = arith.constant 0 : index
    %477 = vector.load %arg12[%c56, %c0_306] : memref<128x32xf32, #tpu.memory_space<vmem>>, vector<8x32xf32>
    tpu.vector_store %arg12[%c56, %c0_306], %476 {strides = array<i32>} : memref<128x32xf32, #tpu.memory_space<vmem>>, vector<8x32xf32>,
    %c288_307 = arith.constant 288 : index
    %c0_308 = arith.constant 0 : index
    %478 = tpu.strided_load %arg11[%c288_307, %c0_308] {strides = array<i32: 2, 1>} : memref<576x32xf32, #tpu.memory_space<vmem>>, vector<8x32xf32>
    %c289_309 = arith.constant 289 : index
    %c0_310 = arith.constant 0 : index
    %479 = tpu.strided_load %arg11[%c289_309, %c0_310] {strides = array<i32: 2, 1>} : memref<576x32xf32, #tpu.memory_space<vmem>>, vector<8x32xf32>
    %480 = arith.maximumf %478, %479 : vector<8x32xf32>
    %c306_311 = arith.constant 306 : index
    %c0_312 = arith.constant 0 : index
    %481 = tpu.strided_load %arg11[%c306_311, %c0_312] {strides = array<i32: 2, 1>} : memref<576x32xf32, #tpu.memory_space<vmem>>, vector<8x32xf32>
    %c307_313 = arith.constant 307 : index
    %c0_314 = arith.constant 0 : index
    %482 = tpu.strided_load %arg11[%c307_313, %c0_314] {strides = array<i32: 2, 1>} : memref<576x32xf32, #tpu.memory_space<vmem>>, vector<8x32xf32>
    %483 = arith.maximumf %481, %482 : vector<8x32xf32>
    %484 = arith.maximumf %480, %483 : vector<8x32xf32>
    %485 = arith.addf %484, %389 : vector<8x32xf32>
    %cst_315 = arith.constant 0.000000e+00 : f32
    %486 = vector.broadcast %cst_315 : f32 to vector<8x32xf32>
    %487 = arith.maximumf %485, %486 : vector<8x32xf32>
    %c64 = arith.constant 64 : index
    %c0_316 = arith.constant 0 : index
    %488 = vector.load %arg12[%c64, %c0_316] : memref<128x32xf32, #tpu.memory_space<vmem>>, vector<8x32xf32>
    tpu.vector_store %arg12[%c64, %c0_316], %487 {strides = array<i32>} : memref<128x32xf32, #tpu.memory_space<vmem>>, vector<8x32xf32>,
    %c324 = arith.constant 324 : index
    %c0_317 = arith.constant 0 : index
    %489 = tpu.strided_load %arg11[%c324, %c0_317] {strides = array<i32: 2, 1>} : memref<576x32xf32, #tpu.memory_space<vmem>>, vector<8x32xf32>
    %c325 = arith.constant 325 : index
    %c0_318 = arith.constant 0 : index
    %490 = tpu.strided_load %arg11[%c325, %c0_318] {strides = array<i32: 2, 1>} : memref<576x32xf32, #tpu.memory_space<vmem>>, vector<8x32xf32>
    %491 = arith.maximumf %489, %490 : vector<8x32xf32>
    %c342 = arith.constant 342 : index
    %c0_319 = arith.constant 0 : index
    %492 = tpu.strided_load %arg11[%c342, %c0_319] {strides = array<i32: 2, 1>} : memref<576x32xf32, #tpu.memory_space<vmem>>, vector<8x32xf32>
    %c343 = arith.constant 343 : index
    %c0_320 = arith.constant 0 : index
    %493 = tpu.strided_load %arg11[%c343, %c0_320] {strides = array<i32: 2, 1>} : memref<576x32xf32, #tpu.memory_space<vmem>>, vector<8x32xf32>
    %494 = arith.maximumf %492, %493 : vector<8x32xf32>
    %495 = arith.maximumf %491, %494 : vector<8x32xf32>
    %496 = arith.addf %495, %389 : vector<8x32xf32>
    %cst_321 = arith.constant 0.000000e+00 : f32
    %497 = vector.broadcast %cst_321 : f32 to vector<8x32xf32>
    %498 = arith.maximumf %496, %497 : vector<8x32xf32>
    %c72_322 = arith.constant 72 : index
    %c0_323 = arith.constant 0 : index
    %499 = vector.load %arg12[%c72_322, %c0_323] : memref<128x32xf32, #tpu.memory_space<vmem>>, vector<8x32xf32>
    tpu.vector_store %arg12[%c72_322, %c0_323], %498 {strides = array<i32>} : memref<128x32xf32, #tpu.memory_space<vmem>>, vector<8x32xf32>,
    %c360 = arith.constant 360 : index
    %c0_324 = arith.constant 0 : index
    %500 = tpu.strided_load %arg11[%c360, %c0_324] {strides = array<i32: 2, 1>} : memref<576x32xf32, #tpu.memory_space<vmem>>, vector<8x32xf32>
    %c361 = arith.constant 361 : index
    %c0_325 = arith.constant 0 : index
    %501 = tpu.strided_load %arg11[%c361, %c0_325] {strides = array<i32: 2, 1>} : memref<576x32xf32, #tpu.memory_space<vmem>>, vector<8x32xf32>
    %502 = arith.maximumf %500, %501 : vector<8x32xf32>
    %c378 = arith.constant 378 : index
    %c0_326 = arith.constant 0 : index
    %503 = tpu.strided_load %arg11[%c378, %c0_326] {strides = array<i32: 2, 1>} : memref<576x32xf32, #tpu.memory_space<vmem>>, vector<8x32xf32>
    %c379 = arith.constant 379 : index
    %c0_327 = arith.constant 0 : index
    %504 = tpu.strided_load %arg11[%c379, %c0_327] {strides = array<i32: 2, 1>} : memref<576x32xf32, #tpu.memory_space<vmem>>, vector<8x32xf32>
    %505 = arith.maximumf %503, %504 : vector<8x32xf32>
    %506 = arith.maximumf %502, %505 : vector<8x32xf32>
    %507 = arith.addf %506, %389 : vector<8x32xf32>
    %cst_328 = arith.constant 0.000000e+00 : f32
    %508 = vector.broadcast %cst_328 : f32 to vector<8x32xf32>
    %509 = arith.maximumf %507, %508 : vector<8x32xf32>
    %c80 = arith.constant 80 : index
    %c0_329 = arith.constant 0 : index
    %510 = vector.load %arg12[%c80, %c0_329] : memref<128x32xf32, #tpu.memory_space<vmem>>, vector<8x32xf32>
    tpu.vector_store %arg12[%c80, %c0_329], %509 {strides = array<i32>} : memref<128x32xf32, #tpu.memory_space<vmem>>, vector<8x32xf32>,
    %c396 = arith.constant 396 : index
    %c0_330 = arith.constant 0 : index
    %511 = tpu.strided_load %arg11[%c396, %c0_330] {strides = array<i32: 2, 1>} : memref<576x32xf32, #tpu.memory_space<vmem>>, vector<8x32xf32>
    %c397 = arith.constant 397 : index
    %c0_331 = arith.constant 0 : index
    %512 = tpu.strided_load %arg11[%c397, %c0_331] {strides = array<i32: 2, 1>} : memref<576x32xf32, #tpu.memory_space<vmem>>, vector<8x32xf32>
    %513 = arith.maximumf %511, %512 : vector<8x32xf32>
    %c414 = arith.constant 414 : index
    %c0_332 = arith.constant 0 : index
    %514 = tpu.strided_load %arg11[%c414, %c0_332] {strides = array<i32: 2, 1>} : memref<576x32xf32, #tpu.memory_space<vmem>>, vector<8x32xf32>
    %c415 = arith.constant 415 : index
    %c0_333 = arith.constant 0 : index
    %515 = tpu.strided_load %arg11[%c415, %c0_333] {strides = array<i32: 2, 1>} : memref<576x32xf32, #tpu.memory_space<vmem>>, vector<8x32xf32>
    %516 = arith.maximumf %514, %515 : vector<8x32xf32>
    %517 = arith.maximumf %513, %516 : vector<8x32xf32>
    %518 = arith.addf %517, %389 : vector<8x32xf32>
    %cst_334 = arith.constant 0.000000e+00 : f32
    %519 = vector.broadcast %cst_334 : f32 to vector<8x32xf32>
    %520 = arith.maximumf %518, %519 : vector<8x32xf32>
    %c88 = arith.constant 88 : index
    %c0_335 = arith.constant 0 : index
    %521 = vector.load %arg12[%c88, %c0_335] : memref<128x32xf32, #tpu.memory_space<vmem>>, vector<8x32xf32>
    tpu.vector_store %arg12[%c88, %c0_335], %520 {strides = array<i32>} : memref<128x32xf32, #tpu.memory_space<vmem>>, vector<8x32xf32>,
    %c432 = arith.constant 432 : index
    %c0_336 = arith.constant 0 : index
    %522 = tpu.strided_load %arg11[%c432, %c0_336] {strides = array<i32: 2, 1>} : memref<576x32xf32, #tpu.memory_space<vmem>>, vector<8x32xf32>
    %c433 = arith.constant 433 : index
    %c0_337 = arith.constant 0 : index
    %523 = tpu.strided_load %arg11[%c433, %c0_337] {strides = array<i32: 2, 1>} : memref<576x32xf32, #tpu.memory_space<vmem>>, vector<8x32xf32>
    %524 = arith.maximumf %522, %523 : vector<8x32xf32>
    %c450 = arith.constant 450 : index
    %c0_338 = arith.constant 0 : index
    %525 = tpu.strided_load %arg11[%c450, %c0_338] {strides = array<i32: 2, 1>} : memref<576x32xf32, #tpu.memory_space<vmem>>, vector<8x32xf32>
    %c451 = arith.constant 451 : index
    %c0_339 = arith.constant 0 : index
    %526 = tpu.strided_load %arg11[%c451, %c0_339] {strides = array<i32: 2, 1>} : memref<576x32xf32, #tpu.memory_space<vmem>>, vector<8x32xf32>
    %527 = arith.maximumf %525, %526 : vector<8x32xf32>
    %528 = arith.maximumf %524, %527 : vector<8x32xf32>
    %529 = arith.addf %528, %389 : vector<8x32xf32>
    %cst_340 = arith.constant 0.000000e+00 : f32
    %530 = vector.broadcast %cst_340 : f32 to vector<8x32xf32>
    %531 = arith.maximumf %529, %530 : vector<8x32xf32>
    %c96 = arith.constant 96 : index
    %c0_341 = arith.constant 0 : index
    %532 = vector.load %arg12[%c96, %c0_341] : memref<128x32xf32, #tpu.memory_space<vmem>>, vector<8x32xf32>
    tpu.vector_store %arg12[%c96, %c0_341], %531 {strides = array<i32>} : memref<128x32xf32, #tpu.memory_space<vmem>>, vector<8x32xf32>,
    %c468 = arith.constant 468 : index
    %c0_342 = arith.constant 0 : index
    %533 = tpu.strided_load %arg11[%c468, %c0_342] {strides = array<i32: 2, 1>} : memref<576x32xf32, #tpu.memory_space<vmem>>, vector<8x32xf32>
    %c469 = arith.constant 469 : index
    %c0_343 = arith.constant 0 : index
    %534 = tpu.strided_load %arg11[%c469, %c0_343] {strides = array<i32: 2, 1>} : memref<576x32xf32, #tpu.memory_space<vmem>>, vector<8x32xf32>
    %535 = arith.maximumf %533, %534 : vector<8x32xf32>
    %c486 = arith.constant 486 : index
    %c0_344 = arith.constant 0 : index
    %536 = tpu.strided_load %arg11[%c486, %c0_344] {strides = array<i32: 2, 1>} : memref<576x32xf32, #tpu.memory_space<vmem>>, vector<8x32xf32>
    %c487 = arith.constant 487 : index
    %c0_345 = arith.constant 0 : index
    %537 = tpu.strided_load %arg11[%c487, %c0_345] {strides = array<i32: 2, 1>} : memref<576x32xf32, #tpu.memory_space<vmem>>, vector<8x32xf32>
    %538 = arith.maximumf %536, %537 : vector<8x32xf32>
    %539 = arith.maximumf %535, %538 : vector<8x32xf32>
    %540 = arith.addf %539, %389 : vector<8x32xf32>
    %cst_346 = arith.constant 0.000000e+00 : f32
    %541 = vector.broadcast %cst_346 : f32 to vector<8x32xf32>
    %542 = arith.maximumf %540, %541 : vector<8x32xf32>
    %c104 = arith.constant 104 : index
    %c0_347 = arith.constant 0 : index
    %543 = vector.load %arg12[%c104, %c0_347] : memref<128x32xf32, #tpu.memory_space<vmem>>, vector<8x32xf32>
    tpu.vector_store %arg12[%c104, %c0_347], %542 {strides = array<i32>} : memref<128x32xf32, #tpu.memory_space<vmem>>, vector<8x32xf32>,
    %c504 = arith.constant 504 : index
    %c0_348 = arith.constant 0 : index
    %544 = tpu.strided_load %arg11[%c504, %c0_348] {strides = array<i32: 2, 1>} : memref<576x32xf32, #tpu.memory_space<vmem>>, vector<8x32xf32>
    %c505 = arith.constant 505 : index
    %c0_349 = arith.constant 0 : index
    %545 = tpu.strided_load %arg11[%c505, %c0_349] {strides = array<i32: 2, 1>} : memref<576x32xf32, #tpu.memory_space<vmem>>, vector<8x32xf32>
    %546 = arith.maximumf %544, %545 : vector<8x32xf32>
    %c522 = arith.constant 522 : index
    %c0_350 = arith.constant 0 : index
    %547 = tpu.strided_load %arg11[%c522, %c0_350] {strides = array<i32: 2, 1>} : memref<576x32xf32, #tpu.memory_space<vmem>>, vector<8x32xf32>
    %c523 = arith.constant 523 : index
    %c0_351 = arith.constant 0 : index
    %548 = tpu.strided_load %arg11[%c523, %c0_351] {strides = array<i32: 2, 1>} : memref<576x32xf32, #tpu.memory_space<vmem>>, vector<8x32xf32>
    %549 = arith.maximumf %547, %548 : vector<8x32xf32>
    %550 = arith.maximumf %546, %549 : vector<8x32xf32>
    %551 = arith.addf %550, %389 : vector<8x32xf32>
    %cst_352 = arith.constant 0.000000e+00 : f32
    %552 = vector.broadcast %cst_352 : f32 to vector<8x32xf32>
    %553 = arith.maximumf %551, %552 : vector<8x32xf32>
    %c112 = arith.constant 112 : index
    %c0_353 = arith.constant 0 : index
    %554 = vector.load %arg12[%c112, %c0_353] : memref<128x32xf32, #tpu.memory_space<vmem>>, vector<8x32xf32>
    tpu.vector_store %arg12[%c112, %c0_353], %553 {strides = array<i32>} : memref<128x32xf32, #tpu.memory_space<vmem>>, vector<8x32xf32>,
    %c540 = arith.constant 540 : index
    %c0_354 = arith.constant 0 : index
    %555 = tpu.strided_load %arg11[%c540, %c0_354] {strides = array<i32: 2, 1>} : memref<576x32xf32, #tpu.memory_space<vmem>>, vector<8x32xf32>
    %c541 = arith.constant 541 : index
    %c0_355 = arith.constant 0 : index
    %556 = tpu.strided_load %arg11[%c541, %c0_355] {strides = array<i32: 2, 1>} : memref<576x32xf32, #tpu.memory_space<vmem>>, vector<8x32xf32>
    %557 = arith.maximumf %555, %556 : vector<8x32xf32>
    %c558 = arith.constant 558 : index
    %c0_356 = arith.constant 0 : index
    %558 = tpu.strided_load %arg11[%c558, %c0_356] {strides = array<i32: 2, 1>} : memref<576x32xf32, #tpu.memory_space<vmem>>, vector<8x32xf32>
    %c559 = arith.constant 559 : index
    %c0_357 = arith.constant 0 : index
    %559 = tpu.strided_load %arg11[%c559, %c0_357] {strides = array<i32: 2, 1>} : memref<576x32xf32, #tpu.memory_space<vmem>>, vector<8x32xf32>
    %560 = arith.maximumf %558, %559 : vector<8x32xf32>
    %561 = arith.maximumf %557, %560 : vector<8x32xf32>
    %562 = arith.addf %561, %389 : vector<8x32xf32>
    %cst_358 = arith.constant 0.000000e+00 : f32
    %563 = vector.broadcast %cst_358 : f32 to vector<8x32xf32>
    %564 = arith.maximumf %562, %563 : vector<8x32xf32>
    %c120 = arith.constant 120 : index
    %c0_359 = arith.constant 0 : index
    %565 = vector.load %arg12[%c120, %c0_359] : memref<128x32xf32, #tpu.memory_space<vmem>>, vector<8x32xf32>
    tpu.vector_store %arg12[%c120, %c0_359], %564 {strides = array<i32>} : memref<128x32xf32, #tpu.memory_space<vmem>>, vector<8x32xf32>,
    %cst_360 = arith.constant 0.000000e+00 : f32
    %566 = vector.broadcast %cst_360 : f32 to vector<2x128xf32>
    %c0_361 = arith.constant 0 : index
    %c0_362 = arith.constant 0 : index
    %567 = tpu.strided_load %arg12[%c0_361, %c0_362] {strides = array<i32: 64, 1>} : memref<128x32xf32, #tpu.memory_space<vmem>>, vector<2x32xf32>
    %c0_363 = arith.constant 0 : index
    %c0_364 = arith.constant 0 : index
    %c0_365 = arith.constant 0 : index
    %568 = vector.load %arg6[%c0_363, %c0_364, %c0_365] : memref<64x32x128xf32, #tpu.memory_space<vmem>>, vector<1x32x128xf32>
    %569 = vector.shape_cast %568 : vector<1x32x128xf32> to vector<32x128xf32>
    %cst_366 = arith.constant dense<0.000000e+00> : vector<2x128xf32>
    %570 = tpu.matmul %567, %569, %cst_366 {dimension_numbers = #tpu.dot_dimension_numbers<[1], [0], [0], [1], [0, 0, 1, 1], [], []>} : vector<2x32xf32>, vector<32x128xf32>, vector<2x128xf32> -> vector<2x128xf32>
    %571 = arith.addf %566, %570 : vector<2x128xf32>
    %c1_367 = arith.constant 1 : index
    %c0_368 = arith.constant 0 : index
    %572 = tpu.strided_load %arg12[%c1_367, %c0_368] {strides = array<i32: 64, 1>} : memref<128x32xf32, #tpu.memory_space<vmem>>, vector<2x32xf32>
    %c1_369 = arith.constant 1 : index
    %c0_370 = arith.constant 0 : index
    %c0_371 = arith.constant 0 : index
    %573 = vector.load %arg6[%c1_369, %c0_370, %c0_371] : memref<64x32x128xf32, #tpu.memory_space<vmem>>, vector<1x32x128xf32>
    %574 = vector.shape_cast %573 : vector<1x32x128xf32> to vector<32x128xf32>
    %cst_372 = arith.constant dense<0.000000e+00> : vector<2x128xf32>
    %575 = tpu.matmul %572, %574, %cst_372 {dimension_numbers = #tpu.dot_dimension_numbers<[1], [0], [0], [1], [0, 0, 1, 1], [], []>} : vector<2x32xf32>, vector<32x128xf32>, vector<2x128xf32> -> vector<2x128xf32>
    %576 = arith.addf %571, %575 : vector<2x128xf32>
    %c2_373 = arith.constant 2 : index
    %c0_374 = arith.constant 0 : index
    %577 = tpu.strided_load %arg12[%c2_373, %c0_374] {strides = array<i32: 64, 1>} : memref<128x32xf32, #tpu.memory_space<vmem>>, vector<2x32xf32>
    %c2_375 = arith.constant 2 : index
    %c0_376 = arith.constant 0 : index
    %c0_377 = arith.constant 0 : index
    %578 = vector.load %arg6[%c2_375, %c0_376, %c0_377] : memref<64x32x128xf32, #tpu.memory_space<vmem>>, vector<1x32x128xf32>
    %579 = vector.shape_cast %578 : vector<1x32x128xf32> to vector<32x128xf32>
    %cst_378 = arith.constant dense<0.000000e+00> : vector<2x128xf32>
    %580 = tpu.matmul %577, %579, %cst_378 {dimension_numbers = #tpu.dot_dimension_numbers<[1], [0], [0], [1], [0, 0, 1, 1], [], []>} : vector<2x32xf32>, vector<32x128xf32>, vector<2x128xf32> -> vector<2x128xf32>
    %581 = arith.addf %576, %580 : vector<2x128xf32>
    %c3 = arith.constant 3 : index
    %c0_379 = arith.constant 0 : index
    %582 = tpu.strided_load %arg12[%c3, %c0_379] {strides = array<i32: 64, 1>} : memref<128x32xf32, #tpu.memory_space<vmem>>, vector<2x32xf32>
    %c3_380 = arith.constant 3 : index
    %c0_381 = arith.constant 0 : index
    %c0_382 = arith.constant 0 : index
    %583 = vector.load %arg6[%c3_380, %c0_381, %c0_382] : memref<64x32x128xf32, #tpu.memory_space<vmem>>, vector<1x32x128xf32>
    %584 = vector.shape_cast %583 : vector<1x32x128xf32> to vector<32x128xf32>
    %cst_383 = arith.constant dense<0.000000e+00> : vector<2x128xf32>
    %585 = tpu.matmul %582, %584, %cst_383 {dimension_numbers = #tpu.dot_dimension_numbers<[1], [0], [0], [1], [0, 0, 1, 1], [], []>} : vector<2x32xf32>, vector<32x128xf32>, vector<2x128xf32> -> vector<2x128xf32>
    %586 = arith.addf %581, %585 : vector<2x128xf32>
    %c4 = arith.constant 4 : index
    %c0_384 = arith.constant 0 : index
    %587 = tpu.strided_load %arg12[%c4, %c0_384] {strides = array<i32: 64, 1>} : memref<128x32xf32, #tpu.memory_space<vmem>>, vector<2x32xf32>
    %c4_385 = arith.constant 4 : index
    %c0_386 = arith.constant 0 : index
    %c0_387 = arith.constant 0 : index
    %588 = vector.load %arg6[%c4_385, %c0_386, %c0_387] : memref<64x32x128xf32, #tpu.memory_space<vmem>>, vector<1x32x128xf32>
    %589 = vector.shape_cast %588 : vector<1x32x128xf32> to vector<32x128xf32>
    %cst_388 = arith.constant dense<0.000000e+00> : vector<2x128xf32>
    %590 = tpu.matmul %587, %589, %cst_388 {dimension_numbers = #tpu.dot_dimension_numbers<[1], [0], [0], [1], [0, 0, 1, 1], [], []>} : vector<2x32xf32>, vector<32x128xf32>, vector<2x128xf32> -> vector<2x128xf32>
    %591 = arith.addf %586, %590 : vector<2x128xf32>
    %c5 = arith.constant 5 : index
    %c0_389 = arith.constant 0 : index
    %592 = tpu.strided_load %arg12[%c5, %c0_389] {strides = array<i32: 64, 1>} : memref<128x32xf32, #tpu.memory_space<vmem>>, vector<2x32xf32>
    %c5_390 = arith.constant 5 : index
    %c0_391 = arith.constant 0 : index
    %c0_392 = arith.constant 0 : index
    %593 = vector.load %arg6[%c5_390, %c0_391, %c0_392] : memref<64x32x128xf32, #tpu.memory_space<vmem>>, vector<1x32x128xf32>
    %594 = vector.shape_cast %593 : vector<1x32x128xf32> to vector<32x128xf32>
    %cst_393 = arith.constant dense<0.000000e+00> : vector<2x128xf32>
    %595 = tpu.matmul %592, %594, %cst_393 {dimension_numbers = #tpu.dot_dimension_numbers<[1], [0], [0], [1], [0, 0, 1, 1], [], []>} : vector<2x32xf32>, vector<32x128xf32>, vector<2x128xf32> -> vector<2x128xf32>
    %596 = arith.addf %591, %595 : vector<2x128xf32>
    %c6 = arith.constant 6 : index
    %c0_394 = arith.constant 0 : index
    %597 = tpu.strided_load %arg12[%c6, %c0_394] {strides = array<i32: 64, 1>} : memref<128x32xf32, #tpu.memory_space<vmem>>, vector<2x32xf32>
    %c6_395 = arith.constant 6 : index
    %c0_396 = arith.constant 0 : index
    %c0_397 = arith.constant 0 : index
    %598 = vector.load %arg6[%c6_395, %c0_396, %c0_397] : memref<64x32x128xf32, #tpu.memory_space<vmem>>, vector<1x32x128xf32>
    %599 = vector.shape_cast %598 : vector<1x32x128xf32> to vector<32x128xf32>
    %cst_398 = arith.constant dense<0.000000e+00> : vector<2x128xf32>
    %600 = tpu.matmul %597, %599, %cst_398 {dimension_numbers = #tpu.dot_dimension_numbers<[1], [0], [0], [1], [0, 0, 1, 1], [], []>} : vector<2x32xf32>, vector<32x128xf32>, vector<2x128xf32> -> vector<2x128xf32>
    %601 = arith.addf %596, %600 : vector<2x128xf32>
    %c7 = arith.constant 7 : index
    %c0_399 = arith.constant 0 : index
    %602 = tpu.strided_load %arg12[%c7, %c0_399] {strides = array<i32: 64, 1>} : memref<128x32xf32, #tpu.memory_space<vmem>>, vector<2x32xf32>
    %c7_400 = arith.constant 7 : index
    %c0_401 = arith.constant 0 : index
    %c0_402 = arith.constant 0 : index
    %603 = vector.load %arg6[%c7_400, %c0_401, %c0_402] : memref<64x32x128xf32, #tpu.memory_space<vmem>>, vector<1x32x128xf32>
    %604 = vector.shape_cast %603 : vector<1x32x128xf32> to vector<32x128xf32>
    %cst_403 = arith.constant dense<0.000000e+00> : vector<2x128xf32>
    %605 = tpu.matmul %602, %604, %cst_403 {dimension_numbers = #tpu.dot_dimension_numbers<[1], [0], [0], [1], [0, 0, 1, 1], [], []>} : vector<2x32xf32>, vector<32x128xf32>, vector<2x128xf32> -> vector<2x128xf32>
    %606 = arith.addf %601, %605 : vector<2x128xf32>
    %c8_404 = arith.constant 8 : index
    %c0_405 = arith.constant 0 : index
    %607 = tpu.strided_load %arg12[%c8_404, %c0_405] {strides = array<i32: 64, 1>} : memref<128x32xf32, #tpu.memory_space<vmem>>, vector<2x32xf32>
    %c8_406 = arith.constant 8 : index
    %c0_407 = arith.constant 0 : index
    %c0_408 = arith.constant 0 : index
    %608 = vector.load %arg6[%c8_406, %c0_407, %c0_408] : memref<64x32x128xf32, #tpu.memory_space<vmem>>, vector<1x32x128xf32>
    %609 = vector.shape_cast %608 : vector<1x32x128xf32> to vector<32x128xf32>
    %cst_409 = arith.constant dense<0.000000e+00> : vector<2x128xf32>
    %610 = tpu.matmul %607, %609, %cst_409 {dimension_numbers = #tpu.dot_dimension_numbers<[1], [0], [0], [1], [0, 0, 1, 1], [], []>} : vector<2x32xf32>, vector<32x128xf32>, vector<2x128xf32> -> vector<2x128xf32>
    %611 = arith.addf %606, %610 : vector<2x128xf32>
    %c9 = arith.constant 9 : index
    %c0_410 = arith.constant 0 : index
    %612 = tpu.strided_load %arg12[%c9, %c0_410] {strides = array<i32: 64, 1>} : memref<128x32xf32, #tpu.memory_space<vmem>>, vector<2x32xf32>
    %c9_411 = arith.constant 9 : index
    %c0_412 = arith.constant 0 : index
    %c0_413 = arith.constant 0 : index
    %613 = vector.load %arg6[%c9_411, %c0_412, %c0_413] : memref<64x32x128xf32, #tpu.memory_space<vmem>>, vector<1x32x128xf32>
    %614 = vector.shape_cast %613 : vector<1x32x128xf32> to vector<32x128xf32>
    %cst_414 = arith.constant dense<0.000000e+00> : vector<2x128xf32>
    %615 = tpu.matmul %612, %614, %cst_414 {dimension_numbers = #tpu.dot_dimension_numbers<[1], [0], [0], [1], [0, 0, 1, 1], [], []>} : vector<2x32xf32>, vector<32x128xf32>, vector<2x128xf32> -> vector<2x128xf32>
    %616 = arith.addf %611, %615 : vector<2x128xf32>
    %c10 = arith.constant 10 : index
    %c0_415 = arith.constant 0 : index
    %617 = tpu.strided_load %arg12[%c10, %c0_415] {strides = array<i32: 64, 1>} : memref<128x32xf32, #tpu.memory_space<vmem>>, vector<2x32xf32>
    %c10_416 = arith.constant 10 : index
    %c0_417 = arith.constant 0 : index
    %c0_418 = arith.constant 0 : index
    %618 = vector.load %arg6[%c10_416, %c0_417, %c0_418] : memref<64x32x128xf32, #tpu.memory_space<vmem>>, vector<1x32x128xf32>
    %619 = vector.shape_cast %618 : vector<1x32x128xf32> to vector<32x128xf32>
    %cst_419 = arith.constant dense<0.000000e+00> : vector<2x128xf32>
    %620 = tpu.matmul %617, %619, %cst_419 {dimension_numbers = #tpu.dot_dimension_numbers<[1], [0], [0], [1], [0, 0, 1, 1], [], []>} : vector<2x32xf32>, vector<32x128xf32>, vector<2x128xf32> -> vector<2x128xf32>
    %621 = arith.addf %616, %620 : vector<2x128xf32>
    %c11 = arith.constant 11 : index
    %c0_420 = arith.constant 0 : index
    %622 = tpu.strided_load %arg12[%c11, %c0_420] {strides = array<i32: 64, 1>} : memref<128x32xf32, #tpu.memory_space<vmem>>, vector<2x32xf32>
    %c11_421 = arith.constant 11 : index
    %c0_422 = arith.constant 0 : index
    %c0_423 = arith.constant 0 : index
    %623 = vector.load %arg6[%c11_421, %c0_422, %c0_423] : memref<64x32x128xf32, #tpu.memory_space<vmem>>, vector<1x32x128xf32>
    %624 = vector.shape_cast %623 : vector<1x32x128xf32> to vector<32x128xf32>
    %cst_424 = arith.constant dense<0.000000e+00> : vector<2x128xf32>
    %625 = tpu.matmul %622, %624, %cst_424 {dimension_numbers = #tpu.dot_dimension_numbers<[1], [0], [0], [1], [0, 0, 1, 1], [], []>} : vector<2x32xf32>, vector<32x128xf32>, vector<2x128xf32> -> vector<2x128xf32>
    %626 = arith.addf %621, %625 : vector<2x128xf32>
    %c12 = arith.constant 12 : index
    %c0_425 = arith.constant 0 : index
    %627 = tpu.strided_load %arg12[%c12, %c0_425] {strides = array<i32: 64, 1>} : memref<128x32xf32, #tpu.memory_space<vmem>>, vector<2x32xf32>
    %c12_426 = arith.constant 12 : index
    %c0_427 = arith.constant 0 : index
    %c0_428 = arith.constant 0 : index
    %628 = vector.load %arg6[%c12_426, %c0_427, %c0_428] : memref<64x32x128xf32, #tpu.memory_space<vmem>>, vector<1x32x128xf32>
    %629 = vector.shape_cast %628 : vector<1x32x128xf32> to vector<32x128xf32>
    %cst_429 = arith.constant dense<0.000000e+00> : vector<2x128xf32>
    %630 = tpu.matmul %627, %629, %cst_429 {dimension_numbers = #tpu.dot_dimension_numbers<[1], [0], [0], [1], [0, 0, 1, 1], [], []>} : vector<2x32xf32>, vector<32x128xf32>, vector<2x128xf32> -> vector<2x128xf32>
    %631 = arith.addf %626, %630 : vector<2x128xf32>
    %c13 = arith.constant 13 : index
    %c0_430 = arith.constant 0 : index
    %632 = tpu.strided_load %arg12[%c13, %c0_430] {strides = array<i32: 64, 1>} : memref<128x32xf32, #tpu.memory_space<vmem>>, vector<2x32xf32>
    %c13_431 = arith.constant 13 : index
    %c0_432 = arith.constant 0 : index
    %c0_433 = arith.constant 0 : index
    %633 = vector.load %arg6[%c13_431, %c0_432, %c0_433] : memref<64x32x128xf32, #tpu.memory_space<vmem>>, vector<1x32x128xf32>
    %634 = vector.shape_cast %633 : vector<1x32x128xf32> to vector<32x128xf32>
    %cst_434 = arith.constant dense<0.000000e+00> : vector<2x128xf32>
    %635 = tpu.matmul %632, %634, %cst_434 {dimension_numbers = #tpu.dot_dimension_numbers<[1], [0], [0], [1], [0, 0, 1, 1], [], []>} : vector<2x32xf32>, vector<32x128xf32>, vector<2x128xf32> -> vector<2x128xf32>
    %636 = arith.addf %631, %635 : vector<2x128xf32>
    %c14 = arith.constant 14 : index
    %c0_435 = arith.constant 0 : index
    %637 = tpu.strided_load %arg12[%c14, %c0_435] {strides = array<i32: 64, 1>} : memref<128x32xf32, #tpu.memory_space<vmem>>, vector<2x32xf32>
    %c14_436 = arith.constant 14 : index
    %c0_437 = arith.constant 0 : index
    %c0_438 = arith.constant 0 : index
    %638 = vector.load %arg6[%c14_436, %c0_437, %c0_438] : memref<64x32x128xf32, #tpu.memory_space<vmem>>, vector<1x32x128xf32>
    %639 = vector.shape_cast %638 : vector<1x32x128xf32> to vector<32x128xf32>
    %cst_439 = arith.constant dense<0.000000e+00> : vector<2x128xf32>
    %640 = tpu.matmul %637, %639, %cst_439 {dimension_numbers = #tpu.dot_dimension_numbers<[1], [0], [0], [1], [0, 0, 1, 1], [], []>} : vector<2x32xf32>, vector<32x128xf32>, vector<2x128xf32> -> vector<2x128xf32>
    %641 = arith.addf %636, %640 : vector<2x128xf32>
    %c15 = arith.constant 15 : index
    %c0_440 = arith.constant 0 : index
    %642 = tpu.strided_load %arg12[%c15, %c0_440] {strides = array<i32: 64, 1>} : memref<128x32xf32, #tpu.memory_space<vmem>>, vector<2x32xf32>
    %c15_441 = arith.constant 15 : index
    %c0_442 = arith.constant 0 : index
    %c0_443 = arith.constant 0 : index
    %643 = vector.load %arg6[%c15_441, %c0_442, %c0_443] : memref<64x32x128xf32, #tpu.memory_space<vmem>>, vector<1x32x128xf32>
    %644 = vector.shape_cast %643 : vector<1x32x128xf32> to vector<32x128xf32>
    %cst_444 = arith.constant dense<0.000000e+00> : vector<2x128xf32>
    %645 = tpu.matmul %642, %644, %cst_444 {dimension_numbers = #tpu.dot_dimension_numbers<[1], [0], [0], [1], [0, 0, 1, 1], [], []>} : vector<2x32xf32>, vector<32x128xf32>, vector<2x128xf32> -> vector<2x128xf32>
    %646 = arith.addf %641, %645 : vector<2x128xf32>
    %c16_445 = arith.constant 16 : index
    %c0_446 = arith.constant 0 : index
    %647 = tpu.strided_load %arg12[%c16_445, %c0_446] {strides = array<i32: 64, 1>} : memref<128x32xf32, #tpu.memory_space<vmem>>, vector<2x32xf32>
    %c16_447 = arith.constant 16 : index
    %c0_448 = arith.constant 0 : index
    %c0_449 = arith.constant 0 : index
    %648 = vector.load %arg6[%c16_447, %c0_448, %c0_449] : memref<64x32x128xf32, #tpu.memory_space<vmem>>, vector<1x32x128xf32>
    %649 = vector.shape_cast %648 : vector<1x32x128xf32> to vector<32x128xf32>
    %cst_450 = arith.constant dense<0.000000e+00> : vector<2x128xf32>
    %650 = tpu.matmul %647, %649, %cst_450 {dimension_numbers = #tpu.dot_dimension_numbers<[1], [0], [0], [1], [0, 0, 1, 1], [], []>} : vector<2x32xf32>, vector<32x128xf32>, vector<2x128xf32> -> vector<2x128xf32>
    %651 = arith.addf %646, %650 : vector<2x128xf32>
    %c17 = arith.constant 17 : index
    %c0_451 = arith.constant 0 : index
    %652 = tpu.strided_load %arg12[%c17, %c0_451] {strides = array<i32: 64, 1>} : memref<128x32xf32, #tpu.memory_space<vmem>>, vector<2x32xf32>
    %c17_452 = arith.constant 17 : index
    %c0_453 = arith.constant 0 : index
    %c0_454 = arith.constant 0 : index
    %653 = vector.load %arg6[%c17_452, %c0_453, %c0_454] : memref<64x32x128xf32, #tpu.memory_space<vmem>>, vector<1x32x128xf32>
    %654 = vector.shape_cast %653 : vector<1x32x128xf32> to vector<32x128xf32>
    %cst_455 = arith.constant dense<0.000000e+00> : vector<2x128xf32>
    %655 = tpu.matmul %652, %654, %cst_455 {dimension_numbers = #tpu.dot_dimension_numbers<[1], [0], [0], [1], [0, 0, 1, 1], [], []>} : vector<2x32xf32>, vector<32x128xf32>, vector<2x128xf32> -> vector<2x128xf32>
    %656 = arith.addf %651, %655 : vector<2x128xf32>
    %c18_456 = arith.constant 18 : index
    %c0_457 = arith.constant 0 : index
    %657 = tpu.strided_load %arg12[%c18_456, %c0_457] {strides = array<i32: 64, 1>} : memref<128x32xf32, #tpu.memory_space<vmem>>, vector<2x32xf32>
    %c18_458 = arith.constant 18 : index
    %c0_459 = arith.constant 0 : index
    %c0_460 = arith.constant 0 : index
    %658 = vector.load %arg6[%c18_458, %c0_459, %c0_460] : memref<64x32x128xf32, #tpu.memory_space<vmem>>, vector<1x32x128xf32>
    %659 = vector.shape_cast %658 : vector<1x32x128xf32> to vector<32x128xf32>
    %cst_461 = arith.constant dense<0.000000e+00> : vector<2x128xf32>
    %660 = tpu.matmul %657, %659, %cst_461 {dimension_numbers = #tpu.dot_dimension_numbers<[1], [0], [0], [1], [0, 0, 1, 1], [], []>} : vector<2x32xf32>, vector<32x128xf32>, vector<2x128xf32> -> vector<2x128xf32>
    %661 = arith.addf %656, %660 : vector<2x128xf32>
    %c19_462 = arith.constant 19 : index
    %c0_463 = arith.constant 0 : index
    %662 = tpu.strided_load %arg12[%c19_462, %c0_463] {strides = array<i32: 64, 1>} : memref<128x32xf32, #tpu.memory_space<vmem>>, vector<2x32xf32>
    %c19_464 = arith.constant 19 : index
    %c0_465 = arith.constant 0 : index
    %c0_466 = arith.constant 0 : index
    %663 = vector.load %arg6[%c19_464, %c0_465, %c0_466] : memref<64x32x128xf32, #tpu.memory_space<vmem>>, vector<1x32x128xf32>
    %664 = vector.shape_cast %663 : vector<1x32x128xf32> to vector<32x128xf32>
    %cst_467 = arith.constant dense<0.000000e+00> : vector<2x128xf32>
    %665 = tpu.matmul %662, %664, %cst_467 {dimension_numbers = #tpu.dot_dimension_numbers<[1], [0], [0], [1], [0, 0, 1, 1], [], []>} : vector<2x32xf32>, vector<32x128xf32>, vector<2x128xf32> -> vector<2x128xf32>
    %666 = arith.addf %661, %665 : vector<2x128xf32>
    %c20_468 = arith.constant 20 : index
    %c0_469 = arith.constant 0 : index
    %667 = tpu.strided_load %arg12[%c20_468, %c0_469] {strides = array<i32: 64, 1>} : memref<128x32xf32, #tpu.memory_space<vmem>>, vector<2x32xf32>
    %c20_470 = arith.constant 20 : index
    %c0_471 = arith.constant 0 : index
    %c0_472 = arith.constant 0 : index
    %668 = vector.load %arg6[%c20_470, %c0_471, %c0_472] : memref<64x32x128xf32, #tpu.memory_space<vmem>>, vector<1x32x128xf32>
    %669 = vector.shape_cast %668 : vector<1x32x128xf32> to vector<32x128xf32>
    %cst_473 = arith.constant dense<0.000000e+00> : vector<2x128xf32>
    %670 = tpu.matmul %667, %669, %cst_473 {dimension_numbers = #tpu.dot_dimension_numbers<[1], [0], [0], [1], [0, 0, 1, 1], [], []>} : vector<2x32xf32>, vector<32x128xf32>, vector<2x128xf32> -> vector<2x128xf32>
    %671 = arith.addf %666, %670 : vector<2x128xf32>
    %c21 = arith.constant 21 : index
    %c0_474 = arith.constant 0 : index
    %672 = tpu.strided_load %arg12[%c21, %c0_474] {strides = array<i32: 64, 1>} : memref<128x32xf32, #tpu.memory_space<vmem>>, vector<2x32xf32>
    %c21_475 = arith.constant 21 : index
    %c0_476 = arith.constant 0 : index
    %c0_477 = arith.constant 0 : index
    %673 = vector.load %arg6[%c21_475, %c0_476, %c0_477] : memref<64x32x128xf32, #tpu.memory_space<vmem>>, vector<1x32x128xf32>
    %674 = vector.shape_cast %673 : vector<1x32x128xf32> to vector<32x128xf32>
    %cst_478 = arith.constant dense<0.000000e+00> : vector<2x128xf32>
    %675 = tpu.matmul %672, %674, %cst_478 {dimension_numbers = #tpu.dot_dimension_numbers<[1], [0], [0], [1], [0, 0, 1, 1], [], []>} : vector<2x32xf32>, vector<32x128xf32>, vector<2x128xf32> -> vector<2x128xf32>
    %676 = arith.addf %671, %675 : vector<2x128xf32>
    %c22 = arith.constant 22 : index
    %c0_479 = arith.constant 0 : index
    %677 = tpu.strided_load %arg12[%c22, %c0_479] {strides = array<i32: 64, 1>} : memref<128x32xf32, #tpu.memory_space<vmem>>, vector<2x32xf32>
    %c22_480 = arith.constant 22 : index
    %c0_481 = arith.constant 0 : index
    %c0_482 = arith.constant 0 : index
    %678 = vector.load %arg6[%c22_480, %c0_481, %c0_482] : memref<64x32x128xf32, #tpu.memory_space<vmem>>, vector<1x32x128xf32>
    %679 = vector.shape_cast %678 : vector<1x32x128xf32> to vector<32x128xf32>
    %cst_483 = arith.constant dense<0.000000e+00> : vector<2x128xf32>
    %680 = tpu.matmul %677, %679, %cst_483 {dimension_numbers = #tpu.dot_dimension_numbers<[1], [0], [0], [1], [0, 0, 1, 1], [], []>} : vector<2x32xf32>, vector<32x128xf32>, vector<2x128xf32> -> vector<2x128xf32>
    %681 = arith.addf %676, %680 : vector<2x128xf32>
    %c23 = arith.constant 23 : index
    %c0_484 = arith.constant 0 : index
    %682 = tpu.strided_load %arg12[%c23, %c0_484] {strides = array<i32: 64, 1>} : memref<128x32xf32, #tpu.memory_space<vmem>>, vector<2x32xf32>
    %c23_485 = arith.constant 23 : index
    %c0_486 = arith.constant 0 : index
    %c0_487 = arith.constant 0 : index
    %683 = vector.load %arg6[%c23_485, %c0_486, %c0_487] : memref<64x32x128xf32, #tpu.memory_space<vmem>>, vector<1x32x128xf32>
    %684 = vector.shape_cast %683 : vector<1x32x128xf32> to vector<32x128xf32>
    %cst_488 = arith.constant dense<0.000000e+00> : vector<2x128xf32>
    %685 = tpu.matmul %682, %684, %cst_488 {dimension_numbers = #tpu.dot_dimension_numbers<[1], [0], [0], [1], [0, 0, 1, 1], [], []>} : vector<2x32xf32>, vector<32x128xf32>, vector<2x128xf32> -> vector<2x128xf32>
    %686 = arith.addf %681, %685 : vector<2x128xf32>
    %c24_489 = arith.constant 24 : index
    %c0_490 = arith.constant 0 : index
    %687 = tpu.strided_load %arg12[%c24_489, %c0_490] {strides = array<i32: 64, 1>} : memref<128x32xf32, #tpu.memory_space<vmem>>, vector<2x32xf32>
    %c24_491 = arith.constant 24 : index
    %c0_492 = arith.constant 0 : index
    %c0_493 = arith.constant 0 : index
    %688 = vector.load %arg6[%c24_491, %c0_492, %c0_493] : memref<64x32x128xf32, #tpu.memory_space<vmem>>, vector<1x32x128xf32>
    %689 = vector.shape_cast %688 : vector<1x32x128xf32> to vector<32x128xf32>
    %cst_494 = arith.constant dense<0.000000e+00> : vector<2x128xf32>
    %690 = tpu.matmul %687, %689, %cst_494 {dimension_numbers = #tpu.dot_dimension_numbers<[1], [0], [0], [1], [0, 0, 1, 1], [], []>} : vector<2x32xf32>, vector<32x128xf32>, vector<2x128xf32> -> vector<2x128xf32>
    %691 = arith.addf %686, %690 : vector<2x128xf32>
    %c25 = arith.constant 25 : index
    %c0_495 = arith.constant 0 : index
    %692 = tpu.strided_load %arg12[%c25, %c0_495] {strides = array<i32: 64, 1>} : memref<128x32xf32, #tpu.memory_space<vmem>>, vector<2x32xf32>
    %c25_496 = arith.constant 25 : index
    %c0_497 = arith.constant 0 : index
    %c0_498 = arith.constant 0 : index
    %693 = vector.load %arg6[%c25_496, %c0_497, %c0_498] : memref<64x32x128xf32, #tpu.memory_space<vmem>>, vector<1x32x128xf32>
    %694 = vector.shape_cast %693 : vector<1x32x128xf32> to vector<32x128xf32>
    %cst_499 = arith.constant dense<0.000000e+00> : vector<2x128xf32>
    %695 = tpu.matmul %692, %694, %cst_499 {dimension_numbers = #tpu.dot_dimension_numbers<[1], [0], [0], [1], [0, 0, 1, 1], [], []>} : vector<2x32xf32>, vector<32x128xf32>, vector<2x128xf32> -> vector<2x128xf32>
    %696 = arith.addf %691, %695 : vector<2x128xf32>
    %c26 = arith.constant 26 : index
    %c0_500 = arith.constant 0 : index
    %697 = tpu.strided_load %arg12[%c26, %c0_500] {strides = array<i32: 64, 1>} : memref<128x32xf32, #tpu.memory_space<vmem>>, vector<2x32xf32>
    %c26_501 = arith.constant 26 : index
    %c0_502 = arith.constant 0 : index
    %c0_503 = arith.constant 0 : index
    %698 = vector.load %arg6[%c26_501, %c0_502, %c0_503] : memref<64x32x128xf32, #tpu.memory_space<vmem>>, vector<1x32x128xf32>
    %699 = vector.shape_cast %698 : vector<1x32x128xf32> to vector<32x128xf32>
    %cst_504 = arith.constant dense<0.000000e+00> : vector<2x128xf32>
    %700 = tpu.matmul %697, %699, %cst_504 {dimension_numbers = #tpu.dot_dimension_numbers<[1], [0], [0], [1], [0, 0, 1, 1], [], []>} : vector<2x32xf32>, vector<32x128xf32>, vector<2x128xf32> -> vector<2x128xf32>
    %701 = arith.addf %696, %700 : vector<2x128xf32>
    %c27 = arith.constant 27 : index
    %c0_505 = arith.constant 0 : index
    %702 = tpu.strided_load %arg12[%c27, %c0_505] {strides = array<i32: 64, 1>} : memref<128x32xf32, #tpu.memory_space<vmem>>, vector<2x32xf32>
    %c27_506 = arith.constant 27 : index
    %c0_507 = arith.constant 0 : index
    %c0_508 = arith.constant 0 : index
    %703 = vector.load %arg6[%c27_506, %c0_507, %c0_508] : memref<64x32x128xf32, #tpu.memory_space<vmem>>, vector<1x32x128xf32>
    %704 = vector.shape_cast %703 : vector<1x32x128xf32> to vector<32x128xf32>
    %cst_509 = arith.constant dense<0.000000e+00> : vector<2x128xf32>
    %705 = tpu.matmul %702, %704, %cst_509 {dimension_numbers = #tpu.dot_dimension_numbers<[1], [0], [0], [1], [0, 0, 1, 1], [], []>} : vector<2x32xf32>, vector<32x128xf32>, vector<2x128xf32> -> vector<2x128xf32>
    %706 = arith.addf %701, %705 : vector<2x128xf32>
    %c28 = arith.constant 28 : index
    %c0_510 = arith.constant 0 : index
    %707 = tpu.strided_load %arg12[%c28, %c0_510] {strides = array<i32: 64, 1>} : memref<128x32xf32, #tpu.memory_space<vmem>>, vector<2x32xf32>
    %c28_511 = arith.constant 28 : index
    %c0_512 = arith.constant 0 : index
    %c0_513 = arith.constant 0 : index
    %708 = vector.load %arg6[%c28_511, %c0_512, %c0_513] : memref<64x32x128xf32, #tpu.memory_space<vmem>>, vector<1x32x128xf32>
    %709 = vector.shape_cast %708 : vector<1x32x128xf32> to vector<32x128xf32>
    %cst_514 = arith.constant dense<0.000000e+00> : vector<2x128xf32>
    %710 = tpu.matmul %707, %709, %cst_514 {dimension_numbers = #tpu.dot_dimension_numbers<[1], [0], [0], [1], [0, 0, 1, 1], [], []>} : vector<2x32xf32>, vector<32x128xf32>, vector<2x128xf32> -> vector<2x128xf32>
    %711 = arith.addf %706, %710 : vector<2x128xf32>
    %c29 = arith.constant 29 : index
    %c0_515 = arith.constant 0 : index
    %712 = tpu.strided_load %arg12[%c29, %c0_515] {strides = array<i32: 64, 1>} : memref<128x32xf32, #tpu.memory_space<vmem>>, vector<2x32xf32>
    %c29_516 = arith.constant 29 : index
    %c0_517 = arith.constant 0 : index
    %c0_518 = arith.constant 0 : index
    %713 = vector.load %arg6[%c29_516, %c0_517, %c0_518] : memref<64x32x128xf32, #tpu.memory_space<vmem>>, vector<1x32x128xf32>
    %714 = vector.shape_cast %713 : vector<1x32x128xf32> to vector<32x128xf32>
    %cst_519 = arith.constant dense<0.000000e+00> : vector<2x128xf32>
    %715 = tpu.matmul %712, %714, %cst_519 {dimension_numbers = #tpu.dot_dimension_numbers<[1], [0], [0], [1], [0, 0, 1, 1], [], []>} : vector<2x32xf32>, vector<32x128xf32>, vector<2x128xf32> -> vector<2x128xf32>
    %716 = arith.addf %711, %715 : vector<2x128xf32>
    %c30 = arith.constant 30 : index
    %c0_520 = arith.constant 0 : index
    %717 = tpu.strided_load %arg12[%c30, %c0_520] {strides = array<i32: 64, 1>} : memref<128x32xf32, #tpu.memory_space<vmem>>, vector<2x32xf32>
    %c30_521 = arith.constant 30 : index
    %c0_522 = arith.constant 0 : index
    %c0_523 = arith.constant 0 : index
    %718 = vector.load %arg6[%c30_521, %c0_522, %c0_523] : memref<64x32x128xf32, #tpu.memory_space<vmem>>, vector<1x32x128xf32>
    %719 = vector.shape_cast %718 : vector<1x32x128xf32> to vector<32x128xf32>
    %cst_524 = arith.constant dense<0.000000e+00> : vector<2x128xf32>
    %720 = tpu.matmul %717, %719, %cst_524 {dimension_numbers = #tpu.dot_dimension_numbers<[1], [0], [0], [1], [0, 0, 1, 1], [], []>} : vector<2x32xf32>, vector<32x128xf32>, vector<2x128xf32> -> vector<2x128xf32>
    %721 = arith.addf %716, %720 : vector<2x128xf32>
    %c31 = arith.constant 31 : index
    %c0_525 = arith.constant 0 : index
    %722 = tpu.strided_load %arg12[%c31, %c0_525] {strides = array<i32: 64, 1>} : memref<128x32xf32, #tpu.memory_space<vmem>>, vector<2x32xf32>
    %c31_526 = arith.constant 31 : index
    %c0_527 = arith.constant 0 : index
    %c0_528 = arith.constant 0 : index
    %723 = vector.load %arg6[%c31_526, %c0_527, %c0_528] : memref<64x32x128xf32, #tpu.memory_space<vmem>>, vector<1x32x128xf32>
    %724 = vector.shape_cast %723 : vector<1x32x128xf32> to vector<32x128xf32>
    %cst_529 = arith.constant dense<0.000000e+00> : vector<2x128xf32>
    %725 = tpu.matmul %722, %724, %cst_529 {dimension_numbers = #tpu.dot_dimension_numbers<[1], [0], [0], [1], [0, 0, 1, 1], [], []>} : vector<2x32xf32>, vector<32x128xf32>, vector<2x128xf32> -> vector<2x128xf32>
    %726 = arith.addf %721, %725 : vector<2x128xf32>
    %c32_530 = arith.constant 32 : index
    %c0_531 = arith.constant 0 : index
    %727 = tpu.strided_load %arg12[%c32_530, %c0_531] {strides = array<i32: 64, 1>} : memref<128x32xf32, #tpu.memory_space<vmem>>, vector<2x32xf32>
    %c32_532 = arith.constant 32 : index
    %c0_533 = arith.constant 0 : index
    %c0_534 = arith.constant 0 : index
    %728 = vector.load %arg6[%c32_532, %c0_533, %c0_534] : memref<64x32x128xf32, #tpu.memory_space<vmem>>, vector<1x32x128xf32>
    %729 = vector.shape_cast %728 : vector<1x32x128xf32> to vector<32x128xf32>
    %cst_535 = arith.constant dense<0.000000e+00> : vector<2x128xf32>
    %730 = tpu.matmul %727, %729, %cst_535 {dimension_numbers = #tpu.dot_dimension_numbers<[1], [0], [0], [1], [0, 0, 1, 1], [], []>} : vector<2x32xf32>, vector<32x128xf32>, vector<2x128xf32> -> vector<2x128xf32>
    %731 = arith.addf %726, %730 : vector<2x128xf32>
    %c33 = arith.constant 33 : index
    %c0_536 = arith.constant 0 : index
    %732 = tpu.strided_load %arg12[%c33, %c0_536] {strides = array<i32: 64, 1>} : memref<128x32xf32, #tpu.memory_space<vmem>>, vector<2x32xf32>
    %c33_537 = arith.constant 33 : index
    %c0_538 = arith.constant 0 : index
    %c0_539 = arith.constant 0 : index
    %733 = vector.load %arg6[%c33_537, %c0_538, %c0_539] : memref<64x32x128xf32, #tpu.memory_space<vmem>>, vector<1x32x128xf32>
    %734 = vector.shape_cast %733 : vector<1x32x128xf32> to vector<32x128xf32>
    %cst_540 = arith.constant dense<0.000000e+00> : vector<2x128xf32>
    %735 = tpu.matmul %732, %734, %cst_540 {dimension_numbers = #tpu.dot_dimension_numbers<[1], [0], [0], [1], [0, 0, 1, 1], [], []>} : vector<2x32xf32>, vector<32x128xf32>, vector<2x128xf32> -> vector<2x128xf32>
    %736 = arith.addf %731, %735 : vector<2x128xf32>
    %c34_541 = arith.constant 34 : index
    %c0_542 = arith.constant 0 : index
    %737 = tpu.strided_load %arg12[%c34_541, %c0_542] {strides = array<i32: 64, 1>} : memref<128x32xf32, #tpu.memory_space<vmem>>, vector<2x32xf32>
    %c34_543 = arith.constant 34 : index
    %c0_544 = arith.constant 0 : index
    %c0_545 = arith.constant 0 : index
    %738 = vector.load %arg6[%c34_543, %c0_544, %c0_545] : memref<64x32x128xf32, #tpu.memory_space<vmem>>, vector<1x32x128xf32>
    %739 = vector.shape_cast %738 : vector<1x32x128xf32> to vector<32x128xf32>
    %cst_546 = arith.constant dense<0.000000e+00> : vector<2x128xf32>
    %740 = tpu.matmul %737, %739, %cst_546 {dimension_numbers = #tpu.dot_dimension_numbers<[1], [0], [0], [1], [0, 0, 1, 1], [], []>} : vector<2x32xf32>, vector<32x128xf32>, vector<2x128xf32> -> vector<2x128xf32>
    %741 = arith.addf %736, %740 : vector<2x128xf32>
    %c35_547 = arith.constant 35 : index
    %c0_548 = arith.constant 0 : index
    %742 = tpu.strided_load %arg12[%c35_547, %c0_548] {strides = array<i32: 64, 1>} : memref<128x32xf32, #tpu.memory_space<vmem>>, vector<2x32xf32>
    %c35_549 = arith.constant 35 : index
    %c0_550 = arith.constant 0 : index
    %c0_551 = arith.constant 0 : index
    %743 = vector.load %arg6[%c35_549, %c0_550, %c0_551] : memref<64x32x128xf32, #tpu.memory_space<vmem>>, vector<1x32x128xf32>
    %744 = vector.shape_cast %743 : vector<1x32x128xf32> to vector<32x128xf32>
    %cst_552 = arith.constant dense<0.000000e+00> : vector<2x128xf32>
    %745 = tpu.matmul %742, %744, %cst_552 {dimension_numbers = #tpu.dot_dimension_numbers<[1], [0], [0], [1], [0, 0, 1, 1], [], []>} : vector<2x32xf32>, vector<32x128xf32>, vector<2x128xf32> -> vector<2x128xf32>
    %746 = arith.addf %741, %745 : vector<2x128xf32>
    %c36_553 = arith.constant 36 : index
    %c0_554 = arith.constant 0 : index
    %747 = tpu.strided_load %arg12[%c36_553, %c0_554] {strides = array<i32: 64, 1>} : memref<128x32xf32, #tpu.memory_space<vmem>>, vector<2x32xf32>
    %c36_555 = arith.constant 36 : index
    %c0_556 = arith.constant 0 : index
    %c0_557 = arith.constant 0 : index
    %748 = vector.load %arg6[%c36_555, %c0_556, %c0_557] : memref<64x32x128xf32, #tpu.memory_space<vmem>>, vector<1x32x128xf32>
    %749 = vector.shape_cast %748 : vector<1x32x128xf32> to vector<32x128xf32>
    %cst_558 = arith.constant dense<0.000000e+00> : vector<2x128xf32>
    %750 = tpu.matmul %747, %749, %cst_558 {dimension_numbers = #tpu.dot_dimension_numbers<[1], [0], [0], [1], [0, 0, 1, 1], [], []>} : vector<2x32xf32>, vector<32x128xf32>, vector<2x128xf32> -> vector<2x128xf32>
    %751 = arith.addf %746, %750 : vector<2x128xf32>
    %c37_559 = arith.constant 37 : index
    %c0_560 = arith.constant 0 : index
    %752 = tpu.strided_load %arg12[%c37_559, %c0_560] {strides = array<i32: 64, 1>} : memref<128x32xf32, #tpu.memory_space<vmem>>, vector<2x32xf32>
    %c37_561 = arith.constant 37 : index
    %c0_562 = arith.constant 0 : index
    %c0_563 = arith.constant 0 : index
    %753 = vector.load %arg6[%c37_561, %c0_562, %c0_563] : memref<64x32x128xf32, #tpu.memory_space<vmem>>, vector<1x32x128xf32>
    %754 = vector.shape_cast %753 : vector<1x32x128xf32> to vector<32x128xf32>
    %cst_564 = arith.constant dense<0.000000e+00> : vector<2x128xf32>
    %755 = tpu.matmul %752, %754, %cst_564 {dimension_numbers = #tpu.dot_dimension_numbers<[1], [0], [0], [1], [0, 0, 1, 1], [], []>} : vector<2x32xf32>, vector<32x128xf32>, vector<2x128xf32> -> vector<2x128xf32>
    %756 = arith.addf %751, %755 : vector<2x128xf32>
    %c38_565 = arith.constant 38 : index
    %c0_566 = arith.constant 0 : index
    %757 = tpu.strided_load %arg12[%c38_565, %c0_566] {strides = array<i32: 64, 1>} : memref<128x32xf32, #tpu.memory_space<vmem>>, vector<2x32xf32>
    %c38_567 = arith.constant 38 : index
    %c0_568 = arith.constant 0 : index
    %c0_569 = arith.constant 0 : index
    %758 = vector.load %arg6[%c38_567, %c0_568, %c0_569] : memref<64x32x128xf32, #tpu.memory_space<vmem>>, vector<1x32x128xf32>
    %759 = vector.shape_cast %758 : vector<1x32x128xf32> to vector<32x128xf32>
    %cst_570 = arith.constant dense<0.000000e+00> : vector<2x128xf32>
    %760 = tpu.matmul %757, %759, %cst_570 {dimension_numbers = #tpu.dot_dimension_numbers<[1], [0], [0], [1], [0, 0, 1, 1], [], []>} : vector<2x32xf32>, vector<32x128xf32>, vector<2x128xf32> -> vector<2x128xf32>
    %761 = arith.addf %756, %760 : vector<2x128xf32>
    %c39 = arith.constant 39 : index
    %c0_571 = arith.constant 0 : index
    %762 = tpu.strided_load %arg12[%c39, %c0_571] {strides = array<i32: 64, 1>} : memref<128x32xf32, #tpu.memory_space<vmem>>, vector<2x32xf32>
    %c39_572 = arith.constant 39 : index
    %c0_573 = arith.constant 0 : index
    %c0_574 = arith.constant 0 : index
    %763 = vector.load %arg6[%c39_572, %c0_573, %c0_574] : memref<64x32x128xf32, #tpu.memory_space<vmem>>, vector<1x32x128xf32>
    %764 = vector.shape_cast %763 : vector<1x32x128xf32> to vector<32x128xf32>
    %cst_575 = arith.constant dense<0.000000e+00> : vector<2x128xf32>
    %765 = tpu.matmul %762, %764, %cst_575 {dimension_numbers = #tpu.dot_dimension_numbers<[1], [0], [0], [1], [0, 0, 1, 1], [], []>} : vector<2x32xf32>, vector<32x128xf32>, vector<2x128xf32> -> vector<2x128xf32>
    %766 = arith.addf %761, %765 : vector<2x128xf32>
    %c40_576 = arith.constant 40 : index
    %c0_577 = arith.constant 0 : index
    %767 = tpu.strided_load %arg12[%c40_576, %c0_577] {strides = array<i32: 64, 1>} : memref<128x32xf32, #tpu.memory_space<vmem>>, vector<2x32xf32>
    %c40_578 = arith.constant 40 : index
    %c0_579 = arith.constant 0 : index
    %c0_580 = arith.constant 0 : index
    %768 = vector.load %arg6[%c40_578, %c0_579, %c0_580] : memref<64x32x128xf32, #tpu.memory_space<vmem>>, vector<1x32x128xf32>
    %769 = vector.shape_cast %768 : vector<1x32x128xf32> to vector<32x128xf32>
    %cst_581 = arith.constant dense<0.000000e+00> : vector<2x128xf32>
    %770 = tpu.matmul %767, %769, %cst_581 {dimension_numbers = #tpu.dot_dimension_numbers<[1], [0], [0], [1], [0, 0, 1, 1], [], []>} : vector<2x32xf32>, vector<32x128xf32>, vector<2x128xf32> -> vector<2x128xf32>
    %771 = arith.addf %766, %770 : vector<2x128xf32>
    %c41 = arith.constant 41 : index
    %c0_582 = arith.constant 0 : index
    %772 = tpu.strided_load %arg12[%c41, %c0_582] {strides = array<i32: 64, 1>} : memref<128x32xf32, #tpu.memory_space<vmem>>, vector<2x32xf32>
    %c41_583 = arith.constant 41 : index
    %c0_584 = arith.constant 0 : index
    %c0_585 = arith.constant 0 : index
    %773 = vector.load %arg6[%c41_583, %c0_584, %c0_585] : memref<64x32x128xf32, #tpu.memory_space<vmem>>, vector<1x32x128xf32>
    %774 = vector.shape_cast %773 : vector<1x32x128xf32> to vector<32x128xf32>
    %cst_586 = arith.constant dense<0.000000e+00> : vector<2x128xf32>
    %775 = tpu.matmul %772, %774, %cst_586 {dimension_numbers = #tpu.dot_dimension_numbers<[1], [0], [0], [1], [0, 0, 1, 1], [], []>} : vector<2x32xf32>, vector<32x128xf32>, vector<2x128xf32> -> vector<2x128xf32>
    %776 = arith.addf %771, %775 : vector<2x128xf32>
    %c42 = arith.constant 42 : index
    %c0_587 = arith.constant 0 : index
    %777 = tpu.strided_load %arg12[%c42, %c0_587] {strides = array<i32: 64, 1>} : memref<128x32xf32, #tpu.memory_space<vmem>>, vector<2x32xf32>
    %c42_588 = arith.constant 42 : index
    %c0_589 = arith.constant 0 : index
    %c0_590 = arith.constant 0 : index
    %778 = vector.load %arg6[%c42_588, %c0_589, %c0_590] : memref<64x32x128xf32, #tpu.memory_space<vmem>>, vector<1x32x128xf32>
    %779 = vector.shape_cast %778 : vector<1x32x128xf32> to vector<32x128xf32>
    %cst_591 = arith.constant dense<0.000000e+00> : vector<2x128xf32>
    %780 = tpu.matmul %777, %779, %cst_591 {dimension_numbers = #tpu.dot_dimension_numbers<[1], [0], [0], [1], [0, 0, 1, 1], [], []>} : vector<2x32xf32>, vector<32x128xf32>, vector<2x128xf32> -> vector<2x128xf32>
    %781 = arith.addf %776, %780 : vector<2x128xf32>
    %c43 = arith.constant 43 : index
    %c0_592 = arith.constant 0 : index
    %782 = tpu.strided_load %arg12[%c43, %c0_592] {strides = array<i32: 64, 1>} : memref<128x32xf32, #tpu.memory_space<vmem>>, vector<2x32xf32>
    %c43_593 = arith.constant 43 : index
    %c0_594 = arith.constant 0 : index
    %c0_595 = arith.constant 0 : index
    %783 = vector.load %arg6[%c43_593, %c0_594, %c0_595] : memref<64x32x128xf32, #tpu.memory_space<vmem>>, vector<1x32x128xf32>
    %784 = vector.shape_cast %783 : vector<1x32x128xf32> to vector<32x128xf32>
    %cst_596 = arith.constant dense<0.000000e+00> : vector<2x128xf32>
    %785 = tpu.matmul %782, %784, %cst_596 {dimension_numbers = #tpu.dot_dimension_numbers<[1], [0], [0], [1], [0, 0, 1, 1], [], []>} : vector<2x32xf32>, vector<32x128xf32>, vector<2x128xf32> -> vector<2x128xf32>
    %786 = arith.addf %781, %785 : vector<2x128xf32>
    %c44 = arith.constant 44 : index
    %c0_597 = arith.constant 0 : index
    %787 = tpu.strided_load %arg12[%c44, %c0_597] {strides = array<i32: 64, 1>} : memref<128x32xf32, #tpu.memory_space<vmem>>, vector<2x32xf32>
    %c44_598 = arith.constant 44 : index
    %c0_599 = arith.constant 0 : index
    %c0_600 = arith.constant 0 : index
    %788 = vector.load %arg6[%c44_598, %c0_599, %c0_600] : memref<64x32x128xf32, #tpu.memory_space<vmem>>, vector<1x32x128xf32>
    %789 = vector.shape_cast %788 : vector<1x32x128xf32> to vector<32x128xf32>
    %cst_601 = arith.constant dense<0.000000e+00> : vector<2x128xf32>
    %790 = tpu.matmul %787, %789, %cst_601 {dimension_numbers = #tpu.dot_dimension_numbers<[1], [0], [0], [1], [0, 0, 1, 1], [], []>} : vector<2x32xf32>, vector<32x128xf32>, vector<2x128xf32> -> vector<2x128xf32>
    %791 = arith.addf %786, %790 : vector<2x128xf32>
    %c45 = arith.constant 45 : index
    %c0_602 = arith.constant 0 : index
    %792 = tpu.strided_load %arg12[%c45, %c0_602] {strides = array<i32: 64, 1>} : memref<128x32xf32, #tpu.memory_space<vmem>>, vector<2x32xf32>
    %c45_603 = arith.constant 45 : index
    %c0_604 = arith.constant 0 : index
    %c0_605 = arith.constant 0 : index
    %793 = vector.load %arg6[%c45_603, %c0_604, %c0_605] : memref<64x32x128xf32, #tpu.memory_space<vmem>>, vector<1x32x128xf32>
    %794 = vector.shape_cast %793 : vector<1x32x128xf32> to vector<32x128xf32>
    %cst_606 = arith.constant dense<0.000000e+00> : vector<2x128xf32>
    %795 = tpu.matmul %792, %794, %cst_606 {dimension_numbers = #tpu.dot_dimension_numbers<[1], [0], [0], [1], [0, 0, 1, 1], [], []>} : vector<2x32xf32>, vector<32x128xf32>, vector<2x128xf32> -> vector<2x128xf32>
    %796 = arith.addf %791, %795 : vector<2x128xf32>
    %c46 = arith.constant 46 : index
    %c0_607 = arith.constant 0 : index
    %797 = tpu.strided_load %arg12[%c46, %c0_607] {strides = array<i32: 64, 1>} : memref<128x32xf32, #tpu.memory_space<vmem>>, vector<2x32xf32>
    %c46_608 = arith.constant 46 : index
    %c0_609 = arith.constant 0 : index
    %c0_610 = arith.constant 0 : index
    %798 = vector.load %arg6[%c46_608, %c0_609, %c0_610] : memref<64x32x128xf32, #tpu.memory_space<vmem>>, vector<1x32x128xf32>
    %799 = vector.shape_cast %798 : vector<1x32x128xf32> to vector<32x128xf32>
    %cst_611 = arith.constant dense<0.000000e+00> : vector<2x128xf32>
    %800 = tpu.matmul %797, %799, %cst_611 {dimension_numbers = #tpu.dot_dimension_numbers<[1], [0], [0], [1], [0, 0, 1, 1], [], []>} : vector<2x32xf32>, vector<32x128xf32>, vector<2x128xf32> -> vector<2x128xf32>
    %801 = arith.addf %796, %800 : vector<2x128xf32>
    %c47 = arith.constant 47 : index
    %c0_612 = arith.constant 0 : index
    %802 = tpu.strided_load %arg12[%c47, %c0_612] {strides = array<i32: 64, 1>} : memref<128x32xf32, #tpu.memory_space<vmem>>, vector<2x32xf32>
    %c47_613 = arith.constant 47 : index
    %c0_614 = arith.constant 0 : index
    %c0_615 = arith.constant 0 : index
    %803 = vector.load %arg6[%c47_613, %c0_614, %c0_615] : memref<64x32x128xf32, #tpu.memory_space<vmem>>, vector<1x32x128xf32>
    %804 = vector.shape_cast %803 : vector<1x32x128xf32> to vector<32x128xf32>
    %cst_616 = arith.constant dense<0.000000e+00> : vector<2x128xf32>
    %805 = tpu.matmul %802, %804, %cst_616 {dimension_numbers = #tpu.dot_dimension_numbers<[1], [0], [0], [1], [0, 0, 1, 1], [], []>} : vector<2x32xf32>, vector<32x128xf32>, vector<2x128xf32> -> vector<2x128xf32>
    %806 = arith.addf %801, %805 : vector<2x128xf32>
    %c48_617 = arith.constant 48 : index
    %c0_618 = arith.constant 0 : index
    %807 = tpu.strided_load %arg12[%c48_617, %c0_618] {strides = array<i32: 64, 1>} : memref<128x32xf32, #tpu.memory_space<vmem>>, vector<2x32xf32>
    %c48_619 = arith.constant 48 : index
    %c0_620 = arith.constant 0 : index
    %c0_621 = arith.constant 0 : index
    %808 = vector.load %arg6[%c48_619, %c0_620, %c0_621] : memref<64x32x128xf32, #tpu.memory_space<vmem>>, vector<1x32x128xf32>
    %809 = vector.shape_cast %808 : vector<1x32x128xf32> to vector<32x128xf32>
    %cst_622 = arith.constant dense<0.000000e+00> : vector<2x128xf32>
    %810 = tpu.matmul %807, %809, %cst_622 {dimension_numbers = #tpu.dot_dimension_numbers<[1], [0], [0], [1], [0, 0, 1, 1], [], []>} : vector<2x32xf32>, vector<32x128xf32>, vector<2x128xf32> -> vector<2x128xf32>
    %811 = arith.addf %806, %810 : vector<2x128xf32>
    %c49 = arith.constant 49 : index
    %c0_623 = arith.constant 0 : index
    %812 = tpu.strided_load %arg12[%c49, %c0_623] {strides = array<i32: 64, 1>} : memref<128x32xf32, #tpu.memory_space<vmem>>, vector<2x32xf32>
    %c49_624 = arith.constant 49 : index
    %c0_625 = arith.constant 0 : index
    %c0_626 = arith.constant 0 : index
    %813 = vector.load %arg6[%c49_624, %c0_625, %c0_626] : memref<64x32x128xf32, #tpu.memory_space<vmem>>, vector<1x32x128xf32>
    %814 = vector.shape_cast %813 : vector<1x32x128xf32> to vector<32x128xf32>
    %cst_627 = arith.constant dense<0.000000e+00> : vector<2x128xf32>
    %815 = tpu.matmul %812, %814, %cst_627 {dimension_numbers = #tpu.dot_dimension_numbers<[1], [0], [0], [1], [0, 0, 1, 1], [], []>} : vector<2x32xf32>, vector<32x128xf32>, vector<2x128xf32> -> vector<2x128xf32>
    %816 = arith.addf %811, %815 : vector<2x128xf32>
    %c50 = arith.constant 50 : index
    %c0_628 = arith.constant 0 : index
    %817 = tpu.strided_load %arg12[%c50, %c0_628] {strides = array<i32: 64, 1>} : memref<128x32xf32, #tpu.memory_space<vmem>>, vector<2x32xf32>
    %c50_629 = arith.constant 50 : index
    %c0_630 = arith.constant 0 : index
    %c0_631 = arith.constant 0 : index
    %818 = vector.load %arg6[%c50_629, %c0_630, %c0_631] : memref<64x32x128xf32, #tpu.memory_space<vmem>>, vector<1x32x128xf32>
    %819 = vector.shape_cast %818 : vector<1x32x128xf32> to vector<32x128xf32>
    %cst_632 = arith.constant dense<0.000000e+00> : vector<2x128xf32>
    %820 = tpu.matmul %817, %819, %cst_632 {dimension_numbers = #tpu.dot_dimension_numbers<[1], [0], [0], [1], [0, 0, 1, 1], [], []>} : vector<2x32xf32>, vector<32x128xf32>, vector<2x128xf32> -> vector<2x128xf32>
    %821 = arith.addf %816, %820 : vector<2x128xf32>
    %c51 = arith.constant 51 : index
    %c0_633 = arith.constant 0 : index
    %822 = tpu.strided_load %arg12[%c51, %c0_633] {strides = array<i32: 64, 1>} : memref<128x32xf32, #tpu.memory_space<vmem>>, vector<2x32xf32>
    %c51_634 = arith.constant 51 : index
    %c0_635 = arith.constant 0 : index
    %c0_636 = arith.constant 0 : index
    %823 = vector.load %arg6[%c51_634, %c0_635, %c0_636] : memref<64x32x128xf32, #tpu.memory_space<vmem>>, vector<1x32x128xf32>
    %824 = vector.shape_cast %823 : vector<1x32x128xf32> to vector<32x128xf32>
    %cst_637 = arith.constant dense<0.000000e+00> : vector<2x128xf32>
    %825 = tpu.matmul %822, %824, %cst_637 {dimension_numbers = #tpu.dot_dimension_numbers<[1], [0], [0], [1], [0, 0, 1, 1], [], []>} : vector<2x32xf32>, vector<32x128xf32>, vector<2x128xf32> -> vector<2x128xf32>
    %826 = arith.addf %821, %825 : vector<2x128xf32>
    %c52 = arith.constant 52 : index
    %c0_638 = arith.constant 0 : index
    %827 = tpu.strided_load %arg12[%c52, %c0_638] {strides = array<i32: 64, 1>} : memref<128x32xf32, #tpu.memory_space<vmem>>, vector<2x32xf32>
    %c52_639 = arith.constant 52 : index
    %c0_640 = arith.constant 0 : index
    %c0_641 = arith.constant 0 : index
    %828 = vector.load %arg6[%c52_639, %c0_640, %c0_641] : memref<64x32x128xf32, #tpu.memory_space<vmem>>, vector<1x32x128xf32>
    %829 = vector.shape_cast %828 : vector<1x32x128xf32> to vector<32x128xf32>
    %cst_642 = arith.constant dense<0.000000e+00> : vector<2x128xf32>
    %830 = tpu.matmul %827, %829, %cst_642 {dimension_numbers = #tpu.dot_dimension_numbers<[1], [0], [0], [1], [0, 0, 1, 1], [], []>} : vector<2x32xf32>, vector<32x128xf32>, vector<2x128xf32> -> vector<2x128xf32>
    %831 = arith.addf %826, %830 : vector<2x128xf32>
    %c53 = arith.constant 53 : index
    %c0_643 = arith.constant 0 : index
    %832 = tpu.strided_load %arg12[%c53, %c0_643] {strides = array<i32: 64, 1>} : memref<128x32xf32, #tpu.memory_space<vmem>>, vector<2x32xf32>
    %c53_644 = arith.constant 53 : index
    %c0_645 = arith.constant 0 : index
    %c0_646 = arith.constant 0 : index
    %833 = vector.load %arg6[%c53_644, %c0_645, %c0_646] : memref<64x32x128xf32, #tpu.memory_space<vmem>>, vector<1x32x128xf32>
    %834 = vector.shape_cast %833 : vector<1x32x128xf32> to vector<32x128xf32>
    %cst_647 = arith.constant dense<0.000000e+00> : vector<2x128xf32>
    %835 = tpu.matmul %832, %834, %cst_647 {dimension_numbers = #tpu.dot_dimension_numbers<[1], [0], [0], [1], [0, 0, 1, 1], [], []>} : vector<2x32xf32>, vector<32x128xf32>, vector<2x128xf32> -> vector<2x128xf32>
    %836 = arith.addf %831, %835 : vector<2x128xf32>
    %c54_648 = arith.constant 54 : index
    %c0_649 = arith.constant 0 : index
    %837 = tpu.strided_load %arg12[%c54_648, %c0_649] {strides = array<i32: 64, 1>} : memref<128x32xf32, #tpu.memory_space<vmem>>, vector<2x32xf32>
    %c54_650 = arith.constant 54 : index
    %c0_651 = arith.constant 0 : index
    %c0_652 = arith.constant 0 : index
    %838 = vector.load %arg6[%c54_650, %c0_651, %c0_652] : memref<64x32x128xf32, #tpu.memory_space<vmem>>, vector<1x32x128xf32>
    %839 = vector.shape_cast %838 : vector<1x32x128xf32> to vector<32x128xf32>
    %cst_653 = arith.constant dense<0.000000e+00> : vector<2x128xf32>
    %840 = tpu.matmul %837, %839, %cst_653 {dimension_numbers = #tpu.dot_dimension_numbers<[1], [0], [0], [1], [0, 0, 1, 1], [], []>} : vector<2x32xf32>, vector<32x128xf32>, vector<2x128xf32> -> vector<2x128xf32>
    %841 = arith.addf %836, %840 : vector<2x128xf32>
    %c55_654 = arith.constant 55 : index
    %c0_655 = arith.constant 0 : index
    %842 = tpu.strided_load %arg12[%c55_654, %c0_655] {strides = array<i32: 64, 1>} : memref<128x32xf32, #tpu.memory_space<vmem>>, vector<2x32xf32>
    %c55_656 = arith.constant 55 : index
    %c0_657 = arith.constant 0 : index
    %c0_658 = arith.constant 0 : index
    %843 = vector.load %arg6[%c55_656, %c0_657, %c0_658] : memref<64x32x128xf32, #tpu.memory_space<vmem>>, vector<1x32x128xf32>
    %844 = vector.shape_cast %843 : vector<1x32x128xf32> to vector<32x128xf32>
    %cst_659 = arith.constant dense<0.000000e+00> : vector<2x128xf32>
    %845 = tpu.matmul %842, %844, %cst_659 {dimension_numbers = #tpu.dot_dimension_numbers<[1], [0], [0], [1], [0, 0, 1, 1], [], []>} : vector<2x32xf32>, vector<32x128xf32>, vector<2x128xf32> -> vector<2x128xf32>
    %846 = arith.addf %841, %845 : vector<2x128xf32>
    %c56_660 = arith.constant 56 : index
    %c0_661 = arith.constant 0 : index
    %847 = tpu.strided_load %arg12[%c56_660, %c0_661] {strides = array<i32: 64, 1>} : memref<128x32xf32, #tpu.memory_space<vmem>>, vector<2x32xf32>
    %c56_662 = arith.constant 56 : index
    %c0_663 = arith.constant 0 : index
    %c0_664 = arith.constant 0 : index
    %848 = vector.load %arg6[%c56_662, %c0_663, %c0_664] : memref<64x32x128xf32, #tpu.memory_space<vmem>>, vector<1x32x128xf32>
    %849 = vector.shape_cast %848 : vector<1x32x128xf32> to vector<32x128xf32>
    %cst_665 = arith.constant dense<0.000000e+00> : vector<2x128xf32>
    %850 = tpu.matmul %847, %849, %cst_665 {dimension_numbers = #tpu.dot_dimension_numbers<[1], [0], [0], [1], [0, 0, 1, 1], [], []>} : vector<2x32xf32>, vector<32x128xf32>, vector<2x128xf32> -> vector<2x128xf32>
    %851 = arith.addf %846, %850 : vector<2x128xf32>
    %c57 = arith.constant 57 : index
    %c0_666 = arith.constant 0 : index
    %852 = tpu.strided_load %arg12[%c57, %c0_666] {strides = array<i32: 64, 1>} : memref<128x32xf32, #tpu.memory_space<vmem>>, vector<2x32xf32>
    %c57_667 = arith.constant 57 : index
    %c0_668 = arith.constant 0 : index
    %c0_669 = arith.constant 0 : index
    %853 = vector.load %arg6[%c57_667, %c0_668, %c0_669] : memref<64x32x128xf32, #tpu.memory_space<vmem>>, vector<1x32x128xf32>
    %854 = vector.shape_cast %853 : vector<1x32x128xf32> to vector<32x128xf32>
    %cst_670 = arith.constant dense<0.000000e+00> : vector<2x128xf32>
    %855 = tpu.matmul %852, %854, %cst_670 {dimension_numbers = #tpu.dot_dimension_numbers<[1], [0], [0], [1], [0, 0, 1, 1], [], []>} : vector<2x32xf32>, vector<32x128xf32>, vector<2x128xf32> -> vector<2x128xf32>
    %856 = arith.addf %851, %855 : vector<2x128xf32>
    %c58 = arith.constant 58 : index
    %c0_671 = arith.constant 0 : index
    %857 = tpu.strided_load %arg12[%c58, %c0_671] {strides = array<i32: 64, 1>} : memref<128x32xf32, #tpu.memory_space<vmem>>, vector<2x32xf32>
    %c58_672 = arith.constant 58 : index
    %c0_673 = arith.constant 0 : index
    %c0_674 = arith.constant 0 : index
    %858 = vector.load %arg6[%c58_672, %c0_673, %c0_674] : memref<64x32x128xf32, #tpu.memory_space<vmem>>, vector<1x32x128xf32>
    %859 = vector.shape_cast %858 : vector<1x32x128xf32> to vector<32x128xf32>
    %cst_675 = arith.constant dense<0.000000e+00> : vector<2x128xf32>
    %860 = tpu.matmul %857, %859, %cst_675 {dimension_numbers = #tpu.dot_dimension_numbers<[1], [0], [0], [1], [0, 0, 1, 1], [], []>} : vector<2x32xf32>, vector<32x128xf32>, vector<2x128xf32> -> vector<2x128xf32>
    %861 = arith.addf %856, %860 : vector<2x128xf32>
    %c59 = arith.constant 59 : index
    %c0_676 = arith.constant 0 : index
    %862 = tpu.strided_load %arg12[%c59, %c0_676] {strides = array<i32: 64, 1>} : memref<128x32xf32, #tpu.memory_space<vmem>>, vector<2x32xf32>
    %c59_677 = arith.constant 59 : index
    %c0_678 = arith.constant 0 : index
    %c0_679 = arith.constant 0 : index
    %863 = vector.load %arg6[%c59_677, %c0_678, %c0_679] : memref<64x32x128xf32, #tpu.memory_space<vmem>>, vector<1x32x128xf32>
    %864 = vector.shape_cast %863 : vector<1x32x128xf32> to vector<32x128xf32>
    %cst_680 = arith.constant dense<0.000000e+00> : vector<2x128xf32>
    %865 = tpu.matmul %862, %864, %cst_680 {dimension_numbers = #tpu.dot_dimension_numbers<[1], [0], [0], [1], [0, 0, 1, 1], [], []>} : vector<2x32xf32>, vector<32x128xf32>, vector<2x128xf32> -> vector<2x128xf32>
    %866 = arith.addf %861, %865 : vector<2x128xf32>
    %c60 = arith.constant 60 : index
    %c0_681 = arith.constant 0 : index
    %867 = tpu.strided_load %arg12[%c60, %c0_681] {strides = array<i32: 64, 1>} : memref<128x32xf32, #tpu.memory_space<vmem>>, vector<2x32xf32>
    %c60_682 = arith.constant 60 : index
    %c0_683 = arith.constant 0 : index
    %c0_684 = arith.constant 0 : index
    %868 = vector.load %arg6[%c60_682, %c0_683, %c0_684] : memref<64x32x128xf32, #tpu.memory_space<vmem>>, vector<1x32x128xf32>
    %869 = vector.shape_cast %868 : vector<1x32x128xf32> to vector<32x128xf32>
    %cst_685 = arith.constant dense<0.000000e+00> : vector<2x128xf32>
    %870 = tpu.matmul %867, %869, %cst_685 {dimension_numbers = #tpu.dot_dimension_numbers<[1], [0], [0], [1], [0, 0, 1, 1], [], []>} : vector<2x32xf32>, vector<32x128xf32>, vector<2x128xf32> -> vector<2x128xf32>
    %871 = arith.addf %866, %870 : vector<2x128xf32>
    %c61 = arith.constant 61 : index
    %c0_686 = arith.constant 0 : index
    %872 = tpu.strided_load %arg12[%c61, %c0_686] {strides = array<i32: 64, 1>} : memref<128x32xf32, #tpu.memory_space<vmem>>, vector<2x32xf32>
    %c61_687 = arith.constant 61 : index
    %c0_688 = arith.constant 0 : index
    %c0_689 = arith.constant 0 : index
    %873 = vector.load %arg6[%c61_687, %c0_688, %c0_689] : memref<64x32x128xf32, #tpu.memory_space<vmem>>, vector<1x32x128xf32>
    %874 = vector.shape_cast %873 : vector<1x32x128xf32> to vector<32x128xf32>
    %cst_690 = arith.constant dense<0.000000e+00> : vector<2x128xf32>
    %875 = tpu.matmul %872, %874, %cst_690 {dimension_numbers = #tpu.dot_dimension_numbers<[1], [0], [0], [1], [0, 0, 1, 1], [], []>} : vector<2x32xf32>, vector<32x128xf32>, vector<2x128xf32> -> vector<2x128xf32>
    %876 = arith.addf %871, %875 : vector<2x128xf32>
    %c62 = arith.constant 62 : index
    %c0_691 = arith.constant 0 : index
    %877 = tpu.strided_load %arg12[%c62, %c0_691] {strides = array<i32: 64, 1>} : memref<128x32xf32, #tpu.memory_space<vmem>>, vector<2x32xf32>
    %c62_692 = arith.constant 62 : index
    %c0_693 = arith.constant 0 : index
    %c0_694 = arith.constant 0 : index
    %878 = vector.load %arg6[%c62_692, %c0_693, %c0_694] : memref<64x32x128xf32, #tpu.memory_space<vmem>>, vector<1x32x128xf32>
    %879 = vector.shape_cast %878 : vector<1x32x128xf32> to vector<32x128xf32>
    %cst_695 = arith.constant dense<0.000000e+00> : vector<2x128xf32>
    %880 = tpu.matmul %877, %879, %cst_695 {dimension_numbers = #tpu.dot_dimension_numbers<[1], [0], [0], [1], [0, 0, 1, 1], [], []>} : vector<2x32xf32>, vector<32x128xf32>, vector<2x128xf32> -> vector<2x128xf32>
    %881 = arith.addf %876, %880 : vector<2x128xf32>
    %c63 = arith.constant 63 : index
    %c0_696 = arith.constant 0 : index
    %882 = tpu.strided_load %arg12[%c63, %c0_696] {strides = array<i32: 64, 1>} : memref<128x32xf32, #tpu.memory_space<vmem>>, vector<2x32xf32>
    %c63_697 = arith.constant 63 : index
    %c0_698 = arith.constant 0 : index
    %c0_699 = arith.constant 0 : index
    %883 = vector.load %arg6[%c63_697, %c0_698, %c0_699] : memref<64x32x128xf32, #tpu.memory_space<vmem>>, vector<1x32x128xf32>
    %884 = vector.shape_cast %883 : vector<1x32x128xf32> to vector<32x128xf32>
    %cst_700 = arith.constant dense<0.000000e+00> : vector<2x128xf32>
    %885 = tpu.matmul %882, %884, %cst_700 {dimension_numbers = #tpu.dot_dimension_numbers<[1], [0], [0], [1], [0, 0, 1, 1], [], []>} : vector<2x32xf32>, vector<32x128xf32>, vector<2x128xf32> -> vector<2x128xf32>
    %886 = arith.addf %881, %885 : vector<2x128xf32>
    %c0_701 = arith.constant 0 : index
    %c0_702 = arith.constant 0 : index
    %887 = vector.load %arg7[%c0_701, %c0_702] : memref<1x128xf32, #tpu.memory_space<vmem>>, vector<1x128xf32>
    %888 = vector.broadcast %887 : vector<1x128xf32> to vector<2x128xf32>
    %889 = arith.addf %886, %888 : vector<2x128xf32>
    %c0_703 = arith.constant 0 : index
    %c0_704 = arith.constant 0 : index
    %890 = vector.load %arg8[%c0_703, %c0_704] : memref<2x128xf32, #tpu.memory_space<vmem>>, vector<2x128xf32>
    tpu.vector_store %arg8[%c0_703, %c0_704], %889 {strides = array<i32>} : memref<2x128xf32, #tpu.memory_space<vmem>>, vector<2x128xf32>,
    return
  }
  func.func @transform_0(%arg0: i32) -> (i32, i32) {
    %c0_i32 = arith.constant 0 : i32
    %c0_i32_0 = arith.constant 0 : i32
    return %arg0, %c0_i32 : i32, i32
  }
  func.func @transform_1(%arg0: i32) -> (i32, i32) {
    %c0_i32 = arith.constant 0 : i32
    %c0_i32_0 = arith.constant 0 : i32
    %c0_i32_1 = arith.constant 0 : i32
    return %c0_i32, %c0_i32_0 : i32, i32
  }
  func.func @transform_2(%arg0: i32) -> (i32, i32) {
    %c0_i32 = arith.constant 0 : i32
    %c0_i32_0 = arith.constant 0 : i32
    %c0_i32_1 = arith.constant 0 : i32
    return %c0_i32, %c0_i32_0 : i32, i32
  }
  func.func @transform_3(%arg0: i32) -> (i32, i32) {
    %c0_i32 = arith.constant 0 : i32
    %c0_i32_0 = arith.constant 0 : i32
    %c0_i32_1 = arith.constant 0 : i32
    return %c0_i32, %c0_i32_0 : i32, i32
  }
  func.func @transform_4(%arg0: i32) -> (i32, i32) {
    %c0_i32 = arith.constant 0 : i32
    %c0_i32_0 = arith.constant 0 : i32
    %c0_i32_1 = arith.constant 0 : i32
    return %c0_i32, %c0_i32_0 : i32, i32
  }
  func.func @transform_5(%arg0: i32) -> (i32, i32, i32) {
    %c0_i32 = arith.constant 0 : i32
    %c0_i32_0 = arith.constant 0 : i32
    %c0_i32_1 = arith.constant 0 : i32
    %c0_i32_2 = arith.constant 0 : i32
    return %c0_i32, %c0_i32_0, %c0_i32_1 : i32, i32, i32
  }
  func.func @transform_6(%arg0: i32) -> (i32, i32) {
    %c0_i32 = arith.constant 0 : i32
    %c0_i32_0 = arith.constant 0 : i32
    %c0_i32_1 = arith.constant 0 : i32
    return %c0_i32, %c0_i32_0 : i32, i32
  }
  func.func @transform_7(%arg0: i32) -> (i32, i32) {
    %c0_i32 = arith.constant 0 : i32
    %c0_i32_0 = arith.constant 0 : i32
    return %arg0, %c0_i32 : i32, i32
  }
}

</mosaic_0001>

<llo_original>
// kernel: basic_cnn_forward.1
$region0: #{basic_cnn_forward.1}
  #allocation0 [shape = 'u32[]', space=smem, size = 0x4, offset = 0x4, fixed_abs, tag = 'smem constant byte address 0x4 - core index']
  #allocation1 [shape = 'u32[72,128]{1,0:T(1,128)}', space=vmem, size = 0x9000, scoped, tag = 'internal scratch']
  #allocation2 [shape = 'f32[2176,16]{1,0:T(8,128)}', space=vmem, size = 0x110000, scoped, tag = 'scratch operand']
  #allocation3 [shape = 'f32[656,16]{1,0:T(8,128)}', space=vmem, size = 0x52000, scoped, tag = 'scratch operand']
  #allocation4 [shape = 'f32[576,32]{1,0:T(8,128)}', space=vmem, size = 0x48000, scoped, tag = 'scratch operand']
  #allocation5 [shape = 'f32[128,32]{1,0:T(8,128)}', space=vmem, size = 0x10000, scoped, tag = 'scratch operand']
  %s0 = inlined_call_operand.vmem [shape: f32[2176,32], index: 0, kind: input, shape index: {}]
  %s1 = inlined_call_operand.vmem [shape: f32[32,16], index: 1, kind: input, shape index: {}]
  %s2 = inlined_call_operand.vmem [shape: f32[1,16], index: 2, kind: input, shape index: {}]
  %s3 = inlined_call_operand.vmem [shape: f32[144,32], index: 3, kind: input, shape index: {}]
  %s4 = inlined_call_operand.vmem [shape: f32[1,32], index: 4, kind: input, shape index: {}]
  %s5 = inlined_call_operand.vmem [shape: f32[64,32,128], index: 5, kind: input, shape index: {}]
  %s6 = inlined_call_operand.vmem [shape: f32[1,128], index: 6, kind: input, shape index: {}]
  %s7 = inlined_call_operand.hbm [shape: f32[2,128], index: 7, kind: output, shape index: {}]
  %s8 = sld [smem:[#allocation0]]
  $region38: #{basic_cnn_forward.1} parent=0
    _
  %s10 = ssub.s32 1, %s8
  %s11 = scalar_select 0, %s10, %s8
  $region1: #{basic_cnn_forward.1} parent=0
    #allocation6 [shape = 'u8[1024]{0}', space=vmem, size = 0x400, scoped, tag = 'output window, operand 0, single buffered']
    #allocation7 [shape = 's32[1]{0}', space=sflag, size = 0x4, scoped, tag = 'scoped memory for basic_cnn_forward.1']
    %12 = vsyncpa [#allocation7], 0
    // Predicated region
    $region2: #{basic_cnn_forward.1} parent=1 // pred_check
      _
    $region3: #{basic_cnn_forward.1} parent=1 // pred_check_branch
      %14 = sbr.rel (0) target = $region5
    $region4: #{basic_cnn_forward.1} parent=1 // pred_region
      _
    $region5: #{basic_cnn_forward.1} parent=1 // pred_fallthru
      _
    // Predicated region
    $region6: #{basic_cnn_forward.1} parent=1 // pred_check
      _
    $region7: #{basic_cnn_forward.1} parent=1 // pred_check_branch
      %16 = sbr.rel (0) target = $region9
    $region8: #{basic_cnn_forward.1} parent=1 // pred_region
      _
    $region9: #{basic_cnn_forward.1} parent=1 // pred_fallthru
      _
    // Predicated region
    $region10: #{basic_cnn_forward.1} parent=1 // pred_check
      _
    $region11: #{basic_cnn_forward.1} parent=1 // pred_check_branch
      %18 = sbr.rel (0) target = $region13
    $region12: #{basic_cnn_forward.1} parent=1 // pred_region
      _
    $region13: #{basic_cnn_forward.1} parent=1 // pred_fallthru
      _
    // Predicated region
    $region14: #{basic_cnn_forward.1} parent=1 // pred_check
      _
    $region15: #{basic_cnn_forward.1} parent=1 // pred_check_branch
      %20 = sbr.rel (0) target = $region17
    $region16: #{basic_cnn_forward.1} parent=1 // pred_region
      _
    $region17: #{basic_cnn_forward.1} parent=1 // pred_fallthru
      _
    // Predicated region
    $region18: #{basic_cnn_forward.1} parent=1 // pred_check
      _
    $region19: #{basic_cnn_forward.1} parent=1 // pred_check_branch
      %22 = sbr.rel (0) target = $region21
    $region20: #{basic_cnn_forward.1} parent=1 // pred_region
      _
    $region21: #{basic_cnn_forward.1} parent=1 // pred_fallthru
      _
    // Predicated region
    $region22: #{basic_cnn_forward.1} parent=1 // pred_check
      _
    $region23: #{basic_cnn_forward.1} parent=1 // pred_check_branch
      %24 = sbr.rel (0) target = $region25
    $region24: #{basic_cnn_forward.1} parent=1 // pred_region
      _
    $region25: #{basic_cnn_forward.1} parent=1 // pred_fallthru
      _
    // Predicated region
    $region26: #{basic_cnn_forward.1} parent=1 // pred_check
      _
    $region27: #{basic_cnn_forward.1} parent=1 // pred_check_branch
      %26 = sbr.rel (0) target = $region29
    $region28: #{basic_cnn_forward.1} parent=1 // pred_region
      _
    $region29: #{basic_cnn_forward.1} parent=1 // pred_fallthru
      _
    %v27 = vld [vmem:[%s0] sm:$0xff]
    %v28 = vld [vmem:[%s0 + $0x8] sm:$0xff]
    %v29 = vld [vmem:[%s0 + $0x10] sm:$0xff]
    %v30 = vld [vmem:[%s0 + $0x18] sm:$0xff]
    %v31 = vld [vmem:[%s0 + $0x20] sm:$0xff]
    %v32 = vld [vmem:[%s0 + $0x28] sm:$0xff]
    %v33 = vld [vmem:[%s0 + $0x30] sm:$0xff]
    %v34 = vld [vmem:[%s0 + $0x38] sm:$0xff]
    %v35 = vld [vmem:[%s0 + $0x40] sm:$0xff]
    %v36 = vld [vmem:[%s0 + $0x48] sm:$0xff]
    %v37 = vld [vmem:[%s0 + $0x50] sm:$0xff]
    %v38 = vld [vmem:[%s0 + $0x58] sm:$0xff]
    %v39 = vld [vmem:[%s0 + $0x60] sm:$0xff]
    %v40 = vld [vmem:[%s0 + $0x68] sm:$0xff]
    %v41 = vld [vmem:[%s0 + $0x70] sm:$0xff]
    %v42 = vld [vmem:[%s0 + $0x78] sm:$0xff]
    %v43 = vld [vmem:[%s0 + $0x80] sm:$0xff]
    %v44 = vld [vmem:[%s0 + $0x88] sm:$0xff]
    %v45 = vld [vmem:[%s0 + $0x90] sm:$0xff]
    %v46 = vld [vmem:[%s0 + $0x98] sm:$0xff]
    %v47 = vld [vmem:[%s0 + $0xa0] sm:$0xff]
    %v48 = vld [vmem:[%s0 + $0xa8] sm:$0xff]
    %v49 = vld [vmem:[%s0 + $0xb0] sm:$0xff]
    %v50 = vld [vmem:[%s0 + $0xb8] sm:$0xff]
    %v51 = vld [vmem:[%s0 + $0xc0] sm:$0xff]
    %v52 = vld [vmem:[%s0 + $0xc8] sm:$0xff]
    %v53 = vld [vmem:[%s0 + $0xd0] sm:$0xff]
    %v54 = vld [vmem:[%s0 + $0xd8] sm:$0xff]
    %v55 = vld [vmem:[%s0 + $0xe0] sm:$0xff]
    %v56 = vld [vmem:[%s0 + $0xe8] sm:$0xff]
    %v57 = vld [vmem:[%s0 + $0xf0] sm:$0xff]
    %v58 = vld [vmem:[%s0 + $0xf8] sm:$0xff]
    %v59 = vld [vmem:[%s0 + $0x100] sm:$0xff]
    %v60 = vld [vmem:[%s0 + $0x108] sm:$0xff]
    %v61 = vld [vmem:[%s0 + $0x110] sm:$0xff]
    %v62 = vld [vmem:[%s0 + $0x118] sm:$0xff]
    %v63 = vld [vmem:[%s0 + $0x120] sm:$0xff]
    %v64 = vld [vmem:[%s0 + $0x128] sm:$0xff]
    %v65 = vld [vmem:[%s0 + $0x130] sm:$0xff]
    %v66 = vld [vmem:[%s0 + $0x138] sm:$0xff]
    %v67 = vld [vmem:[%s0 + $0x140] sm:$0xff]
    %v68 = vld [vmem:[%s0 + $0x148] sm:$0xff]
    %v69 = vld [vmem:[%s0 + $0x150] sm:$0xff]
    %v70 = vld [vmem:[%s0 + $0x158] sm:$0xff]
    %v71 = vld [vmem:[%s0 + $0x160] sm:$0xff]
    %v72 = vld [vmem:[%s0 + $0x168] sm:$0xff]
    %v73 = vld [vmem:[%s0 + $0x170] sm:$0xff]
    %v74 = vld [vmem:[%s0 + $0x178] sm:$0xff]
    %v75 = vld [vmem:[%s0 + $0x180] sm:$0xff]
    %v76 = vld [vmem:[%s0 + $0x188] sm:$0xff]
    %v77 = vld [vmem:[%s0 + $0x190] sm:$0xff]
    %v78 = vld [vmem:[%s0 + $0x198] sm:$0xff]
    %v79 = vld [vmem:[%s0 + $0x1a0] sm:$0xff]
    %v80 = vld [vmem:[%s0 + $0x1a8] sm:$0xff]
    %v81 = vld [vmem:[%s0 + $0x1b0] sm:$0xff]
    %v82 = vld [vmem:[%s0 + $0x1b8] sm:$0xff]
    %v83 = vld [vmem:[%s0 + $0x1c0] sm:$0xff]
    %v84 = vld [vmem:[%s0 + $0x1c8] sm:$0xff]
    %v85 = vld [vmem:[%s0 + $0x1d0] sm:$0xff]
    %v86 = vld [vmem:[%s0 + $0x1d8] sm:$0xff]
    %v87 = vld [vmem:[%s0 + $0x1e0] sm:$0xff]
    %v88 = vld [vmem:[%s0 + $0x1e8] sm:$0xff]
    %v89 = vld [vmem:[%s0 + $0x1f0] sm:$0xff]
    %v90 = vld [vmem:[%s0 + $0x1f8] sm:$0xff]
    %v91 = vld [vmem:[%s0 + $0x200] sm:$0xff]
    %v92 = vld [vmem:[%s0 + $0x208] sm:$0xff]
    %v93 = vld [vmem:[%s0 + $0x210] sm:$0xff]
    %v94 = vld [vmem:[%s0 + $0x218] sm:$0xff]
    %v95 = vld [vmem:[%s0 + $0x220] sm:$0xff]
    %v96 = vld [vmem:[%s0 + $0x228] sm:$0xff]
    %v97 = vld [vmem:[%s0 + $0x230] sm:$0xff]
    %v98 = vld [vmem:[%s0 + $0x238] sm:$0xff]
    %v99 = vld [vmem:[%s0 + $0x240] sm:$0xff]
    %v100 = vld [vmem:[%s0 + $0x248] sm:$0xff]
    %v101 = vld [vmem:[%s0 + $0x250] sm:$0xff]
    %v102 = vld [vmem:[%s0 + $0x258] sm:$0xff]
    %v103 = vld [vmem:[%s0 + $0x260] sm:$0xff]
    %v104 = vld [vmem:[%s0 + $0x268] sm:$0xff]
    %v105 = vld [vmem:[%s0 + $0x270] sm:$0xff]
    %v106 = vld [vmem:[%s0 + $0x278] sm:$0xff]
    %v107 = vld [vmem:[%s0 + $0x280] sm:$0xff]
    %v108 = vld [vmem:[%s0 + $0x288] sm:$0xff]
    %v109 = vld [vmem:[%s0 + $0x290] sm:$0xff]
    %v110 = vld [vmem:[%s0 + $0x298] sm:$0xff]
    %v111 = vld [vmem:[%s0 + $0x2a0] sm:$0xff]
    %v112 = vld [vmem:[%s0 + $0x2a8] sm:$0xff]
    %v113 = vld [vmem:[%s0 + $0x2b0] sm:$0xff]
    %v114 = vld [vmem:[%s0 + $0x2b8] sm:$0xff]
    %v115 = vld [vmem:[%s0 + $0x2c0] sm:$0xff]
    %v116 = vld [vmem:[%s0 + $0x2c8] sm:$0xff]
    %v117 = vld [vmem:[%s0 + $0x2d0] sm:$0xff]
    %v118 = vld [vmem:[%s0 + $0x2d8] sm:$0xff]
    %v119 = vld [vmem:[%s0 + $0x2e0] sm:$0xff]
    %v120 = vld [vmem:[%s0 + $0x2e8] sm:$0xff]
    %v121 = vld [vmem:[%s0 + $0x2f0] sm:$0xff]
    %v122 = vld [vmem:[%s0 + $0x2f8] sm:$0xff]
    %v123 = vld [vmem:[%s0 + $0x300] sm:$0xff]
    %v124 = vld [vmem:[%s0 + $0x308] sm:$0xff]
    %v125 = vld [vmem:[%s0 + $0x310] sm:$0xff]
    %v126 = vld [vmem:[%s0 + $0x318] sm:$0xff]
    %v127 = vld [vmem:[%s0 + $0x320] sm:$0xff]
    %v128 = vld [vmem:[%s0 + $0x328] sm:$0xff]
    %v129 = vld [vmem:[%s0 + $0x330] sm:$0xff]
    %v130 = vld [vmem:[%s0 + $0x338] sm:$0xff]
    %v131 = vld [vmem:[%s0 + $0x340] sm:$0xff]
    %v132 = vld [vmem:[%s0 + $0x348] sm:$0xff]
    %v133 = vld [vmem:[%s0 + $0x350] sm:$0xff]
    %v134 = vld [vmem:[%s0 + $0x358] sm:$0xff]
    %v135 = vld [vmem:[%s0 + $0x360] sm:$0xff]
    %v136 = vld [vmem:[%s0 + $0x368] sm:$0xff]
    %v137 = vld [vmem:[%s0 + $0x370] sm:$0xff]
    %v138 = vld [vmem:[%s0 + $0x378] sm:$0xff]
    %v139 = vld [vmem:[%s0 + $0x380] sm:$0xff]
    %v140 = vld [vmem:[%s0 + $0x388] sm:$0xff]
    %v141 = vld [vmem:[%s0 + $0x390] sm:$0xff]
    %v142 = vld [vmem:[%s0 + $0x398] sm:$0xff]
    %v143 = vld [vmem:[%s0 + $0x3a0] sm:$0xff]
    %v144 = vld [vmem:[%s0 + $0x3a8] sm:$0xff]
    %v145 = vld [vmem:[%s0 + $0x3b0] sm:$0xff]
    %v146 = vld [vmem:[%s0 + $0x3b8] sm:$0xff]
    %v147 = vld [vmem:[%s0 + $0x3c0] sm:$0xff]
    %v148 = vld [vmem:[%s0 + $0x3c8] sm:$0xff]
    %v149 = vld [vmem:[%s0 + $0x3d0] sm:$0xff]
    %v150 = vld [vmem:[%s0 + $0x3d8] sm:$0xff]
    %v151 = vld [vmem:[%s0 + $0x3e0] sm:$0xff]
    %v152 = vld [vmem:[%s0 + $0x3e8] sm:$0xff]
    %v153 = vld [vmem:[%s0 + $0x3f0] sm:$0xff]
    %v154 = vld [vmem:[%s0 + $0x3f8] sm:$0xff]
    %v155 = vld [vmem:[%s0 + $0x400] sm:$0xff]
    %v156 = vld [vmem:[%s0 + $0x408] sm:$0xff]
    %v157 = vld [vmem:[%s0 + $0x410] sm:$0xff]
    %v158 = vld [vmem:[%s0 + $0x418] sm:$0xff]
    %v159 = vld [vmem:[%s0 + $0x420] sm:$0xff]
    %v160 = vld [vmem:[%s0 + $0x428] sm:$0xff]
    %v161 = vld [vmem:[%s0 + $0x430] sm:$0xff]
    %v162 = vld [vmem:[%s0 + $0x438] sm:$0xff]
    %v163 = vld [vmem:[%s0 + $0x440] sm:$0xff]
    %v164 = vld [vmem:[%s0 + $0x448] sm:$0xff]
    %v165 = vld [vmem:[%s0 + $0x450] sm:$0xff]
    %v166 = vld [vmem:[%s0 + $0x458] sm:$0xff]
    %v167 = vld [vmem:[%s0 + $0x460] sm:$0xff]
    %v168 = vld [vmem:[%s0 + $0x468] sm:$0xff]
    %v169 = vld [vmem:[%s0 + $0x470] sm:$0xff]
    %v170 = vld [vmem:[%s0 + $0x478] sm:$0xff]
    %v171 = vld [vmem:[%s0 + $0x480] sm:$0xff]
    %v172 = vld [vmem:[%s0 + $0x488] sm:$0xff]
    %v173 = vld [vmem:[%s0 + $0x490] sm:$0xff]
    %v174 = vld [vmem:[%s0 + $0x498] sm:$0xff]
    %v175 = vld [vmem:[%s0 + $0x4a0] sm:$0xff]
    %v176 = vld [vmem:[%s0 + $0x4a8] sm:$0xff]
    %v177 = vld [vmem:[%s0 + $0x4b0] sm:$0xff]
    %v178 = vld [vmem:[%s0 + $0x4b8] sm:$0xff]
    %v179 = vld [vmem:[%s0 + $0x4c0] sm:$0xff]
    %v180 = vld [vmem:[%s0 + $0x4c8] sm:$0xff]
    %v181 = vld [vmem:[%s0 + $0x4d0] sm:$0xff]
    %v182 = vld [vmem:[%s0 + $0x4d8] sm:$0xff]
    %v183 = vld [vmem:[%s0 + $0x4e0] sm:$0xff]
    %v184 = vld [vmem:[%s0 + $0x4e8] sm:$0xff]
    %v185 = vld [vmem:[%s0 + $0x4f0] sm:$0xff]
    %v186 = vld [vmem:[%s0 + $0x4f8] sm:$0xff]
    %v187 = vld [vmem:[%s0 + $0x500] sm:$0xff]
    %v188 = vld [vmem:[%s0 + $0x508] sm:$0xff]
    %v189 = vld [vmem:[%s0 + $0x510] sm:$0xff]
    %v190 = vld [vmem:[%s0 + $0x518] sm:$0xff]
    %v191 = vld [vmem:[%s0 + $0x520] sm:$0xff]
    %v192 = vld [vmem:[%s0 + $0x528] sm:$0xff]
    %v193 = vld [vmem:[%s0 + $0x530] sm:$0xff]
    %v194 = vld [vmem:[%s0 + $0x538] sm:$0xff]
    %v195 = vld [vmem:[%s0 + $0x540] sm:$0xff]
    %v196 = vld [vmem:[%s0 + $0x548] sm:$0xff]
    %v197 = vld [vmem:[%s0 + $0x550] sm:$0xff]
    %v198 = vld [vmem:[%s0 + $0x558] sm:$0xff]
    %v199 = vld [vmem:[%s0 + $0x560] sm:$0xff]
    %v200 = vld [vmem:[%s0 + $0x568] sm:$0xff]
    %v201 = vld [vmem:[%s0 + $0x570] sm:$0xff]
    %v202 = vld [vmem:[%s0 + $0x578] sm:$0xff]
    %v203 = vld [vmem:[%s0 + $0x580] sm:$0xff]
    %v204 = vld [vmem:[%s0 + $0x588] sm:$0xff]
    %v205 = vld [vmem:[%s0 + $0x590] sm:$0xff]
    %v206 = vld [vmem:[%s0 + $0x598] sm:$0xff]
    %v207 = vld [vmem:[%s0 + $0x5a0] sm:$0xff]
    %v208 = vld [vmem:[%s0 + $0x5a8] sm:$0xff]
    %v209 = vld [vmem:[%s0 + $0x5b0] sm:$0xff]
    %v210 = vld [vmem:[%s0 + $0x5b8] sm:$0xff]
    %v211 = vld [vmem:[%s0 + $0x5c0] sm:$0xff]
    %v212 = vld [vmem:[%s0 + $0x5c8] sm:$0xff]
    %v213 = vld [vmem:[%s0 + $0x5d0] sm:$0xff]
    %v214 = vld [vmem:[%s0 + $0x5d8] sm:$0xff]
    %v215 = vld [vmem:[%s0 + $0x5e0] sm:$0xff]
    %v216 = vld [vmem:[%s0 + $0x5e8] sm:$0xff]
    %v217 = vld [vmem:[%s0 + $0x5f0] sm:$0xff]
    %v218 = vld [vmem:[%s0 + $0x5f8] sm:$0xff]
    %v219 = vld [vmem:[%s0 + $0x600] sm:$0xff]
    %v220 = vld [vmem:[%s0 + $0x608] sm:$0xff]
    %v221 = vld [vmem:[%s0 + $0x610] sm:$0xff]
    %v222 = vld [vmem:[%s0 + $0x618] sm:$0xff]
    %v223 = vld [vmem:[%s0 + $0x620] sm:$0xff]
    %v224 = vld [vmem:[%s0 + $0x628] sm:$0xff]
    %v225 = vld [vmem:[%s0 + $0x630] sm:$0xff]
    %v226 = vld [vmem:[%s0 + $0x638] sm:$0xff]
    %v227 = vld [vmem:[%s0 + $0x640] sm:$0xff]
    %v228 = vld [vmem:[%s0 + $0x648] sm:$0xff]
    %v229 = vld [vmem:[%s0 + $0x650] sm:$0xff]
    %v230 = vld [vmem:[%s0 + $0x658] sm:$0xff]
    %v231 = vld [vmem:[%s0 + $0x660] sm:$0xff]
    %v232 = vld [vmem:[%s0 + $0x668] sm:$0xff]
    %v233 = vld [vmem:[%s0 + $0x670] sm:$0xff]
    %v234 = vld [vmem:[%s0 + $0x678] sm:$0xff]
    %v235 = vld [vmem:[%s0 + $0x680] sm:$0xff]
    %v236 = vld [vmem:[%s0 + $0x688] sm:$0xff]
    %v237 = vld [vmem:[%s0 + $0x690] sm:$0xff]
    %v238 = vld [vmem:[%s0 + $0x698] sm:$0xff]
    %v239 = vld [vmem:[%s0 + $0x6a0] sm:$0xff]
    %v240 = vld [vmem:[%s0 + $0x6a8] sm:$0xff]
    %v241 = vld [vmem:[%s0 + $0x6b0] sm:$0xff]
    %v242 = vld [vmem:[%s0 + $0x6b8] sm:$0xff]
    %v243 = vld [vmem:[%s0 + $0x6c0] sm:$0xff]
    %v244 = vld [vmem:[%s0 + $0x6c8] sm:$0xff]
    %v245 = vld [vmem:[%s0 + $0x6d0] sm:$0xff]
    %v246 = vld [vmem:[%s0 + $0x6d8] sm:$0xff]
    %v247 = vld [vmem:[%s0 + $0x6e0] sm:$0xff]
    %v248 = vld [vmem:[%s0 + $0x6e8] sm:$0xff]
    %v249 = vld [vmem:[%s0 + $0x6f0] sm:$0xff]
    %v250 = vld [vmem:[%s0 + $0x6f8] sm:$0xff]
    %v251 = vld [vmem:[%s0 + $0x700] sm:$0xff]
    %v252 = vld [vmem:[%s0 + $0x708] sm:$0xff]
    %v253 = vld [vmem:[%s0 + $0x710] sm:$0xff]
    %v254 = vld [vmem:[%s0 + $0x718] sm:$0xff]
    %v255 = vld [vmem:[%s0 + $0x720] sm:$0xff]
    %v256 = vld [vmem:[%s0 + $0x728] sm:$0xff]
    %v257 = vld [vmem:[%s0 + $0x730] sm:$0xff]
    %v258 = vld [vmem:[%s0 + $0x738] sm:$0xff]
    %v259 = vld [vmem:[%s0 + $0x740] sm:$0xff]
    %v260 = vld [vmem:[%s0 + $0x748] sm:$0xff]
    %v261 = vld [vmem:[%s0 + $0x750] sm:$0xff]
    %v262 = vld [vmem:[%s0 + $0x758] sm:$0xff]
    %v263 = vld [vmem:[%s0 + $0x760] sm:$0xff]
    %v264 = vld [vmem:[%s0 + $0x768] sm:$0xff]
    %v265 = vld [vmem:[%s0 + $0x770] sm:$0xff]
    %v266 = vld [vmem:[%s0 + $0x778] sm:$0xff]
    %v267 = vld [vmem:[%s0 + $0x780] sm:$0xff]
    %v268 = vld [vmem:[%s0 + $0x788] sm:$0xff]
    %v269 = vld [vmem:[%s0 + $0x790] sm:$0xff]
    %v270 = vld [vmem:[%s0 + $0x798] sm:$0xff]
    %v271 = vld [vmem:[%s0 + $0x7a0] sm:$0xff]
    %v272 = vld [vmem:[%s0 + $0x7a8] sm:$0xff]
    %v273 = vld [vmem:[%s0 + $0x7b0] sm:$0xff]
    %v274 = vld [vmem:[%s0 + $0x7b8] sm:$0xff]
    %v275 = vld [vmem:[%s0 + $0x7c0] sm:$0xff]
    %v276 = vld [vmem:[%s0 + $0x7c8] sm:$0xff]
    %v277 = vld [vmem:[%s0 + $0x7d0] sm:$0xff]
    %v278 = vld [vmem:[%s0 + $0x7d8] sm:$0xff]
    %v279 = vld [vmem:[%s0 + $0x7e0] sm:$0xff]
    %v280 = vld [vmem:[%s0 + $0x7e8] sm:$0xff]
    %v281 = vld [vmem:[%s0 + $0x7f0] sm:$0xff]
    %v282 = vld [vmem:[%s0 + $0x7f8] sm:$0xff]
    %v283 = vld [vmem:[%s0 + $0x800] sm:$0xff]
    %v284 = vld [vmem:[%s0 + $0x808] sm:$0xff]
    %v285 = vld [vmem:[%s0 + $0x810] sm:$0xff]
    %v286 = vld [vmem:[%s0 + $0x818] sm:$0xff]
    %v287 = vld [vmem:[%s0 + $0x820] sm:$0xff]
    %v288 = vld [vmem:[%s0 + $0x828] sm:$0xff]
    %v289 = vld [vmem:[%s0 + $0x830] sm:$0xff]
    %v290 = vld [vmem:[%s0 + $0x838] sm:$0xff]
    %v291 = vld [vmem:[%s0 + $0x840] sm:$0xff]
    %v292 = vld [vmem:[%s0 + $0x848] sm:$0xff]
    %v293 = vld [vmem:[%s0 + $0x850] sm:$0xff]
    %v294 = vld [vmem:[%s0 + $0x858] sm:$0xff]
    %v295 = vld [vmem:[%s0 + $0x860] sm:$0xff]
    %v296 = vld [vmem:[%s0 + $0x868] sm:$0xff]
    %v297 = vld [vmem:[%s0 + $0x870] sm:$0xff]
    %v298 = vld [vmem:[%s0 + $0x878] sm:$0xff]
    %v299 = vld [vmem:[%s1] sm:$0xff]
    %v300 = vld [vmem:[%s1 + $0x8] sm:$0xff]
    %v301 = vld [vmem:[%s1 + $0x10] sm:$0xff]
    %v302 = vld [vmem:[%s1 + $0x18] sm:$0xff]
    %vm303 = vcmask 261120
    %v305 = vsel %vm303, %v27, 0
    %v308 = vsel %vm303, %v28, 0
    %v311 = vsel %vm303, %v29, 0
    %v314 = vsel %vm303, %v30, 0
    %v317 = vsel %vm303, %v31, 0
    %v320 = vsel %vm303, %v32, 0
    %v323 = vsel %vm303, %v33, 0
    %v326 = vsel %vm303, %v34, 0
    %v329 = vsel %vm303, %v35, 0
    %v332 = vsel %vm303, %v36, 0
    %v335 = vsel %vm303, %v37, 0
    %v338 = vsel %vm303, %v38, 0
    %v341 = vsel %vm303, %v39, 0
    %v344 = vsel %vm303, %v40, 0
    %v347 = vsel %vm303, %v41, 0
    %v350 = vsel %vm303, %v42, 0
    %v353 = vsel %vm303, %v43, 0
    %v356 = vsel %vm303, %v44, 0
    %v359 = vsel %vm303, %v45, 0
    %v362 = vsel %vm303, %v46, 0
    %v365 = vsel %vm303, %v47, 0
    %v368 = vsel %vm303, %v48, 0
    %v371 = vsel %vm303, %v49, 0
    %v374 = vsel %vm303, %v50, 0
    %v377 = vsel %vm303, %v51, 0
    %v380 = vsel %vm303, %v52, 0
    %v383 = vsel %vm303, %v53, 0
    %v386 = vsel %vm303, %v54, 0
    %v389 = vsel %vm303, %v55, 0
    %v392 = vsel %vm303, %v56, 0
    %v395 = vsel %vm303, %v57, 0
    %v398 = vsel %vm303, %v58, 0
    %v401 = vsel %vm303, %v59, 0
    %v404 = vsel %vm303, %v60, 0
    %v407 = vsel %vm303, %v61, 0
    %v410 = vsel %vm303, %v62, 0
    %v413 = vsel %vm303, %v63, 0
    %v416 = vsel %vm303, %v64, 0
    %v419 = vsel %vm303, %v65, 0
    %v422 = vsel %vm303, %v66, 0
    %v425 = vsel %vm303, %v67, 0
    %v428 = vsel %vm303, %v68, 0
    %v431 = vsel %vm303, %v69, 0
    %v434 = vsel %vm303, %v70, 0
    %v437 = vsel %vm303, %v71, 0
    %v440 = vsel %vm303, %v72, 0
    %v443 = vsel %vm303, %v73, 0
    %v446 = vsel %vm303, %v74, 0
    %v449 = vsel %vm303, %v75, 0
    %v452 = vsel %vm303, %v76, 0
    %v455 = vsel %vm303, %v77, 0
    %v458 = vsel %vm303, %v78, 0
    %v461 = vsel %vm303, %v79, 0
    %v464 = vsel %vm303, %v80, 0
    %v467 = vsel %vm303, %v81, 0
    %v470 = vsel %vm303, %v82, 0
    %v473 = vsel %vm303, %v83, 0
    %v476 = vsel %vm303, %v84, 0
    %v479 = vsel %vm303, %v85, 0
    %v482 = vsel %vm303, %v86, 0
    %v485 = vsel %vm303, %v87, 0
    %v488 = vsel %vm303, %v88, 0
    %v491 = vsel %vm303, %v89, 0
    %v494 = vsel %vm303, %v90, 0
    %v497 = vsel %vm303, %v91, 0
    %v500 = vsel %vm303, %v92, 0
    %v503 = vsel %vm303, %v93, 0
    %v506 = vsel %vm303, %v94, 0
    %v509 = vsel %vm303, %v95, 0
    %v512 = vsel %vm303, %v96, 0
    %v515 = vsel %vm303, %v97, 0
    %v518 = vsel %vm303, %v98, 0
    %v521 = vsel %vm303, %v99, 0
    %v524 = vsel %vm303, %v100, 0
    %v527 = vsel %vm303, %v101, 0
    %v530 = vsel %vm303, %v102, 0
    %v533 = vsel %vm303, %v103, 0
    %v536 = vsel %vm303, %v104, 0
    %v539 = vsel %vm303, %v105, 0
    %v542 = vsel %vm303, %v106, 0
    %v545 = vsel %vm303, %v107, 0
    %v548 = vsel %vm303, %v108, 0
    %v551 = vsel %vm303, %v109, 0
    %v554 = vsel %vm303, %v110, 0
    %v557 = vsel %vm303, %v111, 0
    %v560 = vsel %vm303, %v112, 0
    %v563 = vsel %vm303, %v113, 0
    %v566 = vsel %vm303, %v114, 0
    %v569 = vsel %vm303, %v115, 0
    %v572 = vsel %vm303, %v116, 0
    %v575 = vsel %vm303, %v117, 0
    %v578 = vsel %vm303, %v118, 0
    %v581 = vsel %vm303, %v119, 0
    %v584 = vsel %vm303, %v120, 0
    %v587 = vsel %vm303, %v121, 0
    %v590 = vsel %vm303, %v122, 0
    %v593 = vsel %vm303, %v123, 0
    %v596 = vsel %vm303, %v124, 0
    %v599 = vsel %vm303, %v125, 0
    %v602 = vsel %vm303, %v126, 0
    %v605 = vsel %vm303, %v127, 0
    %v608 = vsel %vm303, %v128, 0
    %v611 = vsel %vm303, %v129, 0
    %v614 = vsel %vm303, %v130, 0
    %v617 = vsel %vm303, %v131, 0
    %v620 = vsel %vm303, %v132, 0
    %v623 = vsel %vm303, %v133, 0
    %v626 = vsel %vm303, %v134, 0
    %v629 = vsel %vm303, %v135, 0
    %v632 = vsel %vm303, %v136, 0
    %v635 = vsel %vm303, %v137, 0
    %v638 = vsel %vm303, %v138, 0
    %v641 = vsel %vm303, %v139, 0
    %v644 = vsel %vm303, %v140, 0
    %v647 = vsel %vm303, %v141, 0
    %v650 = vsel %vm303, %v142, 0
    %v653 = vsel %vm303, %v143, 0
    %v656 = vsel %vm303, %v144, 0
    %v659 = vsel %vm303, %v145, 0
    %v662 = vsel %vm303, %v146, 0
    %v665 = vsel %vm303, %v147, 0
    %v668 = vsel %vm303, %v148, 0
    %v671 = vsel %vm303, %v149, 0
    %v674 = vsel %vm303, %v150, 0
    %v677 = vsel %vm303, %v151, 0
    %v680 = vsel %vm303, %v152, 0
    %v683 = vsel %vm303, %v153, 0
    %v686 = vsel %vm303, %v154, 0
    %v689 = vsel %vm303, %v155, 0
    %v692 = vsel %vm303, %v156, 0
    %v695 = vsel %vm303, %v157, 0
    %v698 = vsel %vm303, %v158, 0
    %v701 = vsel %vm303, %v159, 0
    %v704 = vsel %vm303, %v160, 0
    %v707 = vsel %vm303, %v161, 0
    %v710 = vsel %vm303, %v162, 0
    %v713 = vsel %vm303, %v163, 0
    %v716 = vsel %vm303, %v164, 0
    %v719 = vsel %vm303, %v165, 0
    %v722 = vsel %vm303, %v166, 0
    %v725 = vsel %vm303, %v167, 0
    %v728 = vsel %vm303, %v168, 0
    %v731 = vsel %vm303, %v169, 0
    %v734 = vsel %vm303, %v170, 0
    %v737 = vsel %vm303, %v171, 0
    %v740 = vsel %vm303, %v172, 0
    %v743 = vsel %vm303, %v173, 0
    %v746 = vsel %vm303, %v174, 0
    %v749 = vsel %vm303, %v175, 0
    %v752 = vsel %vm303, %v176, 0
    %v755 = vsel %vm303, %v177, 0
    %v758 = vsel %vm303, %v178, 0
    %v761 = vsel %vm303, %v179, 0
    %v764 = vsel %vm303, %v180, 0
    %v767 = vsel %vm303, %v181, 0
    %v770 = vsel %vm303, %v182, 0
    %v773 = vsel %vm303, %v183, 0
    %v776 = vsel %vm303, %v184, 0
    %v779 = vsel %vm303, %v185, 0
    %v782 = vsel %vm303, %v186, 0
    %v785 = vsel %vm303, %v187, 0
    %v788 = vsel %vm303, %v188, 0
    %v791 = vsel %vm303, %v189, 0
    %v794 = vsel %vm303, %v190, 0
    %v797 = vsel %vm303, %v191, 0
    %v800 = vsel %vm303, %v192, 0
    %v803 = vsel %vm303, %v193, 0
    %v806 = vsel %vm303, %v194, 0
    %v809 = vsel %vm303, %v195, 0
    %v812 = vsel %vm303, %v196, 0
    %v815 = vsel %vm303, %v197, 0
    %v818 = vsel %vm303, %v198, 0
    %v821 = vsel %vm303, %v199, 0
    %v824 = vsel %vm303, %v200, 0
    %v827 = vsel %vm303, %v201, 0
    %v830 = vsel %vm303, %v202, 0
    %v833 = vsel %vm303, %v203, 0
    %v836 = vsel %vm303, %v204, 0
    %v839 = vsel %vm303, %v205, 0
    %v842 = vsel %vm303, %v206, 0
    %v845 = vsel %vm303, %v207, 0
    %v848 = vsel %vm303, %v208, 0
    %v851 = vsel %vm303, %v209, 0
    %v854 = vsel %vm303, %v210, 0
    %v857 = vsel %vm303, %v211, 0
    %v860 = vsel %vm303, %v212, 0
    %v863 = vsel %vm303, %v213, 0
    %v866 = vsel %vm303, %v214, 0
    %v869 = vsel %vm303, %v215, 0
    %v872 = vsel %vm303, %v216, 0
    %v875 = vsel %vm303, %v217, 0
    %v878 = vsel %vm303, %v218, 0
    %v881 = vsel %vm303, %v219, 0
    %v884 = vsel %vm303, %v220, 0
    %v887 = vsel %vm303, %v221, 0
    %v890 = vsel %vm303, %v222, 0
    %v893 = vsel %vm303, %v223, 0
    %v896 = vsel %vm303, %v224, 0
    %v899 = vsel %vm303, %v225, 0
    %v902 = vsel %vm303, %v226, 0
    %v905 = vsel %vm303, %v227, 0
    %v908 = vsel %vm303, %v228, 0
    %v911 = vsel %vm303, %v229, 0
    %v914 = vsel %vm303, %v230, 0
    %v917 = vsel %vm303, %v231, 0
    %v920 = vsel %vm303, %v232, 0
    %v923 = vsel %vm303, %v233, 0
    %v926 = vsel %vm303, %v234, 0
    %v929 = vsel %vm303, %v235, 0
    %v932 = vsel %vm303, %v236, 0
    %v935 = vsel %vm303, %v237, 0
    %v938 = vsel %vm303, %v238, 0
    %v941 = vsel %vm303, %v239, 0
    %v944 = vsel %vm303, %v240, 0
    %v947 = vsel %vm303, %v241, 0
    %v950 = vsel %vm303, %v242, 0
    %v953 = vsel %vm303, %v243, 0
    %v956 = vsel %vm303, %v244, 0
    %v959 = vsel %vm303, %v245, 0
    %v962 = vsel %vm303, %v246, 0
    %v965 = vsel %vm303, %v247, 0
    %v968 = vsel %vm303, %v248, 0
    %v971 = vsel %vm303, %v249, 0
    %v974 = vsel %vm303, %v250, 0
    %v977 = vsel %vm303, %v251, 0
    %v980 = vsel %vm303, %v252, 0
    %v983 = vsel %vm303, %v253, 0
    %v986 = vsel %vm303, %v254, 0
    %v989 = vsel %vm303, %v255, 0
    %v992 = vsel %vm303, %v256, 0
    %v995 = vsel %vm303, %v257, 0
    %v998 = vsel %vm303, %v258, 0
    %v1001 = vsel %vm303, %v259, 0
    %v1004 = vsel %vm303, %v260, 0
    %v1007 = vsel %vm303, %v261, 0
    %v1010 = vsel %vm303, %v262, 0
    %v1013 = vsel %vm303, %v263, 0
    %v1016 = vsel %vm303, %v264, 0
    %v1019 = vsel %vm303, %v265, 0
    %v1022 = vsel %vm303, %v266, 0
    %v1025 = vsel %vm303, %v267, 0
    %v1028 = vsel %vm303, %v268, 0
    %v1031 = vsel %vm303, %v269, 0
    %v1034 = vsel %vm303, %v270, 0
    %v1037 = vsel %vm303, %v271, 0
    %v1040 = vsel %vm303, %v272, 0
    %v1043 = vsel %vm303, %v273, 0
    %v1046 = vsel %vm303, %v274, 0
    %v1049 = vsel %vm303, %v275, 0
    %v1052 = vsel %vm303, %v276, 0
    %v1055 = vsel %vm303, %v277, 0
    %v1058 = vsel %vm303, %v278, 0
    %v1061 = vsel %vm303, %v279, 0
    %v1064 = vsel %vm303, %v280, 0
    %v1067 = vsel %vm303, %v281, 0
    %v1070 = vsel %vm303, %v282, 0
    %v1073 = vsel %vm303, %v283, 0
    %v1076 = vsel %vm303, %v284, 0
    %v1079 = vsel %vm303, %v285, 0
    %v1082 = vsel %vm303, %v286, 0
    %v1085 = vsel %vm303, %v287, 0
    %v1088 = vsel %vm303, %v288, 0
    %v1091 = vsel %vm303, %v289, 0
    %v1094 = vsel %vm303, %v290, 0
    %v1097 = vsel %vm303, %v291, 0
    %v1100 = vsel %vm303, %v292, 0
    %v1103 = vsel %vm303, %v293, 0
    %v1106 = vsel %vm303, %v294, 0
    %v1109 = vsel %vm303, %v295, 0
    %v1112 = vsel %vm303, %v296, 0
    %v1115 = vsel %vm303, %v297, 0
    %v1118 = vsel %vm303, %v298, 0
    %1120 = vmatpush.msra.mxu0 0.0
    %1121 = vmatpush.msra.mxu0 0.0
    %1122 = vmatpush.msra.mxu0 0.0
    %1123 = vmatpush.msra.mxu0 0.0
    %1124 = vmatpush.msra.mxu0 0.0
    %1125 = vmatpush.msra.mxu0 0.0
    %1126 = vmatpush.msra.mxu0 0.0
    %1127 = vmatpush.msra.mxu0 0.0
    %1128 = vmatpush.msra.mxu0 0.0
    %1129 = vmatpush.msra.mxu0 0.0
    %1130 = vmatpush.msra.mxu0 0.0
    %1131 = vmatpush.msra.mxu0 0.0
    %1132 = vmatpush.msra.mxu0 %v302
    %1133 = vmatpush.msra.mxu0 %v301
    %1134 = vmatpush.msra.mxu0 %v300
    %1135 = vmatpush.msra.mxu0 %v299
    %1136 = vmatmul.f32.gmra.mxu0 %v305
    %v1137 = vpop.f32.mrf.mxu0
    %v1138 = vadd.f32 0.0, %v1137
    %1139 = vmatmul.f32.gmra.mxu0 %v308
    %v1140 = vpop.f32.mrf.mxu0
    %v1141 = vadd.f32 0.0, %v1140
    %1142 = vmatmul.f32.gmra.mxu0 %v311
    %v1143 = vpop.f32.mrf.mxu0
    %v1144 = vadd.f32 0.0, %v1143
    %1145 = vmatmul.f32.gmra.mxu0 %v314
    %v1146 = vpop.f32.mrf.mxu0
    %v1147 = vadd.f32 0.0, %v1146
    %1148 = vmatmul.f32.gmra.mxu0 %v317
    %v1149 = vpop.f32.mrf.mxu0
    %v1150 = vadd.f32 0.0, %v1149
    %1151 = vmatmul.f32.gmra.mxu0 %v320
    %v1152 = vpop.f32.mrf.mxu0
    %v1153 = vadd.f32 0.0, %v1152
    %1154 = vmatmul.f32.gmra.mxu0 %v323
    %v1155 = vpop.f32.mrf.mxu0
    %v1156 = vadd.f32 0.0, %v1155
    %1157 = vmatmul.f32.gmra.mxu0 %v326
    %v1158 = vpop.f32.mrf.mxu0
    %v1159 = vadd.f32 0.0, %v1158
    %1160 = vmatmul.f32.gmra.mxu0 %v329
    %v1161 = vpop.f32.mrf.mxu0
    %v1162 = vadd.f32 0.0, %v1161
    %1163 = vmatmul.f32.gmra.mxu0 %v332
    %v1164 = vpop.f32.mrf.mxu0
    %v1165 = vadd.f32 0.0, %v1164
    %1166 = vmatmul.f32.gmra.mxu0 %v335
    %v1167 = vpop.f32.mrf.mxu0
    %v1168 = vadd.f32 0.0, %v1167
    %1169 = vmatmul.f32.gmra.mxu0 %v338
    %v1170 = vpop.f32.mrf.mxu0
    %v1171 = vadd.f32 0.0, %v1170
    %1172 = vmatmul.f32.gmra.mxu0 %v341
    %v1173 = vpop.f32.mrf.mxu0
    %v1174 = vadd.f32 0.0, %v1173
    %1175 = vmatmul.f32.gmra.mxu0 %v344
    %v1176 = vpop.f32.mrf.mxu0
    %v1177 = vadd.f32 0.0, %v1176
    %1178 = vmatmul.f32.gmra.mxu0 %v347
    %v1179 = vpop.f32.mrf.mxu0
    %v1180 = vadd.f32 0.0, %v1179
    %1181 = vmatmul.f32.gmra.mxu0 %v350
    %v1182 = vpop.f32.mrf.mxu0
    %v1183 = vadd.f32 0.0, %v1182
    %1184 = vmatmul.f32.gmra.mxu0 %v353
    %v1185 = vpop.f32.mrf.mxu0
    %v1186 = vadd.f32 0.0, %v1185
    %1187 = vmatmul.f32.gmra.mxu0 %v356
    %v1188 = vpop.f32.mrf.mxu0
    %v1189 = vadd.f32 0.0, %v1188
    %1190 = vmatmul.f32.gmra.mxu0 %v359
    %v1191 = vpop.f32.mrf.mxu0
    %v1192 = vadd.f32 0.0, %v1191
    %1193 = vmatmul.f32.gmra.mxu0 %v362
    %v1194 = vpop.f32.mrf.mxu0
    %v1195 = vadd.f32 0.0, %v1194
    %1196 = vmatmul.f32.gmra.mxu0 %v365
    %v1197 = vpop.f32.mrf.mxu0
    %v1198 = vadd.f32 0.0, %v1197
    %1199 = vmatmul.f32.gmra.mxu0 %v368
    %v1200 = vpop.f32.mrf.mxu0
    %v1201 = vadd.f32 0.0, %v1200
    %1202 = vmatmul.f32.gmra.mxu0 %v371
    %v1203 = vpop.f32.mrf.mxu0
    %v1204 = vadd.f32 0.0, %v1203
    %1205 = vmatmul.f32.gmra.mxu0 %v374
    %v1206 = vpop.f32.mrf.mxu0
    %v1207 = vadd.f32 0.0, %v1206
    %1208 = vmatmul.f32.gmra.mxu0 %v377
    %v1209 = vpop.f32.mrf.mxu0
    %v1210 = vadd.f32 0.0, %v1209
    %1211 = vmatmul.f32.gmra.mxu0 %v380
    %v1212 = vpop.f32.mrf.mxu0
    %v1213 = vadd.f32 0.0, %v1212
    %1214 = vmatmul.f32.gmra.mxu0 %v383
    %v1215 = vpop.f32.mrf.mxu0
    %v1216 = vadd.f32 0.0, %v1215
    %1217 = vmatmul.f32.gmra.mxu0 %v386
    %v1218 = vpop.f32.mrf.mxu0
    %v1219 = vadd.f32 0.0, %v1218
    %1220 = vmatmul.f32.gmra.mxu0 %v389
    %v1221 = vpop.f32.mrf.mxu0
    %v1222 = vadd.f32 0.0, %v1221
    %1223 = vmatmul.f32.gmra.mxu0 %v392
    %v1224 = vpop.f32.mrf.mxu0
    %v1225 = vadd.f32 0.0, %v1224
    %1226 = vmatmul.f32.gmra.mxu0 %v395
    %v1227 = vpop.f32.mrf.mxu0
    %v1228 = vadd.f32 0.0, %v1227
    %1229 = vmatmul.f32.gmra.mxu0 %v398
    %v1230 = vpop.f32.mrf.mxu0
    %v1231 = vadd.f32 0.0, %v1230
    %1232 = vmatmul.f32.gmra.mxu0 %v401
    %v1233 = vpop.f32.mrf.mxu0
    %v1234 = vadd.f32 0.0, %v1233
    %1235 = vmatmul.f32.gmra.mxu0 %v404
    %v1236 = vpop.f32.mrf.mxu0
    %v1237 = vadd.f32 0.0, %v1236
    %1238 = vmatmul.f32.gmra.mxu0 %v407
    %v1239 = vpop.f32.mrf.mxu0
    %v1240 = vadd.f32 0.0, %v1239
    %1241 = vmatmul.f32.gmra.mxu0 %v410
    %v1242 = vpop.f32.mrf.mxu0
    %v1243 = vadd.f32 0.0, %v1242
    %1244 = vmatmul.f32.gmra.mxu0 %v413
    %v1245 = vpop.f32.mrf.mxu0
    %v1246 = vadd.f32 0.0, %v1245
    %1247 = vmatmul.f32.gmra.mxu0 %v416
    %v1248 = vpop.f32.mrf.mxu0
    %v1249 = vadd.f32 0.0, %v1248
    %1250 = vmatmul.f32.gmra.mxu0 %v419
    %v1251 = vpop.f32.mrf.mxu0
    %v1252 = vadd.f32 0.0, %v1251
    %1253 = vmatmul.f32.gmra.mxu0 %v422
    %v1254 = vpop.f32.mrf.mxu0
    %v1255 = vadd.f32 0.0, %v1254
    %1256 = vmatmul.f32.gmra.mxu0 %v425
    %v1257 = vpop.f32.mrf.mxu0
    %v1258 = vadd.f32 0.0, %v1257
    %1259 = vmatmul.f32.gmra.mxu0 %v428
    %v1260 = vpop.f32.mrf.mxu0
    %v1261 = vadd.f32 0.0, %v1260
    %1262 = vmatmul.f32.gmra.mxu0 %v431
    %v1263 = vpop.f32.mrf.mxu0
    %v1264 = vadd.f32 0.0, %v1263
    %1265 = vmatmul.f32.gmra.mxu0 %v434
    %v1266 = vpop.f32.mrf.mxu0
    %v1267 = vadd.f32 0.0, %v1266
    %1268 = vmatmul.f32.gmra.mxu0 %v437
    %v1269 = vpop.f32.mrf.mxu0
    %v1270 = vadd.f32 0.0, %v1269
    %1271 = vmatmul.f32.gmra.mxu0 %v440
    %v1272 = vpop.f32.mrf.mxu0
    %v1273 = vadd.f32 0.0, %v1272
    %1274 = vmatmul.f32.gmra.mxu0 %v443
    %v1275 = vpop.f32.mrf.mxu0
    %v1276 = vadd.f32 0.0, %v1275
    %1277 = vmatmul.f32.gmra.mxu0 %v446
    %v1278 = vpop.f32.mrf.mxu0
    %v1279 = vadd.f32 0.0, %v1278
    %1280 = vmatmul.f32.gmra.mxu0 %v449
    %v1281 = vpop.f32.mrf.mxu0
    %v1282 = vadd.f32 0.0, %v1281
    %1283 = vmatmul.f32.gmra.mxu0 %v452
    %v1284 = vpop.f32.mrf.mxu0
    %v1285 = vadd.f32 0.0, %v1284
    %1286 = vmatmul.f32.gmra.mxu0 %v455
    %v1287 = vpop.f32.mrf.mxu0
    %v1288 = vadd.f32 0.0, %v1287
    %1289 = vmatmul.f32.gmra.mxu0 %v458
    %v1290 = vpop.f32.mrf.mxu0
    %v1291 = vadd.f32 0.0, %v1290
    %1292 = vmatmul.f32.gmra.mxu0 %v461
    %v1293 = vpop.f32.mrf.mxu0
    %v1294 = vadd.f32 0.0, %v1293
    %1295 = vmatmul.f32.gmra.mxu0 %v464
    %v1296 = vpop.f32.mrf.mxu0
    %v1297 = vadd.f32 0.0, %v1296
    %1298 = vmatmul.f32.gmra.mxu0 %v467
    %v1299 = vpop.f32.mrf.mxu0
    %v1300 = vadd.f32 0.0, %v1299
    %1301 = vmatmul.f32.gmra.mxu0 %v470
    %v1302 = vpop.f32.mrf.mxu0
    %v1303 = vadd.f32 0.0, %v1302
    %1304 = vmatmul.f32.gmra.mxu0 %v473
    %v1305 = vpop.f32.mrf.mxu0
    %v1306 = vadd.f32 0.0, %v1305
    %1307 = vmatmul.f32.gmra.mxu0 %v476
    %v1308 = vpop.f32.mrf.mxu0
    %v1309 = vadd.f32 0.0, %v1308
    %1310 = vmatmul.f32.gmra.mxu0 %v479
    %v1311 = vpop.f32.mrf.mxu0
    %v1312 = vadd.f32 0.0, %v1311
    %1313 = vmatmul.f32.gmra.mxu0 %v482
    %v1314 = vpop.f32.mrf.mxu0
    %v1315 = vadd.f32 0.0, %v1314
    %1316 = vmatmul.f32.gmra.mxu0 %v485
    %v1317 = vpop.f32.mrf.mxu0
    %v1318 = vadd.f32 0.0, %v1317
    %1319 = vmatmul.f32.gmra.mxu0 %v488
    %v1320 = vpop.f32.mrf.mxu0
    %v1321 = vadd.f32 0.0, %v1320
    %1322 = vmatmul.f32.gmra.mxu0 %v491
    %v1323 = vpop.f32.mrf.mxu0
    %v1324 = vadd.f32 0.0, %v1323
    %1325 = vmatmul.f32.gmra.mxu0 %v494
    %v1326 = vpop.f32.mrf.mxu0
    %v1327 = vadd.f32 0.0, %v1326
    %1328 = vmatmul.f32.gmra.mxu0 %v497
    %v1329 = vpop.f32.mrf.mxu0
    %v1330 = vadd.f32 0.0, %v1329
    %1331 = vmatmul.f32.gmra.mxu0 %v500
    %v1332 = vpop.f32.mrf.mxu0
    %v1333 = vadd.f32 0.0, %v1332
    %1334 = vmatmul.f32.gmra.mxu0 %v503
    %v1335 = vpop.f32.mrf.mxu0
    %v1336 = vadd.f32 0.0, %v1335
    %1337 = vmatmul.f32.gmra.mxu0 %v506
    %v1338 = vpop.f32.mrf.mxu0
    %v1339 = vadd.f32 0.0, %v1338
    %1340 = vmatmul.f32.gmra.mxu0 %v509
    %v1341 = vpop.f32.mrf.mxu0
    %v1342 = vadd.f32 0.0, %v1341
    %1343 = vmatmul.f32.gmra.mxu0 %v512
    %v1344 = vpop.f32.mrf.mxu0
    %v1345 = vadd.f32 0.0, %v1344
    %1346 = vmatmul.f32.gmra.mxu0 %v515
    %v1347 = vpop.f32.mrf.mxu0
    %v1348 = vadd.f32 0.0, %v1347
    %1349 = vmatmul.f32.gmra.mxu0 %v518
    %v1350 = vpop.f32.mrf.mxu0
    %v1351 = vadd.f32 0.0, %v1350
    %1352 = vmatmul.f32.gmra.mxu0 %v521
    %v1353 = vpop.f32.mrf.mxu0
    %v1354 = vadd.f32 0.0, %v1353
    %1355 = vmatmul.f32.gmra.mxu0 %v524
    %v1356 = vpop.f32.mrf.mxu0
    %v1357 = vadd.f32 0.0, %v1356
    %1358 = vmatmul.f32.gmra.mxu0 %v527
    %v1359 = vpop.f32.mrf.mxu0
    %v1360 = vadd.f32 0.0, %v1359
    %1361 = vmatmul.f32.gmra.mxu0 %v530
    %v1362 = vpop.f32.mrf.mxu0
    %v1363 = vadd.f32 0.0, %v1362
    %1364 = vmatmul.f32.gmra.mxu0 %v533
    %v1365 = vpop.f32.mrf.mxu0
    %v1366 = vadd.f32 0.0, %v1365
    %1367 = vmatmul.f32.gmra.mxu0 %v536
    %v1368 = vpop.f32.mrf.mxu0
    %v1369 = vadd.f32 0.0, %v1368
    %1370 = vmatmul.f32.gmra.mxu0 %v539
    %v1371 = vpop.f32.mrf.mxu0
    %v1372 = vadd.f32 0.0, %v1371
    %1373 = vmatmul.f32.gmra.mxu0 %v542
    %v1374 = vpop.f32.mrf.mxu0
    %v1375 = vadd.f32 0.0, %v1374
    %1376 = vmatmul.f32.gmra.mxu0 %v545
    %v1377 = vpop.f32.mrf.mxu0
    %v1378 = vadd.f32 0.0, %v1377
    %1379 = vmatmul.f32.gmra.mxu0 %v548
    %v1380 = vpop.f32.mrf.mxu0
    %v1381 = vadd.f32 0.0, %v1380
    %1382 = vmatmul.f32.gmra.mxu0 %v551
    %v1383 = vpop.f32.mrf.mxu0
    %v1384 = vadd.f32 0.0, %v1383
    %1385 = vmatmul.f32.gmra.mxu0 %v554
    %v1386 = vpop.f32.mrf.mxu0
    %v1387 = vadd.f32 0.0, %v1386
    %1388 = vmatmul.f32.gmra.mxu0 %v557
    %v1389 = vpop.f32.mrf.mxu0
    %v1390 = vadd.f32 0.0, %v1389
    %1391 = vmatmul.f32.gmra.mxu0 %v560
    %v1392 = vpop.f32.mrf.mxu0
    %v1393 = vadd.f32 0.0, %v1392
    %1394 = vmatmul.f32.gmra.mxu0 %v563
    %v1395 = vpop.f32.mrf.mxu0
    %v1396 = vadd.f32 0.0, %v1395
    %1397 = vmatmul.f32.gmra.mxu0 %v566
    %v1398 = vpop.f32.mrf.mxu0
    %v1399 = vadd.f32 0.0, %v1398
    %1400 = vmatmul.f32.gmra.mxu0 %v569
    %v1401 = vpop.f32.mrf.mxu0
    %v1402 = vadd.f32 0.0, %v1401
    %1403 = vmatmul.f32.gmra.mxu0 %v572
    %v1404 = vpop.f32.mrf.mxu0
    %v1405 = vadd.f32 0.0, %v1404
    %1406 = vmatmul.f32.gmra.mxu0 %v575
    %v1407 = vpop.f32.mrf.mxu0
    %v1408 = vadd.f32 0.0, %v1407
    %1409 = vmatmul.f32.gmra.mxu0 %v578
    %v1410 = vpop.f32.mrf.mxu0
    %v1411 = vadd.f32 0.0, %v1410
    %1412 = vmatmul.f32.gmra.mxu0 %v581
    %v1413 = vpop.f32.mrf.mxu0
    %v1414 = vadd.f32 0.0, %v1413
    %1415 = vmatmul.f32.gmra.mxu0 %v584
    %v1416 = vpop.f32.mrf.mxu0
    %v1417 = vadd.f32 0.0, %v1416
    %1418 = vmatmul.f32.gmra.mxu0 %v587
    %v1419 = vpop.f32.mrf.mxu0
    %v1420 = vadd.f32 0.0, %v1419
    %1421 = vmatmul.f32.gmra.mxu0 %v590
    %v1422 = vpop.f32.mrf.mxu0
    %v1423 = vadd.f32 0.0, %v1422
    %1424 = vmatmul.f32.gmra.mxu0 %v593
    %v1425 = vpop.f32.mrf.mxu0
    %v1426 = vadd.f32 0.0, %v1425
    %1427 = vmatmul.f32.gmra.mxu0 %v596
    %v1428 = vpop.f32.mrf.mxu0
    %v1429 = vadd.f32 0.0, %v1428
    %1430 = vmatmul.f32.gmra.mxu0 %v599
    %v1431 = vpop.f32.mrf.mxu0
    %v1432 = vadd.f32 0.0, %v1431
    %1433 = vmatmul.f32.gmra.mxu0 %v602
    %v1434 = vpop.f32.mrf.mxu0
    %v1435 = vadd.f32 0.0, %v1434
    %1436 = vmatmul.f32.gmra.mxu0 %v605
    %v1437 = vpop.f32.mrf.mxu0
    %v1438 = vadd.f32 0.0, %v1437
    %1439 = vmatmul.f32.gmra.mxu0 %v608
    %v1440 = vpop.f32.mrf.mxu0
    %v1441 = vadd.f32 0.0, %v1440
    %1442 = vmatmul.f32.gmra.mxu0 %v611
    %v1443 = vpop.f32.mrf.mxu0
    %v1444 = vadd.f32 0.0, %v1443
    %1445 = vmatmul.f32.gmra.mxu0 %v614
    %v1446 = vpop.f32.mrf.mxu0
    %v1447 = vadd.f32 0.0, %v1446
    %1448 = vmatmul.f32.gmra.mxu0 %v617
    %v1449 = vpop.f32.mrf.mxu0
    %v1450 = vadd.f32 0.0, %v1449
    %1451 = vmatmul.f32.gmra.mxu0 %v620
    %v1452 = vpop.f32.mrf.mxu0
    %v1453 = vadd.f32 0.0, %v1452
    %1454 = vmatmul.f32.gmra.mxu0 %v623
    %v1455 = vpop.f32.mrf.mxu0
    %v1456 = vadd.f32 0.0, %v1455
    %1457 = vmatmul.f32.gmra.mxu0 %v626
    %v1458 = vpop.f32.mrf.mxu0
    %v1459 = vadd.f32 0.0, %v1458
    %1460 = vmatmul.f32.gmra.mxu0 %v629
    %v1461 = vpop.f32.mrf.mxu0
    %v1462 = vadd.f32 0.0, %v1461
    %1463 = vmatmul.f32.gmra.mxu0 %v632
    %v1464 = vpop.f32.mrf.mxu0
    %v1465 = vadd.f32 0.0, %v1464
    %1466 = vmatmul.f32.gmra.mxu0 %v635
    %v1467 = vpop.f32.mrf.mxu0
    %v1468 = vadd.f32 0.0, %v1467
    %1469 = vmatmul.f32.gmra.mxu0 %v638
    %v1470 = vpop.f32.mrf.mxu0
    %v1471 = vadd.f32 0.0, %v1470
    %1472 = vmatmul.f32.gmra.mxu0 %v641
    %v1473 = vpop.f32.mrf.mxu0
    %v1474 = vadd.f32 0.0, %v1473
    %1475 = vmatmul.f32.gmra.mxu0 %v644
    %v1476 = vpop.f32.mrf.mxu0
    %v1477 = vadd.f32 0.0, %v1476
    %1478 = vmatmul.f32.gmra.mxu0 %v647
    %v1479 = vpop.f32.mrf.mxu0
    %v1480 = vadd.f32 0.0, %v1479
    %1481 = vmatmul.f32.gmra.mxu0 %v650
    %v1482 = vpop.f32.mrf.mxu0
    %v1483 = vadd.f32 0.0, %v1482
    %1484 = vmatmul.f32.gmra.mxu0 %v653
    %v1485 = vpop.f32.mrf.mxu0
    %v1486 = vadd.f32 0.0, %v1485
    %1487 = vmatmul.f32.gmra.mxu0 %v656
    %v1488 = vpop.f32.mrf.mxu0
    %v1489 = vadd.f32 0.0, %v1488
    %1490 = vmatmul.f32.gmra.mxu0 %v659
    %v1491 = vpop.f32.mrf.mxu0
    %v1492 = vadd.f32 0.0, %v1491
    %1493 = vmatmul.f32.gmra.mxu0 %v662
    %v1494 = vpop.f32.mrf.mxu0
    %v1495 = vadd.f32 0.0, %v1494
    %1496 = vmatmul.f32.gmra.mxu0 %v665
    %v1497 = vpop.f32.mrf.mxu0
    %v1498 = vadd.f32 0.0, %v1497
    %1499 = vmatmul.f32.gmra.mxu0 %v668
    %v1500 = vpop.f32.mrf.mxu0
    %v1501 = vadd.f32 0.0, %v1500
    %1502 = vmatmul.f32.gmra.mxu0 %v671
    %v1503 = vpop.f32.mrf.mxu0
    %v1504 = vadd.f32 0.0, %v1503
    %1505 = vmatmul.f32.gmra.mxu0 %v674
    %v1506 = vpop.f32.mrf.mxu0
    %v1507 = vadd.f32 0.0, %v1506
    %1508 = vmatmul.f32.gmra.mxu0 %v677
    %v1509 = vpop.f32.mrf.mxu0
    %v1510 = vadd.f32 0.0, %v1509
    %1511 = vmatmul.f32.gmra.mxu0 %v680
    %v1512 = vpop.f32.mrf.mxu0
    %v1513 = vadd.f32 0.0, %v1512
    %1514 = vmatmul.f32.gmra.mxu0 %v683
    %v1515 = vpop.f32.mrf.mxu0
    %v1516 = vadd.f32 0.0, %v1515
    %1517 = vmatmul.f32.gmra.mxu0 %v686
    %v1518 = vpop.f32.mrf.mxu0
    %v1519 = vadd.f32 0.0, %v1518
    %1520 = vmatmul.f32.gmra.mxu0 %v689
    %v1521 = vpop.f32.mrf.mxu0
    %v1522 = vadd.f32 0.0, %v1521
    %1523 = vmatmul.f32.gmra.mxu0 %v692
    %v1524 = vpop.f32.mrf.mxu0
    %v1525 = vadd.f32 0.0, %v1524
    %1526 = vmatmul.f32.gmra.mxu0 %v695
    %v1527 = vpop.f32.mrf.mxu0
    %v1528 = vadd.f32 0.0, %v1527
    %1529 = vmatmul.f32.gmra.mxu0 %v698
    %v1530 = vpop.f32.mrf.mxu0
    %v1531 = vadd.f32 0.0, %v1530
    %1532 = vmatmul.f32.gmra.mxu0 %v701
    %v1533 = vpop.f32.mrf.mxu0
    %v1534 = vadd.f32 0.0, %v1533
    %1535 = vmatmul.f32.gmra.mxu0 %v704
    %v1536 = vpop.f32.mrf.mxu0
    %v1537 = vadd.f32 0.0, %v1536
    %1538 = vmatmul.f32.gmra.mxu0 %v707
    %v1539 = vpop.f32.mrf.mxu0
    %v1540 = vadd.f32 0.0, %v1539
    %1541 = vmatmul.f32.gmra.mxu0 %v710
    %v1542 = vpop.f32.mrf.mxu0
    %v1543 = vadd.f32 0.0, %v1542
    %1544 = vmatmul.f32.gmra.mxu0 %v713
    %v1545 = vpop.f32.mrf.mxu0
    %v1546 = vadd.f32 0.0, %v1545
    %1547 = vmatmul.f32.gmra.mxu0 %v716
    %v1548 = vpop.f32.mrf.mxu0
    %v1549 = vadd.f32 0.0, %v1548
    %1550 = vmatmul.f32.gmra.mxu0 %v719
    %v1551 = vpop.f32.mrf.mxu0
    %v1552 = vadd.f32 0.0, %v1551
    %1553 = vmatmul.f32.gmra.mxu0 %v722
    %v1554 = vpop.f32.mrf.mxu0
    %v1555 = vadd.f32 0.0, %v1554
    %1556 = vmatmul.f32.gmra.mxu0 %v725
    %v1557 = vpop.f32.mrf.mxu0
    %v1558 = vadd.f32 0.0, %v1557
    %1559 = vmatmul.f32.gmra.mxu0 %v728
    %v1560 = vpop.f32.mrf.mxu0
    %v1561 = vadd.f32 0.0, %v1560
    %1562 = vmatmul.f32.gmra.mxu0 %v731
    %v1563 = vpop.f32.mrf.mxu0
    %v1564 = vadd.f32 0.0, %v1563
    %1565 = vmatmul.f32.gmra.mxu0 %v734
    %v1566 = vpop.f32.mrf.mxu0
    %v1567 = vadd.f32 0.0, %v1566
    %1568 = vmatmul.f32.gmra.mxu0 %v737
    %v1569 = vpop.f32.mrf.mxu0
    %v1570 = vadd.f32 0.0, %v1569
    %1571 = vmatmul.f32.gmra.mxu0 %v740
    %v1572 = vpop.f32.mrf.mxu0
    %v1573 = vadd.f32 0.0, %v1572
    %1574 = vmatmul.f32.gmra.mxu0 %v743
    %v1575 = vpop.f32.mrf.mxu0
    %v1576 = vadd.f32 0.0, %v1575
    %1577 = vmatmul.f32.gmra.mxu0 %v746
    %v1578 = vpop.f32.mrf.mxu0
    %v1579 = vadd.f32 0.0, %v1578
    %1580 = vmatmul.f32.gmra.mxu0 %v749
    %v1581 = vpop.f32.mrf.mxu0
    %v1582 = vadd.f32 0.0, %v1581
    %1583 = vmatmul.f32.gmra.mxu0 %v752
    %v1584 = vpop.f32.mrf.mxu0
    %v1585 = vadd.f32 0.0, %v1584
    %1586 = vmatmul.f32.gmra.mxu0 %v755
    %v1587 = vpop.f32.mrf.mxu0
    %v1588 = vadd.f32 0.0, %v1587
    %1589 = vmatmul.f32.gmra.mxu0 %v758
    %v1590 = vpop.f32.mrf.mxu0
    %v1591 = vadd.f32 0.0, %v1590
    %1592 = vmatmul.f32.gmra.mxu0 %v761
    %v1593 = vpop.f32.mrf.mxu0
    %v1594 = vadd.f32 0.0, %v1593
    %1595 = vmatmul.f32.gmra.mxu0 %v764
    %v1596 = vpop.f32.mrf.mxu0
    %v1597 = vadd.f32 0.0, %v1596
    %1598 = vmatmul.f32.gmra.mxu0 %v767
    %v1599 = vpop.f32.mrf.mxu0
    %v1600 = vadd.f32 0.0, %v1599
    %1601 = vmatmul.f32.gmra.mxu0 %v770
    %v1602 = vpop.f32.mrf.mxu0
    %v1603 = vadd.f32 0.0, %v1602
    %1604 = vmatmul.f32.gmra.mxu0 %v773
    %v1605 = vpop.f32.mrf.mxu0
    %v1606 = vadd.f32 0.0, %v1605
    %1607 = vmatmul.f32.gmra.mxu0 %v776
    %v1608 = vpop.f32.mrf.mxu0
    %v1609 = vadd.f32 0.0, %v1608
    %1610 = vmatmul.f32.gmra.mxu0 %v779
    %v1611 = vpop.f32.mrf.mxu0
    %v1612 = vadd.f32 0.0, %v1611
    %1613 = vmatmul.f32.gmra.mxu0 %v782
    %v1614 = vpop.f32.mrf.mxu0
    %v1615 = vadd.f32 0.0, %v1614
    %1616 = vmatmul.f32.gmra.mxu0 %v785
    %v1617 = vpop.f32.mrf.mxu0
    %v1618 = vadd.f32 0.0, %v1617
    %1619 = vmatmul.f32.gmra.mxu0 %v788
    %v1620 = vpop.f32.mrf.mxu0
    %v1621 = vadd.f32 0.0, %v1620
    %1622 = vmatmul.f32.gmra.mxu0 %v791
    %v1623 = vpop.f32.mrf.mxu0
    %v1624 = vadd.f32 0.0, %v1623
    %1625 = vmatmul.f32.gmra.mxu0 %v794
    %v1626 = vpop.f32.mrf.mxu0
    %v1627 = vadd.f32 0.0, %v1626
    %1628 = vmatmul.f32.gmra.mxu0 %v797
    %v1629 = vpop.f32.mrf.mxu0
    %v1630 = vadd.f32 0.0, %v1629
    %1631 = vmatmul.f32.gmra.mxu0 %v800
    %v1632 = vpop.f32.mrf.mxu0
    %v1633 = vadd.f32 0.0, %v1632
    %1634 = vmatmul.f32.gmra.mxu0 %v803
    %v1635 = vpop.f32.mrf.mxu0
    %v1636 = vadd.f32 0.0, %v1635
    %1637 = vmatmul.f32.gmra.mxu0 %v806
    %v1638 = vpop.f32.mrf.mxu0
    %v1639 = vadd.f32 0.0, %v1638
    %1640 = vmatmul.f32.gmra.mxu0 %v809
    %v1641 = vpop.f32.mrf.mxu0
    %v1642 = vadd.f32 0.0, %v1641
    %1643 = vmatmul.f32.gmra.mxu0 %v812
    %v1644 = vpop.f32.mrf.mxu0
    %v1645 = vadd.f32 0.0, %v1644
    %1646 = vmatmul.f32.gmra.mxu0 %v815
    %v1647 = vpop.f32.mrf.mxu0
    %v1648 = vadd.f32 0.0, %v1647
    %1649 = vmatmul.f32.gmra.mxu0 %v818
    %v1650 = vpop.f32.mrf.mxu0
    %v1651 = vadd.f32 0.0, %v1650
    %1652 = vmatmul.f32.gmra.mxu0 %v821
    %v1653 = vpop.f32.mrf.mxu0
    %v1654 = vadd.f32 0.0, %v1653
    %1655 = vmatmul.f32.gmra.mxu0 %v824
    %v1656 = vpop.f32.mrf.mxu0
    %v1657 = vadd.f32 0.0, %v1656
    %1658 = vmatmul.f32.gmra.mxu0 %v827
    %v1659 = vpop.f32.mrf.mxu0
    %v1660 = vadd.f32 0.0, %v1659
    %1661 = vmatmul.f32.gmra.mxu0 %v830
    %v1662 = vpop.f32.mrf.mxu0
    %v1663 = vadd.f32 0.0, %v1662
    %1664 = vmatmul.f32.gmra.mxu0 %v833
    %v1665 = vpop.f32.mrf.mxu0
    %v1666 = vadd.f32 0.0, %v1665
    %1667 = vmatmul.f32.gmra.mxu0 %v836
    %v1668 = vpop.f32.mrf.mxu0
    %v1669 = vadd.f32 0.0, %v1668
    %1670 = vmatmul.f32.gmra.mxu0 %v839
    %v1671 = vpop.f32.mrf.mxu0
    %v1672 = vadd.f32 0.0, %v1671
    %1673 = vmatmul.f32.gmra.mxu0 %v842
    %v1674 = vpop.f32.mrf.mxu0
    %v1675 = vadd.f32 0.0, %v1674
    %1676 = vmatmul.f32.gmra.mxu0 %v845
    %v1677 = vpop.f32.mrf.mxu0
    %v1678 = vadd.f32 0.0, %v1677
    %1679 = vmatmul.f32.gmra.mxu0 %v848
    %v1680 = vpop.f32.mrf.mxu0
    %v1681 = vadd.f32 0.0, %v1680
    %1682 = vmatmul.f32.gmra.mxu0 %v851
    %v1683 = vpop.f32.mrf.mxu0
    %v1684 = vadd.f32 0.0, %v1683
    %1685 = vmatmul.f32.gmra.mxu0 %v854
    %v1686 = vpop.f32.mrf.mxu0
    %v1687 = vadd.f32 0.0, %v1686
    %1688 = vmatmul.f32.gmra.mxu0 %v857
    %v1689 = vpop.f32.mrf.mxu0
    %v1690 = vadd.f32 0.0, %v1689
    %1691 = vmatmul.f32.gmra.mxu0 %v860
    %v1692 = vpop.f32.mrf.mxu0
    %v1693 = vadd.f32 0.0, %v1692
    %1694 = vmatmul.f32.gmra.mxu0 %v863
    %v1695 = vpop.f32.mrf.mxu0
    %v1696 = vadd.f32 0.0, %v1695
    %1697 = vmatmul.f32.gmra.mxu0 %v866
    %v1698 = vpop.f32.mrf.mxu0
    %v1699 = vadd.f32 0.0, %v1698
    %1700 = vmatmul.f32.gmra.mxu0 %v869
    %v1701 = vpop.f32.mrf.mxu0
    %v1702 = vadd.f32 0.0, %v1701
    %1703 = vmatmul.f32.gmra.mxu0 %v872
    %v1704 = vpop.f32.mrf.mxu0
    %v1705 = vadd.f32 0.0, %v1704
    %1706 = vmatmul.f32.gmra.mxu0 %v875
    %v1707 = vpop.f32.mrf.mxu0
    %v1708 = vadd.f32 0.0, %v1707
    %1709 = vmatmul.f32.gmra.mxu0 %v878
    %v1710 = vpop.f32.mrf.mxu0
    %v1711 = vadd.f32 0.0, %v1710
    %1712 = vmatmul.f32.gmra.mxu0 %v881
    %v1713 = vpop.f32.mrf.mxu0
    %v1714 = vadd.f32 0.0, %v1713
    %1715 = vmatmul.f32.gmra.mxu0 %v884
    %v1716 = vpop.f32.mrf.mxu0
    %v1717 = vadd.f32 0.0, %v1716
    %1718 = vmatmul.f32.gmra.mxu0 %v887
    %v1719 = vpop.f32.mrf.mxu0
    %v1720 = vadd.f32 0.0, %v1719
    %1721 = vmatmul.f32.gmra.mxu0 %v890
    %v1722 = vpop.f32.mrf.mxu0
    %v1723 = vadd.f32 0.0, %v1722
    %1724 = vmatmul.f32.gmra.mxu0 %v893
    %v1725 = vpop.f32.mrf.mxu0
    %v1726 = vadd.f32 0.0, %v1725
    %1727 = vmatmul.f32.gmra.mxu0 %v896
    %v1728 = vpop.f32.mrf.mxu0
    %v1729 = vadd.f32 0.0, %v1728
    %1730 = vmatmul.f32.gmra.mxu0 %v899
    %v1731 = vpop.f32.mrf.mxu0
    %v1732 = vadd.f32 0.0, %v1731
    %1733 = vmatmul.f32.gmra.mxu0 %v902
    %v1734 = vpop.f32.mrf.mxu0
    %v1735 = vadd.f32 0.0, %v1734
    %1736 = vmatmul.f32.gmra.mxu0 %v905
    %v1737 = vpop.f32.mrf.mxu0
    %v1738 = vadd.f32 0.0, %v1737
    %1739 = vmatmul.f32.gmra.mxu0 %v908
    %v1740 = vpop.f32.mrf.mxu0
    %v1741 = vadd.f32 0.0, %v1740
    %1742 = vmatmul.f32.gmra.mxu0 %v911
    %v1743 = vpop.f32.mrf.mxu0
    %v1744 = vadd.f32 0.0, %v1743
    %1745 = vmatmul.f32.gmra.mxu0 %v914
    %v1746 = vpop.f32.mrf.mxu0
    %v1747 = vadd.f32 0.0, %v1746
    %1748 = vmatmul.f32.gmra.mxu0 %v917
    %v1749 = vpop.f32.mrf.mxu0
    %v1750 = vadd.f32 0.0, %v1749
    %1751 = vmatmul.f32.gmra.mxu0 %v920
    %v1752 = vpop.f32.mrf.mxu0
    %v1753 = vadd.f32 0.0, %v1752
    %1754 = vmatmul.f32.gmra.mxu0 %v923
    %v1755 = vpop.f32.mrf.mxu0
    %v1756 = vadd.f32 0.0, %v1755
    %1757 = vmatmul.f32.gmra.mxu0 %v926
    %v1758 = vpop.f32.mrf.mxu0
    %v1759 = vadd.f32 0.0, %v1758
    %1760 = vmatmul.f32.gmra.mxu0 %v929
    %v1761 = vpop.f32.mrf.mxu0
    %v1762 = vadd.f32 0.0, %v1761
    %1763 = vmatmul.f32.gmra.mxu0 %v932
    %v1764 = vpop.f32.mrf.mxu0
    %v1765 = vadd.f32 0.0, %v1764
    %1766 = vmatmul.f32.gmra.mxu0 %v935
    %v1767 = vpop.f32.mrf.mxu0
    %v1768 = vadd.f32 0.0, %v1767
    %1769 = vmatmul.f32.gmra.mxu0 %v938
    %v1770 = vpop.f32.mrf.mxu0
    %v1771 = vadd.f32 0.0, %v1770
    %1772 = vmatmul.f32.gmra.mxu0 %v941
    %v1773 = vpop.f32.mrf.mxu0
    %v1774 = vadd.f32 0.0, %v1773
    %1775 = vmatmul.f32.gmra.mxu0 %v944
    %v1776 = vpop.f32.mrf.mxu0
    %v1777 = vadd.f32 0.0, %v1776
    %1778 = vmatmul.f32.gmra.mxu0 %v947
    %v1779 = vpop.f32.mrf.mxu0
    %v1780 = vadd.f32 0.0, %v1779
    %1781 = vmatmul.f32.gmra.mxu0 %v950
    %v1782 = vpop.f32.mrf.mxu0
    %v1783 = vadd.f32 0.0, %v1782
    %1784 = vmatmul.f32.gmra.mxu0 %v953
    %v1785 = vpop.f32.mrf.mxu0
    %v1786 = vadd.f32 0.0, %v1785
    %1787 = vmatmul.f32.gmra.mxu0 %v956
    %v1788 = vpop.f32.mrf.mxu0
    %v1789 = vadd.f32 0.0, %v1788
    %1790 = vmatmul.f32.gmra.mxu0 %v959
    %v1791 = vpop.f32.mrf.mxu0
    %v1792 = vadd.f32 0.0, %v1791
    %1793 = vmatmul.f32.gmra.mxu0 %v962
    %v1794 = vpop.f32.mrf.mxu0
    %v1795 = vadd.f32 0.0, %v1794
    %1796 = vmatmul.f32.gmra.mxu0 %v965
    %v1797 = vpop.f32.mrf.mxu0
    %v1798 = vadd.f32 0.0, %v1797
    %1799 = vmatmul.f32.gmra.mxu0 %v968
    %v1800 = vpop.f32.mrf.mxu0
    %v1801 = vadd.f32 0.0, %v1800
    %1802 = vmatmul.f32.gmra.mxu0 %v971
    %v1803 = vpop.f32.mrf.mxu0
    %v1804 = vadd.f32 0.0, %v1803
    %1805 = vmatmul.f32.gmra.mxu0 %v974
    %v1806 = vpop.f32.mrf.mxu0
    %v1807 = vadd.f32 0.0, %v1806
    %1808 = vmatmul.f32.gmra.mxu0 %v977
    %v1809 = vpop.f32.mrf.mxu0
    %v1810 = vadd.f32 0.0, %v1809
    %1811 = vmatmul.f32.gmra.mxu0 %v980
    %v1812 = vpop.f32.mrf.mxu0
    %v1813 = vadd.f32 0.0, %v1812
    %1814 = vmatmul.f32.gmra.mxu0 %v983
    %v1815 = vpop.f32.mrf.mxu0
    %v1816 = vadd.f32 0.0, %v1815
    %1817 = vmatmul.f32.gmra.mxu0 %v986
    %v1818 = vpop.f32.mrf.mxu0
    %v1819 = vadd.f32 0.0, %v1818
    %1820 = vmatmul.f32.gmra.mxu0 %v989
    %v1821 = vpop.f32.mrf.mxu0
    %v1822 = vadd.f32 0.0, %v1821
    %1823 = vmatmul.f32.gmra.mxu0 %v992
    %v1824 = vpop.f32.mrf.mxu0
    %v1825 = vadd.f32 0.0, %v1824
    %1826 = vmatmul.f32.gmra.mxu0 %v995
    %v1827 = vpop.f32.mrf.mxu0
    %v1828 = vadd.f32 0.0, %v1827
    %1829 = vmatmul.f32.gmra.mxu0 %v998
    %v1830 = vpop.f32.mrf.mxu0
    %v1831 = vadd.f32 0.0, %v1830
    %1832 = vmatmul.f32.gmra.mxu0 %v1001
    %v1833 = vpop.f32.mrf.mxu0
    %v1834 = vadd.f32 0.0, %v1833
    %1835 = vmatmul.f32.gmra.mxu0 %v1004
    %v1836 = vpop.f32.mrf.mxu0
    %v1837 = vadd.f32 0.0, %v1836
    %1838 = vmatmul.f32.gmra.mxu0 %v1007
    %v1839 = vpop.f32.mrf.mxu0
    %v1840 = vadd.f32 0.0, %v1839
    %1841 = vmatmul.f32.gmra.mxu0 %v1010
    %v1842 = vpop.f32.mrf.mxu0
    %v1843 = vadd.f32 0.0, %v1842
    %1844 = vmatmul.f32.gmra.mxu0 %v1013
    %v1845 = vpop.f32.mrf.mxu0
    %v1846 = vadd.f32 0.0, %v1845
    %1847 = vmatmul.f32.gmra.mxu0 %v1016
    %v1848 = vpop.f32.mrf.mxu0
    %v1849 = vadd.f32 0.0, %v1848
    %1850 = vmatmul.f32.gmra.mxu0 %v1019
    %v1851 = vpop.f32.mrf.mxu0
    %v1852 = vadd.f32 0.0, %v1851
    %1853 = vmatmul.f32.gmra.mxu0 %v1022
    %v1854 = vpop.f32.mrf.mxu0
    %v1855 = vadd.f32 0.0, %v1854
    %1856 = vmatmul.f32.gmra.mxu0 %v1025
    %v1857 = vpop.f32.mrf.mxu0
    %v1858 = vadd.f32 0.0, %v1857
    %1859 = vmatmul.f32.gmra.mxu0 %v1028
    %v1860 = vpop.f32.mrf.mxu0
    %v1861 = vadd.f32 0.0, %v1860
    %1862 = vmatmul.f32.gmra.mxu0 %v1031
    %v1863 = vpop.f32.mrf.mxu0
    %v1864 = vadd.f32 0.0, %v1863
    %1865 = vmatmul.f32.gmra.mxu0 %v1034
    %v1866 = vpop.f32.mrf.mxu0
    %v1867 = vadd.f32 0.0, %v1866
    %1868 = vmatmul.f32.gmra.mxu0 %v1037
    %v1869 = vpop.f32.mrf.mxu0
    %v1870 = vadd.f32 0.0, %v1869
    %1871 = vmatmul.f32.gmra.mxu0 %v1040
    %v1872 = vpop.f32.mrf.mxu0
    %v1873 = vadd.f32 0.0, %v1872
    %1874 = vmatmul.f32.gmra.mxu0 %v1043
    %v1875 = vpop.f32.mrf.mxu0
    %v1876 = vadd.f32 0.0, %v1875
    %1877 = vmatmul.f32.gmra.mxu0 %v1046
    %v1878 = vpop.f32.mrf.mxu0
    %v1879 = vadd.f32 0.0, %v1878
    %1880 = vmatmul.f32.gmra.mxu0 %v1049
    %v1881 = vpop.f32.mrf.mxu0
    %v1882 = vadd.f32 0.0, %v1881
    %1883 = vmatmul.f32.gmra.mxu0 %v1052
    %v1884 = vpop.f32.mrf.mxu0
    %v1885 = vadd.f32 0.0, %v1884
    %1886 = vmatmul.f32.gmra.mxu0 %v1055
    %v1887 = vpop.f32.mrf.mxu0
    %v1888 = vadd.f32 0.0, %v1887
    %1889 = vmatmul.f32.gmra.mxu0 %v1058
    %v1890 = vpop.f32.mrf.mxu0
    %v1891 = vadd.f32 0.0, %v1890
    %1892 = vmatmul.f32.gmra.mxu0 %v1061
    %v1893 = vpop.f32.mrf.mxu0
    %v1894 = vadd.f32 0.0, %v1893
    %1895 = vmatmul.f32.gmra.mxu0 %v1064
    %v1896 = vpop.f32.mrf.mxu0
    %v1897 = vadd.f32 0.0, %v1896
    %1898 = vmatmul.f32.gmra.mxu0 %v1067
    %v1899 = vpop.f32.mrf.mxu0
    %v1900 = vadd.f32 0.0, %v1899
    %1901 = vmatmul.f32.gmra.mxu0 %v1070
    %v1902 = vpop.f32.mrf.mxu0
    %v1903 = vadd.f32 0.0, %v1902
    %1904 = vmatmul.f32.gmra.mxu0 %v1073
    %v1905 = vpop.f32.mrf.mxu0
    %v1906 = vadd.f32 0.0, %v1905
    %1907 = vmatmul.f32.gmra.mxu0 %v1076
    %v1908 = vpop.f32.mrf.mxu0
    %v1909 = vadd.f32 0.0, %v1908
    %1910 = vmatmul.f32.gmra.mxu0 %v1079
    %v1911 = vpop.f32.mrf.mxu0
    %v1912 = vadd.f32 0.0, %v1911
    %1913 = vmatmul.f32.gmra.mxu0 %v1082
    %v1914 = vpop.f32.mrf.mxu0
    %v1915 = vadd.f32 0.0, %v1914
    %1916 = vmatmul.f32.gmra.mxu0 %v1085
    %v1917 = vpop.f32.mrf.mxu0
    %v1918 = vadd.f32 0.0, %v1917
    %1919 = vmatmul.f32.gmra.mxu0 %v1088
    %v1920 = vpop.f32.mrf.mxu0
    %v1921 = vadd.f32 0.0, %v1920
    %1922 = vmatmul.f32.gmra.mxu0 %v1091
    %v1923 = vpop.f32.mrf.mxu0
    %v1924 = vadd.f32 0.0, %v1923
    %1925 = vmatmul.f32.gmra.mxu0 %v1094
    %v1926 = vpop.f32.mrf.mxu0
    %v1927 = vadd.f32 0.0, %v1926
    %1928 = vmatmul.f32.gmra.mxu0 %v1097
    %v1929 = vpop.f32.mrf.mxu0
    %v1930 = vadd.f32 0.0, %v1929
    %1931 = vmatmul.f32.gmra.mxu0 %v1100
    %v1932 = vpop.f32.mrf.mxu0
    %v1933 = vadd.f32 0.0, %v1932
    %1934 = vmatmul.f32.gmra.mxu0 %v1103
    %v1935 = vpop.f32.mrf.mxu0
    %v1936 = vadd.f32 0.0, %v1935
    %1937 = vmatmul.f32.gmra.mxu0 %v1106
    %v1938 = vpop.f32.mrf.mxu0
    %v1939 = vadd.f32 0.0, %v1938
    %1940 = vmatmul.f32.gmra.mxu0 %v1109
    %v1941 = vpop.f32.mrf.mxu0
    %v1942 = vadd.f32 0.0, %v1941
    %1943 = vmatmul.f32.gmra.mxu0 %v1112
    %v1944 = vpop.f32.mrf.mxu0
    %v1945 = vadd.f32 0.0, %v1944
    %1946 = vmatmul.f32.gmra.mxu0 %v1115
    %v1947 = vpop.f32.mrf.mxu0
    %v1948 = vadd.f32 0.0, %v1947
    %1949 = vmatmul.f32.gmra.mxu0 %v1118
    %v1950 = vpop.f32.mrf.mxu0
    %v1951 = vadd.f32 0.0, %v1950
    %1952 = vdwg.mxu0
    %vm1953 = vcmask 130048
    %1954 = vst.msk [vmem:[#allocation2] sm:$0xff] %vm1953, %v1138
    %1955 = vst.msk [vmem:[#allocation2 + $0x8] sm:$0xff] %vm1953, %v1141
    %1956 = vst.msk [vmem:[#allocation2 + $0x10] sm:$0xff] %vm1953, %v1144
    %1957 = vst.msk [vmem:[#allocation2 + $0x18] sm:$0xff] %vm1953, %v1147
    %1958 = vst.msk [vmem:[#allocation2 + $0x20] sm:$0xff] %vm1953, %v1150
    %1959 = vst.msk [vmem:[#allocation2 + $0x28] sm:$0xff] %vm1953, %v1153
    %1960 = vst.msk [vmem:[#allocation2 + $0x30] sm:$0xff] %vm1953, %v1156
    %1961 = vst.msk [vmem:[#allocation2 + $0x38] sm:$0xff] %vm1953, %v1159
    %1962 = vst.msk [vmem:[#allocation2 + $0x40] sm:$0xff] %vm1953, %v1162
    %1963 = vst.msk [vmem:[#allocation2 + $0x48] sm:$0xff] %vm1953, %v1165
    %1964 = vst.msk [vmem:[#allocation2 + $0x50] sm:$0xff] %vm1953, %v1168
    %1965 = vst.msk [vmem:[#allocation2 + $0x58] sm:$0xff] %vm1953, %v1171
    %1966 = vst.msk [vmem:[#allocation2 + $0x60] sm:$0xff] %vm1953, %v1174
    %1967 = vst.msk [vmem:[#allocation2 + $0x68] sm:$0xff] %vm1953, %v1177
    %1968 = vst.msk [vmem:[#allocation2 + $0x70] sm:$0xff] %vm1953, %v1180
    %1969 = vst.msk [vmem:[#allocation2 + $0x78] sm:$0xff] %vm1953, %v1183
    %1970 = vst.msk [vmem:[#allocation2 + $0x80] sm:$0xff] %vm1953, %v1186
    %1971 = vst.msk [vmem:[#allocation2 + $0x88] sm:$0xff] %vm1953, %v1189
    %1972 = vst.msk [vmem:[#allocation2 + $0x90] sm:$0xff] %vm1953, %v1192
    %1973 = vst.msk [vmem:[#allocation2 + $0x98] sm:$0xff] %vm1953, %v1195
    %1974 = vst.msk [vmem:[#allocation2 + $0xa0] sm:$0xff] %vm1953, %v1198
    %1975 = vst.msk [vmem:[#allocation2 + $0xa8] sm:$0xff] %vm1953, %v1201
    %1976 = vst.msk [vmem:[#allocation2 + $0xb0] sm:$0xff] %vm1953, %v1204
    %1977 = vst.msk [vmem:[#allocation2 + $0xb8] sm:$0xff] %vm1953, %v1207
    %1978 = vst.msk [vmem:[#allocation2 + $0xc0] sm:$0xff] %vm1953, %v1210
    %1979 = vst.msk [vmem:[#allocation2 + $0xc8] sm:$0xff] %vm1953, %v1213
    %1980 = vst.msk [vmem:[#allocation2 + $0xd0] sm:$0xff] %vm1953, %v1216
    %1981 = vst.msk [vmem:[#allocation2 + $0xd8] sm:$0xff] %vm1953, %v1219
    %1982 = vst.msk [vmem:[#allocation2 + $0xe0] sm:$0xff] %vm1953, %v1222
    %1983 = vst.msk [vmem:[#allocation2 + $0xe8] sm:$0xff] %vm1953, %v1225
    %1984 = vst.msk [vmem:[#allocation2 + $0xf0] sm:$0xff] %vm1953, %v1228
    %1985 = vst.msk [vmem:[#allocation2 + $0xf8] sm:$0xff] %vm1953, %v1231
    %1986 = vst.msk [vmem:[#allocation2 + $0x100] sm:$0xff] %vm1953, %v1234
    %1987 = vst.msk [vmem:[#allocation2 + $0x108] sm:$0xff] %vm1953, %v1237
    %1988 = vst.msk [vmem:[#allocation2 + $0x110] sm:$0xff] %vm1953, %v1240
    %1989 = vst.msk [vmem:[#allocation2 + $0x118] sm:$0xff] %vm1953, %v1243
    %1990 = vst.msk [vmem:[#allocation2 + $0x120] sm:$0xff] %vm1953, %v1246
    %1991 = vst.msk [vmem:[#allocation2 + $0x128] sm:$0xff] %vm1953, %v1249
    %1992 = vst.msk [vmem:[#allocation2 + $0x130] sm:$0xff] %vm1953, %v1252
    %1993 = vst.msk [vmem:[#allocation2 + $0x138] sm:$0xff] %vm1953, %v1255
    %1994 = vst.msk [vmem:[#allocation2 + $0x140] sm:$0xff] %vm1953, %v1258
    %1995 = vst.msk [vmem:[#allocation2 + $0x148] sm:$0xff] %vm1953, %v1261
    %1996 = vst.msk [vmem:[#allocation2 + $0x150] sm:$0xff] %vm1953, %v1264
    %1997 = vst.msk [vmem:[#allocation2 + $0x158] sm:$0xff] %vm1953, %v1267
    %1998 = vst.msk [vmem:[#allocation2 + $0x160] sm:$0xff] %vm1953, %v1270
    %1999 = vst.msk [vmem:[#allocation2 + $0x168] sm:$0xff] %vm1953, %v1273
    %2000 = vst.msk [vmem:[#allocation2 + $0x170] sm:$0xff] %vm1953, %v1276
    %2001 = vst.msk [vmem:[#allocation2 + $0x178] sm:$0xff] %vm1953, %v1279
    %2002 = vst.msk [vmem:[#allocation2 + $0x180] sm:$0xff] %vm1953, %v1282
    %2003 = vst.msk [vmem:[#allocation2 + $0x188] sm:$0xff] %vm1953, %v1285
    %2004 = vst.msk [vmem:[#allocation2 + $0x190] sm:$0xff] %vm1953, %v1288
    %2005 = vst.msk [vmem:[#allocation2 + $0x198] sm:$0xff] %vm1953, %v1291
    %2006 = vst.msk [vmem:[#allocation2 + $0x1a0] sm:$0xff] %vm1953, %v1294
    %2007 = vst.msk [vmem:[#allocation2 + $0x1a8] sm:$0xff] %vm1953, %v1297
    %2008 = vst.msk [vmem:[#allocation2 + $0x1b0] sm:$0xff] %vm1953, %v1300
    %2009 = vst.msk [vmem:[#allocation2 + $0x1b8] sm:$0xff] %vm1953, %v1303
    %2010 = vst.msk [vmem:[#allocation2 + $0x1c0] sm:$0xff] %vm1953, %v1306
    %2011 = vst.msk [vmem:[#allocation2 + $0x1c8] sm:$0xff] %vm1953, %v1309
    %2012 = vst.msk [vmem:[#allocation2 + $0x1d0] sm:$0xff] %vm1953, %v1312
    %2013 = vst.msk [vmem:[#allocation2 + $0x1d8] sm:$0xff] %vm1953, %v1315
    %2014 = vst.msk [vmem:[#allocation2 + $0x1e0] sm:$0xff] %vm1953, %v1318
    %2015 = vst.msk [vmem:[#allocation2 + $0x1e8] sm:$0xff] %vm1953, %v1321
    %2016 = vst.msk [vmem:[#allocation2 + $0x1f0] sm:$0xff] %vm1953, %v1324
    %2017 = vst.msk [vmem:[#allocation2 + $0x1f8] sm:$0xff] %vm1953, %v1327
    %2018 = vst.msk [vmem:[#allocation2 + $0x200] sm:$0xff] %vm1953, %v1330
    %2019 = vst.msk [vmem:[#allocation2 + $0x208] sm:$0xff] %vm1953, %v1333
    %2020 = vst.msk [vmem:[#allocation2 + $0x210] sm:$0xff] %vm1953, %v1336
    %2021 = vst.msk [vmem:[#allocation2 + $0x218] sm:$0xff] %vm1953, %v1339
    %2022 = vst.msk [vmem:[#allocation2 + $0x220] sm:$0xff] %vm1953, %v1342
    %2023 = vst.msk [vmem:[#allocation2 + $0x228] sm:$0xff] %vm1953, %v1345
    %2024 = vst.msk [vmem:[#allocation2 + $0x230] sm:$0xff] %vm1953, %v1348
    %2025 = vst.msk [vmem:[#allocation2 + $0x238] sm:$0xff] %vm1953, %v1351
    %2026 = vst.msk [vmem:[#allocation2 + $0x240] sm:$0xff] %vm1953, %v1354
    %2027 = vst.msk [vmem:[#allocation2 + $0x248] sm:$0xff] %vm1953, %v1357
    %2028 = vst.msk [vmem:[#allocation2 + $0x250] sm:$0xff] %vm1953, %v1360
    %2029 = vst.msk [vmem:[#allocation2 + $0x258] sm:$0xff] %vm1953, %v1363
    %2030 = vst.msk [vmem:[#allocation2 + $0x260] sm:$0xff] %vm1953, %v1366
    %2031 = vst.msk [vmem:[#allocation2 + $0x268] sm:$0xff] %vm1953, %v1369
    %2032 = vst.msk [vmem:[#allocation2 + $0x270] sm:$0xff] %vm1953, %v1372
    %2033 = vst.msk [vmem:[#allocation2 + $0x278] sm:$0xff] %vm1953, %v1375
    %2034 = vst.msk [vmem:[#allocation2 + $0x280] sm:$0xff] %vm1953, %v1378
    %2035 = vst.msk [vmem:[#allocation2 + $0x288] sm:$0xff] %vm1953, %v1381
    %2036 = vst.msk [vmem:[#allocation2 + $0x290] sm:$0xff] %vm1953, %v1384
    %2037 = vst.msk [vmem:[#allocation2 + $0x298] sm:$0xff] %vm1953, %v1387
    %2038 = vst.msk [vmem:[#allocation2 + $0x2a0] sm:$0xff] %vm1953, %v1390
    %2039 = vst.msk [vmem:[#allocation2 + $0x2a8] sm:$0xff] %vm1953, %v1393
    %2040 = vst.msk [vmem:[#allocation2 + $0x2b0] sm:$0xff] %vm1953, %v1396
    %2041 = vst.msk [vmem:[#allocation2 + $0x2b8] sm:$0xff] %vm1953, %v1399
    %2042 = vst.msk [vmem:[#allocation2 + $0x2c0] sm:$0xff] %vm1953, %v1402
    %2043 = vst.msk [vmem:[#allocation2 + $0x2c8] sm:$0xff] %vm1953, %v1405
    %2044 = vst.msk [vmem:[#allocation2 + $0x2d0] sm:$0xff] %vm1953, %v1408
    %2045 = vst.msk [vmem:[#allocation2 + $0x2d8] sm:$0xff] %vm1953, %v1411
    %2046 = vst.msk [vmem:[#allocation2 + $0x2e0] sm:$0xff] %vm1953, %v1414
    %2047 = vst.msk [vmem:[#allocation2 + $0x2e8] sm:$0xff] %vm1953, %v1417
    %2048 = vst.msk [vmem:[#allocation2 + $0x2f0] sm:$0xff] %vm1953, %v1420
    %2049 = vst.msk [vmem:[#allocation2 + $0x2f8] sm:$0xff] %vm1953, %v1423
    %2050 = vst.msk [vmem:[#allocation2 + $0x300] sm:$0xff] %vm1953, %v1426
    %2051 = vst.msk [vmem:[#allocation2 + $0x308] sm:$0xff] %vm1953, %v1429
    %2052 = vst.msk [vmem:[#allocation2 + $0x310] sm:$0xff] %vm1953, %v1432
    %2053 = vst.msk [vmem:[#allocation2 + $0x318] sm:$0xff] %vm1953, %v1435
    %2054 = vst.msk [vmem:[#allocation2 + $0x320] sm:$0xff] %vm1953, %v1438
    %2055 = vst.msk [vmem:[#allocation2 + $0x328] sm:$0xff] %vm1953, %v1441
    %2056 = vst.msk [vmem:[#allocation2 + $0x330] sm:$0xff] %vm1953, %v1444
    %2057 = vst.msk [vmem:[#allocation2 + $0x338] sm:$0xff] %vm1953, %v1447
    %2058 = vst.msk [vmem:[#allocation2 + $0x340] sm:$0xff] %vm1953, %v1450
    %2059 = vst.msk [vmem:[#allocation2 + $0x348] sm:$0xff] %vm1953, %v1453
    %2060 = vst.msk [vmem:[#allocation2 + $0x350] sm:$0xff] %vm1953, %v1456
    %2061 = vst.msk [vmem:[#allocation2 + $0x358] sm:$0xff] %vm1953, %v1459
    %2062 = vst.msk [vmem:[#allocation2 + $0x360] sm:$0xff] %vm1953, %v1462
    %2063 = vst.msk [vmem:[#allocation2 + $0x368] sm:$0xff] %vm1953, %v1465
    %2064 = vst.msk [vmem:[#allocation2 + $0x370] sm:$0xff] %vm1953, %v1468
    %2065 = vst.msk [vmem:[#allocation2 + $0x378] sm:$0xff] %vm1953, %v1471
    %2066 = vst.msk [vmem:[#allocation2 + $0x380] sm:$0xff] %vm1953, %v1474
    %2067 = vst.msk [vmem:[#allocation2 + $0x388] sm:$0xff] %vm1953, %v1477
    %2068 = vst.msk [vmem:[#allocation2 + $0x390] sm:$0xff] %vm1953, %v1480
    %2069 = vst.msk [vmem:[#allocation2 + $0x398] sm:$0xff] %vm1953, %v1483
    %2070 = vst.msk [vmem:[#allocation2 + $0x3a0] sm:$0xff] %vm1953, %v1486
    %2071 = vst.msk [vmem:[#allocation2 + $0x3a8] sm:$0xff] %vm1953, %v1489
    %2072 = vst.msk [vmem:[#allocation2 + $0x3b0] sm:$0xff] %vm1953, %v1492
    %2073 = vst.msk [vmem:[#allocation2 + $0x3b8] sm:$0xff] %vm1953, %v1495
    %2074 = vst.msk [vmem:[#allocation2 + $0x3c0] sm:$0xff] %vm1953, %v1498
    %2075 = vst.msk [vmem:[#allocation2 + $0x3c8] sm:$0xff] %vm1953, %v1501
    %2076 = vst.msk [vmem:[#allocation2 + $0x3d0] sm:$0xff] %vm1953, %v1504
    %2077 = vst.msk [vmem:[#allocation2 + $0x3d8] sm:$0xff] %vm1953, %v1507
    %2078 = vst.msk [vmem:[#allocation2 + $0x3e0] sm:$0xff] %vm1953, %v1510
    %2079 = vst.msk [vmem:[#allocation2 + $0x3e8] sm:$0xff] %vm1953, %v1513
    %2080 = vst.msk [vmem:[#allocation2 + $0x3f0] sm:$0xff] %vm1953, %v1516
    %2081 = vst.msk [vmem:[#allocation2 + $0x3f8] sm:$0xff] %vm1953, %v1519
    %2082 = vst.msk [vmem:[#allocation2 + $0x400] sm:$0xff] %vm1953, %v1522
    %2083 = vst.msk [vmem:[#allocation2 + $0x408] sm:$0xff] %vm1953, %v1525
    %2084 = vst.msk [vmem:[#allocation2 + $0x410] sm:$0xff] %vm1953, %v1528
    %2085 = vst.msk [vmem:[#allocation2 + $0x418] sm:$0xff] %vm1953, %v1531
    %2086 = vst.msk [vmem:[#allocation2 + $0x420] sm:$0xff] %vm1953, %v1534
    %2087 = vst.msk [vmem:[#allocation2 + $0x428] sm:$0xff] %vm1953, %v1537
    %2088 = vst.msk [vmem:[#allocation2 + $0x430] sm:$0xff] %vm1953, %v1540
    %2089 = vst.msk [vmem:[#allocation2 + $0x438] sm:$0xff] %vm1953, %v1543
    %2090 = vst.msk [vmem:[#allocation2 + $0x440] sm:$0xff] %vm1953, %v1546
    %2091 = vst.msk [vmem:[#allocation2 + $0x448] sm:$0xff] %vm1953, %v1549
    %2092 = vst.msk [vmem:[#allocation2 + $0x450] sm:$0xff] %vm1953, %v1552
    %2093 = vst.msk [vmem:[#allocation2 + $0x458] sm:$0xff] %vm1953, %v1555
    %2094 = vst.msk [vmem:[#allocation2 + $0x460] sm:$0xff] %vm1953, %v1558
    %2095 = vst.msk [vmem:[#allocation2 + $0x468] sm:$0xff] %vm1953, %v1561
    %2096 = vst.msk [vmem:[#allocation2 + $0x470] sm:$0xff] %vm1953, %v1564
    %2097 = vst.msk [vmem:[#allocation2 + $0x478] sm:$0xff] %vm1953, %v1567
    %2098 = vst.msk [vmem:[#allocation2 + $0x480] sm:$0xff] %vm1953, %v1570
    %2099 = vst.msk [vmem:[#allocation2 + $0x488] sm:$0xff] %vm1953, %v1573
    %2100 = vst.msk [vmem:[#allocation2 + $0x490] sm:$0xff] %vm1953, %v1576
    %2101 = vst.msk [vmem:[#allocation2 + $0x498] sm:$0xff] %vm1953, %v1579
    %2102 = vst.msk [vmem:[#allocation2 + $0x4a0] sm:$0xff] %vm1953, %v1582
    %2103 = vst.msk [vmem:[#allocation2 + $0x4a8] sm:$0xff] %vm1953, %v1585
    %2104 = vst.msk [vmem:[#allocation2 + $0x4b0] sm:$0xff] %vm1953, %v1588
    %2105 = vst.msk [vmem:[#allocation2 + $0x4b8] sm:$0xff] %vm1953, %v1591
    %2106 = vst.msk [vmem:[#allocation2 + $0x4c0] sm:$0xff] %vm1953, %v1594
    %2107 = vst.msk [vmem:[#allocation2 + $0x4c8] sm:$0xff] %vm1953, %v1597
    %2108 = vst.msk [vmem:[#allocation2 + $0x4d0] sm:$0xff] %vm1953, %v1600
    %2109 = vst.msk [vmem:[#allocation2 + $0x4d8] sm:$0xff] %vm1953, %v1603
    %2110 = vst.msk [vmem:[#allocation2 + $0x4e0] sm:$0xff] %vm1953, %v1606
    %2111 = vst.msk [vmem:[#allocation2 + $0x4e8] sm:$0xff] %vm1953, %v1609
    %2112 = vst.msk [vmem:[#allocation2 + $0x4f0] sm:$0xff] %vm1953, %v1612
    %2113 = vst.msk [vmem:[#allocation2 + $0x4f8] sm:$0xff] %vm1953, %v1615
    %2114 = vst.msk [vmem:[#allocation2 + $0x500] sm:$0xff] %vm1953, %v1618
    %2115 = vst.msk [vmem:[#allocation2 + $0x508] sm:$0xff] %vm1953, %v1621
    %2116 = vst.msk [vmem:[#allocation2 + $0x510] sm:$0xff] %vm1953, %v1624
    %2117 = vst.msk [vmem:[#allocation2 + $0x518] sm:$0xff] %vm1953, %v1627
    %2118 = vst.msk [vmem:[#allocation2 + $0x520] sm:$0xff] %vm1953, %v1630
    %2119 = vst.msk [vmem:[#allocation2 + $0x528] sm:$0xff] %vm1953, %v1633
    %2120 = vst.msk [vmem:[#allocation2 + $0x530] sm:$0xff] %vm1953, %v1636
    %2121 = vst.msk [vmem:[#allocation2 + $0x538] sm:$0xff] %vm1953, %v1639
    %2122 = vst.msk [vmem:[#allocation2 + $0x540] sm:$0xff] %vm1953, %v1642
    %2123 = vst.msk [vmem:[#allocation2 + $0x548] sm:$0xff] %vm1953, %v1645
    %2124 = vst.msk [vmem:[#allocation2 + $0x550] sm:$0xff] %vm1953, %v1648
    %2125 = vst.msk [vmem:[#allocation2 + $0x558] sm:$0xff] %vm1953, %v1651
    %2126 = vst.msk [vmem:[#allocation2 + $0x560] sm:$0xff] %vm1953, %v1654
    %2127 = vst.msk [vmem:[#allocation2 + $0x568] sm:$0xff] %vm1953, %v1657
    %2128 = vst.msk [vmem:[#allocation2 + $0x570] sm:$0xff] %vm1953, %v1660
    %2129 = vst.msk [vmem:[#allocation2 + $0x578] sm:$0xff] %vm1953, %v1663
    %2130 = vst.msk [vmem:[#allocation2 + $0x580] sm:$0xff] %vm1953, %v1666
    %2131 = vst.msk [vmem:[#allocation2 + $0x588] sm:$0xff] %vm1953, %v1669
    %2132 = vst.msk [vmem:[#allocation2 + $0x590] sm:$0xff] %vm1953, %v1672
    %2133 = vst.msk [vmem:[#allocation2 + $0x598] sm:$0xff] %vm1953, %v1675
    %2134 = vst.msk [vmem:[#allocation2 + $0x5a0] sm:$0xff] %vm1953, %v1678
    %2135 = vst.msk [vmem:[#allocation2 + $0x5a8] sm:$0xff] %vm1953, %v1681
    %2136 = vst.msk [vmem:[#allocation2 + $0x5b0] sm:$0xff] %vm1953, %v1684
    %2137 = vst.msk [vmem:[#allocation2 + $0x5b8] sm:$0xff] %vm1953, %v1687
    %2138 = vst.msk [vmem:[#allocation2 + $0x5c0] sm:$0xff] %vm1953, %v1690
    %2139 = vst.msk [vmem:[#allocation2 + $0x5c8] sm:$0xff] %vm1953, %v1693
    %2140 = vst.msk [vmem:[#allocation2 + $0x5d0] sm:$0xff] %vm1953, %v1696
    %2141 = vst.msk [vmem:[#allocation2 + $0x5d8] sm:$0xff] %vm1953, %v1699
    %2142 = vst.msk [vmem:[#allocation2 + $0x5e0] sm:$0xff] %vm1953, %v1702
    %2143 = vst.msk [vmem:[#allocation2 + $0x5e8] sm:$0xff] %vm1953, %v1705
    %2144 = vst.msk [vmem:[#allocation2 + $0x5f0] sm:$0xff] %vm1953, %v1708
    %2145 = vst.msk [vmem:[#allocation2 + $0x5f8] sm:$0xff] %vm1953, %v1711
    %2146 = vst.msk [vmem:[#allocation2 + $0x600] sm:$0xff] %vm1953, %v1714
    %2147 = vst.msk [vmem:[#allocation2 + $0x608] sm:$0xff] %vm1953, %v1717
    %2148 = vst.msk [vmem:[#allocation2 + $0x610] sm:$0xff] %vm1953, %v1720
    %2149 = vst.msk [vmem:[#allocation2 + $0x618] sm:$0xff] %vm1953, %v1723
    %2150 = vst.msk [vmem:[#allocation2 + $0x620] sm:$0xff] %vm1953, %v1726
    %2151 = vst.msk [vmem:[#allocation2 + $0x628] sm:$0xff] %vm1953, %v1729
    %2152 = vst.msk [vmem:[#allocation2 + $0x630] sm:$0xff] %vm1953, %v1732
    %2153 = vst.msk [vmem:[#allocation2 + $0x638] sm:$0xff] %vm1953, %v1735
    %2154 = vst.msk [vmem:[#allocation2 + $0x640] sm:$0xff] %vm1953, %v1738
    %2155 = vst.msk [vmem:[#allocation2 + $0x648] sm:$0xff] %vm1953, %v1741
    %2156 = vst.msk [vmem:[#allocation2 + $0x650] sm:$0xff] %vm1953, %v1744
    %2157 = vst.msk [vmem:[#allocation2 + $0x658] sm:$0xff] %vm1953, %v1747
    %2158 = vst.msk [vmem:[#allocation2 + $0x660] sm:$0xff] %vm1953, %v1750
    %2159 = vst.msk [vmem:[#allocation2 + $0x668] sm:$0xff] %vm1953, %v1753
    %2160 = vst.msk [vmem:[#allocation2 + $0x670] sm:$0xff] %vm1953, %v1756
    %2161 = vst.msk [vmem:[#allocation2 + $0x678] sm:$0xff] %vm1953, %v1759
    %2162 = vst.msk [vmem:[#allocation2 + $0x680] sm:$0xff] %vm1953, %v1762
    %2163 = vst.msk [vmem:[#allocation2 + $0x688] sm:$0xff] %vm1953, %v1765
    %2164 = vst.msk [vmem:[#allocation2 + $0x690] sm:$0xff] %vm1953, %v1768
    %2165 = vst.msk [vmem:[#allocation2 + $0x698] sm:$0xff] %vm1953, %v1771
    %2166 = vst.msk [vmem:[#allocation2 + $0x6a0] sm:$0xff] %vm1953, %v1774
    %2167 = vst.msk [vmem:[#allocation2 + $0x6a8] sm:$0xff] %vm1953, %v1777
    %2168 = vst.msk [vmem:[#allocation2 + $0x6b0] sm:$0xff] %vm1953, %v1780
    %2169 = vst.msk [vmem:[#allocation2 + $0x6b8] sm:$0xff] %vm1953, %v1783
    %2170 = vst.msk [vmem:[#allocation2 + $0x6c0] sm:$0xff] %vm1953, %v1786
    %2171 = vst.msk [vmem:[#allocation2 + $0x6c8] sm:$0xff] %vm1953, %v1789
    %2172 = vst.msk [vmem:[#allocation2 + $0x6d0] sm:$0xff] %vm1953, %v1792
    %2173 = vst.msk [vmem:[#allocation2 + $0x6d8] sm:$0xff] %vm1953, %v1795
    %2174 = vst.msk [vmem:[#allocation2 + $0x6e0] sm:$0xff] %vm1953, %v1798
    %2175 = vst.msk [vmem:[#allocation2 + $0x6e8] sm:$0xff] %vm1953, %v1801
    %2176 = vst.msk [vmem:[#allocation2 + $0x6f0] sm:$0xff] %vm1953, %v1804
    %2177 = vst.msk [vmem:[#allocation2 + $0x6f8] sm:$0xff] %vm1953, %v1807
    %2178 = vst.msk [vmem:[#allocation2 + $0x700] sm:$0xff] %vm1953, %v1810
    %2179 = vst.msk [vmem:[#allocation2 + $0x708] sm:$0xff] %vm1953, %v1813
    %2180 = vst.msk [vmem:[#allocation2 + $0x710] sm:$0xff] %vm1953, %v1816
    %2181 = vst.msk [vmem:[#allocation2 + $0x718] sm:$0xff] %vm1953, %v1819
    %2182 = vst.msk [vmem:[#allocation2 + $0x720] sm:$0xff] %vm1953, %v1822
    %2183 = vst.msk [vmem:[#allocation2 + $0x728] sm:$0xff] %vm1953, %v1825
    %2184 = vst.msk [vmem:[#allocation2 + $0x730] sm:$0xff] %vm1953, %v1828
    %2185 = vst.msk [vmem:[#allocation2 + $0x738] sm:$0xff] %vm1953, %v1831
    %2186 = vst.msk [vmem:[#allocation2 + $0x740] sm:$0xff] %vm1953, %v1834
    %2187 = vst.msk [vmem:[#allocation2 + $0x748] sm:$0xff] %vm1953, %v1837
    %2188 = vst.msk [vmem:[#allocation2 + $0x750] sm:$0xff] %vm1953, %v1840
    %2189 = vst.msk [vmem:[#allocation2 + $0x758] sm:$0xff] %vm1953, %v1843
    %2190 = vst.msk [vmem:[#allocation2 + $0x760] sm:$0xff] %vm1953, %v1846
    %2191 = vst.msk [vmem:[#allocation2 + $0x768] sm:$0xff] %vm1953, %v1849
    %2192 = vst.msk [vmem:[#allocation2 + $0x770] sm:$0xff] %vm1953, %v1852
    %2193 = vst.msk [vmem:[#allocation2 + $0x778] sm:$0xff] %vm1953, %v1855
    %2194 = vst.msk [vmem:[#allocation2 + $0x780] sm:$0xff] %vm1953, %v1858
    %2195 = vst.msk [vmem:[#allocation2 + $0x788] sm:$0xff] %vm1953, %v1861
    %2196 = vst.msk [vmem:[#allocation2 + $0x790] sm:$0xff] %vm1953, %v1864
    %2197 = vst.msk [vmem:[#allocation2 + $0x798] sm:$0xff] %vm1953, %v1867
    %2198 = vst.msk [vmem:[#allocation2 + $0x7a0] sm:$0xff] %vm1953, %v1870
    %2199 = vst.msk [vmem:[#allocation2 + $0x7a8] sm:$0xff] %vm1953, %v1873
    %2200 = vst.msk [vmem:[#allocation2 + $0x7b0] sm:$0xff] %vm1953, %v1876
    %2201 = vst.msk [vmem:[#allocation2 + $0x7b8] sm:$0xff] %vm1953, %v1879
    %2202 = vst.msk [vmem:[#allocation2 + $0x7c0] sm:$0xff] %vm1953, %v1882
    %2203 = vst.msk [vmem:[#allocation2 + $0x7c8] sm:$0xff] %vm1953, %v1885
    %2204 = vst.msk [vmem:[#allocation2 + $0x7d0] sm:$0xff] %vm1953, %v1888
    %2205 = vst.msk [vmem:[#allocation2 + $0x7d8] sm:$0xff] %vm1953, %v1891
    %2206 = vst.msk [vmem:[#allocation2 + $0x7e0] sm:$0xff] %vm1953, %v1894
    %2207 = vst.msk [vmem:[#allocation2 + $0x7e8] sm:$0xff] %vm1953, %v1897
    %2208 = vst.msk [vmem:[#allocation2 + $0x7f0] sm:$0xff] %vm1953, %v1900
    %2209 = vst.msk [vmem:[#allocation2 + $0x7f8] sm:$0xff] %vm1953, %v1903
    %2210 = vst.msk [vmem:[#allocation2 + $0x800] sm:$0xff] %vm1953, %v1906
    %2211 = vst.msk [vmem:[#allocation2 + $0x808] sm:$0xff] %vm1953, %v1909
    %2212 = vst.msk [vmem:[#allocation2 + $0x810] sm:$0xff] %vm1953, %v1912
    %2213 = vst.msk [vmem:[#allocation2 + $0x818] sm:$0xff] %vm1953, %v1915
    %2214 = vst.msk [vmem:[#allocation2 + $0x820] sm:$0xff] %vm1953, %v1918
    %2215 = vst.msk [vmem:[#allocation2 + $0x828] sm:$0xff] %vm1953, %v1921
    %2216 = vst.msk [vmem:[#allocation2 + $0x830] sm:$0xff] %vm1953, %v1924
    %2217 = vst.msk [vmem:[#allocation2 + $0x838] sm:$0xff] %vm1953, %v1927
    %2218 = vst.msk [vmem:[#allocation2 + $0x840] sm:$0xff] %vm1953, %v1930
    %2219 = vst.msk [vmem:[#allocation2 + $0x848] sm:$0xff] %vm1953, %v1933
    %2220 = vst.msk [vmem:[#allocation2 + $0x850] sm:$0xff] %vm1953, %v1936
    %2221 = vst.msk [vmem:[#allocation2 + $0x858] sm:$0xff] %vm1953, %v1939
    %2222 = vst.msk [vmem:[#allocation2 + $0x860] sm:$0xff] %vm1953, %v1942
    %2223 = vst.msk [vmem:[#allocation2 + $0x868] sm:$0xff] %vm1953, %v1945
    %2224 = vst.msk [vmem:[#allocation2 + $0x870] sm:$0xff] %vm1953, %v1948
    %2225 = vst.msk [vmem:[#allocation2 + $0x878] sm:$0xff] %vm1953, %v1951
    %2226 = vst.msk [vmem:[#allocation3] sm:$0xff] %vm1953, 0.0
    %2227 = vst.msk [vmem:[#allocation3 + $0x8] sm:$0xff] %vm1953, 0.0
    %2228 = vst.msk [vmem:[#allocation3 + $0x10] sm:$0xff] %vm1953, 0.0
    %2229 = vst.msk [vmem:[#allocation3 + $0x18] sm:$0xff] %vm1953, 0.0
    %2230 = vst.msk [vmem:[#allocation3 + $0x20] sm:$0xff] %vm1953, 0.0
    %2231 = vst.msk [vmem:[#allocation3 + $0x28] sm:$0xff] %vm1953, 0.0
    %2232 = vst.msk [vmem:[#allocation3 + $0x30] sm:$0xff] %vm1953, 0.0
    %2233 = vst.msk [vmem:[#allocation3 + $0x38] sm:$0xff] %vm1953, 0.0
    %2234 = vst.msk [vmem:[#allocation3 + $0x40] sm:$0xff] %vm1953, 0.0
    %2235 = vst.msk [vmem:[#allocation3 + $0x48] sm:$0xff] %vm1953, 0.0
    %2236 = vst.msk [vmem:[#allocation3 + $0x50] sm:$0xff] %vm1953, 0.0
    %2237 = vst.msk [vmem:[#allocation3 + $0x58] sm:$0xff] %vm1953, 0.0
    %2238 = vst.msk [vmem:[#allocation3 + $0x60] sm:$0xff] %vm1953, 0.0
    %2239 = vst.msk [vmem:[#allocation3 + $0x68] sm:$0xff] %vm1953, 0.0
    %2240 = vst.msk [vmem:[#allocation3 + $0x70] sm:$0xff] %vm1953, 0.0
    %2241 = vst.msk [vmem:[#allocation3 + $0x78] sm:$0xff] %vm1953, 0.0
    %2242 = vst.msk [vmem:[#allocation3 + $0x80] sm:$0xff] %vm1953, 0.0
    %2243 = vst.msk [vmem:[#allocation3 + $0x88] sm:$0xff] %vm1953, 0.0
    %2244 = vst.msk [vmem:[#allocation3 + $0x90] sm:$0xff] %vm1953, 0.0
    %2245 = vst.msk [vmem:[#allocation3 + $0x98] sm:$0xff] %vm1953, 0.0
    %2246 = vst.msk [vmem:[#allocation3 + $0xa0] sm:$0xff] %vm1953, 0.0
    %2247 = vst.msk [vmem:[#allocation3 + $0xa8] sm:$0xff] %vm1953, 0.0
    %2248 = vst.msk [vmem:[#allocation3 + $0xb0] sm:$0xff] %vm1953, 0.0
    %2249 = vst.msk [vmem:[#allocation3 + $0xb8] sm:$0xff] %vm1953, 0.0
    %2250 = vst.msk [vmem:[#allocation3 + $0xc0] sm:$0xff] %vm1953, 0.0
    %2251 = vst.msk [vmem:[#allocation3 + $0xc8] sm:$0xff] %vm1953, 0.0
    %2252 = vst.msk [vmem:[#allocation3 + $0xd0] sm:$0xff] %vm1953, 0.0
    %2253 = vst.msk [vmem:[#allocation3 + $0xd8] sm:$0xff] %vm1953, 0.0
    %2254 = vst.msk [vmem:[#allocation3 + $0xe0] sm:$0xff] %vm1953, 0.0
    %2255 = vst.msk [vmem:[#allocation3 + $0xe8] sm:$0xff] %vm1953, 0.0
    %2256 = vst.msk [vmem:[#allocation3 + $0xf0] sm:$0xff] %vm1953, 0.0
    %2257 = vst.msk [vmem:[#allocation3 + $0xf8] sm:$0xff] %vm1953, 0.0
    %2258 = vst.msk [vmem:[#allocation3 + $0x100] sm:$0xff] %vm1953, 0.0
    %2259 = vst.msk [vmem:[#allocation3 + $0x108] sm:$0xff] %vm1953, 0.0
    %2260 = vst.msk [vmem:[#allocation3 + $0x110] sm:$0xff] %vm1953, 0.0
    %2261 = vst.msk [vmem:[#allocation3 + $0x118] sm:$0xff] %vm1953, 0.0
    %2262 = vst.msk [vmem:[#allocation3 + $0x120] sm:$0xff] %vm1953, 0.0
    %2263 = vst.msk [vmem:[#allocation3 + $0x128] sm:$0xff] %vm1953, 0.0
    %2264 = vst.msk [vmem:[#allocation3 + $0x130] sm:$0xff] %vm1953, 0.0
    %2265 = vst.msk [vmem:[#allocation3 + $0x138] sm:$0xff] %vm1953, 0.0
    %2266 = vst.msk [vmem:[#allocation3 + $0x140] sm:$0xff] %vm1953, 0.0
    %2267 = vst.msk [vmem:[#allocation3 + $0x148] sm:$0xff] %vm1953, 0.0
    %2268 = vst.msk [vmem:[#allocation3 + $0x150] sm:$0xff] %vm1953, 0.0
    %2269 = vst.msk [vmem:[#allocation3 + $0x158] sm:$0xff] %vm1953, 0.0
    %2270 = vst.msk [vmem:[#allocation3 + $0x160] sm:$0xff] %vm1953, 0.0
    %2271 = vst.msk [vmem:[#allocation3 + $0x168] sm:$0xff] %vm1953, 0.0
    %2272 = vst.msk [vmem:[#allocation3 + $0x170] sm:$0xff] %vm1953, 0.0
    %2273 = vst.msk [vmem:[#allocation3 + $0x178] sm:$0xff] %vm1953, 0.0
    %2274 = vst.msk [vmem:[#allocation3 + $0x180] sm:$0xff] %vm1953, 0.0
    %2275 = vst.msk [vmem:[#allocation3 + $0x188] sm:$0xff] %vm1953, 0.0
    %2276 = vst.msk [vmem:[#allocation3 + $0x190] sm:$0xff] %vm1953, 0.0
    %2277 = vst.msk [vmem:[#allocation3 + $0x198] sm:$0xff] %vm1953, 0.0
    %2278 = vst.msk [vmem:[#allocation3 + $0x1a0] sm:$0xff] %vm1953, 0.0
    %2279 = vst.msk [vmem:[#allocation3 + $0x1a8] sm:$0xff] %vm1953, 0.0
    %2280 = vst.msk [vmem:[#allocation3 + $0x1b0] sm:$0xff] %vm1953, 0.0
    %2281 = vst.msk [vmem:[#allocation3 + $0x1b8] sm:$0xff] %vm1953, 0.0
    %2282 = vst.msk [vmem:[#allocation3 + $0x1c0] sm:$0xff] %vm1953, 0.0
    %2283 = vst.msk [vmem:[#allocation3 + $0x1c8] sm:$0xff] %vm1953, 0.0
    %2284 = vst.msk [vmem:[#allocation3 + $0x1d0] sm:$0xff] %vm1953, 0.0
    %2285 = vst.msk [vmem:[#allocation3 + $0x1d8] sm:$0xff] %vm1953, 0.0
    %2286 = vst.msk [vmem:[#allocation3 + $0x1e0] sm:$0xff] %vm1953, 0.0
    %2287 = vst.msk [vmem:[#allocation3 + $0x1e8] sm:$0xff] %vm1953, 0.0
    %2288 = vst.msk [vmem:[#allocation3 + $0x1f0] sm:$0xff] %vm1953, 0.0
    %2289 = vst.msk [vmem:[#allocation3 + $0x1f8] sm:$0xff] %vm1953, 0.0
    %2290 = vst.msk [vmem:[#allocation3 + $0x200] sm:$0xff] %vm1953, 0.0
    %2291 = vst.msk [vmem:[#allocation3 + $0x208] sm:$0xff] %vm1953, 0.0
    %2292 = vst.msk [vmem:[#allocation3 + $0x210] sm:$0xff] %vm1953, 0.0
    %2293 = vst.msk [vmem:[#allocation3 + $0x218] sm:$0xff] %vm1953, 0.0
    %2294 = vst.msk [vmem:[#allocation3 + $0x220] sm:$0xff] %vm1953, 0.0
    %2295 = vst.msk [vmem:[#allocation3 + $0x228] sm:$0xff] %vm1953, 0.0
    %2296 = vst.msk [vmem:[#allocation3 + $0x230] sm:$0xff] %vm1953, 0.0
    %2297 = vst.msk [vmem:[#allocation3 + $0x238] sm:$0xff] %vm1953, 0.0
    %2298 = vst.msk [vmem:[#allocation3 + $0x240] sm:$0xff] %vm1953, 0.0
    %2299 = vst.msk [vmem:[#allocation3 + $0x248] sm:$0xff] %vm1953, 0.0
    %2300 = vst.msk [vmem:[#allocation3 + $0x250] sm:$0xff] %vm1953, 0.0
    %2301 = vst.msk [vmem:[#allocation3 + $0x258] sm:$0xff] %vm1953, 0.0
    %2302 = vst.msk [vmem:[#allocation3 + $0x260] sm:$0xff] %vm1953, 0.0
    %2303 = vst.msk [vmem:[#allocation3 + $0x268] sm:$0xff] %vm1953, 0.0
    %2304 = vst.msk [vmem:[#allocation3 + $0x270] sm:$0xff] %vm1953, 0.0
    %2305 = vst.msk [vmem:[#allocation3 + $0x278] sm:$0xff] %vm1953, 0.0
    %2306 = vst.msk [vmem:[#allocation3 + $0x280] sm:$0xff] %vm1953, 0.0
    %2307 = vst.msk [vmem:[#allocation3 + $0x288] sm:$0xff] %vm1953, 0.0
    %v2308 = vld [vmem:[%s2] sm:$0x1]
    %v2310 = vperm.slane %v2308, 0
    %v2312 = vld [vmem:[#allocation2] ss:$2 sm:$0xff]
    %s2313 = scalar_lea.vmem [#allocation2], 16
    %v2314 = vld [vmem:[%s2313] ss:$2 sm:$0xff]
    %s2315 = scalar_lea.vmem [#allocation2], 1
    %v2316 = vld [vmem:[%s2315] ss:$2 sm:$0xff]
    %s2317 = scalar_lea.vmem [#allocation2], 17
    %v2318 = vld [vmem:[%s2317] ss:$2 sm:$0xff]
    %v2319 = vmax.f32 %v2312, %v2316
    %v2320 = vmax.f32 %v2314, %v2318
    %s2321 = scalar_lea.vmem [#allocation2], 34
    %v2322 = vld [vmem:[%s2321] ss:$2 sm:$0xff]
    %s2323 = scalar_lea.vmem [#allocation2], 50
    %v2324 = vld [vmem:[%s2323] ss:$2 sm:$0xff]
    %s2325 = scalar_lea.vmem [#allocation2], 35
    %v2326 = vld [vmem:[%s2325] ss:$2 sm:$0xff]
    %s2327 = scalar_lea.vmem [#allocation2], 51
    %v2328 = vld [vmem:[%s2327] ss:$2 sm:$0xff]
    %v2329 = vmax.f32 %v2322, %v2326
    %v2330 = vmax.f32 %v2324, %v2328
    %v2331 = vmax.f32 %v2319, %v2329
    %v2332 = vmax.f32 %v2320, %v2330
    %v2333 = vadd.f32 %v2331, %v2310
    %v2334 = vadd.f32 %v2332, %v2310
    %v2335 = vmax.f32 %v2333, 0.0
    %v2336 = vmax.f32 %v2334, 0.0
    %2337 = vst.msk [vmem:[#allocation3 + $0x13] sm:$0xff] %vm1953, %v2335
    %2338 = vst.msk [vmem:[#allocation3 + $0x1b] sm:$0xff] %vm1953, %v2336
    %s2339 = scalar_lea.vmem [#allocation2], 68
    %v2340 = vld [vmem:[%s2339] ss:$2 sm:$0xff]
    %s2341 = scalar_lea.vmem [#allocation2], 84
    %v2342 = vld [vmem:[%s2341] ss:$2 sm:$0xff]
    %s2343 = scalar_lea.vmem [#allocation2], 69
    %v2344 = vld [vmem:[%s2343] ss:$2 sm:$0xff]
    %s2345 = scalar_lea.vmem [#allocation2], 85
    %v2346 = vld [vmem:[%s2345] ss:$2 sm:$0xff]
    %v2347 = vmax.f32 %v2340, %v2344
    %v2348 = vmax.f32 %v2342, %v2346
    %s2349 = scalar_lea.vmem [#allocation2], 102
    %v2350 = vld [vmem:[%s2349] ss:$2 sm:$0xff]
    %s2351 = scalar_lea.vmem [#allocation2], 118
    %v2352 = vld [vmem:[%s2351] ss:$2 sm:$0xff]
    %s2353 = scalar_lea.vmem [#allocation2], 103
    %v2354 = vld [vmem:[%s2353] ss:$2 sm:$0xff]
    %s2355 = scalar_lea.vmem [#allocation2], 119
    %v2356 = vld [vmem:[%s2355] ss:$2 sm:$0xff]
    %v2357 = vmax.f32 %v2350, %v2354
    %v2358 = vmax.f32 %v2352, %v2356
    %v2359 = vmax.f32 %v2347, %v2357
    %v2360 = vmax.f32 %v2348, %v2358
    %v2361 = vadd.f32 %v2359, %v2310
    %v2362 = vadd.f32 %v2360, %v2310
    %v2363 = vmax.f32 %v2361, 0.0
    %v2364 = vmax.f32 %v2362, 0.0
    %2365 = vst.msk [vmem:[#allocation3 + $0x25] sm:$0xff] %vm1953, %v2363
    %2366 = vst.msk [vmem:[#allocation3 + $0x2d] sm:$0xff] %vm1953, %v2364
    %s2367 = scalar_lea.vmem [#allocation2], 136
    %v2368 = vld [vmem:[%s2367] ss:$2 sm:$0xff]
    %s2369 = scalar_lea.vmem [#allocation2], 152
    %v2370 = vld [vmem:[%s2369] ss:$2 sm:$0xff]
    %s2371 = scalar_lea.vmem [#allocation2], 137
    %v2372 = vld [vmem:[%s2371] ss:$2 sm:$0xff]
    %s2373 = scalar_lea.vmem [#allocation2], 153
    %v2374 = vld [vmem:[%s2373] ss:$2 sm:$0xff]
    %v2375 = vmax.f32 %v2368, %v2372
    %v2376 = vmax.f32 %v2370, %v2374
    %s2377 = scalar_lea.vmem [#allocation2], 170
    %v2378 = vld [vmem:[%s2377] ss:$2 sm:$0xff]
    %s2379 = scalar_lea.vmem [#allocation2], 186
    %v2380 = vld [vmem:[%s2379] ss:$2 sm:$0xff]
    %s2381 = scalar_lea.vmem [#allocation2], 171
    %v2382 = vld [vmem:[%s2381] ss:$2 sm:$0xff]
    %s2383 = scalar_lea.vmem [#allocation2], 187
    %v2384 = vld [vmem:[%s2383] ss:$2 sm:$0xff]
    %v2385 = vmax.f32 %v2378, %v2382
    %v2386 = vmax.f32 %v2380, %v2384
    %v2387 = vmax.f32 %v2375, %v2385
    %v2388 = vmax.f32 %v2376, %v2386
    %v2389 = vadd.f32 %v2387, %v2310
    %v2390 = vadd.f32 %v2388, %v2310
    %v2391 = vmax.f32 %v2389, 0.0
    %v2392 = vmax.f32 %v2390, 0.0
    %2393 = vst.msk [vmem:[#allocation3 + $0x37] sm:$0xff] %vm1953, %v2391
    %2394 = vst.msk [vmem:[#allocation3 + $0x3f] sm:$0xff] %vm1953, %v2392
    %s2395 = scalar_lea.vmem [#allocation2], 204
    %v2396 = vld [vmem:[%s2395] ss:$2 sm:$0xff]
    %s2397 = scalar_lea.vmem [#allocation2], 220
    %v2398 = vld [vmem:[%s2397] ss:$2 sm:$0xff]
    %s2399 = scalar_lea.vmem [#allocation2], 205
    %v2400 = vld [vmem:[%s2399] ss:$2 sm:$0xff]
    %s2401 = scalar_lea.vmem [#allocation2], 221
    %v2402 = vld [vmem:[%s2401] ss:$2 sm:$0xff]
    %v2403 = vmax.f32 %v2396, %v2400
    %v2404 = vmax.f32 %v2398, %v2402
    %s2405 = scalar_lea.vmem [#allocation2], 238
    %v2406 = vld [vmem:[%s2405] ss:$2 sm:$0xff]
    %s2407 = scalar_lea.vmem [#allocation2], 254
    %v2408 = vld [vmem:[%s2407] ss:$2 sm:$0xff]
    %s2409 = scalar_lea.vmem [#allocation2], 239
    %v2410 = vld [vmem:[%s2409] ss:$2 sm:$0xff]
    %s2411 = scalar_lea.vmem [#allocation2], 255
    %v2412 = vld [vmem:[%s2411] ss:$2 sm:$0xff]
    %v2413 = vmax.f32 %v2406, %v2410
    %v2414 = vmax.f32 %v2408, %v2412
    %v2415 = vmax.f32 %v2403, %v2413
    %v2416 = vmax.f32 %v2404, %v2414
    %v2417 = vadd.f32 %v2415, %v2310
    %v2418 = vadd.f32 %v2416, %v2310
    %v2419 = vmax.f32 %v2417, 0.0
    %v2420 = vmax.f32 %v2418, 0.0
    %2421 = vst.msk [vmem:[#allocation3 + $0x49] sm:$0xff] %vm1953, %v2419
    %2422 = vst.msk [vmem:[#allocation3 + $0x51] sm:$0xff] %vm1953, %v2420
    %s2423 = scalar_lea.vmem [#allocation2], 272
    %v2424 = vld [vmem:[%s2423] ss:$2 sm:$0xff]
    %s2425 = scalar_lea.vmem [#allocation2], 288
    %v2426 = vld [vmem:[%s2425] ss:$2 sm:$0xff]
    %s2427 = scalar_lea.vmem [#allocation2], 273
    %v2428 = vld [vmem:[%s2427] ss:$2 sm:$0xff]
    %s2429 = scalar_lea.vmem [#allocation2], 289
    %v2430 = vld [vmem:[%s2429] ss:$2 sm:$0xff]
    %v2431 = vmax.f32 %v2424, %v2428
    %v2432 = vmax.f32 %v2426, %v2430
    %s2433 = scalar_lea.vmem [#allocation2], 306
    %v2434 = vld [vmem:[%s2433] ss:$2 sm:$0xff]
    %s2435 = scalar_lea.vmem [#allocation2], 322
    %v2436 = vld [vmem:[%s2435] ss:$2 sm:$0xff]
    %s2437 = scalar_lea.vmem [#allocation2], 307
    %v2438 = vld [vmem:[%s2437] ss:$2 sm:$0xff]
    %s2439 = scalar_lea.vmem [#allocation2], 323
    %v2440 = vld [vmem:[%s2439] ss:$2 sm:$0xff]
    %v2441 = vmax.f32 %v2434, %v2438
    %v2442 = vmax.f32 %v2436, %v2440
    %v2443 = vmax.f32 %v2431, %v2441
    %v2444 = vmax.f32 %v2432, %v2442
    %v2445 = vadd.f32 %v2443, %v2310
    %v2446 = vadd.f32 %v2444, %v2310
    %v2447 = vmax.f32 %v2445, 0.0
    %v2448 = vmax.f32 %v2446, 0.0
    %2449 = vst.msk [vmem:[#allocation3 + $0x5b] sm:$0xff] %vm1953, %v2447
    %2450 = vst.msk [vmem:[#allocation3 + $0x63] sm:$0xff] %vm1953, %v2448
    %s2451 = scalar_lea.vmem [#allocation2], 340
    %v2452 = vld [vmem:[%s2451] ss:$2 sm:$0xff]
    %s2453 = scalar_lea.vmem [#allocation2], 356
    %v2454 = vld [vmem:[%s2453] ss:$2 sm:$0xff]
    %s2455 = scalar_lea.vmem [#allocation2], 341
    %v2456 = vld [vmem:[%s2455] ss:$2 sm:$0xff]
    %s2457 = scalar_lea.vmem [#allocation2], 357
    %v2458 = vld [vmem:[%s2457] ss:$2 sm:$0xff]
    %v2459 = vmax.f32 %v2452, %v2456
    %v2460 = vmax.f32 %v2454, %v2458
    %s2461 = scalar_lea.vmem [#allocation2], 374
    %v2462 = vld [vmem:[%s2461] ss:$2 sm:$0xff]
    %s2463 = scalar_lea.vmem [#allocation2], 390
    %v2464 = vld [vmem:[%s2463] ss:$2 sm:$0xff]
    %s2465 = scalar_lea.vmem [#allocation2], 375
    %v2466 = vld [vmem:[%s2465] ss:$2 sm:$0xff]
    %s2467 = scalar_lea.vmem [#allocation2], 391
    %v2468 = vld [vmem:[%s2467] ss:$2 sm:$0xff]
    %v2469 = vmax.f32 %v2462, %v2466
    %v2470 = vmax.f32 %v2464, %v2468
    %v2471 = vmax.f32 %v2459, %v2469
    %v2472 = vmax.f32 %v2460, %v2470
    %v2473 = vadd.f32 %v2471, %v2310
    %v2474 = vadd.f32 %v2472, %v2310
    %v2475 = vmax.f32 %v2473, 0.0
    %v2476 = vmax.f32 %v2474, 0.0
    %2477 = vst.msk [vmem:[#allocation3 + $0x6d] sm:$0xff] %vm1953, %v2475
    %2478 = vst.msk [vmem:[#allocation3 + $0x75] sm:$0xff] %vm1953, %v2476
    %s2479 = scalar_lea.vmem [#allocation2], 408
    %v2480 = vld [vmem:[%s2479] ss:$2 sm:$0xff]
    %s2481 = scalar_lea.vmem [#allocation2], 424
    %v2482 = vld [vmem:[%s2481] ss:$2 sm:$0xff]
    %s2483 = scalar_lea.vmem [#allocation2], 409
    %v2484 = vld [vmem:[%s2483] ss:$2 sm:$0xff]
    %s2485 = scalar_lea.vmem [#allocation2], 425
    %v2486 = vld [vmem:[%s2485] ss:$2 sm:$0xff]
    %v2487 = vmax.f32 %v2480, %v2484
    %v2488 = vmax.f32 %v2482, %v2486
    %s2489 = scalar_lea.vmem [#allocation2], 442
    %v2490 = vld [vmem:[%s2489] ss:$2 sm:$0xff]
    %s2491 = scalar_lea.vmem [#allocation2], 458
    %v2492 = vld [vmem:[%s2491] ss:$2 sm:$0xff]
    %s2493 = scalar_lea.vmem [#allocation2], 443
    %v2494 = vld [vmem:[%s2493] ss:$2 sm:$0xff]
    %s2495 = scalar_lea.vmem [#allocation2], 459
    %v2496 = vld [vmem:[%s2495] ss:$2 sm:$0xff]
    %v2497 = vmax.f32 %v2490, %v2494
    %v2498 = vmax.f32 %v2492, %v2496
    %v2499 = vmax.f32 %v2487, %v2497
    %v2500 = vmax.f32 %v2488, %v2498
    %v2501 = vadd.f32 %v2499, %v2310
    %v2502 = vadd.f32 %v2500, %v2310
    %v2503 = vmax.f32 %v2501, 0.0
    %v2504 = vmax.f32 %v2502, 0.0
    %2505 = vst.msk [vmem:[#allocation3 + $0x7f] sm:$0xff] %vm1953, %v2503
    %2506 = vst.msk [vmem:[#allocation3 + $0x87] sm:$0xff] %vm1953, %v2504
    %s2507 = scalar_lea.vmem [#allocation2], 476
    %v2508 = vld [vmem:[%s2507] ss:$2 sm:$0xff]
    %s2509 = scalar_lea.vmem [#allocation2], 492
    %v2510 = vld [vmem:[%s2509] ss:$2 sm:$0xff]
    %s2511 = scalar_lea.vmem [#allocation2], 477
    %v2512 = vld [vmem:[%s2511] ss:$2 sm:$0xff]
    %s2513 = scalar_lea.vmem [#allocation2], 493
    %v2514 = vld [vmem:[%s2513] ss:$2 sm:$0xff]
    %v2515 = vmax.f32 %v2508, %v2512
    %v2516 = vmax.f32 %v2510, %v2514
    %s2517 = scalar_lea.vmem [#allocation2], 510
    %v2518 = vld [vmem:[%s2517] ss:$2 sm:$0xff]
    %s2519 = scalar_lea.vmem [#allocation2], 526
    %v2520 = vld [vmem:[%s2519] ss:$2 sm:$0xff]
    %s2521 = scalar_lea.vmem [#allocation2], 511
    %v2522 = vld [vmem:[%s2521] ss:$2 sm:$0xff]
    %s2523 = scalar_lea.vmem [#allocation2], 527
    %v2524 = vld [vmem:[%s2523] ss:$2 sm:$0xff]
    %v2525 = vmax.f32 %v2518, %v2522
    %v2526 = vmax.f32 %v2520, %v2524
    %v2527 = vmax.f32 %v2515, %v2525
    %v2528 = vmax.f32 %v2516, %v2526
    %v2529 = vadd.f32 %v2527, %v2310
    %v2530 = vadd.f32 %v2528, %v2310
    %v2531 = vmax.f32 %v2529, 0.0
    %v2532 = vmax.f32 %v2530, 0.0
    %2533 = vst.msk [vmem:[#allocation3 + $0x91] sm:$0xff] %vm1953, %v2531
    %2534 = vst.msk [vmem:[#allocation3 + $0x99] sm:$0xff] %vm1953, %v2532
    %s2535 = scalar_lea.vmem [#allocation2], 544
    %v2536 = vld [vmem:[%s2535] ss:$2 sm:$0xff]
    %s2537 = scalar_lea.vmem [#allocation2], 560
    %v2538 = vld [vmem:[%s2537] ss:$2 sm:$0xff]
    %s2539 = scalar_lea.vmem [#allocation2], 545
    %v2540 = vld [vmem:[%s2539] ss:$2 sm:$0xff]
    %s2541 = scalar_lea.vmem [#allocation2], 561
    %v2542 = vld [vmem:[%s2541] ss:$2 sm:$0xff]
    %v2543 = vmax.f32 %v2536, %v2540
    %v2544 = vmax.f32 %v2538, %v2542
    %s2545 = scalar_lea.vmem [#allocation2], 578
    %v2546 = vld [vmem:[%s2545] ss:$2 sm:$0xff]
    %s2547 = scalar_lea.vmem [#allocation2], 594
    %v2548 = vld [vmem:[%s2547] ss:$2 sm:$0xff]
    %s2549 = scalar_lea.vmem [#allocation2], 579
    %v2550 = vld [vmem:[%s2549] ss:$2 sm:$0xff]
    %s2551 = scalar_lea.vmem [#allocation2], 595
    %v2552 = vld [vmem:[%s2551] ss:$2 sm:$0xff]
    %v2553 = vmax.f32 %v2546, %v2550
    %v2554 = vmax.f32 %v2548, %v2552
    %v2555 = vmax.f32 %v2543, %v2553
    %v2556 = vmax.f32 %v2544, %v2554
    %v2557 = vadd.f32 %v2555, %v2310
    %v2558 = vadd.f32 %v2556, %v2310
    %v2559 = vmax.f32 %v2557, 0.0
    %v2560 = vmax.f32 %v2558, 0.0
    %2561 = vst.msk [vmem:[#allocation3 + $0xa3] sm:$0xff] %vm1953, %v2559
    %2562 = vst.msk [vmem:[#allocation3 + $0xab] sm:$0xff] %vm1953, %v2560
    %s2563 = scalar_lea.vmem [#allocation2], 612
    %v2564 = vld [vmem:[%s2563] ss:$2 sm:$0xff]
    %s2565 = scalar_lea.vmem [#allocation2], 628
    %v2566 = vld [vmem:[%s2565] ss:$2 sm:$0xff]
    %s2567 = scalar_lea.vmem [#allocation2], 613
    %v2568 = vld [vmem:[%s2567] ss:$2 sm:$0xff]
    %s2569 = scalar_lea.vmem [#allocation2], 629
    %v2570 = vld [vmem:[%s2569] ss:$2 sm:$0xff]
    %v2571 = vmax.f32 %v2564, %v2568
    %v2572 = vmax.f32 %v2566, %v2570
    %s2573 = scalar_lea.vmem [#allocation2], 646
    %v2574 = vld [vmem:[%s2573] ss:$2 sm:$0xff]
    %s2575 = scalar_lea.vmem [#allocation2], 662
    %v2576 = vld [vmem:[%s2575] ss:$2 sm:$0xff]
    %s2577 = scalar_lea.vmem [#allocation2], 647
    %v2578 = vld [vmem:[%s2577] ss:$2 sm:$0xff]
    %s2579 = scalar_lea.vmem [#allocation2], 663
    %v2580 = vld [vmem:[%s2579] ss:$2 sm:$0xff]
    %v2581 = vmax.f32 %v2574, %v2578
    %v2582 = vmax.f32 %v2576, %v2580
    %v2583 = vmax.f32 %v2571, %v2581
    %v2584 = vmax.f32 %v2572, %v2582
    %v2585 = vadd.f32 %v2583, %v2310
    %v2586 = vadd.f32 %v2584, %v2310
    %v2587 = vmax.f32 %v2585, 0.0
    %v2588 = vmax.f32 %v2586, 0.0
    %2589 = vst.msk [vmem:[#allocation3 + $0xb5] sm:$0xff] %vm1953, %v2587
    %2590 = vst.msk [vmem:[#allocation3 + $0xbd] sm:$0xff] %vm1953, %v2588
    %s2591 = scalar_lea.vmem [#allocation2], 680
    %v2592 = vld [vmem:[%s2591] ss:$2 sm:$0xff]
    %s2593 = scalar_lea.vmem [#allocation2], 696
    %v2594 = vld [vmem:[%s2593] ss:$2 sm:$0xff]
    %s2595 = scalar_lea.vmem [#allocation2], 681
    %v2596 = vld [vmem:[%s2595] ss:$2 sm:$0xff]
    %s2597 = scalar_lea.vmem [#allocation2], 697
    %v2598 = vld [vmem:[%s2597] ss:$2 sm:$0xff]
    %v2599 = vmax.f32 %v2592, %v2596
    %v2600 = vmax.f32 %v2594, %v2598
    %s2601 = scalar_lea.vmem [#allocation2], 714
    %v2602 = vld [vmem:[%s2601] ss:$2 sm:$0xff]
    %s2603 = scalar_lea.vmem [#allocation2], 730
    %v2604 = vld [vmem:[%s2603] ss:$2 sm:$0xff]
    %s2605 = scalar_lea.vmem [#allocation2], 715
    %v2606 = vld [vmem:[%s2605] ss:$2 sm:$0xff]
    %s2607 = scalar_lea.vmem [#allocation2], 731
    %v2608 = vld [vmem:[%s2607] ss:$2 sm:$0xff]
    %v2609 = vmax.f32 %v2602, %v2606
    %v2610 = vmax.f32 %v2604, %v2608
    %v2611 = vmax.f32 %v2599, %v2609
    %v2612 = vmax.f32 %v2600, %v2610
    %v2613 = vadd.f32 %v2611, %v2310
    %v2614 = vadd.f32 %v2612, %v2310
    %v2615 = vmax.f32 %v2613, 0.0
    %v2616 = vmax.f32 %v2614, 0.0
    %2617 = vst.msk [vmem:[#allocation3 + $0xc7] sm:$0xff] %vm1953, %v2615
    %2618 = vst.msk [vmem:[#allocation3 + $0xcf] sm:$0xff] %vm1953, %v2616
    %s2619 = scalar_lea.vmem [#allocation2], 748
    %v2620 = vld [vmem:[%s2619] ss:$2 sm:$0xff]
    %s2621 = scalar_lea.vmem [#allocation2], 764
    %v2622 = vld [vmem:[%s2621] ss:$2 sm:$0xff]
    %s2623 = scalar_lea.vmem [#allocation2], 749
    %v2624 = vld [vmem:[%s2623] ss:$2 sm:$0xff]
    %s2625 = scalar_lea.vmem [#allocation2], 765
    %v2626 = vld [vmem:[%s2625] ss:$2 sm:$0xff]
    %v2627 = vmax.f32 %v2620, %v2624
    %v2628 = vmax.f32 %v2622, %v2626
    %s2629 = scalar_lea.vmem [#allocation2], 782
    %v2630 = vld [vmem:[%s2629] ss:$2 sm:$0xff]
    %s2631 = scalar_lea.vmem [#allocation2], 798
    %v2632 = vld [vmem:[%s2631] ss:$2 sm:$0xff]
    %s2633 = scalar_lea.vmem [#allocation2], 783
    %v2634 = vld [vmem:[%s2633] ss:$2 sm:$0xff]
    %s2635 = scalar_lea.vmem [#allocation2], 799
    %v2636 = vld [vmem:[%s2635] ss:$2 sm:$0xff]
    %v2637 = vmax.f32 %v2630, %v2634
    %v2638 = vmax.f32 %v2632, %v2636
    %v2639 = vmax.f32 %v2627, %v2637
    %v2640 = vmax.f32 %v2628, %v2638
    %v2641 = vadd.f32 %v2639, %v2310
    %v2642 = vadd.f32 %v2640, %v2310
    %v2643 = vmax.f32 %v2641, 0.0
    %v2644 = vmax.f32 %v2642, 0.0
    %2645 = vst.msk [vmem:[#allocation3 + $0xd9] sm:$0xff] %vm1953, %v2643
    %2646 = vst.msk [vmem:[#allocation3 + $0xe1] sm:$0xff] %vm1953, %v2644
    %s2647 = scalar_lea.vmem [#allocation2], 816
    %v2648 = vld [vmem:[%s2647] ss:$2 sm:$0xff]
    %s2649 = scalar_lea.vmem [#allocation2], 832
    %v2650 = vld [vmem:[%s2649] ss:$2 sm:$0xff]
    %s2651 = scalar_lea.vmem [#allocation2], 817
    %v2652 = vld [vmem:[%s2651] ss:$2 sm:$0xff]
    %s2653 = scalar_lea.vmem [#allocation2], 833
    %v2654 = vld [vmem:[%s2653] ss:$2 sm:$0xff]
    %v2655 = vmax.f32 %v2648, %v2652
    %v2656 = vmax.f32 %v2650, %v2654
    %s2657 = scalar_lea.vmem [#allocation2], 850
    %v2658 = vld [vmem:[%s2657] ss:$2 sm:$0xff]
    %s2659 = scalar_lea.vmem [#allocation2], 866
    %v2660 = vld [vmem:[%s2659] ss:$2 sm:$0xff]
    %s2661 = scalar_lea.vmem [#allocation2], 851
    %v2662 = vld [vmem:[%s2661] ss:$2 sm:$0xff]
    %s2663 = scalar_lea.vmem [#allocation2], 867
    %v2664 = vld [vmem:[%s2663] ss:$2 sm:$0xff]
    %v2665 = vmax.f32 %v2658, %v2662
    %v2666 = vmax.f32 %v2660, %v2664
    %v2667 = vmax.f32 %v2655, %v2665
    %v2668 = vmax.f32 %v2656, %v2666
    %v2669 = vadd.f32 %v2667, %v2310
    %v2670 = vadd.f32 %v2668, %v2310
    %v2671 = vmax.f32 %v2669, 0.0
    %v2672 = vmax.f32 %v2670, 0.0
    %2673 = vst.msk [vmem:[#allocation3 + $0xeb] sm:$0xff] %vm1953, %v2671
    %2674 = vst.msk [vmem:[#allocation3 + $0xf3] sm:$0xff] %vm1953, %v2672
    %s2675 = scalar_lea.vmem [#allocation2], 884
    %v2676 = vld [vmem:[%s2675] ss:$2 sm:$0xff]
    %s2677 = scalar_lea.vmem [#allocation2], 900
    %v2678 = vld [vmem:[%s2677] ss:$2 sm:$0xff]
    %s2679 = scalar_lea.vmem [#allocation2], 885
    %v2680 = vld [vmem:[%s2679] ss:$2 sm:$0xff]
    %s2681 = scalar_lea.vmem [#allocation2], 901
    %v2682 = vld [vmem:[%s2681] ss:$2 sm:$0xff]
    %v2683 = vmax.f32 %v2676, %v2680
    %v2684 = vmax.f32 %v2678, %v2682
    %s2685 = scalar_lea.vmem [#allocation2], 918
    %v2686 = vld [vmem:[%s2685] ss:$2 sm:$0xff]
    %s2687 = scalar_lea.vmem [#allocation2], 934
    %v2688 = vld [vmem:[%s2687] ss:$2 sm:$0xff]
    %s2689 = scalar_lea.vmem [#allocation2], 919
    %v2690 = vld [vmem:[%s2689] ss:$2 sm:$0xff]
    %s2691 = scalar_lea.vmem [#allocation2], 935
    %v2692 = vld [vmem:[%s2691] ss:$2 sm:$0xff]
    %v2693 = vmax.f32 %v2686, %v2690
    %v2694 = vmax.f32 %v2688, %v2692
    %v2695 = vmax.f32 %v2683, %v2693
    %v2696 = vmax.f32 %v2684, %v2694
    %v2697 = vadd.f32 %v2695, %v2310
    %v2698 = vadd.f32 %v2696, %v2310
    %v2699 = vmax.f32 %v2697, 0.0
    %v2700 = vmax.f32 %v2698, 0.0
    %2701 = vst.msk [vmem:[#allocation3 + $0xfd] sm:$0xff] %vm1953, %v2699
    %2702 = vst.msk [vmem:[#allocation3 + $0x105] sm:$0xff] %vm1953, %v2700
    %s2703 = scalar_lea.vmem [#allocation2], 952
    %v2704 = vld [vmem:[%s2703] ss:$2 sm:$0xff]
    %s2705 = scalar_lea.vmem [#allocation2], 968
    %v2706 = vld [vmem:[%s2705] ss:$2 sm:$0xff]
    %s2707 = scalar_lea.vmem [#allocation2], 953
    %v2708 = vld [vmem:[%s2707] ss:$2 sm:$0xff]
    %s2709 = scalar_lea.vmem [#allocation2], 969
    %v2710 = vld [vmem:[%s2709] ss:$2 sm:$0xff]
    %v2711 = vmax.f32 %v2704, %v2708
    %v2712 = vmax.f32 %v2706, %v2710
    %s2713 = scalar_lea.vmem [#allocation2], 986
    %v2714 = vld [vmem:[%s2713] ss:$2 sm:$0xff]
    %s2715 = scalar_lea.vmem [#allocation2], 1002
    %v2716 = vld [vmem:[%s2715] ss:$2 sm:$0xff]
    %s2717 = scalar_lea.vmem [#allocation2], 987
    %v2718 = vld [vmem:[%s2717] ss:$2 sm:$0xff]
    %s2719 = scalar_lea.vmem [#allocation2], 1003
    %v2720 = vld [vmem:[%s2719] ss:$2 sm:$0xff]
    %v2721 = vmax.f32 %v2714, %v2718
    %v2722 = vmax.f32 %v2716, %v2720
    %v2723 = vmax.f32 %v2711, %v2721
    %v2724 = vmax.f32 %v2712, %v2722
    %v2725 = vadd.f32 %v2723, %v2310
    %v2726 = vadd.f32 %v2724, %v2310
    %v2727 = vmax.f32 %v2725, 0.0
    %v2728 = vmax.f32 %v2726, 0.0
    %2729 = vst.msk [vmem:[#allocation3 + $0x10f] sm:$0xff] %vm1953, %v2727
    %2730 = vst.msk [vmem:[#allocation3 + $0x117] sm:$0xff] %vm1953, %v2728
    %s2731 = scalar_lea.vmem [#allocation2], 1020
    %v2732 = vld [vmem:[%s2731] ss:$2 sm:$0xff]
    %s2733 = scalar_lea.vmem [#allocation2], 1036
    %v2734 = vld [vmem:[%s2733] ss:$2 sm:$0xff]
    %s2735 = scalar_lea.vmem [#allocation2], 1021
    %v2736 = vld [vmem:[%s2735] ss:$2 sm:$0xff]
    %s2737 = scalar_lea.vmem [#allocation2], 1037
    %v2738 = vld [vmem:[%s2737] ss:$2 sm:$0xff]
    %v2739 = vmax.f32 %v2732, %v2736
    %v2740 = vmax.f32 %v2734, %v2738
    %s2741 = scalar_lea.vmem [#allocation2], 1054
    %v2742 = vld [vmem:[%s2741] ss:$2 sm:$0xff]
    %s2743 = scalar_lea.vmem [#allocation2], 1070
    %v2744 = vld [vmem:[%s2743] ss:$2 sm:$0xff]
    %s2745 = scalar_lea.vmem [#allocation2], 1055
    %v2746 = vld [vmem:[%s2745] ss:$2 sm:$0xff]
    %s2747 = scalar_lea.vmem [#allocation2], 1071
    %v2748 = vld [vmem:[%s2747] ss:$2 sm:$0xff]
    %v2749 = vmax.f32 %v2742, %v2746
    %v2750 = vmax.f32 %v2744, %v2748
    %v2751 = vmax.f32 %v2739, %v2749
    %v2752 = vmax.f32 %v2740, %v2750
    %v2753 = vadd.f32 %v2751, %v2310
    %v2754 = vadd.f32 %v2752, %v2310
    %v2755 = vmax.f32 %v2753, 0.0
    %v2756 = vmax.f32 %v2754, 0.0
    %2757 = vst.msk [vmem:[#allocation3 + $0x121] sm:$0xff] %vm1953, %v2755
    %2758 = vst.msk [vmem:[#allocation3 + $0x129] sm:$0xff] %vm1953, %v2756
    %s2759 = scalar_lea.vmem [#allocation2], 1088
    %v2760 = vld [vmem:[%s2759] ss:$2 sm:$0xff]
    %s2761 = scalar_lea.vmem [#allocation2], 1104
    %v2762 = vld [vmem:[%s2761] ss:$2 sm:$0xff]
    %s2763 = scalar_lea.vmem [#allocation2], 1089
    %v2764 = vld [vmem:[%s2763] ss:$2 sm:$0xff]
    %s2765 = scalar_lea.vmem [#allocation2], 1105
    %v2766 = vld [vmem:[%s2765] ss:$2 sm:$0xff]
    %v2767 = vmax.f32 %v2760, %v2764
    %v2768 = vmax.f32 %v2762, %v2766
    %s2769 = scalar_lea.vmem [#allocation2], 1122
    %v2770 = vld [vmem:[%s2769] ss:$2 sm:$0xff]
    %s2771 = scalar_lea.vmem [#allocation2], 1138
    %v2772 = vld [vmem:[%s2771] ss:$2 sm:$0xff]
    %s2773 = scalar_lea.vmem [#allocation2], 1123
    %v2774 = vld [vmem:[%s2773] ss:$2 sm:$0xff]
    %s2775 = scalar_lea.vmem [#allocation2], 1139
    %v2776 = vld [vmem:[%s2775] ss:$2 sm:$0xff]
    %v2777 = vmax.f32 %v2770, %v2774
    %v2778 = vmax.f32 %v2772, %v2776
    %v2779 = vmax.f32 %v2767, %v2777
    %v2780 = vmax.f32 %v2768, %v2778
    %v2781 = vadd.f32 %v2779, %v2310
    %v2782 = vadd.f32 %v2780, %v2310
    %v2783 = vmax.f32 %v2781, 0.0
    %v2784 = vmax.f32 %v2782, 0.0
    %2785 = vst.msk [vmem:[#allocation3 + $0x15b] sm:$0xff] %vm1953, %v2783
    %2786 = vst.msk [vmem:[#allocation3 + $0x163] sm:$0xff] %vm1953, %v2784
    %s2787 = scalar_lea.vmem [#allocation2], 1156
    %v2788 = vld [vmem:[%s2787] ss:$2 sm:$0xff]
    %s2789 = scalar_lea.vmem [#allocation2], 1172
    %v2790 = vld [vmem:[%s2789] ss:$2 sm:$0xff]
    %s2791 = scalar_lea.vmem [#allocation2], 1157
    %v2792 = vld [vmem:[%s2791] ss:$2 sm:$0xff]
    %s2793 = scalar_lea.vmem [#allocation2], 1173
    %v2794 = vld [vmem:[%s2793] ss:$2 sm:$0xff]
    %v2795 = vmax.f32 %v2788, %v2792
    %v2796 = vmax.f32 %v2790, %v2794
    %s2797 = scalar_lea.vmem [#allocation2], 1190
    %v2798 = vld [vmem:[%s2797] ss:$2 sm:$0xff]
    %s2799 = scalar_lea.vmem [#allocation2], 1206
    %v2800 = vld [vmem:[%s2799] ss:$2 sm:$0xff]
    %s2801 = scalar_lea.vmem [#allocation2], 1191
    %v2802 = vld [vmem:[%s2801] ss:$2 sm:$0xff]
    %s2803 = scalar_lea.vmem [#allocation2], 1207
    %v2804 = vld [vmem:[%s2803] ss:$2 sm:$0xff]
    %v2805 = vmax.f32 %v2798, %v2802
    %v2806 = vmax.f32 %v2800, %v2804
    %v2807 = vmax.f32 %v2795, %v2805
    %v2808 = vmax.f32 %v2796, %v2806
    %v2809 = vadd.f32 %v2807, %v2310
    %v2810 = vadd.f32 %v2808, %v2310
    %v2811 = vmax.f32 %v2809, 0.0
    %v2812 = vmax.f32 %v2810, 0.0
    %2813 = vst.msk [vmem:[#allocation3 + $0x16d] sm:$0xff] %vm1953, %v2811
    %2814 = vst.msk [vmem:[#allocation3 + $0x175] sm:$0xff] %vm1953, %v2812
    %s2815 = scalar_lea.vmem [#allocation2], 1224
    %v2816 = vld [vmem:[%s2815] ss:$2 sm:$0xff]
    %s2817 = scalar_lea.vmem [#allocation2], 1240
    %v2818 = vld [vmem:[%s2817] ss:$2 sm:$0xff]
    %s2819 = scalar_lea.vmem [#allocation2], 1225
    %v2820 = vld [vmem:[%s2819] ss:$2 sm:$0xff]
    %s2821 = scalar_lea.vmem [#allocation2], 1241
    %v2822 = vld [vmem:[%s2821] ss:$2 sm:$0xff]
    %v2823 = vmax.f32 %v2816, %v2820
    %v2824 = vmax.f32 %v2818, %v2822
    %s2825 = scalar_lea.vmem [#allocation2], 1258
    %v2826 = vld [vmem:[%s2825] ss:$2 sm:$0xff]
    %s2827 = scalar_lea.vmem [#allocation2], 1274
    %v2828 = vld [vmem:[%s2827] ss:$2 sm:$0xff]
    %s2829 = scalar_lea.vmem [#allocation2], 1259
    %v2830 = vld [vmem:[%s2829] ss:$2 sm:$0xff]
    %s2831 = scalar_lea.vmem [#allocation2], 1275
    %v2832 = vld [vmem:[%s2831] ss:$2 sm:$0xff]
    %v2833 = vmax.f32 %v2826, %v2830
    %v2834 = vmax.f32 %v2828, %v2832
    %v2835 = vmax.f32 %v2823, %v2833
    %v2836 = vmax.f32 %v2824, %v2834
    %v2837 = vadd.f32 %v2835, %v2310
    %v2838 = vadd.f32 %v2836, %v2310
    %v2839 = vmax.f32 %v2837, 0.0
    %v2840 = vmax.f32 %v2838, 0.0
    %2841 = vst.msk [vmem:[#allocation3 + $0x17f] sm:$0xff] %vm1953, %v2839
    %2842 = vst.msk [vmem:[#allocation3 + $0x187] sm:$0xff] %vm1953, %v2840
    %s2843 = scalar_lea.vmem [#allocation2], 1292
    %v2844 = vld [vmem:[%s2843] ss:$2 sm:$0xff]
    %s2845 = scalar_lea.vmem [#allocation2], 1308
    %v2846 = vld [vmem:[%s2845] ss:$2 sm:$0xff]
    %s2847 = scalar_lea.vmem [#allocation2], 1293
    %v2848 = vld [vmem:[%s2847] ss:$2 sm:$0xff]
    %s2849 = scalar_lea.vmem [#allocation2], 1309
    %v2850 = vld [vmem:[%s2849] ss:$2 sm:$0xff]
    %v2851 = vmax.f32 %v2844, %v2848
    %v2852 = vmax.f32 %v2846, %v2850
    %s2853 = scalar_lea.vmem [#allocation2], 1326
    %v2854 = vld [vmem:[%s2853] ss:$2 sm:$0xff]
    %s2855 = scalar_lea.vmem [#allocation2], 1342
    %v2856 = vld [vmem:[%s2855] ss:$2 sm:$0xff]
    %s2857 = scalar_lea.vmem [#allocation2], 1327
    %v2858 = vld [vmem:[%s2857] ss:$2 sm:$0xff]
    %s2859 = scalar_lea.vmem [#allocation2], 1343
    %v2860 = vld [vmem:[%s2859] ss:$2 sm:$0xff]
    %v2861 = vmax.f32 %v2854, %v2858
    %v2862 = vmax.f32 %v2856, %v2860
    %v2863 = vmax.f32 %v2851, %v2861
    %v2864 = vmax.f32 %v2852, %v2862
    %v2865 = vadd.f32 %v2863, %v2310
    %v2866 = vadd.f32 %v2864, %v2310
    %v2867 = vmax.f32 %v2865, 0.0
    %v2868 = vmax.f32 %v2866, 0.0
    %2869 = vst.msk [vmem:[#allocation3 + $0x191] sm:$0xff] %vm1953, %v2867
    %2870 = vst.msk [vmem:[#allocation3 + $0x199] sm:$0xff] %vm1953, %v2868
    %s2871 = scalar_lea.vmem [#allocation2], 1360
    %v2872 = vld [vmem:[%s2871] ss:$2 sm:$0xff]
    %s2873 = scalar_lea.vmem [#allocation2], 1376
    %v2874 = vld [vmem:[%s2873] ss:$2 sm:$0xff]
    %s2875 = scalar_lea.vmem [#allocation2], 1361
    %v2876 = vld [vmem:[%s2875] ss:$2 sm:$0xff]
    %s2877 = scalar_lea.vmem [#allocation2], 1377
    %v2878 = vld [vmem:[%s2877] ss:$2 sm:$0xff]
    %v2879 = vmax.f32 %v2872, %v2876
    %v2880 = vmax.f32 %v2874, %v2878
    %s2881 = scalar_lea.vmem [#allocation2], 1394
    %v2882 = vld [vmem:[%s2881] ss:$2 sm:$0xff]
    %s2883 = scalar_lea.vmem [#allocation2], 1410
    %v2884 = vld [vmem:[%s2883] ss:$2 sm:$0xff]
    %s2885 = scalar_lea.vmem [#allocation2], 1395
    %v2886 = vld [vmem:[%s2885] ss:$2 sm:$0xff]
    %s2887 = scalar_lea.vmem [#allocation2], 1411
    %v2888 = vld [vmem:[%s2887] ss:$2 sm:$0xff]
    %v2889 = vmax.f32 %v2882, %v2886
    %v2890 = vmax.f32 %v2884, %v2888
    %v2891 = vmax.f32 %v2879, %v2889
    %v2892 = vmax.f32 %v2880, %v2890
    %v2893 = vadd.f32 %v2891, %v2310
    %v2894 = vadd.f32 %v2892, %v2310
    %v2895 = vmax.f32 %v2893, 0.0
    %v2896 = vmax.f32 %v2894, 0.0
    %2897 = vst.msk [vmem:[#allocation3 + $0x1a3] sm:$0xff] %vm1953, %v2895
    %2898 = vst.msk [vmem:[#allocation3 + $0x1ab] sm:$0xff] %vm1953, %v2896
    %s2899 = scalar_lea.vmem [#allocation2], 1428
    %v2900 = vld [vmem:[%s2899] ss:$2 sm:$0xff]
    %s2901 = scalar_lea.vmem [#allocation2], 1444
    %v2902 = vld [vmem:[%s2901] ss:$2 sm:$0xff]
    %s2903 = scalar_lea.vmem [#allocation2], 1429
    %v2904 = vld [vmem:[%s2903] ss:$2 sm:$0xff]
    %s2905 = scalar_lea.vmem [#allocation2], 1445
    %v2906 = vld [vmem:[%s2905] ss:$2 sm:$0xff]
    %v2907 = vmax.f32 %v2900, %v2904
    %v2908 = vmax.f32 %v2902, %v2906
    %s2909 = scalar_lea.vmem [#allocation2], 1462
    %v2910 = vld [vmem:[%s2909] ss:$2 sm:$0xff]
    %s2911 = scalar_lea.vmem [#allocation2], 1478
    %v2912 = vld [vmem:[%s2911] ss:$2 sm:$0xff]
    %s2913 = scalar_lea.vmem [#allocation2], 1463
    %v2914 = vld [vmem:[%s2913] ss:$2 sm:$0xff]
    %s2915 = scalar_lea.vmem [#allocation2], 1479
    %v2916 = vld [vmem:[%s2915] ss:$2 sm:$0xff]
    %v2917 = vmax.f32 %v2910, %v2914
    %v2918 = vmax.f32 %v2912, %v2916
    %v2919 = vmax.f32 %v2907, %v2917
    %v2920 = vmax.f32 %v2908, %v2918
    %v2921 = vadd.f32 %v2919, %v2310
    %v2922 = vadd.f32 %v2920, %v2310
    %v2923 = vmax.f32 %v2921, 0.0
    %v2924 = vmax.f32 %v2922, 0.0
    %2925 = vst.msk [vmem:[#allocation3 + $0x1b5] sm:$0xff] %vm1953, %v2923
    %2926 = vst.msk [vmem:[#allocation3 + $0x1bd] sm:$0xff] %vm1953, %v2924
    %s2927 = scalar_lea.vmem [#allocation2], 1496
    %v2928 = vld [vmem:[%s2927] ss:$2 sm:$0xff]
    %s2929 = scalar_lea.vmem [#allocation2], 1512
    %v2930 = vld [vmem:[%s2929] ss:$2 sm:$0xff]
    %s2931 = scalar_lea.vmem [#allocation2], 1497
    %v2932 = vld [vmem:[%s2931] ss:$2 sm:$0xff]
    %s2933 = scalar_lea.vmem [#allocation2], 1513
    %v2934 = vld [vmem:[%s2933] ss:$2 sm:$0xff]
    %v2935 = vmax.f32 %v2928, %v2932
    %v2936 = vmax.f32 %v2930, %v2934
    %s2937 = scalar_lea.vmem [#allocation2], 1530
    %v2938 = vld [vmem:[%s2937] ss:$2 sm:$0xff]
    %s2939 = scalar_lea.vmem [#allocation2], 1546
    %v2940 = vld [vmem:[%s2939] ss:$2 sm:$0xff]
    %s2941 = scalar_lea.vmem [#allocation2], 1531
    %v2942 = vld [vmem:[%s2941] ss:$2 sm:$0xff]
    %s2943 = scalar_lea.vmem [#allocation2], 1547
    %v2944 = vld [vmem:[%s2943] ss:$2 sm:$0xff]
    %v2945 = vmax.f32 %v2938, %v2942
    %v2946 = vmax.f32 %v2940, %v2944
    %v2947 = vmax.f32 %v2935, %v2945
    %v2948 = vmax.f32 %v2936, %v2946
    %v2949 = vadd.f32 %v2947, %v2310
    %v2950 = vadd.f32 %v2948, %v2310
    %v2951 = vmax.f32 %v2949, 0.0
    %v2952 = vmax.f32 %v2950, 0.0
    %2953 = vst.msk [vmem:[#allocation3 + $0x1c7] sm:$0xff] %vm1953, %v2951
    %2954 = vst.msk [vmem:[#allocation3 + $0x1cf] sm:$0xff] %vm1953, %v2952
    %s2955 = scalar_lea.vmem [#allocation2], 1564
    %v2956 = vld [vmem:[%s2955] ss:$2 sm:$0xff]
    %s2957 = scalar_lea.vmem [#allocation2], 1580
    %v2958 = vld [vmem:[%s2957] ss:$2 sm:$0xff]
    %s2959 = scalar_lea.vmem [#allocation2], 1565
    %v2960 = vld [vmem:[%s2959] ss:$2 sm:$0xff]
    %s2961 = scalar_lea.vmem [#allocation2], 1581
    %v2962 = vld [vmem:[%s2961] ss:$2 sm:$0xff]
    %v2963 = vmax.f32 %v2956, %v2960
    %v2964 = vmax.f32 %v2958, %v2962
    %s2965 = scalar_lea.vmem [#allocation2], 1598
    %v2966 = vld [vmem:[%s2965] ss:$2 sm:$0xff]
    %s2967 = scalar_lea.vmem [#allocation2], 1614
    %v2968 = vld [vmem:[%s2967] ss:$2 sm:$0xff]
    %s2969 = scalar_lea.vmem [#allocation2], 1599
    %v2970 = vld [vmem:[%s2969] ss:$2 sm:$0xff]
    %s2971 = scalar_lea.vmem [#allocation2], 1615
    %v2972 = vld [vmem:[%s2971] ss:$2 sm:$0xff]
    %v2973 = vmax.f32 %v2966, %v2970
    %v2974 = vmax.f32 %v2968, %v2972
    %v2975 = vmax.f32 %v2963, %v2973
    %v2976 = vmax.f32 %v2964, %v2974
    %v2977 = vadd.f32 %v2975, %v2310
    %v2978 = vadd.f32 %v2976, %v2310
    %v2979 = vmax.f32 %v2977, 0.0
    %v2980 = vmax.f32 %v2978, 0.0
    %2981 = vst.msk [vmem:[#allocation3 + $0x1d9] sm:$0xff] %vm1953, %v2979
    %2982 = vst.msk [vmem:[#allocation3 + $0x1e1] sm:$0xff] %vm1953, %v2980
    %s2983 = scalar_lea.vmem [#allocation2], 1632
    %v2984 = vld [vmem:[%s2983] ss:$2 sm:$0xff]
    %s2985 = scalar_lea.vmem [#allocation2], 1648
    %v2986 = vld [vmem:[%s2985] ss:$2 sm:$0xff]
    %s2987 = scalar_lea.vmem [#allocation2], 1633
    %v2988 = vld [vmem:[%s2987] ss:$2 sm:$0xff]
    %s2989 = scalar_lea.vmem [#allocation2], 1649
    %v2990 = vld [vmem:[%s2989] ss:$2 sm:$0xff]
    %v2991 = vmax.f32 %v2984, %v2988
    %v2992 = vmax.f32 %v2986, %v2990
    %s2993 = scalar_lea.vmem [#allocation2], 1666
    %v2994 = vld [vmem:[%s2993] ss:$2 sm:$0xff]
    %s2995 = scalar_lea.vmem [#allocation2], 1682
    %v2996 = vld [vmem:[%s2995] ss:$2 sm:$0xff]
    %s2997 = scalar_lea.vmem [#allocation2], 1667
    %v2998 = vld [vmem:[%s2997] ss:$2 sm:$0xff]
    %s2999 = scalar_lea.vmem [#allocation2], 1683
    %v3000 = vld [vmem:[%s2999] ss:$2 sm:$0xff]
    %v3001 = vmax.f32 %v2994, %v2998
    %v3002 = vmax.f32 %v2996, %v3000
    %v3003 = vmax.f32 %v2991, %v3001
    %v3004 = vmax.f32 %v2992, %v3002
    %v3005 = vadd.f32 %v3003, %v2310
    %v3006 = vadd.f32 %v3004, %v2310
    %v3007 = vmax.f32 %v3005, 0.0
    %v3008 = vmax.f32 %v3006, 0.0
    %3009 = vst.msk [vmem:[#allocation3 + $0x1eb] sm:$0xff] %vm1953, %v3007
    %3010 = vst.msk [vmem:[#allocation3 + $0x1f3] sm:$0xff] %vm1953, %v3008
    %s3011 = scalar_lea.vmem [#allocation2], 1700
    %v3012 = vld [vmem:[%s3011] ss:$2 sm:$0xff]
    %s3013 = scalar_lea.vmem [#allocation2], 1716
    %v3014 = vld [vmem:[%s3013] ss:$2 sm:$0xff]
    %s3015 = scalar_lea.vmem [#allocation2], 1701
    %v3016 = vld [vmem:[%s3015] ss:$2 sm:$0xff]
    %s3017 = scalar_lea.vmem [#allocation2], 1717
    %v3018 = vld [vmem:[%s3017] ss:$2 sm:$0xff]
    %v3019 = vmax.f32 %v3012, %v3016
    %v3020 = vmax.f32 %v3014, %v3018
    %s3021 = scalar_lea.vmem [#allocation2], 1734
    %v3022 = vld [vmem:[%s3021] ss:$2 sm:$0xff]
    %s3023 = scalar_lea.vmem [#allocation2], 1750
    %v3024 = vld [vmem:[%s3023] ss:$2 sm:$0xff]
    %s3025 = scalar_lea.vmem [#allocation2], 1735
    %v3026 = vld [vmem:[%s3025] ss:$2 sm:$0xff]
    %s3027 = scalar_lea.vmem [#allocation2], 1751
    %v3028 = vld [vmem:[%s3027] ss:$2 sm:$0xff]
    %v3029 = vmax.f32 %v3022, %v3026
    %v3030 = vmax.f32 %v3024, %v3028
    %v3031 = vmax.f32 %v3019, %v3029
    %v3032 = vmax.f32 %v3020, %v3030
    %v3033 = vadd.f32 %v3031, %v2310
    %v3034 = vadd.f32 %v3032, %v2310
    %v3035 = vmax.f32 %v3033, 0.0
    %v3036 = vmax.f32 %v3034, 0.0
    %3037 = vst.msk [vmem:[#allocation3 + $0x1fd] sm:$0xff] %vm1953, %v3035
    %3038 = vst.msk [vmem:[#allocation3 + $0x205] sm:$0xff] %vm1953, %v3036
    %s3039 = scalar_lea.vmem [#allocation2], 1768
    %v3040 = vld [vmem:[%s3039] ss:$2 sm:$0xff]
    %s3041 = scalar_lea.vmem [#allocation2], 1784
    %v3042 = vld [vmem:[%s3041] ss:$2 sm:$0xff]
    %s3043 = scalar_lea.vmem [#allocation2], 1769
    %v3044 = vld [vmem:[%s3043] ss:$2 sm:$0xff]
    %s3045 = scalar_lea.vmem [#allocation2], 1785
    %v3046 = vld [vmem:[%s3045] ss:$2 sm:$0xff]
    %v3047 = vmax.f32 %v3040, %v3044
    %v3048 = vmax.f32 %v3042, %v3046
    %s3049 = scalar_lea.vmem [#allocation2], 1802
    %v3050 = vld [vmem:[%s3049] ss:$2 sm:$0xff]
    %s3051 = scalar_lea.vmem [#allocation2], 1818
    %v3052 = vld [vmem:[%s3051] ss:$2 sm:$0xff]
    %s3053 = scalar_lea.vmem [#allocation2], 1803
    %v3054 = vld [vmem:[%s3053] ss:$2 sm:$0xff]
    %s3055 = scalar_lea.vmem [#allocation2], 1819
    %v3056 = vld [vmem:[%s3055] ss:$2 sm:$0xff]
    %v3057 = vmax.f32 %v3050, %v3054
    %v3058 = vmax.f32 %v3052, %v3056
    %v3059 = vmax.f32 %v3047, %v3057
    %v3060 = vmax.f32 %v3048, %v3058
    %v3061 = vadd.f32 %v3059, %v2310
    %v3062 = vadd.f32 %v3060, %v2310
    %v3063 = vmax.f32 %v3061, 0.0
    %v3064 = vmax.f32 %v3062, 0.0
    %3065 = vst.msk [vmem:[#allocation3 + $0x20f] sm:$0xff] %vm1953, %v3063
    %3066 = vst.msk [vmem:[#allocation3 + $0x217] sm:$0xff] %vm1953, %v3064
    %s3067 = scalar_lea.vmem [#allocation2], 1836
    %v3068 = vld [vmem:[%s3067] ss:$2 sm:$0xff]
    %s3069 = scalar_lea.vmem [#allocation2], 1852
    %v3070 = vld [vmem:[%s3069] ss:$2 sm:$0xff]
    %s3071 = scalar_lea.vmem [#allocation2], 1837
    %v3072 = vld [vmem:[%s3071] ss:$2 sm:$0xff]
    %s3073 = scalar_lea.vmem [#allocation2], 1853
    %v3074 = vld [vmem:[%s3073] ss:$2 sm:$0xff]
    %v3075 = vmax.f32 %v3068, %v3072
    %v3076 = vmax.f32 %v3070, %v3074
    %s3077 = scalar_lea.vmem [#allocation2], 1870
    %v3078 = vld [vmem:[%s3077] ss:$2 sm:$0xff]
    %s3079 = scalar_lea.vmem [#allocation2], 1886
    %v3080 = vld [vmem:[%s3079] ss:$2 sm:$0xff]
    %s3081 = scalar_lea.vmem [#allocation2], 1871
    %v3082 = vld [vmem:[%s3081] ss:$2 sm:$0xff]
    %s3083 = scalar_lea.vmem [#allocation2], 1887
    %v3084 = vld [vmem:[%s3083] ss:$2 sm:$0xff]
    %v3085 = vmax.f32 %v3078, %v3082
    %v3086 = vmax.f32 %v3080, %v3084
    %v3087 = vmax.f32 %v3075, %v3085
    %v3088 = vmax.f32 %v3076, %v3086
    %v3089 = vadd.f32 %v3087, %v2310
    %v3090 = vadd.f32 %v3088, %v2310
    %v3091 = vmax.f32 %v3089, 0.0
    %v3092 = vmax.f32 %v3090, 0.0
    %3093 = vst.msk [vmem:[#allocation3 + $0x221] sm:$0xff] %vm1953, %v3091
    %3094 = vst.msk [vmem:[#allocation3 + $0x229] sm:$0xff] %vm1953, %v3092
    %s3095 = scalar_lea.vmem [#allocation2], 1904
    %v3096 = vld [vmem:[%s3095] ss:$2 sm:$0xff]
    %s3097 = scalar_lea.vmem [#allocation2], 1920
    %v3098 = vld [vmem:[%s3097] ss:$2 sm:$0xff]
    %s3099 = scalar_lea.vmem [#allocation2], 1905
    %v3100 = vld [vmem:[%s3099] ss:$2 sm:$0xff]
    %s3101 = scalar_lea.vmem [#allocation2], 1921
    %v3102 = vld [vmem:[%s3101] ss:$2 sm:$0xff]
    %v3103 = vmax.f32 %v3096, %v3100
    %v3104 = vmax.f32 %v3098, %v3102
    %s3105 = scalar_lea.vmem [#allocation2], 1938
    %v3106 = vld [vmem:[%s3105] ss:$2 sm:$0xff]
    %s3107 = scalar_lea.vmem [#allocation2], 1954
    %v3108 = vld [vmem:[%s3107] ss:$2 sm:$0xff]
    %s3109 = scalar_lea.vmem [#allocation2], 1939
    %v3110 = vld [vmem:[%s3109] ss:$2 sm:$0xff]
    %s3111 = scalar_lea.vmem [#allocation2], 1955
    %v3112 = vld [vmem:[%s3111] ss:$2 sm:$0xff]
    %v3113 = vmax.f32 %v3106, %v3110
    %v3114 = vmax.f32 %v3108, %v3112
    %v3115 = vmax.f32 %v3103, %v3113
    %v3116 = vmax.f32 %v3104, %v3114
    %v3117 = vadd.f32 %v3115, %v2310
    %v3118 = vadd.f32 %v3116, %v2310
    %v3119 = vmax.f32 %v3117, 0.0
    %v3120 = vmax.f32 %v3118, 0.0
    %3121 = vst.msk [vmem:[#allocation3 + $0x233] sm:$0xff] %vm1953, %v3119
    %3122 = vst.msk [vmem:[#allocation3 + $0x23b] sm:$0xff] %vm1953, %v3120
    %s3123 = scalar_lea.vmem [#allocation2], 1972
    %v3124 = vld [vmem:[%s3123] ss:$2 sm:$0xff]
    %s3125 = scalar_lea.vmem [#allocation2], 1988
    %v3126 = vld [vmem:[%s3125] ss:$2 sm:$0xff]
    %s3127 = scalar_lea.vmem [#allocation2], 1973
    %v3128 = vld [vmem:[%s3127] ss:$2 sm:$0xff]
    %s3129 = scalar_lea.vmem [#allocation2], 1989
    %v3130 = vld [vmem:[%s3129] ss:$2 sm:$0xff]
    %v3131 = vmax.f32 %v3124, %v3128
    %v3132 = vmax.f32 %v3126, %v3130
    %s3133 = scalar_lea.vmem [#allocation2], 2006
    %v3134 = vld [vmem:[%s3133] ss:$2 sm:$0xff]
    %s3135 = scalar_lea.vmem [#allocation2], 2022
    %v3136 = vld [vmem:[%s3135] ss:$2 sm:$0xff]
    %s3137 = scalar_lea.vmem [#allocation2], 2007
    %v3138 = vld [vmem:[%s3137] ss:$2 sm:$0xff]
    %s3139 = scalar_lea.vmem [#allocation2], 2023
    %v3140 = vld [vmem:[%s3139] ss:$2 sm:$0xff]
    %v3141 = vmax.f32 %v3134, %v3138
    %v3142 = vmax.f32 %v3136, %v3140
    %v3143 = vmax.f32 %v3131, %v3141
    %v3144 = vmax.f32 %v3132, %v3142
    %v3145 = vadd.f32 %v3143, %v2310
    %v3146 = vadd.f32 %v3144, %v2310
    %v3147 = vmax.f32 %v3145, 0.0
    %v3148 = vmax.f32 %v3146, 0.0
    %3149 = vst.msk [vmem:[#allocation3 + $0x245] sm:$0xff] %vm1953, %v3147
    %3150 = vst.msk [vmem:[#allocation3 + $0x24d] sm:$0xff] %vm1953, %v3148
    %s3151 = scalar_lea.vmem [#allocation2], 2040
    %v3152 = vld [vmem:[%s3151] ss:$2 sm:$0xff]
    %s3153 = scalar_lea.vmem [#allocation2], 2056
    %v3154 = vld [vmem:[%s3153] ss:$2 sm:$0xff]
    %s3155 = scalar_lea.vmem [#allocation2], 2041
    %v3156 = vld [vmem:[%s3155] ss:$2 sm:$0xff]
    %s3157 = scalar_lea.vmem [#allocation2], 2057
    %v3158 = vld [vmem:[%s3157] ss:$2 sm:$0xff]
    %v3159 = vmax.f32 %v3152, %v3156
    %v3160 = vmax.f32 %v3154, %v3158
    %s3161 = scalar_lea.vmem [#allocation2], 2074
    %v3162 = vld [vmem:[%s3161] ss:$2 sm:$0xff]
    %s3163 = scalar_lea.vmem [#allocation2], 2090
    %v3164 = vld [vmem:[%s3163] ss:$2 sm:$0xff]
    %s3165 = scalar_lea.vmem [#allocation2], 2075
    %v3166 = vld [vmem:[%s3165] ss:$2 sm:$0xff]
    %s3167 = scalar_lea.vmem [#allocation2], 2091
    %v3168 = vld [vmem:[%s3167] ss:$2 sm:$0xff]
    %v3169 = vmax.f32 %v3162, %v3166
    %v3170 = vmax.f32 %v3164, %v3168
    %v3171 = vmax.f32 %v3159, %v3169
    %v3172 = vmax.f32 %v3160, %v3170
    %v3173 = vadd.f32 %v3171, %v2310
    %v3174 = vadd.f32 %v3172, %v2310
    %v3175 = vmax.f32 %v3173, 0.0
    %v3176 = vmax.f32 %v3174, 0.0
    %3177 = vst.msk [vmem:[#allocation3 + $0x257] sm:$0xff] %vm1953, %v3175
    %3178 = vst.msk [vmem:[#allocation3 + $0x25f] sm:$0xff] %vm1953, %v3176
    %s3179 = scalar_lea.vmem [#allocation2], 2108
    %v3180 = vld [vmem:[%s3179] ss:$2 sm:$0xff]
    %s3181 = scalar_lea.vmem [#allocation2], 2124
    %v3182 = vld [vmem:[%s3181] ss:$2 sm:$0xff]
    %s3183 = scalar_lea.vmem [#allocation2], 2109
    %v3184 = vld [vmem:[%s3183] ss:$2 sm:$0xff]
    %s3185 = scalar_lea.vmem [#allocation2], 2125
    %v3186 = vld [vmem:[%s3185] ss:$2 sm:$0xff]
    %v3187 = vmax.f32 %v3180, %v3184
    %v3188 = vmax.f32 %v3182, %v3186
    %s3189 = scalar_lea.vmem [#allocation2], 2142
    %v3190 = vld [vmem:[%s3189] ss:$2 sm:$0xff]
    %s3191 = scalar_lea.vmem [#allocation2], 2158
    %v3192 = vld [vmem:[%s3191] ss:$2 sm:$0xff]
    %s3193 = scalar_lea.vmem [#allocation2], 2143
    %v3194 = vld [vmem:[%s3193] ss:$2 sm:$0xff]
    %s3195 = scalar_lea.vmem [#allocation2], 2159
    %v3196 = vld [vmem:[%s3195] ss:$2 sm:$0xff]
    %v3197 = vmax.f32 %v3190, %v3194
    %v3198 = vmax.f32 %v3192, %v3196
    %v3199 = vmax.f32 %v3187, %v3197
    %v3200 = vmax.f32 %v3188, %v3198
    %v3201 = vadd.f32 %v3199, %v2310
    %v3202 = vadd.f32 %v3200, %v2310
    %v3203 = vmax.f32 %v3201, 0.0
    %v3204 = vmax.f32 %v3202, 0.0
    %3205 = vst.msk [vmem:[#allocation3 + $0x269] sm:$0xff] %vm1953, %v3203
    %3206 = vst.msk [vmem:[#allocation3 + $0x271] sm:$0xff] %vm1953, %v3204
    %v3207 = vld [vmem:[#allocation3] sm:$0xff]
    %v3208 = vld [vmem:[#allocation3 + $0x8] sm:$0xff]
    %v3209 = vld [vmem:[#allocation3 + $0x10] sm:$0xff]
    %v3210 = vld [vmem:[#allocation3 + $0x18] sm:$0xff]
    %v3211 = vld [vmem:[#allocation3 + $0x20] sm:$0xff]
    %v3212 = vld [vmem:[#allocation3 + $0x28] sm:$0xff]
    %v3213 = vld [vmem:[#allocation3 + $0x30] sm:$0xff]
    %v3214 = vld [vmem:[#allocation3 + $0x38] sm:$0xff]
    %v3215 = vld [vmem:[#allocation3 + $0x40] sm:$0xff]
    %v3216 = vld [vmem:[#allocation3 + $0x48] sm:$0xff]
    %v3217 = vld [vmem:[#allocation3 + $0x50] sm:$0xff]
    %v3218 = vld [vmem:[#allocation3 + $0x58] sm:$0xff]
    %v3219 = vld [vmem:[#allocation3 + $0x60] sm:$0xff]
    %v3220 = vld [vmem:[#allocation3 + $0x68] sm:$0xff]
    %v3221 = vld [vmem:[#allocation3 + $0x70] sm:$0xff]
    %v3222 = vld [vmem:[#allocation3 + $0x78] sm:$0xff]
    %v3223 = vld [vmem:[#allocation3 + $0x80] sm:$0xff]
    %v3224 = vld [vmem:[#allocation3 + $0x88] sm:$0xff]
    %v3225 = vld [vmem:[#allocation3 + $0x90] sm:$0xff]
    %v3226 = vld [vmem:[#allocation3 + $0x98] sm:$0xff]
    %v3227 = vld [vmem:[#allocation3 + $0xa0] sm:$0xff]
    %v3228 = vld [vmem:[#allocation3 + $0xa8] sm:$0xff]
    %v3229 = vld [vmem:[#allocation3 + $0xb0] sm:$0xff]
    %v3230 = vld [vmem:[#allocation3 + $0xb8] sm:$0xff]
    %v3231 = vld [vmem:[#allocation3 + $0xc0] sm:$0xff]
    %v3232 = vld [vmem:[#allocation3 + $0xc8] sm:$0xff]
    %v3233 = vld [vmem:[#allocation3 + $0xd0] sm:$0xff]
    %v3234 = vld [vmem:[#allocation3 + $0xd8] sm:$0xff]
    %v3235 = vld [vmem:[#allocation3 + $0xe0] sm:$0xff]
    %v3236 = vld [vmem:[#allocation3 + $0xe8] sm:$0xff]
    %v3237 = vld [vmem:[#allocation3 + $0xf0] sm:$0xff]
    %v3238 = vld [vmem:[#allocation3 + $0xf8] sm:$0xff]
    %v3239 = vld [vmem:[#allocation3 + $0x100] sm:$0xff]
    %v3240 = vld [vmem:[#allocation3 + $0x108] sm:$0xff]
    %v3241 = vld [vmem:[#allocation3 + $0x110] sm:$0xff]
    %v3242 = vld [vmem:[#allocation3 + $0x118] sm:$0xff]
    %v3243 = vld [vmem:[#allocation3 + $0x1] sm:$0xff]
    %v3244 = vld [vmem:[#allocation3 + $0x9] sm:$0xff]
    %v3245 = vld [vmem:[#allocation3 + $0x11] sm:$0xff]
    %v3246 = vld [vmem:[#allocation3 + $0x19] sm:$0xff]
    %v3247 = vld [vmem:[#allocation3 + $0x21] sm:$0xff]
    %v3248 = vld [vmem:[#allocation3 + $0x29] sm:$0xff]
    %v3249 = vld [vmem:[#allocation3 + $0x31] sm:$0xff]
    %v3250 = vld [vmem:[#allocation3 + $0x39] sm:$0xff]
    %v3251 = vld [vmem:[#allocation3 + $0x41] sm:$0xff]
    %v3252 = vld [vmem:[#allocation3 + $0x49] sm:$0xff]
    %v3253 = vld [vmem:[#allocation3 + $0x51] sm:$0xff]
    %v3254 = vld [vmem:[#allocation3 + $0x59] sm:$0xff]
    %v3255 = vld [vmem:[#allocation3 + $0x61] sm:$0xff]
    %v3256 = vld [vmem:[#allocation3 + $0x69] sm:$0xff]
    %v3257 = vld [vmem:[#allocation3 + $0x71] sm:$0xff]
    %v3258 = vld [vmem:[#allocation3 + $0x79] sm:$0xff]
    %v3259 = vld [vmem:[#allocation3 + $0x81] sm:$0xff]
    %v3260 = vld [vmem:[#allocation3 + $0x89] sm:$0xff]
    %v3261 = vld [vmem:[#allocation3 + $0x91] sm:$0xff]
    %v3262 = vld [vmem:[#allocation3 + $0x99] sm:$0xff]
    %v3263 = vld [vmem:[#allocation3 + $0xa1] sm:$0xff]
    %v3264 = vld [vmem:[#allocation3 + $0xa9] sm:$0xff]
    %v3265 = vld [vmem:[#allocation3 + $0xb1] sm:$0xff]
    %v3266 = vld [vmem:[#allocation3 + $0xb9] sm:$0xff]
    %v3267 = vld [vmem:[#allocation3 + $0xc1] sm:$0xff]
    %v3268 = vld [vmem:[#allocation3 + $0xc9] sm:$0xff]
    %v3269 = vld [vmem:[#allocation3 + $0xd1] sm:$0xff]
    %v3270 = vld [vmem:[#allocation3 + $0xd9] sm:$0xff]
    %v3271 = vld [vmem:[#allocation3 + $0xe1] sm:$0xff]
    %v3272 = vld [vmem:[#allocation3 + $0xe9] sm:$0xff]
    %v3273 = vld [vmem:[#allocation3 + $0xf1] sm:$0xff]
    %v3274 = vld [vmem:[#allocation3 + $0xf9] sm:$0xff]
    %v3275 = vld [vmem:[#allocation3 + $0x101] sm:$0xff]
    %v3276 = vld [vmem:[#allocation3 + $0x109] sm:$0xff]
    %v3277 = vld [vmem:[#allocation3 + $0x111] sm:$0xff]
    %v3278 = vld [vmem:[#allocation3 + $0x119] sm:$0xff]
    %v3279 = vld [vmem:[#allocation3 + $0x2] sm:$0xff]
    %v3280 = vld [vmem:[#allocation3 + $0xa] sm:$0xff]
    %v3281 = vld [vmem:[#allocation3 + $0x12] sm:$0xff]
    %v3282 = vld [vmem:[#allocation3 + $0x1a] sm:$0xff]
    %v3283 = vld [vmem:[#allocation3 + $0x22] sm:$0xff]
    %v3284 = vld [vmem:[#allocation3 + $0x2a] sm:$0xff]
    %v3285 = vld [vmem:[#allocation3 + $0x32] sm:$0xff]
    %v3286 = vld [vmem:[#allocation3 + $0x3a] sm:$0xff]
    %v3287 = vld [vmem:[#allocation3 + $0x42] sm:$0xff]
    %v3288 = vld [vmem:[#allocation3 + $0x4a] sm:$0xff]
    %v3289 = vld [vmem:[#allocation3 + $0x52] sm:$0xff]
    %v3290 = vld [vmem:[#allocation3 + $0x5a] sm:$0xff]
    %v3291 = vld [vmem:[#allocation3 + $0x62] sm:$0xff]
    %v3292 = vld [vmem:[#allocation3 + $0x6a] sm:$0xff]
    %v3293 = vld [vmem:[#allocation3 + $0x72] sm:$0xff]
    %v3294 = vld [vmem:[#allocation3 + $0x7a] sm:$0xff]
    %v3295 = vld [vmem:[#allocation3 + $0x82] sm:$0xff]
    %v3296 = vld [vmem:[#allocation3 + $0x8a] sm:$0xff]
    %v3297 = vld [vmem:[#allocation3 + $0x92] sm:$0xff]
    %v3298 = vld [vmem:[#allocation3 + $0x9a] sm:$0xff]
    %v3299 = vld [vmem:[#allocation3 + $0xa2] sm:$0xff]
    %v3300 = vld [vmem:[#allocation3 + $0xaa] sm:$0xff]
    %v3301 = vld [vmem:[#allocation3 + $0xb2] sm:$0xff]
    %v3302 = vld [vmem:[#allocation3 + $0xba] sm:$0xff]
    %v3303 = vld [vmem:[#allocation3 + $0xc2] sm:$0xff]
    %v3304 = vld [vmem:[#allocation3 + $0xca] sm:$0xff]
    %v3305 = vld [vmem:[#allocation3 + $0xd2] sm:$0xff]
    %v3306 = vld [vmem:[#allocation3 + $0xda] sm:$0xff]
    %v3307 = vld [vmem:[#allocation3 + $0xe2] sm:$0xff]
    %v3308 = vld [vmem:[#allocation3 + $0xea] sm:$0xff]
    %v3309 = vld [vmem:[#allocation3 + $0xf2] sm:$0xff]
    %v3310 = vld [vmem:[#allocation3 + $0xfa] sm:$0xff]
    %v3311 = vld [vmem:[#allocation3 + $0x102] sm:$0xff]
    %v3312 = vld [vmem:[#allocation3 + $0x10a] sm:$0xff]
    %v3313 = vld [vmem:[#allocation3 + $0x112] sm:$0xff]
    %v3314 = vld [vmem:[#allocation3 + $0x11a] sm:$0xff]
    %v3315 = vld [vmem:[#allocation3 + $0x122] sm:$0xff]
    %v3316 = vld [vmem:[#allocation3 + $0x12a] sm:$0xff]
    %v3317 = vld [vmem:[#allocation3 + $0x13] sm:$0xff]
    %v3318 = vld [vmem:[#allocation3 + $0x1b] sm:$0xff]
    %v3319 = vld [vmem:[#allocation3 + $0x23] sm:$0xff]
    %v3320 = vld [vmem:[#allocation3 + $0x2b] sm:$0xff]
    %v3321 = vld [vmem:[#allocation3 + $0x33] sm:$0xff]
    %v3322 = vld [vmem:[#allocation3 + $0x3b] sm:$0xff]
    %v3323 = vld [vmem:[#allocation3 + $0x43] sm:$0xff]
    %v3324 = vld [vmem:[#allocation3 + $0x4b] sm:$0xff]
    %v3325 = vld [vmem:[#allocation3 + $0x53] sm:$0xff]
    %v3326 = vld [vmem:[#allocation3 + $0x5b] sm:$0xff]
    %v3327 = vld [vmem:[#allocation3 + $0x63] sm:$0xff]
    %v3328 = vld [vmem:[#allocation3 + $0x6b] sm:$0xff]
    %v3329 = vld [vmem:[#allocation3 + $0x73] sm:$0xff]
    %v3330 = vld [vmem:[#allocation3 + $0x7b] sm:$0xff]
    %v3331 = vld [vmem:[#allocation3 + $0x83] sm:$0xff]
    %v3332 = vld [vmem:[#allocation3 + $0x8b] sm:$0xff]
    %v3333 = vld [vmem:[#allocation3 + $0x93] sm:$0xff]
    %v3334 = vld [vmem:[#allocation3 + $0x9b] sm:$0xff]
    %v3335 = vld [vmem:[#allocation3 + $0xa3] sm:$0xff]
    %v3336 = vld [vmem:[#allocation3 + $0xab] sm:$0xff]
    %v3337 = vld [vmem:[#allocation3 + $0xb3] sm:$0xff]
    %v3338 = vld [vmem:[#allocation3 + $0xbb] sm:$0xff]
    %v3339 = vld [vmem:[#allocation3 + $0xc3] sm:$0xff]
    %v3340 = vld [vmem:[#allocation3 + $0xcb] sm:$0xff]
    %v3341 = vld [vmem:[#allocation3 + $0xd3] sm:$0xff]
    %v3342 = vld [vmem:[#allocation3 + $0xdb] sm:$0xff]
    %v3343 = vld [vmem:[#allocation3 + $0xe3] sm:$0xff]
    %v3344 = vld [vmem:[#allocation3 + $0xeb] sm:$0xff]
    %v3345 = vld [vmem:[#allocation3 + $0xf3] sm:$0xff]
    %v3346 = vld [vmem:[#allocation3 + $0xfb] sm:$0xff]
    %v3347 = vld [vmem:[#allocation3 + $0x103] sm:$0xff]
    %v3348 = vld [vmem:[#allocation3 + $0x10b] sm:$0xff]
    %v3349 = vld [vmem:[#allocation3 + $0x113] sm:$0xff]
    %v3350 = vld [vmem:[#allocation3 + $0x11b] sm:$0xff]
    %v3351 = vld [vmem:[#allocation3 + $0x123] sm:$0xff]
    %v3352 = vld [vmem:[#allocation3 + $0x12b] sm:$0xff]
    %v3353 = vld [vmem:[#allocation3 + $0x14] sm:$0xff]
    %v3354 = vld [vmem:[#allocation3 + $0x1c] sm:$0xff]
    %v3355 = vld [vmem:[#allocation3 + $0x24] sm:$0xff]
    %v3356 = vld [vmem:[#allocation3 + $0x2c] sm:$0xff]
    %v3357 = vld [vmem:[#allocation3 + $0x34] sm:$0xff]
    %v3358 = vld [vmem:[#allocation3 + $0x3c] sm:$0xff]
    %v3359 = vld [vmem:[#allocation3 + $0x44] sm:$0xff]
    %v3360 = vld [vmem:[#allocation3 + $0x4c] sm:$0xff]
    %v3361 = vld [vmem:[#allocation3 + $0x54] sm:$0xff]
    %v3362 = vld [vmem:[#allocation3 + $0x5c] sm:$0xff]
    %v3363 = vld [vmem:[#allocation3 + $0x64] sm:$0xff]
    %v3364 = vld [vmem:[#allocation3 + $0x6c] sm:$0xff]
    %v3365 = vld [vmem:[#allocation3 + $0x74] sm:$0xff]
    %v3366 = vld [vmem:[#allocation3 + $0x7c] sm:$0xff]
    %v3367 = vld [vmem:[#allocation3 + $0x84] sm:$0xff]
    %v3368 = vld [vmem:[#allocation3 + $0x8c] sm:$0xff]
    %v3369 = vld [vmem:[#allocation3 + $0x94] sm:$0xff]
    %v3370 = vld [vmem:[#allocation3 + $0x9c] sm:$0xff]
    %v3371 = vld [vmem:[#allocation3 + $0xa4] sm:$0xff]
    %v3372 = vld [vmem:[#allocation3 + $0xac] sm:$0xff]
    %v3373 = vld [vmem:[#allocation3 + $0xb4] sm:$0xff]
    %v3374 = vld [vmem:[#allocation3 + $0xbc] sm:$0xff]
    %v3375 = vld [vmem:[#allocation3 + $0xc4] sm:$0xff]
    %v3376 = vld [vmem:[#allocation3 + $0xcc] sm:$0xff]
    %v3377 = vld [vmem:[#allocation3 + $0xd4] sm:$0xff]
    %v3378 = vld [vmem:[#allocation3 + $0xdc] sm:$0xff]
    %v3379 = vld [vmem:[#allocation3 + $0xe4] sm:$0xff]
    %v3380 = vld [vmem:[#allocation3 + $0xec] sm:$0xff]
    %v3381 = vld [vmem:[#allocation3 + $0xf4] sm:$0xff]
    %v3382 = vld [vmem:[#allocation3 + $0xfc] sm:$0xff]
    %v3383 = vld [vmem:[#allocation3 + $0x104] sm:$0xff]
    %v3384 = vld [vmem:[#allocation3 + $0x10c] sm:$0xff]
    %v3385 = vld [vmem:[#allocation3 + $0x114] sm:$0xff]
    %v3386 = vld [vmem:[#allocation3 + $0x11c] sm:$0xff]
    %v3387 = vld [vmem:[#allocation3 + $0x124] sm:$0xff]
    %v3388 = vld [vmem:[#allocation3 + $0x12c] sm:$0xff]
    %v3389 = vld [vmem:[#allocation3 + $0x134] sm:$0xff]
    %v3390 = vld [vmem:[#allocation3 + $0x13c] sm:$0xff]
    %v3391 = vld [vmem:[#allocation3 + $0x25] sm:$0xff]
    %v3392 = vld [vmem:[#allocation3 + $0x2d] sm:$0xff]
    %v3393 = vld [vmem:[#allocation3 + $0x35] sm:$0xff]
    %v3394 = vld [vmem:[#allocation3 + $0x3d] sm:$0xff]
    %v3395 = vld [vmem:[#allocation3 + $0x45] sm:$0xff]
    %v3396 = vld [vmem:[#allocation3 + $0x4d] sm:$0xff]
    %v3397 = vld [vmem:[#allocation3 + $0x55] sm:$0xff]
    %v3398 = vld [vmem:[#allocation3 + $0x5d] sm:$0xff]
    %v3399 = vld [vmem:[#allocation3 + $0x65] sm:$0xff]
    %v3400 = vld [vmem:[#allocation3 + $0x6d] sm:$0xff]
    %v3401 = vld [vmem:[#allocation3 + $0x75] sm:$0xff]
    %v3402 = vld [vmem:[#allocation3 + $0x7d] sm:$0xff]
    %v3403 = vld [vmem:[#allocation3 + $0x85] sm:$0xff]
    %v3404 = vld [vmem:[#allocation3 + $0x8d] sm:$0xff]
    %v3405 = vld [vmem:[#allocation3 + $0x95] sm:$0xff]
    %v3406 = vld [vmem:[#allocation3 + $0x9d] sm:$0xff]
    %v3407 = vld [vmem:[#allocation3 + $0xa5] sm:$0xff]
    %v3408 = vld [vmem:[#allocation3 + $0xad] sm:$0xff]
    %v3409 = vld [vmem:[#allocation3 + $0xb5] sm:$0xff]
    %v3410 = vld [vmem:[#allocation3 + $0xbd] sm:$0xff]
    %v3411 = vld [vmem:[#allocation3 + $0xc5] sm:$0xff]
    %v3412 = vld [vmem:[#allocation3 + $0xcd] sm:$0xff]
    %v3413 = vld [vmem:[#allocation3 + $0xd5] sm:$0xff]
    %v3414 = vld [vmem:[#allocation3 + $0xdd] sm:$0xff]
    %v3415 = vld [vmem:[#allocation3 + $0xe5] sm:$0xff]
    %v3416 = vld [vmem:[#allocation3 + $0xed] sm:$0xff]
    %v3417 = vld [vmem:[#allocation3 + $0xf5] sm:$0xff]
    %v3418 = vld [vmem:[#allocation3 + $0xfd] sm:$0xff]
    %v3419 = vld [vmem:[#allocation3 + $0x105] sm:$0xff]
    %v3420 = vld [vmem:[#allocation3 + $0x10d] sm:$0xff]
    %v3421 = vld [vmem:[#allocation3 + $0x115] sm:$0xff]
    %v3422 = vld [vmem:[#allocation3 + $0x11d] sm:$0xff]
    %v3423 = vld [vmem:[#allocation3 + $0x125] sm:$0xff]
    %v3424 = vld [vmem:[#allocation3 + $0x12d] sm:$0xff]
    %v3425 = vld [vmem:[#allocation3 + $0x135] sm:$0xff]
    %v3426 = vld [vmem:[#allocation3 + $0x13d] sm:$0xff]
    %v3427 = vld [vmem:[#allocation3 + $0x26] sm:$0xff]
    %v3428 = vld [vmem:[#allocation3 + $0x2e] sm:$0xff]
    %v3429 = vld [vmem:[#allocation3 + $0x36] sm:$0xff]
    %v3430 = vld [vmem:[#allocation3 + $0x3e] sm:$0xff]
    %v3431 = vld [vmem:[#allocation3 + $0x46] sm:$0xff]
    %v3432 = vld [vmem:[#allocation3 + $0x4e] sm:$0xff]
    %v3433 = vld [vmem:[#allocation3 + $0x56] sm:$0xff]
    %v3434 = vld [vmem:[#allocation3 + $0x5e] sm:$0xff]
    %v3435 = vld [vmem:[#allocation3 + $0x66] sm:$0xff]
    %v3436 = vld [vmem:[#allocation3 + $0x6e] sm:$0xff]
    %v3437 = vld [vmem:[#allocation3 + $0x76] sm:$0xff]
    %v3438 = vld [vmem:[#allocation3 + $0x7e] sm:$0xff]
    %v3439 = vld [vmem:[#allocation3 + $0x86] sm:$0xff]
    %v3440 = vld [vmem:[#allocation3 + $0x8e] sm:$0xff]
    %v3441 = vld [vmem:[#allocation3 + $0x96] sm:$0xff]
    %v3442 = vld [vmem:[#allocation3 + $0x9e] sm:$0xff]
    %v3443 = vld [vmem:[#allocation3 + $0xa6] sm:$0xff]
    %v3444 = vld [vmem:[#allocation3 + $0xae] sm:$0xff]
    %v3445 = vld [vmem:[#allocation3 + $0xb6] sm:$0xff]
    %v3446 = vld [vmem:[#allocation3 + $0xbe] sm:$0xff]
    %v3447 = vld [vmem:[#allocation3 + $0xc6] sm:$0xff]
    %v3448 = vld [vmem:[#allocation3 + $0xce] sm:$0xff]
    %v3449 = vld [vmem:[#allocation3 + $0xd6] sm:$0xff]
    %v3450 = vld [vmem:[#allocation3 + $0xde] sm:$0xff]
    %v3451 = vld [vmem:[#allocation3 + $0xe6] sm:$0xff]
    %v3452 = vld [vmem:[#allocation3 + $0xee] sm:$0xff]
    %v3453 = vld [vmem:[#allocation3 + $0xf6] sm:$0xff]
    %v3454 = vld [vmem:[#allocation3 + $0xfe] sm:$0xff]
    %v3455 = vld [vmem:[#allocation3 + $0x106] sm:$0xff]
    %v3456 = vld [vmem:[#allocation3 + $0x10e] sm:$0xff]
    %v3457 = vld [vmem:[#allocation3 + $0x116] sm:$0xff]
    %v3458 = vld [vmem:[#allocation3 + $0x11e] sm:$0xff]
    %v3459 = vld [vmem:[#allocation3 + $0x126] sm:$0xff]
    %v3460 = vld [vmem:[#allocation3 + $0x12e] sm:$0xff]
    %v3461 = vld [vmem:[#allocation3 + $0x136] sm:$0xff]
    %v3462 = vld [vmem:[#allocation3 + $0x13e] sm:$0xff]
    %3499 = vrot.lane.b32.xlu0 %v3243, 16
    %v3500 = vpop.permute.xlu0 %3499
    %3501 = vrot.lane.b32.xlu0 %v3244, 16
    %v3502 = vpop.permute.xlu0 %3501
    %3503 = vrot.lane.b32.xlu0 %v3245, 16
    %v3504 = vpop.permute.xlu0 %3503
    %3505 = vrot.lane.b32.xlu0 %v3246, 16
    %v3506 = vpop.permute.xlu0 %3505
    %3507 = vrot.lane.b32.xlu0 %v3247, 16
    %v3508 = vpop.permute.xlu0 %3507
    %3509 = vrot.lane.b32.xlu0 %v3248, 16
    %v3510 = vpop.permute.xlu0 %3509
    %3511 = vrot.lane.b32.xlu0 %v3249, 16
    %v3512 = vpop.permute.xlu0 %3511
    %3513 = vrot.lane.b32.xlu0 %v3250, 16
    %v3514 = vpop.permute.xlu0 %3513
    %3515 = vrot.lane.b32.xlu0 %v3251, 16
    %v3516 = vpop.permute.xlu0 %3515
    %3517 = vrot.lane.b32.xlu0 %v3252, 16
    %v3518 = vpop.permute.xlu0 %3517
    %3519 = vrot.lane.b32.xlu0 %v3253, 16
    %v3520 = vpop.permute.xlu0 %3519
    %3521 = vrot.lane.b32.xlu0 %v3254, 16
    %v3522 = vpop.permute.xlu0 %3521
    %3523 = vrot.lane.b32.xlu0 %v3255, 16
    %v3524 = vpop.permute.xlu0 %3523
    %3525 = vrot.lane.b32.xlu0 %v3256, 16
    %v3526 = vpop.permute.xlu0 %3525
    %3527 = vrot.lane.b32.xlu0 %v3257, 16
    %v3528 = vpop.permute.xlu0 %3527
    %3529 = vrot.lane.b32.xlu0 %v3258, 16
    %v3530 = vpop.permute.xlu0 %3529
    %3531 = vrot.lane.b32.xlu0 %v3259, 16
    %v3532 = vpop.permute.xlu0 %3531
    %3533 = vrot.lane.b32.xlu0 %v3260, 16
    %v3534 = vpop.permute.xlu0 %3533
    %3535 = vrot.lane.b32.xlu0 %v3261, 16
    %v3536 = vpop.permute.xlu0 %3535
    %3537 = vrot.lane.b32.xlu0 %v3262, 16
    %v3538 = vpop.permute.xlu0 %3537
    %3539 = vrot.lane.b32.xlu0 %v3263, 16
    %v3540 = vpop.permute.xlu0 %3539
    %3541 = vrot.lane.b32.xlu0 %v3264, 16
    %v3542 = vpop.permute.xlu0 %3541
    %3543 = vrot.lane.b32.xlu0 %v3265, 16
    %v3544 = vpop.permute.xlu0 %3543
    %3545 = vrot.lane.b32.xlu0 %v3266, 16
    %v3546 = vpop.permute.xlu0 %3545
    %3547 = vrot.lane.b32.xlu0 %v3267, 16
    %v3548 = vpop.permute.xlu0 %3547
    %3549 = vrot.lane.b32.xlu0 %v3268, 16
    %v3550 = vpop.permute.xlu0 %3549
    %3551 = vrot.lane.b32.xlu0 %v3269, 16
    %v3552 = vpop.permute.xlu0 %3551
    %3553 = vrot.lane.b32.xlu0 %v3270, 16
    %v3554 = vpop.permute.xlu0 %3553
    %3555 = vrot.lane.b32.xlu0 %v3271, 16
    %v3556 = vpop.permute.xlu0 %3555
    %3557 = vrot.lane.b32.xlu0 %v3272, 16
    %v3558 = vpop.permute.xlu0 %3557
    %3559 = vrot.lane.b32.xlu0 %v3273, 16
    %v3560 = vpop.permute.xlu0 %3559
    %3561 = vrot.lane.b32.xlu0 %v3274, 16
    %v3562 = vpop.permute.xlu0 %3561
    %3563 = vrot.lane.b32.xlu0 %v3275, 16
    %v3564 = vpop.permute.xlu0 %3563
    %3565 = vrot.lane.b32.xlu0 %v3276, 16
    %v3566 = vpop.permute.xlu0 %3565
    %3567 = vrot.lane.b32.xlu0 %v3277, 16
    %v3568 = vpop.permute.xlu0 %3567
    %3569 = vrot.lane.b32.xlu0 %v3278, 16
    %v3570 = vpop.permute.xlu0 %3569
    %3643 = vrot.lane.b32.xlu0 %v3279, 32
    %v3644 = vpop.permute.xlu0 %3643
    %3645 = vrot.lane.b32.xlu0 %v3280, 32
    %v3646 = vpop.permute.xlu0 %3645
    %3647 = vrot.lane.b32.xlu0 %v3281, 32
    %v3648 = vpop.permute.xlu0 %3647
    %3649 = vrot.lane.b32.xlu0 %v3282, 32
    %v3650 = vpop.permute.xlu0 %3649
    %3651 = vrot.lane.b32.xlu0 %v3283, 32
    %v3652 = vpop.permute.xlu0 %3651
    %3653 = vrot.lane.b32.xlu0 %v3284, 32
    %v3654 = vpop.permute.xlu0 %3653
    %3655 = vrot.lane.b32.xlu0 %v3285, 32
    %v3656 = vpop.permute.xlu0 %3655
    %3657 = vrot.lane.b32.xlu0 %v3286, 32
    %v3658 = vpop.permute.xlu0 %3657
    %3659 = vrot.lane.b32.xlu0 %v3287, 32
    %v3660 = vpop.permute.xlu0 %3659
    %3661 = vrot.lane.b32.xlu0 %v3288, 32
    %v3662 = vpop.permute.xlu0 %3661
    %3663 = vrot.lane.b32.xlu0 %v3289, 32
    %v3664 = vpop.permute.xlu0 %3663
    %3665 = vrot.lane.b32.xlu0 %v3290, 32
    %v3666 = vpop.permute.xlu0 %3665
    %3667 = vrot.lane.b32.xlu0 %v3291, 32
    %v3668 = vpop.permute.xlu0 %3667
    %3669 = vrot.lane.b32.xlu0 %v3292, 32
    %v3670 = vpop.permute.xlu0 %3669
    %3671 = vrot.lane.b32.xlu0 %v3293, 32
    %v3672 = vpop.permute.xlu0 %3671
    %3673 = vrot.lane.b32.xlu0 %v3294, 32
    %v3674 = vpop.permute.xlu0 %3673
    %3675 = vrot.lane.b32.xlu0 %v3295, 32
    %v3676 = vpop.permute.xlu0 %3675
    %3677 = vrot.lane.b32.xlu0 %v3296, 32
    %v3678 = vpop.permute.xlu0 %3677
    %3679 = vrot.lane.b32.xlu0 %v3297, 32
    %v3680 = vpop.permute.xlu0 %3679
    %3681 = vrot.lane.b32.xlu0 %v3298, 32
    %v3682 = vpop.permute.xlu0 %3681
    %3683 = vrot.lane.b32.xlu0 %v3299, 32
    %v3684 = vpop.permute.xlu0 %3683
    %3685 = vrot.lane.b32.xlu0 %v3300, 32
    %v3686 = vpop.permute.xlu0 %3685
    %3687 = vrot.lane.b32.xlu0 %v3301, 32
    %v3688 = vpop.permute.xlu0 %3687
    %3689 = vrot.lane.b32.xlu0 %v3302, 32
    %v3690 = vpop.permute.xlu0 %3689
    %3691 = vrot.lane.b32.xlu0 %v3303, 32
    %v3692 = vpop.permute.xlu0 %3691
    %3693 = vrot.lane.b32.xlu0 %v3304, 32
    %v3694 = vpop.permute.xlu0 %3693
    %3695 = vrot.lane.b32.xlu0 %v3305, 32
    %v3696 = vpop.permute.xlu0 %3695
    %3697 = vrot.lane.b32.xlu0 %v3306, 32
    %v3698 = vpop.permute.xlu0 %3697
    %3699 = vrot.lane.b32.xlu0 %v3307, 32
    %v3700 = vpop.permute.xlu0 %3699
    %3701 = vrot.lane.b32.xlu0 %v3308, 32
    %v3702 = vpop.permute.xlu0 %3701
    %3703 = vrot.lane.b32.xlu0 %v3309, 32
    %v3704 = vpop.permute.xlu0 %3703
    %3705 = vrot.lane.b32.xlu0 %v3310, 32
    %v3706 = vpop.permute.xlu0 %3705
    %3707 = vrot.lane.b32.xlu0 %v3311, 32
    %v3708 = vpop.permute.xlu0 %3707
    %3709 = vrot.lane.b32.xlu0 %v3312, 32
    %v3710 = vpop.permute.xlu0 %3709
    %3711 = vrot.lane.b32.xlu0 %v3313, 32
    %v3712 = vpop.permute.xlu0 %3711
    %3713 = vrot.lane.b32.xlu0 %v3314, 32
    %v3714 = vpop.permute.xlu0 %3713
    %3753 = vrot.lane.b32.xlu0 %v3281, 48
    %v3754 = vpop.permute.xlu0 %3753
    %3755 = vrot.lane.b32.xlu0 %v3282, 48
    %v3756 = vpop.permute.xlu0 %3755
    %3757 = vrot.lane.b32.xlu0 %v3283, 48
    %v3758 = vpop.permute.xlu0 %3757
    %3759 = vrot.lane.b32.xlu0 %v3284, 48
    %v3760 = vpop.permute.xlu0 %3759
    %3761 = vrot.lane.b32.xlu0 %v3285, 48
    %v3762 = vpop.permute.xlu0 %3761
    %3763 = vrot.lane.b32.xlu0 %v3286, 48
    %v3764 = vpop.permute.xlu0 %3763
    %3765 = vrot.lane.b32.xlu0 %v3287, 48
    %v3766 = vpop.permute.xlu0 %3765
    %3767 = vrot.lane.b32.xlu0 %v3288, 48
    %v3768 = vpop.permute.xlu0 %3767
    %3769 = vrot.lane.b32.xlu0 %v3289, 48
    %v3770 = vpop.permute.xlu0 %3769
    %3771 = vrot.lane.b32.xlu0 %v3290, 48
    %v3772 = vpop.permute.xlu0 %3771
    %3773 = vrot.lane.b32.xlu0 %v3291, 48
    %v3774 = vpop.permute.xlu0 %3773
    %3775 = vrot.lane.b32.xlu0 %v3292, 48
    %v3776 = vpop.permute.xlu0 %3775
    %3777 = vrot.lane.b32.xlu0 %v3293, 48
    %v3778 = vpop.permute.xlu0 %3777
    %3779 = vrot.lane.b32.xlu0 %v3294, 48
    %v3780 = vpop.permute.xlu0 %3779
    %3781 = vrot.lane.b32.xlu0 %v3295, 48
    %v3782 = vpop.permute.xlu0 %3781
    %3783 = vrot.lane.b32.xlu0 %v3296, 48
    %v3784 = vpop.permute.xlu0 %3783
    %3785 = vrot.lane.b32.xlu0 %v3297, 48
    %v3786 = vpop.permute.xlu0 %3785
    %3787 = vrot.lane.b32.xlu0 %v3298, 48
    %v3788 = vpop.permute.xlu0 %3787
    %3789 = vrot.lane.b32.xlu0 %v3299, 48
    %v3790 = vpop.permute.xlu0 %3789
    %3791 = vrot.lane.b32.xlu0 %v3300, 48
    %v3792 = vpop.permute.xlu0 %3791
    %3793 = vrot.lane.b32.xlu0 %v3301, 48
    %v3794 = vpop.permute.xlu0 %3793
    %3795 = vrot.lane.b32.xlu0 %v3302, 48
    %v3796 = vpop.permute.xlu0 %3795
    %3797 = vrot.lane.b32.xlu0 %v3303, 48
    %v3798 = vpop.permute.xlu0 %3797
    %3799 = vrot.lane.b32.xlu0 %v3304, 48
    %v3800 = vpop.permute.xlu0 %3799
    %3801 = vrot.lane.b32.xlu0 %v3305, 48
    %v3802 = vpop.permute.xlu0 %3801
    %3803 = vrot.lane.b32.xlu0 %v3306, 48
    %v3804 = vpop.permute.xlu0 %3803
    %3805 = vrot.lane.b32.xlu0 %v3307, 48
    %v3806 = vpop.permute.xlu0 %3805
    %3807 = vrot.lane.b32.xlu0 %v3308, 48
    %v3808 = vpop.permute.xlu0 %3807
    %3809 = vrot.lane.b32.xlu0 %v3309, 48
    %v3810 = vpop.permute.xlu0 %3809
    %3811 = vrot.lane.b32.xlu0 %v3310, 48
    %v3812 = vpop.permute.xlu0 %3811
    %3813 = vrot.lane.b32.xlu0 %v3311, 48
    %v3814 = vpop.permute.xlu0 %3813
    %3815 = vrot.lane.b32.xlu0 %v3312, 48
    %v3816 = vpop.permute.xlu0 %3815
    %3817 = vrot.lane.b32.xlu0 %v3313, 48
    %v3818 = vpop.permute.xlu0 %3817
    %3819 = vrot.lane.b32.xlu0 %v3314, 48
    %v3820 = vpop.permute.xlu0 %3819
    %3821 = vrot.lane.b32.xlu0 %v3315, 48
    %v3822 = vpop.permute.xlu0 %3821
    %3823 = vrot.lane.b32.xlu0 %v3316, 48
    %v3824 = vpop.permute.xlu0 %3823
    %3897 = vrot.lane.b32.xlu0 %v3317, 64
    %v3898 = vpop.permute.xlu0 %3897
    %3899 = vrot.lane.b32.xlu0 %v3318, 64
    %v3900 = vpop.permute.xlu0 %3899
    %3901 = vrot.lane.b32.xlu0 %v3319, 64
    %v3902 = vpop.permute.xlu0 %3901
    %3903 = vrot.lane.b32.xlu0 %v3320, 64
    %v3904 = vpop.permute.xlu0 %3903
    %3905 = vrot.lane.b32.xlu0 %v3321, 64
    %v3906 = vpop.permute.xlu0 %3905
    %3907 = vrot.lane.b32.xlu0 %v3322, 64
    %v3908 = vpop.permute.xlu0 %3907
    %3909 = vrot.lane.b32.xlu0 %v3323, 64
    %v3910 = vpop.permute.xlu0 %3909
    %3911 = vrot.lane.b32.xlu0 %v3324, 64
    %v3912 = vpop.permute.xlu0 %3911
    %3913 = vrot.lane.b32.xlu0 %v3325, 64
    %v3914 = vpop.permute.xlu0 %3913
    %3915 = vrot.lane.b32.xlu0 %v3326, 64
    %v3916 = vpop.permute.xlu0 %3915
    %3917 = vrot.lane.b32.xlu0 %v3327, 64
    %v3918 = vpop.permute.xlu0 %3917
    %3919 = vrot.lane.b32.xlu0 %v3328, 64
    %v3920 = vpop.permute.xlu0 %3919
    %3921 = vrot.lane.b32.xlu0 %v3329, 64
    %v3922 = vpop.permute.xlu0 %3921
    %3923 = vrot.lane.b32.xlu0 %v3330, 64
    %v3924 = vpop.permute.xlu0 %3923
    %3925 = vrot.lane.b32.xlu0 %v3331, 64
    %v3926 = vpop.permute.xlu0 %3925
    %3927 = vrot.lane.b32.xlu0 %v3332, 64
    %v3928 = vpop.permute.xlu0 %3927
    %3929 = vrot.lane.b32.xlu0 %v3333, 64
    %v3930 = vpop.permute.xlu0 %3929
    %3931 = vrot.lane.b32.xlu0 %v3334, 64
    %v3932 = vpop.permute.xlu0 %3931
    %3933 = vrot.lane.b32.xlu0 %v3335, 64
    %v3934 = vpop.permute.xlu0 %3933
    %3935 = vrot.lane.b32.xlu0 %v3336, 64
    %v3936 = vpop.permute.xlu0 %3935
    %3937 = vrot.lane.b32.xlu0 %v3337, 64
    %v3938 = vpop.permute.xlu0 %3937
    %3939 = vrot.lane.b32.xlu0 %v3338, 64
    %v3940 = vpop.permute.xlu0 %3939
    %3941 = vrot.lane.b32.xlu0 %v3339, 64
    %v3942 = vpop.permute.xlu0 %3941
    %3943 = vrot.lane.b32.xlu0 %v3340, 64
    %v3944 = vpop.permute.xlu0 %3943
    %3945 = vrot.lane.b32.xlu0 %v3341, 64
    %v3946 = vpop.permute.xlu0 %3945
    %3947 = vrot.lane.b32.xlu0 %v3342, 64
    %v3948 = vpop.permute.xlu0 %3947
    %3949 = vrot.lane.b32.xlu0 %v3343, 64
    %v3950 = vpop.permute.xlu0 %3949
    %3951 = vrot.lane.b32.xlu0 %v3344, 64
    %v3952 = vpop.permute.xlu0 %3951
    %3953 = vrot.lane.b32.xlu0 %v3345, 64
    %v3954 = vpop.permute.xlu0 %3953
    %3955 = vrot.lane.b32.xlu0 %v3346, 64
    %v3956 = vpop.permute.xlu0 %3955
    %3957 = vrot.lane.b32.xlu0 %v3347, 64
    %v3958 = vpop.permute.xlu0 %3957
    %3959 = vrot.lane.b32.xlu0 %v3348, 64
    %v3960 = vpop.permute.xlu0 %3959
    %3961 = vrot.lane.b32.xlu0 %v3349, 64
    %v3962 = vpop.permute.xlu0 %3961
    %3963 = vrot.lane.b32.xlu0 %v3350, 64
    %v3964 = vpop.permute.xlu0 %3963
    %3965 = vrot.lane.b32.xlu0 %v3351, 64
    %v3966 = vpop.permute.xlu0 %3965
    %3967 = vrot.lane.b32.xlu0 %v3352, 64
    %v3968 = vpop.permute.xlu0 %3967
    %4041 = vrot.lane.b32.xlu0 %v3353, 80
    %v4042 = vpop.permute.xlu0 %4041
    %4043 = vrot.lane.b32.xlu0 %v3354, 80
    %v4044 = vpop.permute.xlu0 %4043
    %4045 = vrot.lane.b32.xlu0 %v3355, 80
    %v4046 = vpop.permute.xlu0 %4045
    %4047 = vrot.lane.b32.xlu0 %v3356, 80
    %v4048 = vpop.permute.xlu0 %4047
    %4049 = vrot.lane.b32.xlu0 %v3357, 80
    %v4050 = vpop.permute.xlu0 %4049
    %4051 = vrot.lane.b32.xlu0 %v3358, 80
    %v4052 = vpop.permute.xlu0 %4051
    %4053 = vrot.lane.b32.xlu0 %v3359, 80
    %v4054 = vpop.permute.xlu0 %4053
    %4055 = vrot.lane.b32.xlu0 %v3360, 80
    %v4056 = vpop.permute.xlu0 %4055
    %4057 = vrot.lane.b32.xlu0 %v3361, 80
    %v4058 = vpop.permute.xlu0 %4057
    %4059 = vrot.lane.b32.xlu0 %v3362, 80
    %v4060 = vpop.permute.xlu0 %4059
    %4061 = vrot.lane.b32.xlu0 %v3363, 80
    %v4062 = vpop.permute.xlu0 %4061
    %4063 = vrot.lane.b32.xlu0 %v3364, 80
    %v4064 = vpop.permute.xlu0 %4063
    %4065 = vrot.lane.b32.xlu0 %v3365, 80
    %v4066 = vpop.permute.xlu0 %4065
    %4067 = vrot.lane.b32.xlu0 %v3366, 80
    %v4068 = vpop.permute.xlu0 %4067
    %4069 = vrot.lane.b32.xlu0 %v3367, 80
    %v4070 = vpop.permute.xlu0 %4069
    %4071 = vrot.lane.b32.xlu0 %v3368, 80
    %v4072 = vpop.permute.xlu0 %4071
    %4073 = vrot.lane.b32.xlu0 %v3369, 80
    %v4074 = vpop.permute.xlu0 %4073
    %4075 = vrot.lane.b32.xlu0 %v3370, 80
    %v4076 = vpop.permute.xlu0 %4075
    %4077 = vrot.lane.b32.xlu0 %v3371, 80
    %v4078 = vpop.permute.xlu0 %4077
    %4079 = vrot.lane.b32.xlu0 %v3372, 80
    %v4080 = vpop.permute.xlu0 %4079
    %4081 = vrot.lane.b32.xlu0 %v3373, 80
    %v4082 = vpop.permute.xlu0 %4081
    %4083 = vrot.lane.b32.xlu0 %v3374, 80
    %v4084 = vpop.permute.xlu0 %4083
    %4085 = vrot.lane.b32.xlu0 %v3375, 80
    %v4086 = vpop.permute.xlu0 %4085
    %4087 = vrot.lane.b32.xlu0 %v3376, 80
    %v4088 = vpop.permute.xlu0 %4087
    %4089 = vrot.lane.b32.xlu0 %v3377, 80
    %v4090 = vpop.permute.xlu0 %4089
    %4091 = vrot.lane.b32.xlu0 %v3378, 80
    %v4092 = vpop.permute.xlu0 %4091
    %4093 = vrot.lane.b32.xlu0 %v3379, 80
    %v4094 = vpop.permute.xlu0 %4093
    %4095 = vrot.lane.b32.xlu0 %v3380, 80
    %v4096 = vpop.permute.xlu0 %4095
    %4097 = vrot.lane.b32.xlu0 %v3381, 80
    %v4098 = vpop.permute.xlu0 %4097
    %4099 = vrot.lane.b32.xlu0 %v3382, 80
    %v4100 = vpop.permute.xlu0 %4099
    %4101 = vrot.lane.b32.xlu0 %v3383, 80
    %v4102 = vpop.permute.xlu0 %4101
    %4103 = vrot.lane.b32.xlu0 %v3384, 80
    %v4104 = vpop.permute.xlu0 %4103
    %4105 = vrot.lane.b32.xlu0 %v3385, 80
    %v4106 = vpop.permute.xlu0 %4105
    %4107 = vrot.lane.b32.xlu0 %v3386, 80
    %v4108 = vpop.permute.xlu0 %4107
    %4109 = vrot.lane.b32.xlu0 %v3387, 80
    %v4110 = vpop.permute.xlu0 %4109
    %4111 = vrot.lane.b32.xlu0 %v3388, 80
    %v4112 = vpop.permute.xlu0 %4111
    %4151 = vrot.lane.b32.xlu0 %v3355, 96
    %v4152 = vpop.permute.xlu0 %4151
    %4153 = vrot.lane.b32.xlu0 %v3356, 96
    %v4154 = vpop.permute.xlu0 %4153
    %4155 = vrot.lane.b32.xlu0 %v3357, 96
    %v4156 = vpop.permute.xlu0 %4155
    %4157 = vrot.lane.b32.xlu0 %v3358, 96
    %v4158 = vpop.permute.xlu0 %4157
    %4159 = vrot.lane.b32.xlu0 %v3359, 96
    %v4160 = vpop.permute.xlu0 %4159
    %4161 = vrot.lane.b32.xlu0 %v3360, 96
    %v4162 = vpop.permute.xlu0 %4161
    %4163 = vrot.lane.b32.xlu0 %v3361, 96
    %v4164 = vpop.permute.xlu0 %4163
    %4165 = vrot.lane.b32.xlu0 %v3362, 96
    %v4166 = vpop.permute.xlu0 %4165
    %4167 = vrot.lane.b32.xlu0 %v3363, 96
    %v4168 = vpop.permute.xlu0 %4167
    %4169 = vrot.lane.b32.xlu0 %v3364, 96
    %v4170 = vpop.permute.xlu0 %4169
    %4171 = vrot.lane.b32.xlu0 %v3365, 96
    %v4172 = vpop.permute.xlu0 %4171
    %4173 = vrot.lane.b32.xlu0 %v3366, 96
    %v4174 = vpop.permute.xlu0 %4173
    %4175 = vrot.lane.b32.xlu0 %v3367, 96
    %v4176 = vpop.permute.xlu0 %4175
    %4177 = vrot.lane.b32.xlu0 %v3368, 96
    %v4178 = vpop.permute.xlu0 %4177
    %4179 = vrot.lane.b32.xlu0 %v3369, 96
    %v4180 = vpop.permute.xlu0 %4179
    %4181 = vrot.lane.b32.xlu0 %v3370, 96
    %v4182 = vpop.permute.xlu0 %4181
    %4183 = vrot.lane.b32.xlu0 %v3371, 96
    %v4184 = vpop.permute.xlu0 %4183
    %4185 = vrot.lane.b32.xlu0 %v3372, 96
    %v4186 = vpop.permute.xlu0 %4185
    %4187 = vrot.lane.b32.xlu0 %v3373, 96
    %v4188 = vpop.permute.xlu0 %4187
    %4189 = vrot.lane.b32.xlu0 %v3374, 96
    %v4190 = vpop.permute.xlu0 %4189
    %4191 = vrot.lane.b32.xlu0 %v3375, 96
    %v4192 = vpop.permute.xlu0 %4191
    %4193 = vrot.lane.b32.xlu0 %v3376, 96
    %v4194 = vpop.permute.xlu0 %4193
    %4195 = vrot.lane.b32.xlu0 %v3377, 96
    %v4196 = vpop.permute.xlu0 %4195
    %4197 = vrot.lane.b32.xlu0 %v3378, 96
    %v4198 = vpop.permute.xlu0 %4197
    %4199 = vrot.lane.b32.xlu0 %v3379, 96
    %v4200 = vpop.permute.xlu0 %4199
    %4201 = vrot.lane.b32.xlu0 %v3380, 96
    %v4202 = vpop.permute.xlu0 %4201
    %4203 = vrot.lane.b32.xlu0 %v3381, 96
    %v4204 = vpop.permute.xlu0 %4203
    %4205 = vrot.lane.b32.xlu0 %v3382, 96
    %v4206 = vpop.permute.xlu0 %4205
    %4207 = vrot.lane.b32.xlu0 %v3383, 96
    %v4208 = vpop.permute.xlu0 %4207
    %4209 = vrot.lane.b32.xlu0 %v3384, 96
    %v4210 = vpop.permute.xlu0 %4209
    %4211 = vrot.lane.b32.xlu0 %v3385, 96
    %v4212 = vpop.permute.xlu0 %4211
    %4213 = vrot.lane.b32.xlu0 %v3386, 96
    %v4214 = vpop.permute.xlu0 %4213
    %4215 = vrot.lane.b32.xlu0 %v3387, 96
    %v4216 = vpop.permute.xlu0 %4215
    %4217 = vrot.lane.b32.xlu0 %v3388, 96
    %v4218 = vpop.permute.xlu0 %4217
    %4219 = vrot.lane.b32.xlu0 %v3389, 96
    %v4220 = vpop.permute.xlu0 %4219
    %4221 = vrot.lane.b32.xlu0 %v3390, 96
    %v4222 = vpop.permute.xlu0 %4221
    %4295 = vrot.lane.b32.xlu0 %v3391, 112
    %v4296 = vpop.permute.xlu0 %4295
    %4297 = vrot.lane.b32.xlu0 %v3392, 112
    %v4298 = vpop.permute.xlu0 %4297
    %4299 = vrot.lane.b32.xlu0 %v3393, 112
    %v4300 = vpop.permute.xlu0 %4299
    %4301 = vrot.lane.b32.xlu0 %v3394, 112
    %v4302 = vpop.permute.xlu0 %4301
    %4303 = vrot.lane.b32.xlu0 %v3395, 112
    %v4304 = vpop.permute.xlu0 %4303
    %4305 = vrot.lane.b32.xlu0 %v3396, 112
    %v4306 = vpop.permute.xlu0 %4305
    %4307 = vrot.lane.b32.xlu0 %v3397, 112
    %v4308 = vpop.permute.xlu0 %4307
    %4309 = vrot.lane.b32.xlu0 %v3398, 112
    %v4310 = vpop.permute.xlu0 %4309
    %4311 = vrot.lane.b32.xlu0 %v3399, 112
    %v4312 = vpop.permute.xlu0 %4311
    %4313 = vrot.lane.b32.xlu0 %v3400, 112
    %v4314 = vpop.permute.xlu0 %4313
    %4315 = vrot.lane.b32.xlu0 %v3401, 112
    %v4316 = vpop.permute.xlu0 %4315
    %4317 = vrot.lane.b32.xlu0 %v3402, 112
    %v4318 = vpop.permute.xlu0 %4317
    %4319 = vrot.lane.b32.xlu0 %v3403, 112
    %v4320 = vpop.permute.xlu0 %4319
    %4321 = vrot.lane.b32.xlu0 %v3404, 112
    %v4322 = vpop.permute.xlu0 %4321
    %4323 = vrot.lane.b32.xlu0 %v3405, 112
    %v4324 = vpop.permute.xlu0 %4323
    %4325 = vrot.lane.b32.xlu0 %v3406, 112
    %v4326 = vpop.permute.xlu0 %4325
    %4327 = vrot.lane.b32.xlu0 %v3407, 112
    %v4328 = vpop.permute.xlu0 %4327
    %4329 = vrot.lane.b32.xlu0 %v3408, 112
    %v4330 = vpop.permute.xlu0 %4329
    %4331 = vrot.lane.b32.xlu0 %v3409, 112
    %v4332 = vpop.permute.xlu0 %4331
    %4333 = vrot.lane.b32.xlu0 %v3410, 112
    %v4334 = vpop.permute.xlu0 %4333
    %4335 = vrot.lane.b32.xlu0 %v3411, 112
    %v4336 = vpop.permute.xlu0 %4335
    %4337 = vrot.lane.b32.xlu0 %v3412, 112
    %v4338 = vpop.permute.xlu0 %4337
    %4339 = vrot.lane.b32.xlu0 %v3413, 112
    %v4340 = vpop.permute.xlu0 %4339
    %4341 = vrot.lane.b32.xlu0 %v3414, 112
    %v4342 = vpop.permute.xlu0 %4341
    %4343 = vrot.lane.b32.xlu0 %v3415, 112
    %v4344 = vpop.permute.xlu0 %4343
    %4345 = vrot.lane.b32.xlu0 %v3416, 112
    %v4346 = vpop.permute.xlu0 %4345
    %4347 = vrot.lane.b32.xlu0 %v3417, 112
    %v4348 = vpop.permute.xlu0 %4347
    %4349 = vrot.lane.b32.xlu0 %v3418, 112
    %v4350 = vpop.permute.xlu0 %4349
    %4351 = vrot.lane.b32.xlu0 %v3419, 112
    %v4352 = vpop.permute.xlu0 %4351
    %4353 = vrot.lane.b32.xlu0 %v3420, 112
    %v4354 = vpop.permute.xlu0 %4353
    %4355 = vrot.lane.b32.xlu0 %v3421, 112
    %v4356 = vpop.permute.xlu0 %4355
    %4357 = vrot.lane.b32.xlu0 %v3422, 112
    %v4358 = vpop.permute.xlu0 %4357
    %4359 = vrot.lane.b32.xlu0 %v3423, 112
    %v4360 = vpop.permute.xlu0 %4359
    %4361 = vrot.lane.b32.xlu0 %v3424, 112
    %v4362 = vpop.permute.xlu0 %4361
    %4363 = vrot.lane.b32.xlu0 %v3425, 112
    %v4364 = vpop.permute.xlu0 %4363
    %4365 = vrot.lane.b32.xlu0 %v3426, 112
    %v4366 = vpop.permute.xlu0 %4365
    %v4403 = vsel %vm1953, %v3207, %v3500
    %v4404 = vsel %vm1953, %v3208, %v3502
    %v4405 = vsel %vm1953, %v3209, %v3504
    %v4406 = vsel %vm1953, %v3210, %v3506
    %v4407 = vsel %vm1953, %v3211, %v3508
    %v4408 = vsel %vm1953, %v3212, %v3510
    %v4409 = vsel %vm1953, %v3213, %v3512
    %v4410 = vsel %vm1953, %v3214, %v3514
    %v4411 = vsel %vm1953, %v3215, %v3516
    %v4412 = vsel %vm1953, %v3216, %v3518
    %v4413 = vsel %vm1953, %v3217, %v3520
    %v4414 = vsel %vm1953, %v3218, %v3522
    %v4415 = vsel %vm1953, %v3219, %v3524
    %v4416 = vsel %vm1953, %v3220, %v3526
    %v4417 = vsel %vm1953, %v3221, %v3528
    %v4418 = vsel %vm1953, %v3222, %v3530
    %v4419 = vsel %vm1953, %v3223, %v3532
    %v4420 = vsel %vm1953, %v3224, %v3534
    %v4421 = vsel %vm1953, %v3225, %v3536
    %v4422 = vsel %vm1953, %v3226, %v3538
    %v4423 = vsel %vm1953, %v3227, %v3540
    %v4424 = vsel %vm1953, %v3228, %v3542
    %v4425 = vsel %vm1953, %v3229, %v3544
    %v4426 = vsel %vm1953, %v3230, %v3546
    %v4427 = vsel %vm1953, %v3231, %v3548
    %v4428 = vsel %vm1953, %v3232, %v3550
    %v4429 = vsel %vm1953, %v3233, %v3552
    %v4430 = vsel %vm1953, %v3234, %v3554
    %v4431 = vsel %vm1953, %v3235, %v3556
    %v4432 = vsel %vm1953, %v3236, %v3558
    %v4433 = vsel %vm1953, %v3237, %v3560
    %v4434 = vsel %vm1953, %v3238, %v3562
    %v4435 = vsel %vm1953, %v3239, %v3564
    %v4436 = vsel %vm1953, %v3240, %v3566
    %v4437 = vsel %vm1953, %v3241, %v3568
    %v4438 = vsel %vm1953, %v3242, %v3570
    %v4439 = vsel %vm303, %v4403, %v3644
    %v4440 = vsel %vm303, %v4404, %v3646
    %v4441 = vsel %vm303, %v4405, %v3648
    %v4442 = vsel %vm303, %v4406, %v3650
    %v4443 = vsel %vm303, %v4407, %v3652
    %v4444 = vsel %vm303, %v4408, %v3654
    %v4445 = vsel %vm303, %v4409, %v3656
    %v4446 = vsel %vm303, %v4410, %v3658
    %v4447 = vsel %vm303, %v4411, %v3660
    %v4448 = vsel %vm303, %v4412, %v3662
    %v4449 = vsel %vm303, %v4413, %v3664
    %v4450 = vsel %vm303, %v4414, %v3666
    %v4451 = vsel %vm303, %v4415, %v3668
    %v4452 = vsel %vm303, %v4416, %v3670
    %v4453 = vsel %vm303, %v4417, %v3672
    %v4454 = vsel %vm303, %v4418, %v3674
    %v4455 = vsel %vm303, %v4419, %v3676
    %v4456 = vsel %vm303, %v4420, %v3678
    %v4457 = vsel %vm303, %v4421, %v3680
    %v4458 = vsel %vm303, %v4422, %v3682
    %v4459 = vsel %vm303, %v4423, %v3684
    %v4460 = vsel %vm303, %v4424, %v3686
    %v4461 = vsel %vm303, %v4425, %v3688
    %v4462 = vsel %vm303, %v4426, %v3690
    %v4463 = vsel %vm303, %v4427, %v3692
    %v4464 = vsel %vm303, %v4428, %v3694
    %v4465 = vsel %vm303, %v4429, %v3696
    %v4466 = vsel %vm303, %v4430, %v3698
    %v4467 = vsel %vm303, %v4431, %v3700
    %v4468 = vsel %vm303, %v4432, %v3702
    %v4469 = vsel %vm303, %v4433, %v3704
    %v4470 = vsel %vm303, %v4434, %v3706
    %v4471 = vsel %vm303, %v4435, %v3708
    %v4472 = vsel %vm303, %v4436, %v3710
    %v4473 = vsel %vm303, %v4437, %v3712
    %v4474 = vsel %vm303, %v4438, %v3714
    %vm4475 = vcmask 392192
    %v4476 = vsel %vm4475, %v4439, %v3754
    %v4477 = vsel %vm4475, %v4440, %v3756
    %v4478 = vsel %vm4475, %v4441, %v3758
    %v4479 = vsel %vm4475, %v4442, %v3760
    %v4480 = vsel %vm4475, %v4443, %v3762
    %v4481 = vsel %vm4475, %v4444, %v3764
    %v4482 = vsel %vm4475, %v4445, %v3766
    %v4483 = vsel %vm4475, %v4446, %v3768
    %v4484 = vsel %vm4475, %v4447, %v3770
    %v4485 = vsel %vm4475, %v4448, %v3772
    %v4486 = vsel %vm4475, %v4449, %v3774
    %v4487 = vsel %vm4475, %v4450, %v3776
    %v4488 = vsel %vm4475, %v4451, %v3778
    %v4489 = vsel %vm4475, %v4452, %v3780
    %v4490 = vsel %vm4475, %v4453, %v3782
    %v4491 = vsel %vm4475, %v4454, %v3784
    %v4492 = vsel %vm4475, %v4455, %v3786
    %v4493 = vsel %vm4475, %v4456, %v3788
    %v4494 = vsel %vm4475, %v4457, %v3790
    %v4495 = vsel %vm4475, %v4458, %v3792
    %v4496 = vsel %vm4475, %v4459, %v3794
    %v4497 = vsel %vm4475, %v4460, %v3796
    %v4498 = vsel %vm4475, %v4461, %v3798
    %v4499 = vsel %vm4475, %v4462, %v3800
    %v4500 = vsel %vm4475, %v4463, %v3802
    %v4501 = vsel %vm4475, %v4464, %v3804
    %v4502 = vsel %vm4475, %v4465, %v3806
    %v4503 = vsel %vm4475, %v4466, %v3808
    %v4504 = vsel %vm4475, %v4467, %v3810
    %v4505 = vsel %vm4475, %v4468, %v3812
    %v4506 = vsel %vm4475, %v4469, %v3814
    %v4507 = vsel %vm4475, %v4470, %v3816
    %v4508 = vsel %vm4475, %v4471, %v3818
    %v4509 = vsel %vm4475, %v4472, %v3820
    %v4510 = vsel %vm4475, %v4473, %v3822
    %v4511 = vsel %vm4475, %v4474, %v3824
    %vm4512 = vcmask 523264
    %v4513 = vsel %vm4512, %v4476, %v3898
    %v4514 = vsel %vm4512, %v4477, %v3900
    %v4515 = vsel %vm4512, %v4478, %v3902
    %v4516 = vsel %vm4512, %v4479, %v3904
    %v4517 = vsel %vm4512, %v4480, %v3906
    %v4518 = vsel %vm4512, %v4481, %v3908
    %v4519 = vsel %vm4512, %v4482, %v3910
    %v4520 = vsel %vm4512, %v4483, %v3912
    %v4521 = vsel %vm4512, %v4484, %v3914
    %v4522 = vsel %vm4512, %v4485, %v3916
    %v4523 = vsel %vm4512, %v4486, %v3918
    %v4524 = vsel %vm4512, %v4487, %v3920
    %v4525 = vsel %vm4512, %v4488, %v3922
    %v4526 = vsel %vm4512, %v4489, %v3924
    %v4527 = vsel %vm4512, %v4490, %v3926
    %v4528 = vsel %vm4512, %v4491, %v3928
    %v4529 = vsel %vm4512, %v4492, %v3930
    %v4530 = vsel %vm4512, %v4493, %v3932
    %v4531 = vsel %vm4512, %v4494, %v3934
    %v4532 = vsel %vm4512, %v4495, %v3936
    %v4533 = vsel %vm4512, %v4496, %v3938
    %v4534 = vsel %vm4512, %v4497, %v3940
    %v4535 = vsel %vm4512, %v4498, %v3942
    %v4536 = vsel %vm4512, %v4499, %v3944
    %v4537 = vsel %vm4512, %v4500, %v3946
    %v4538 = vsel %vm4512, %v4501, %v3948
    %v4539 = vsel %vm4512, %v4502, %v3950
    %v4540 = vsel %vm4512, %v4503, %v3952
    %v4541 = vsel %vm4512, %v4504, %v3954
    %v4542 = vsel %vm4512, %v4505, %v3956
    %v4543 = vsel %vm4512, %v4506, %v3958
    %v4544 = vsel %vm4512, %v4507, %v3960
    %v4545 = vsel %vm4512, %v4508, %v3962
    %v4546 = vsel %vm4512, %v4509, %v3964
    %v4547 = vsel %vm4512, %v4510, %v3966
    %v4548 = vsel %vm4512, %v4511, %v3968
    %vm4549 = vcmask 654336
    %v4550 = vsel %vm4549, %v4513, %v4042
    %v4551 = vsel %vm4549, %v4514, %v4044
    %v4552 = vsel %vm4549, %v4515, %v4046
    %v4553 = vsel %vm4549, %v4516, %v4048
    %v4554 = vsel %vm4549, %v4517, %v4050
    %v4555 = vsel %vm4549, %v4518, %v4052
    %v4556 = vsel %vm4549, %v4519, %v4054
    %v4557 = vsel %vm4549, %v4520, %v4056
    %v4558 = vsel %vm4549, %v4521, %v4058
    %v4559 = vsel %vm4549, %v4522, %v4060
    %v4560 = vsel %vm4549, %v4523, %v4062
    %v4561 = vsel %vm4549, %v4524, %v4064
    %v4562 = vsel %vm4549, %v4525, %v4066
    %v4563 = vsel %vm4549, %v4526, %v4068
    %v4564 = vsel %vm4549, %v4527, %v4070
    %v4565 = vsel %vm4549, %v4528, %v4072
    %v4566 = vsel %vm4549, %v4529, %v4074
    %v4567 = vsel %vm4549, %v4530, %v4076
    %v4568 = vsel %vm4549, %v4531, %v4078
    %v4569 = vsel %vm4549, %v4532, %v4080
    %v4570 = vsel %vm4549, %v4533, %v4082
    %v4571 = vsel %vm4549, %v4534, %v4084
    %v4572 = vsel %vm4549, %v4535, %v4086
    %v4573 = vsel %vm4549, %v4536, %v4088
    %v4574 = vsel %vm4549, %v4537, %v4090
    %v4575 = vsel %vm4549, %v4538, %v4092
    %v4576 = vsel %vm4549, %v4539, %v4094
    %v4577 = vsel %vm4549, %v4540, %v4096
    %v4578 = vsel %vm4549, %v4541, %v4098
    %v4579 = vsel %vm4549, %v4542, %v4100
    %v4580 = vsel %vm4549, %v4543, %v4102
    %v4581 = vsel %vm4549, %v4544, %v4104
    %v4582 = vsel %vm4549, %v4545, %v4106
    %v4583 = vsel %vm4549, %v4546, %v4108
    %v4584 = vsel %vm4549, %v4547, %v4110
    %v4585 = vsel %vm4549, %v4548, %v4112
    %vm4586 = vcmask 785408
    %v4587 = vsel %vm4586, %v4550, %v4152
    %v4588 = vsel %vm4586, %v4551, %v4154
    %v4589 = vsel %vm4586, %v4552, %v4156
    %v4590 = vsel %vm4586, %v4553, %v4158
    %v4591 = vsel %vm4586, %v4554, %v4160
    %v4592 = vsel %vm4586, %v4555, %v4162
    %v4593 = vsel %vm4586, %v4556, %v4164
    %v4594 = vsel %vm4586, %v4557, %v4166
    %v4595 = vsel %vm4586, %v4558, %v4168
    %v4596 = vsel %vm4586, %v4559, %v4170
    %v4597 = vsel %vm4586, %v4560, %v4172
    %v4598 = vsel %vm4586, %v4561, %v4174
    %v4599 = vsel %vm4586, %v4562, %v4176
    %v4600 = vsel %vm4586, %v4563, %v4178
    %v4601 = vsel %vm4586, %v4564, %v4180
    %v4602 = vsel %vm4586, %v4565, %v4182
    %v4603 = vsel %vm4586, %v4566, %v4184
    %v4604 = vsel %vm4586, %v4567, %v4186
    %v4605 = vsel %vm4586, %v4568, %v4188
    %v4606 = vsel %vm4586, %v4569, %v4190
    %v4607 = vsel %vm4586, %v4570, %v4192
    %v4608 = vsel %vm4586, %v4571, %v4194
    %v4609 = vsel %vm4586, %v4572, %v4196
    %v4610 = vsel %vm4586, %v4573, %v4198
    %v4611 = vsel %vm4586, %v4574, %v4200
    %v4612 = vsel %vm4586, %v4575, %v4202
    %v4613 = vsel %vm4586, %v4576, %v4204
    %v4614 = vsel %vm4586, %v4577, %v4206
    %v4615 = vsel %vm4586, %v4578, %v4208
    %v4616 = vsel %vm4586, %v4579, %v4210
    %v4617 = vsel %vm4586, %v4580, %v4212
    %v4618 = vsel %vm4586, %v4581, %v4214
    %v4619 = vsel %vm4586, %v4582, %v4216
    %v4620 = vsel %vm4586, %v4583, %v4218
    %v4621 = vsel %vm4586, %v4584, %v4220
    %v4622 = vsel %vm4586, %v4585, %v4222
    %vm4623 = vcmask 916480
    %v4624 = vsel %vm4623, %v4587, %v4296
    %v4625 = vsel %vm4623, %v4588, %v4298
    %v4626 = vsel %vm4623, %v4589, %v4300
    %v4627 = vsel %vm4623, %v4590, %v4302
    %v4628 = vsel %vm4623, %v4591, %v4304
    %v4629 = vsel %vm4623, %v4592, %v4306
    %v4630 = vsel %vm4623, %v4593, %v4308
    %v4631 = vsel %vm4623, %v4594, %v4310
    %v4632 = vsel %vm4623, %v4595, %v4312
    %v4633 = vsel %vm4623, %v4596, %v4314
    %v4634 = vsel %vm4623, %v4597, %v4316
    %v4635 = vsel %vm4623, %v4598, %v4318
    %v4636 = vsel %vm4623, %v4599, %v4320
    %v4637 = vsel %vm4623, %v4600, %v4322
    %v4638 = vsel %vm4623, %v4601, %v4324
    %v4639 = vsel %vm4623, %v4602, %v4326
    %v4640 = vsel %vm4623, %v4603, %v4328
    %v4641 = vsel %vm4623, %v4604, %v4330
    %v4642 = vsel %vm4623, %v4605, %v4332
    %v4643 = vsel %vm4623, %v4606, %v4334
    %v4644 = vsel %vm4623, %v4607, %v4336
    %v4645 = vsel %vm4623, %v4608, %v4338
    %v4646 = vsel %vm4623, %v4609, %v4340
    %v4647 = vsel %vm4623, %v4610, %v4342
    %v4648 = vsel %vm4623, %v4611, %v4344
    %v4649 = vsel %vm4623, %v4612, %v4346
    %v4650 = vsel %vm4623, %v4613, %v4348
    %v4651 = vsel %vm4623, %v4614, %v4350
    %v4652 = vsel %vm4623, %v4615, %v4352
    %v4653 = vsel %vm4623, %v4616, %v4354
    %v4654 = vsel %vm4623, %v4617, %v4356
    %v4655 = vsel %vm4623, %v4618, %v4358
    %v4656 = vsel %vm4623, %v4619, %v4360
    %v4657 = vsel %vm4623, %v4620, %v4362
    %v4658 = vsel %vm4623, %v4621, %v4364
    %v4659 = vsel %vm4623, %v4622, %v4366
    %v4660 = vld [vmem:[%s3] sm:$0xff]
    %v4661 = vld [vmem:[%s3 + $0x8] sm:$0xff]
    %v4662 = vld [vmem:[%s3 + $0x10] sm:$0xff]
    %v4663 = vld [vmem:[%s3 + $0x18] sm:$0xff]
    %v4664 = vld [vmem:[%s3 + $0x20] sm:$0xff]
    %v4665 = vld [vmem:[%s3 + $0x28] sm:$0xff]
    %v4666 = vld [vmem:[%s3 + $0x30] sm:$0xff]
    %v4667 = vld [vmem:[%s3 + $0x38] sm:$0xff]
    %v4668 = vld [vmem:[%s3 + $0x40] sm:$0xff]
    %v4669 = vld [vmem:[%s3 + $0x48] sm:$0xff]
    %v4670 = vld [vmem:[%s3 + $0x50] sm:$0xff]
    %v4671 = vld [vmem:[%s3 + $0x58] sm:$0xff]
    %v4672 = vld [vmem:[%s3 + $0x60] sm:$0xff]
    %v4673 = vld [vmem:[%s3 + $0x68] sm:$0xff]
    %v4674 = vld [vmem:[%s3 + $0x70] sm:$0xff]
    %v4675 = vld [vmem:[%s3 + $0x78] sm:$0xff]
    %v4676 = vld [vmem:[%s3 + $0x80] sm:$0xff]
    %v4677 = vld [vmem:[%s3 + $0x88] sm:$0xff]
    %v4679 = vsel %vm1953, %v3427, 0
    %v4682 = vsel %vm1953, %v3428, 0
    %v4685 = vsel %vm1953, %v3429, 0
    %v4688 = vsel %vm1953, %v3430, 0
    %v4691 = vsel %vm1953, %v3431, 0
    %v4694 = vsel %vm1953, %v3432, 0
    %v4697 = vsel %vm1953, %v3433, 0
    %v4700 = vsel %vm1953, %v3434, 0
    %v4703 = vsel %vm1953, %v3435, 0
    %v4706 = vsel %vm1953, %v3436, 0
    %v4709 = vsel %vm1953, %v3437, 0
    %v4712 = vsel %vm1953, %v3438, 0
    %v4715 = vsel %vm1953, %v3439, 0
    %v4718 = vsel %vm1953, %v3440, 0
    %v4721 = vsel %vm1953, %v3441, 0
    %v4724 = vsel %vm1953, %v3442, 0
    %v4727 = vsel %vm1953, %v3443, 0
    %v4730 = vsel %vm1953, %v3444, 0
    %v4733 = vsel %vm1953, %v3445, 0
    %v4736 = vsel %vm1953, %v3446, 0
    %v4739 = vsel %vm1953, %v3447, 0
    %v4742 = vsel %vm1953, %v3448, 0
    %v4745 = vsel %vm1953, %v3449, 0
    %v4748 = vsel %vm1953, %v3450, 0
    %v4751 = vsel %vm1953, %v3451, 0
    %v4754 = vsel %vm1953, %v3452, 0
    %v4757 = vsel %vm1953, %v3453, 0
    %v4760 = vsel %vm1953, %v3454, 0
    %v4763 = vsel %vm1953, %v3455, 0
    %v4766 = vsel %vm1953, %v3456, 0
    %v4769 = vsel %vm1953, %v3457, 0
    %v4772 = vsel %vm1953, %v3458, 0
    %v4775 = vsel %vm1953, %v3459, 0
    %v4778 = vsel %vm1953, %v3460, 0
    %v4781 = vsel %vm1953, %v3461, 0
    %v4784 = vsel %vm1953, %v3462, 0
    %4786 = vmatpush.msra.mxu0 %v4675
    %4787 = vmatpush.msra.mxu0 %v4674
    %4788 = vmatpush.msra.mxu0 %v4673
    %4789 = vmatpush.msra.mxu0 %v4672
    %4790 = vmatpush.msra.mxu0 %v4671
    %4791 = vmatpush.msra.mxu0 %v4670
    %4792 = vmatpush.msra.mxu0 %v4669
    %4793 = vmatpush.msra.mxu0 %v4668
    %4794 = vmatpush.msra.mxu0 %v4667
    %4795 = vmatpush.msra.mxu0 %v4666
    %4796 = vmatpush.msra.mxu0 %v4665
    %4797 = vmatpush.msra.mxu0 %v4664
    %4798 = vmatpush.msra.mxu0 %v4663
    %4799 = vmatpush.msra.mxu0 %v4662
    %4800 = vmatpush.msra.mxu0 %v4661
    %4801 = vmatpush.msra.mxu0 %v4660
    %4802 = vmatmul.f32.gmra.mxu0 %v4624
    %v4803 = vpop.f32.mrf.mxu0
    %v4804 = vadd.f32 0.0, %v4803
    %4805 = vmatmul.f32.gmra.mxu0 %v4625
    %v4806 = vpop.f32.mrf.mxu0
    %v4807 = vadd.f32 0.0, %v4806
    %4808 = vmatmul.f32.gmra.mxu0 %v4626
    %v4809 = vpop.f32.mrf.mxu0
    %v4810 = vadd.f32 0.0, %v4809
    %4811 = vmatmul.f32.gmra.mxu0 %v4627
    %v4812 = vpop.f32.mrf.mxu0
    %v4813 = vadd.f32 0.0, %v4812
    %4814 = vmatmul.f32.gmra.mxu0 %v4628
    %v4815 = vpop.f32.mrf.mxu0
    %v4816 = vadd.f32 0.0, %v4815
    %4817 = vmatmul.f32.gmra.mxu0 %v4629
    %v4818 = vpop.f32.mrf.mxu0
    %v4819 = vadd.f32 0.0, %v4818
    %4820 = vmatmul.f32.gmra.mxu0 %v4630
    %v4821 = vpop.f32.mrf.mxu0
    %v4822 = vadd.f32 0.0, %v4821
    %4823 = vmatmul.f32.gmra.mxu0 %v4631
    %v4824 = vpop.f32.mrf.mxu0
    %v4825 = vadd.f32 0.0, %v4824
    %4826 = vmatmul.f32.gmra.mxu0 %v4632
    %v4827 = vpop.f32.mrf.mxu0
    %v4828 = vadd.f32 0.0, %v4827
    %4829 = vmatmul.f32.gmra.mxu0 %v4633
    %v4830 = vpop.f32.mrf.mxu0
    %v4831 = vadd.f32 0.0, %v4830
    %4832 = vmatmul.f32.gmra.mxu0 %v4634
    %v4833 = vpop.f32.mrf.mxu0
    %v4834 = vadd.f32 0.0, %v4833
    %4835 = vmatmul.f32.gmra.mxu0 %v4635
    %v4836 = vpop.f32.mrf.mxu0
    %v4837 = vadd.f32 0.0, %v4836
    %4838 = vmatmul.f32.gmra.mxu0 %v4636
    %v4839 = vpop.f32.mrf.mxu0
    %v4840 = vadd.f32 0.0, %v4839
    %4841 = vmatmul.f32.gmra.mxu0 %v4637
    %v4842 = vpop.f32.mrf.mxu0
    %v4843 = vadd.f32 0.0, %v4842
    %4844 = vmatmul.f32.gmra.mxu0 %v4638
    %v4845 = vpop.f32.mrf.mxu0
    %v4846 = vadd.f32 0.0, %v4845
    %4847 = vmatmul.f32.gmra.mxu0 %v4639
    %v4848 = vpop.f32.mrf.mxu0
    %v4849 = vadd.f32 0.0, %v4848
    %4850 = vmatmul.f32.gmra.mxu0 %v4640
    %v4851 = vpop.f32.mrf.mxu0
    %v4852 = vadd.f32 0.0, %v4851
    %4853 = vmatmul.f32.gmra.mxu0 %v4641
    %v4854 = vpop.f32.mrf.mxu0
    %v4855 = vadd.f32 0.0, %v4854
    %4856 = vmatmul.f32.gmra.mxu0 %v4642
    %v4857 = vpop.f32.mrf.mxu0
    %v4858 = vadd.f32 0.0, %v4857
    %4859 = vmatmul.f32.gmra.mxu0 %v4643
    %v4860 = vpop.f32.mrf.mxu0
    %v4861 = vadd.f32 0.0, %v4860
    %4862 = vmatmul.f32.gmra.mxu0 %v4644
    %v4863 = vpop.f32.mrf.mxu0
    %v4864 = vadd.f32 0.0, %v4863
    %4865 = vmatmul.f32.gmra.mxu0 %v4645
    %v4866 = vpop.f32.mrf.mxu0
    %v4867 = vadd.f32 0.0, %v4866
    %4868 = vmatmul.f32.gmra.mxu0 %v4646
    %v4869 = vpop.f32.mrf.mxu0
    %v4870 = vadd.f32 0.0, %v4869
    %4871 = vmatmul.f32.gmra.mxu0 %v4647
    %v4872 = vpop.f32.mrf.mxu0
    %v4873 = vadd.f32 0.0, %v4872
    %4874 = vmatmul.f32.gmra.mxu0 %v4648
    %v4875 = vpop.f32.mrf.mxu0
    %v4876 = vadd.f32 0.0, %v4875
    %4877 = vmatmul.f32.gmra.mxu0 %v4649
    %v4878 = vpop.f32.mrf.mxu0
    %v4879 = vadd.f32 0.0, %v4878
    %4880 = vmatmul.f32.gmra.mxu0 %v4650
    %v4881 = vpop.f32.mrf.mxu0
    %v4882 = vadd.f32 0.0, %v4881
    %4883 = vmatmul.f32.gmra.mxu0 %v4651
    %v4884 = vpop.f32.mrf.mxu0
    %v4885 = vadd.f32 0.0, %v4884
    %4886 = vmatmul.f32.gmra.mxu0 %v4652
    %v4887 = vpop.f32.mrf.mxu0
    %v4888 = vadd.f32 0.0, %v4887
    %4889 = vmatmul.f32.gmra.mxu0 %v4653
    %v4890 = vpop.f32.mrf.mxu0
    %v4891 = vadd.f32 0.0, %v4890
    %4892 = vmatmul.f32.gmra.mxu0 %v4654
    %v4893 = vpop.f32.mrf.mxu0
    %v4894 = vadd.f32 0.0, %v4893
    %4895 = vmatmul.f32.gmra.mxu0 %v4655
    %v4896 = vpop.f32.mrf.mxu0
    %v4897 = vadd.f32 0.0, %v4896
    %4898 = vmatmul.f32.gmra.mxu0 %v4656
    %v4899 = vpop.f32.mrf.mxu0
    %v4900 = vadd.f32 0.0, %v4899
    %4901 = vmatmul.f32.gmra.mxu0 %v4657
    %v4902 = vpop.f32.mrf.mxu0
    %v4903 = vadd.f32 0.0, %v4902
    %4904 = vmatmul.f32.gmra.mxu0 %v4658
    %v4905 = vpop.f32.mrf.mxu0
    %v4906 = vadd.f32 0.0, %v4905
    %4907 = vmatmul.f32.gmra.mxu0 %v4659
    %v4908 = vpop.f32.mrf.mxu0
    %v4909 = vadd.f32 0.0, %v4908
    %4910 = vdwg.mxu0
    %4911 = vmatpush.msra.mxu0 0.0
    %4912 = vmatpush.msra.mxu0 0.0
    %4913 = vmatpush.msra.mxu0 0.0
    %4914 = vmatpush.msra.mxu0 0.0
    %4915 = vmatpush.msra.mxu0 0.0
    %4916 = vmatpush.msra.mxu0 0.0
    %4917 = vmatpush.msra.mxu0 0.0
    %4918 = vmatpush.msra.mxu0 0.0
    %4919 = vmatpush.msra.mxu0 0.0
    %4920 = vmatpush.msra.mxu0 0.0
    %4921 = vmatpush.msra.mxu0 0.0
    %4922 = vmatpush.msra.mxu0 0.0
    %4923 = vmatpush.msra.mxu0 0.0
    %4924 = vmatpush.msra.mxu0 0.0
    %4925 = vmatpush.msra.mxu0 %v4677
    %4926 = vmatpush.msra.mxu0 %v4676
    %4927 = vmatmul.f32.gmra.mxu0 %v4679
    %v4928 = vpop.f32.mrf.mxu0
    %v4929 = vadd.f32 %v4804, %v4928
    %4930 = vmatmul.f32.gmra.mxu0 %v4682
    %v4931 = vpop.f32.mrf.mxu0
    %v4932 = vadd.f32 %v4807, %v4931
    %4933 = vmatmul.f32.gmra.mxu0 %v4685
    %v4934 = vpop.f32.mrf.mxu0
    %v4935 = vadd.f32 %v4810, %v4934
    %4936 = vmatmul.f32.gmra.mxu0 %v4688
    %v4937 = vpop.f32.mrf.mxu0
    %v4938 = vadd.f32 %v4813, %v4937
    %4939 = vmatmul.f32.gmra.mxu0 %v4691
    %v4940 = vpop.f32.mrf.mxu0
    %v4941 = vadd.f32 %v4816, %v4940
    %4942 = vmatmul.f32.gmra.mxu0 %v4694
    %v4943 = vpop.f32.mrf.mxu0
    %v4944 = vadd.f32 %v4819, %v4943
    %4945 = vmatmul.f32.gmra.mxu0 %v4697
    %v4946 = vpop.f32.mrf.mxu0
    %v4947 = vadd.f32 %v4822, %v4946
    %4948 = vmatmul.f32.gmra.mxu0 %v4700
    %v4949 = vpop.f32.mrf.mxu0
    %v4950 = vadd.f32 %v4825, %v4949
    %4951 = vmatmul.f32.gmra.mxu0 %v4703
    %v4952 = vpop.f32.mrf.mxu0
    %v4953 = vadd.f32 %v4828, %v4952
    %4954 = vmatmul.f32.gmra.mxu0 %v4706
    %v4955 = vpop.f32.mrf.mxu0
    %v4956 = vadd.f32 %v4831, %v4955
    %4957 = vmatmul.f32.gmra.mxu0 %v4709
    %v4958 = vpop.f32.mrf.mxu0
    %v4959 = vadd.f32 %v4834, %v4958
    %4960 = vmatmul.f32.gmra.mxu0 %v4712
    %v4961 = vpop.f32.mrf.mxu0
    %v4962 = vadd.f32 %v4837, %v4961
    %4963 = vmatmul.f32.gmra.mxu0 %v4715
    %v4964 = vpop.f32.mrf.mxu0
    %v4965 = vadd.f32 %v4840, %v4964
    %4966 = vmatmul.f32.gmra.mxu0 %v4718
    %v4967 = vpop.f32.mrf.mxu0
    %v4968 = vadd.f32 %v4843, %v4967
    %4969 = vmatmul.f32.gmra.mxu0 %v4721
    %v4970 = vpop.f32.mrf.mxu0
    %v4971 = vadd.f32 %v4846, %v4970
    %4972 = vmatmul.f32.gmra.mxu0 %v4724
    %v4973 = vpop.f32.mrf.mxu0
    %v4974 = vadd.f32 %v4849, %v4973
    %4975 = vmatmul.f32.gmra.mxu0 %v4727
    %v4976 = vpop.f32.mrf.mxu0
    %v4977 = vadd.f32 %v4852, %v4976
    %4978 = vmatmul.f32.gmra.mxu0 %v4730
    %v4979 = vpop.f32.mrf.mxu0
    %v4980 = vadd.f32 %v4855, %v4979
    %4981 = vmatmul.f32.gmra.mxu0 %v4733
    %v4982 = vpop.f32.mrf.mxu0
    %v4983 = vadd.f32 %v4858, %v4982
    %4984 = vmatmul.f32.gmra.mxu0 %v4736
    %v4985 = vpop.f32.mrf.mxu0
    %v4986 = vadd.f32 %v4861, %v4985
    %4987 = vmatmul.f32.gmra.mxu0 %v4739
    %v4988 = vpop.f32.mrf.mxu0
    %v4989 = vadd.f32 %v4864, %v4988
    %4990 = vmatmul.f32.gmra.mxu0 %v4742
    %v4991 = vpop.f32.mrf.mxu0
    %v4992 = vadd.f32 %v4867, %v4991
    %4993 = vmatmul.f32.gmra.mxu0 %v4745
    %v4994 = vpop.f32.mrf.mxu0
    %v4995 = vadd.f32 %v4870, %v4994
    %4996 = vmatmul.f32.gmra.mxu0 %v4748
    %v4997 = vpop.f32.mrf.mxu0
    %v4998 = vadd.f32 %v4873, %v4997
    %4999 = vmatmul.f32.gmra.mxu0 %v4751
    %v5000 = vpop.f32.mrf.mxu0
    %v5001 = vadd.f32 %v4876, %v5000
    %5002 = vmatmul.f32.gmra.mxu0 %v4754
    %v5003 = vpop.f32.mrf.mxu0
    %v5004 = vadd.f32 %v4879, %v5003
    %5005 = vmatmul.f32.gmra.mxu0 %v4757
    %v5006 = vpop.f32.mrf.mxu0
    %v5007 = vadd.f32 %v4882, %v5006
    %5008 = vmatmul.f32.gmra.mxu0 %v4760
    %v5009 = vpop.f32.mrf.mxu0
    %v5010 = vadd.f32 %v4885, %v5009
    %5011 = vmatmul.f32.gmra.mxu0 %v4763
    %v5012 = vpop.f32.mrf.mxu0
    %v5013 = vadd.f32 %v4888, %v5012
    %5014 = vmatmul.f32.gmra.mxu0 %v4766
    %v5015 = vpop.f32.mrf.mxu0
    %v5016 = vadd.f32 %v4891, %v5015
    %5017 = vmatmul.f32.gmra.mxu0 %v4769
    %v5018 = vpop.f32.mrf.mxu0
    %v5019 = vadd.f32 %v4894, %v5018
    %5020 = vmatmul.f32.gmra.mxu0 %v4772
    %v5021 = vpop.f32.mrf.mxu0
    %v5022 = vadd.f32 %v4897, %v5021
    %5023 = vmatmul.f32.gmra.mxu0 %v4775
    %v5024 = vpop.f32.mrf.mxu0
    %v5025 = vadd.f32 %v4900, %v5024
    %5026 = vmatmul.f32.gmra.mxu0 %v4778
    %v5027 = vpop.f32.mrf.mxu0
    %v5028 = vadd.f32 %v4903, %v5027
    %5029 = vmatmul.f32.gmra.mxu0 %v4781
    %v5030 = vpop.f32.mrf.mxu0
    %v5031 = vadd.f32 %v4906, %v5030
    %5032 = vmatmul.f32.gmra.mxu0 %v4784
    %v5033 = vpop.f32.mrf.mxu0
    %v5034 = vadd.f32 %v4909, %v5033
    %5035 = vdwg.mxu0
    %5036 = vst.msk [vmem:[#allocation4] sm:$0xff] %vm303, %v4929
    %5037 = vst.msk [vmem:[#allocation4 + $0x8] sm:$0xff] %vm303, %v4932
    %5038 = vst.msk [vmem:[#allocation4 + $0x10] sm:$0xff] %vm303, %v4935
    %5039 = vst.msk [vmem:[#allocation4 + $0x18] sm:$0xff] %vm303, %v4938
    %5040 = vst.msk [vmem:[#allocation4 + $0x20] sm:$0xff] %vm303, %v4941
    %5041 = vst.msk [vmem:[#allocation4 + $0x28] sm:$0xff] %vm303, %v4944
    %5042 = vst.msk [vmem:[#allocation4 + $0x30] sm:$0xff] %vm303, %v4947
    %5043 = vst.msk [vmem:[#allocation4 + $0x38] sm:$0xff] %vm303, %v4950
    %5044 = vst.msk [vmem:[#allocation4 + $0x40] sm:$0xff] %vm303, %v4953
    %5045 = vst.msk [vmem:[#allocation4 + $0x48] sm:$0xff] %vm303, %v4956
    %5046 = vst.msk [vmem:[#allocation4 + $0x50] sm:$0xff] %vm303, %v4959
    %5047 = vst.msk [vmem:[#allocation4 + $0x58] sm:$0xff] %vm303, %v4962
    %5048 = vst.msk [vmem:[#allocation4 + $0x60] sm:$0xff] %vm303, %v4965
    %5049 = vst.msk [vmem:[#allocation4 + $0x68] sm:$0xff] %vm303, %v4968
    %5050 = vst.msk [vmem:[#allocation4 + $0x70] sm:$0xff] %vm303, %v4971
    %5051 = vst.msk [vmem:[#allocation4 + $0x78] sm:$0xff] %vm303, %v4974
    %5052 = vst.msk [vmem:[#allocation4 + $0x80] sm:$0xff] %vm303, %v4977
    %5053 = vst.msk [vmem:[#allocation4 + $0x88] sm:$0xff] %vm303, %v4980
    %5054 = vst.msk [vmem:[#allocation4 + $0x90] sm:$0xff] %vm303, %v4983
    %5055 = vst.msk [vmem:[#allocation4 + $0x98] sm:$0xff] %vm303, %v4986
    %5056 = vst.msk [vmem:[#allocation4 + $0xa0] sm:$0xff] %vm303, %v4989
    %5057 = vst.msk [vmem:[#allocation4 + $0xa8] sm:$0xff] %vm303, %v4992
    %5058 = vst.msk [vmem:[#allocation4 + $0xb0] sm:$0xff] %vm303, %v4995
    %5059 = vst.msk [vmem:[#allocation4 + $0xb8] sm:$0xff] %vm303, %v4998
    %5060 = vst.msk [vmem:[#allocation4 + $0xc0] sm:$0xff] %vm303, %v5001
    %5061 = vst.msk [vmem:[#allocation4 + $0xc8] sm:$0xff] %vm303, %v5004
    %5062 = vst.msk [vmem:[#allocation4 + $0xd0] sm:$0xff] %vm303, %v5007
    %5063 = vst.msk [vmem:[#allocation4 + $0xd8] sm:$0xff] %vm303, %v5010
    %5064 = vst.msk [vmem:[#allocation4 + $0xe0] sm:$0xff] %vm303, %v5013
    %5065 = vst.msk [vmem:[#allocation4 + $0xe8] sm:$0xff] %vm303, %v5016
    %5066 = vst.msk [vmem:[#allocation4 + $0xf0] sm:$0xff] %vm303, %v5019
    %5067 = vst.msk [vmem:[#allocation4 + $0xf8] sm:$0xff] %vm303, %v5022
    %5068 = vst.msk [vmem:[#allocation4 + $0x100] sm:$0xff] %vm303, %v5025
    %5069 = vst.msk [vmem:[#allocation4 + $0x108] sm:$0xff] %vm303, %v5028
    %5070 = vst.msk [vmem:[#allocation4 + $0x110] sm:$0xff] %vm303, %v5031
    %5071 = vst.msk [vmem:[#allocation4 + $0x118] sm:$0xff] %vm303, %v5034
    %v5072 = vld [vmem:[#allocation3 + $0x148] sm:$0xff]
    %v5073 = vld [vmem:[#allocation3 + $0x150] sm:$0xff]
    %v5074 = vld [vmem:[#allocation3 + $0x158] sm:$0xff]
    %v5075 = vld [vmem:[#allocation3 + $0x160] sm:$0xff]
    %v5076 = vld [vmem:[#allocation3 + $0x168] sm:$0xff]
    %v5077 = vld [vmem:[#allocation3 + $0x170] sm:$0xff]
    %v5078 = vld [vmem:[#allocation3 + $0x178] sm:$0xff]
    %v5079 = vld [vmem:[#allocation3 + $0x180] sm:$0xff]
    %v5080 = vld [vmem:[#allocation3 + $0x188] sm:$0xff]
    %v5081 = vld [vmem:[#allocation3 + $0x190] sm:$0xff]
    %v5082 = vld [vmem:[#allocation3 + $0x198] sm:$0xff]
    %v5083 = vld [vmem:[#allocation3 + $0x1a0] sm:$0xff]
    %v5084 = vld [vmem:[#allocation3 + $0x1a8] sm:$0xff]
    %v5085 = vld [vmem:[#allocation3 + $0x1b0] sm:$0xff]
    %v5086 = vld [vmem:[#allocation3 + $0x1b8] sm:$0xff]
    %v5087 = vld [vmem:[#allocation3 + $0x1c0] sm:$0xff]
    %v5088 = vld [vmem:[#allocation3 + $0x1c8] sm:$0xff]
    %v5089 = vld [vmem:[#allocation3 + $0x1d0] sm:$0xff]
    %v5090 = vld [vmem:[#allocation3 + $0x1d8] sm:$0xff]
    %v5091 = vld [vmem:[#allocation3 + $0x1e0] sm:$0xff]
    %v5092 = vld [vmem:[#allocation3 + $0x1e8] sm:$0xff]
    %v5093 = vld [vmem:[#allocation3 + $0x1f0] sm:$0xff]
    %v5094 = vld [vmem:[#allocation3 + $0x1f8] sm:$0xff]
    %v5095 = vld [vmem:[#allocation3 + $0x200] sm:$0xff]
    %v5096 = vld [vmem:[#allocation3 + $0x208] sm:$0xff]
    %v5097 = vld [vmem:[#allocation3 + $0x210] sm:$0xff]
    %v5098 = vld [vmem:[#allocation3 + $0x218] sm:$0xff]
    %v5099 = vld [vmem:[#allocation3 + $0x220] sm:$0xff]
    %v5100 = vld [vmem:[#allocation3 + $0x228] sm:$0xff]
    %v5101 = vld [vmem:[#allocation3 + $0x230] sm:$0xff]
    %v5102 = vld [vmem:[#allocation3 + $0x238] sm:$0xff]
    %v5103 = vld [vmem:[#allocation3 + $0x240] sm:$0xff]
    %v5104 = vld [vmem:[#allocation3 + $0x248] sm:$0xff]
    %v5105 = vld [vmem:[#allocation3 + $0x250] sm:$0xff]
    %v5106 = vld [vmem:[#allocation3 + $0x258] sm:$0xff]
    %v5107 = vld [vmem:[#allocation3 + $0x260] sm:$0xff]
    %v5108 = vld [vmem:[#allocation3 + $0x149] sm:$0xff]
    %v5109 = vld [vmem:[#allocation3 + $0x151] sm:$0xff]
    %v5110 = vld [vmem:[#allocation3 + $0x159] sm:$0xff]
    %v5111 = vld [vmem:[#allocation3 + $0x161] sm:$0xff]
    %v5112 = vld [vmem:[#allocation3 + $0x169] sm:$0xff]
    %v5113 = vld [vmem:[#allocation3 + $0x171] sm:$0xff]
    %v5114 = vld [vmem:[#allocation3 + $0x179] sm:$0xff]
    %v5115 = vld [vmem:[#allocation3 + $0x181] sm:$0xff]
    %v5116 = vld [vmem:[#allocation3 + $0x189] sm:$0xff]
    %v5117 = vld [vmem:[#allocation3 + $0x191] sm:$0xff]
    %v5118 = vld [vmem:[#allocation3 + $0x199] sm:$0xff]
    %v5119 = vld [vmem:[#allocation3 + $0x1a1] sm:$0xff]
    %v5120 = vld [vmem:[#allocation3 + $0x1a9] sm:$0xff]
    %v5121 = vld [vmem:[#allocation3 + $0x1b1] sm:$0xff]
    %v5122 = vld [vmem:[#allocation3 + $0x1b9] sm:$0xff]
    %v5123 = vld [vmem:[#allocation3 + $0x1c1] sm:$0xff]
    %v5124 = vld [vmem:[#allocation3 + $0x1c9] sm:$0xff]
    %v5125 = vld [vmem:[#allocation3 + $0x1d1] sm:$0xff]
    %v5126 = vld [vmem:[#allocation3 + $0x1d9] sm:$0xff]
    %v5127 = vld [vmem:[#allocation3 + $0x1e1] sm:$0xff]
    %v5128 = vld [vmem:[#allocation3 + $0x1e9] sm:$0xff]
    %v5129 = vld [vmem:[#allocation3 + $0x1f1] sm:$0xff]
    %v5130 = vld [vmem:[#allocation3 + $0x1f9] sm:$0xff]
    %v5131 = vld [vmem:[#allocation3 + $0x201] sm:$0xff]
    %v5132 = vld [vmem:[#allocation3 + $0x209] sm:$0xff]
    %v5133 = vld [vmem:[#allocation3 + $0x211] sm:$0xff]
    %v5134 = vld [vmem:[#allocation3 + $0x219] sm:$0xff]
    %v5135 = vld [vmem:[#allocation3 + $0x221] sm:$0xff]
    %v5136 = vld [vmem:[#allocation3 + $0x229] sm:$0xff]
    %v5137 = vld [vmem:[#allocation3 + $0x231] sm:$0xff]
    %v5138 = vld [vmem:[#allocation3 + $0x239] sm:$0xff]
    %v5139 = vld [vmem:[#allocation3 + $0x241] sm:$0xff]
    %v5140 = vld [vmem:[#allocation3 + $0x249] sm:$0xff]
    %v5141 = vld [vmem:[#allocation3 + $0x251] sm:$0xff]
    %v5142 = vld [vmem:[#allocation3 + $0x259] sm:$0xff]
    %v5143 = vld [vmem:[#allocation3 + $0x261] sm:$0xff]
    %v5144 = vld [vmem:[#allocation3 + $0x14a] sm:$0xff]
    %v5145 = vld [vmem:[#allocation3 + $0x152] sm:$0xff]
    %v5146 = vld [vmem:[#allocation3 + $0x15a] sm:$0xff]
    %v5147 = vld [vmem:[#allocation3 + $0x162] sm:$0xff]
    %v5148 = vld [vmem:[#allocation3 + $0x16a] sm:$0xff]
    %v5149 = vld [vmem:[#allocation3 + $0x172] sm:$0xff]
    %v5150 = vld [vmem:[#allocation3 + $0x17a] sm:$0xff]
    %v5151 = vld [vmem:[#allocation3 + $0x182] sm:$0xff]
    %v5152 = vld [vmem:[#allocation3 + $0x18a] sm:$0xff]
    %v5153 = vld [vmem:[#allocation3 + $0x192] sm:$0xff]
    %v5154 = vld [vmem:[#allocation3 + $0x19a] sm:$0xff]
    %v5155 = vld [vmem:[#allocation3 + $0x1a2] sm:$0xff]
    %v5156 = vld [vmem:[#allocation3 + $0x1aa] sm:$0xff]
    %v5157 = vld [vmem:[#allocation3 + $0x1b2] sm:$0xff]
    %v5158 = vld [vmem:[#allocation3 + $0x1ba] sm:$0xff]
    %v5159 = vld [vmem:[#allocation3 + $0x1c2] sm:$0xff]
    %v5160 = vld [vmem:[#allocation3 + $0x1ca] sm:$0xff]
    %v5161 = vld [vmem:[#allocation3 + $0x1d2] sm:$0xff]
    %v5162 = vld [vmem:[#allocation3 + $0x1da] sm:$0xff]
    %v5163 = vld [vmem:[#allocation3 + $0x1e2] sm:$0xff]
    %v5164 = vld [vmem:[#allocation3 + $0x1ea] sm:$0xff]
    %v5165 = vld [vmem:[#allocation3 + $0x1f2] sm:$0xff]
    %v5166 = vld [vmem:[#allocation3 + $0x1fa] sm:$0xff]
    %v5167 = vld [vmem:[#allocation3 + $0x202] sm:$0xff]
    %v5168 = vld [vmem:[#allocation3 + $0x20a] sm:$0xff]
    %v5169 = vld [vmem:[#allocation3 + $0x212] sm:$0xff]
    %v5170 = vld [vmem:[#allocation3 + $0x21a] sm:$0xff]
    %v5171 = vld [vmem:[#allocation3 + $0x222] sm:$0xff]
    %v5172 = vld [vmem:[#allocation3 + $0x22a] sm:$0xff]
    %v5173 = vld [vmem:[#allocation3 + $0x232] sm:$0xff]
    %v5174 = vld [vmem:[#allocation3 + $0x23a] sm:$0xff]
    %v5175 = vld [vmem:[#allocation3 + $0x242] sm:$0xff]
    %v5176 = vld [vmem:[#allocation3 + $0x24a] sm:$0xff]
    %v5177 = vld [vmem:[#allocation3 + $0x252] sm:$0xff]
    %v5178 = vld [vmem:[#allocation3 + $0x25a] sm:$0xff]
    %v5179 = vld [vmem:[#allocation3 + $0x262] sm:$0xff]
    %v5180 = vld [vmem:[#allocation3 + $0x26a] sm:$0xff]
    %v5181 = vld [vmem:[#allocation3 + $0x272] sm:$0xff]
    %v5182 = vld [vmem:[#allocation3 + $0x15b] sm:$0xff]
    %v5183 = vld [vmem:[#allocation3 + $0x163] sm:$0xff]
    %v5184 = vld [vmem:[#allocation3 + $0x16b] sm:$0xff]
    %v5185 = vld [vmem:[#allocation3 + $0x173] sm:$0xff]
    %v5186 = vld [vmem:[#allocation3 + $0x17b] sm:$0xff]
    %v5187 = vld [vmem:[#allocation3 + $0x183] sm:$0xff]
    %v5188 = vld [vmem:[#allocation3 + $0x18b] sm:$0xff]
    %v5189 = vld [vmem:[#allocation3 + $0x193] sm:$0xff]
    %v5190 = vld [vmem:[#allocation3 + $0x19b] sm:$0xff]
    %v5191 = vld [vmem:[#allocation3 + $0x1a3] sm:$0xff]
    %v5192 = vld [vmem:[#allocation3 + $0x1ab] sm:$0xff]
    %v5193 = vld [vmem:[#allocation3 + $0x1b3] sm:$0xff]
    %v5194 = vld [vmem:[#allocation3 + $0x1bb] sm:$0xff]
    %v5195 = vld [vmem:[#allocation3 + $0x1c3] sm:$0xff]
    %v5196 = vld [vmem:[#allocation3 + $0x1cb] sm:$0xff]
    %v5197 = vld [vmem:[#allocation3 + $0x1d3] sm:$0xff]
    %v5198 = vld [vmem:[#allocation3 + $0x1db] sm:$0xff]
    %v5199 = vld [vmem:[#allocation3 + $0x1e3] sm:$0xff]
    %v5200 = vld [vmem:[#allocation3 + $0x1eb] sm:$0xff]
    %v5201 = vld [vmem:[#allocation3 + $0x1f3] sm:$0xff]
    %v5202 = vld [vmem:[#allocation3 + $0x1fb] sm:$0xff]
    %v5203 = vld [vmem:[#allocation3 + $0x203] sm:$0xff]
    %v5204 = vld [vmem:[#allocation3 + $0x20b] sm:$0xff]
    %v5205 = vld [vmem:[#allocation3 + $0x213] sm:$0xff]
    %v5206 = vld [vmem:[#allocation3 + $0x21b] sm:$0xff]
    %v5207 = vld [vmem:[#allocation3 + $0x223] sm:$0xff]
    %v5208 = vld [vmem:[#allocation3 + $0x22b] sm:$0xff]
    %v5209 = vld [vmem:[#allocation3 + $0x233] sm:$0xff]
    %v5210 = vld [vmem:[#allocation3 + $0x23b] sm:$0xff]
    %v5211 = vld [vmem:[#allocation3 + $0x243] sm:$0xff]
    %v5212 = vld [vmem:[#allocation3 + $0x24b] sm:$0xff]
    %v5213 = vld [vmem:[#allocation3 + $0x253] sm:$0xff]
    %v5214 = vld [vmem:[#allocation3 + $0x25b] sm:$0xff]
    %v5215 = vld [vmem:[#allocation3 + $0x263] sm:$0xff]
    %v5216 = vld [vmem:[#allocation3 + $0x26b] sm:$0xff]
    %v5217 = vld [vmem:[#allocation3 + $0x273] sm:$0xff]
    %v5218 = vld [vmem:[#allocation3 + $0x15c] sm:$0xff]
    %v5219 = vld [vmem:[#allocation3 + $0x164] sm:$0xff]
    %v5220 = vld [vmem:[#allocation3 + $0x16c] sm:$0xff]
    %v5221 = vld [vmem:[#allocation3 + $0x174] sm:$0xff]
    %v5222 = vld [vmem:[#allocation3 + $0x17c] sm:$0xff]
    %v5223 = vld [vmem:[#allocation3 + $0x184] sm:$0xff]
    %v5224 = vld [vmem:[#allocation3 + $0x18c] sm:$0xff]
    %v5225 = vld [vmem:[#allocation3 + $0x194] sm:$0xff]
    %v5226 = vld [vmem:[#allocation3 + $0x19c] sm:$0xff]
    %v5227 = vld [vmem:[#allocation3 + $0x1a4] sm:$0xff]
    %v5228 = vld [vmem:[#allocation3 + $0x1ac] sm:$0xff]
    %v5229 = vld [vmem:[#allocation3 + $0x1b4] sm:$0xff]
    %v5230 = vld [vmem:[#allocation3 + $0x1bc] sm:$0xff]
    %v5231 = vld [vmem:[#allocation3 + $0x1c4] sm:$0xff]
    %v5232 = vld [vmem:[#allocation3 + $0x1cc] sm:$0xff]
    %v5233 = vld [vmem:[#allocation3 + $0x1d4] sm:$0xff]
    %v5234 = vld [vmem:[#allocation3 + $0x1dc] sm:$0xff]
    %v5235 = vld [vmem:[#allocation3 + $0x1e4] sm:$0xff]
    %v5236 = vld [vmem:[#allocation3 + $0x1ec] sm:$0xff]
    %v5237 = vld [vmem:[#allocation3 + $0x1f4] sm:$0xff]
    %v5238 = vld [vmem:[#allocation3 + $0x1fc] sm:$0xff]
    %v5239 = vld [vmem:[#allocation3 + $0x204] sm:$0xff]
    %v5240 = vld [vmem:[#allocation3 + $0x20c] sm:$0xff]
    %v5241 = vld [vmem:[#allocation3 + $0x214] sm:$0xff]
    %v5242 = vld [vmem:[#allocation3 + $0x21c] sm:$0xff]
    %v5243 = vld [vmem:[#allocation3 + $0x224] sm:$0xff]
    %v5244 = vld [vmem:[#allocation3 + $0x22c] sm:$0xff]
    %v5245 = vld [vmem:[#allocation3 + $0x234] sm:$0xff]
    %v5246 = vld [vmem:[#allocation3 + $0x23c] sm:$0xff]
    %v5247 = vld [vmem:[#allocation3 + $0x244] sm:$0xff]
    %v5248 = vld [vmem:[#allocation3 + $0x24c] sm:$0xff]
    %v5249 = vld [vmem:[#allocation3 + $0x254] sm:$0xff]
    %v5250 = vld [vmem:[#allocation3 + $0x25c] sm:$0xff]
    %v5251 = vld [vmem:[#allocation3 + $0x264] sm:$0xff]
    %v5252 = vld [vmem:[#allocation3 + $0x26c] sm:$0xff]
    %v5253 = vld [vmem:[#allocation3 + $0x274] sm:$0xff]
    %v5254 = vld [vmem:[#allocation3 + $0x27c] sm:$0xff]
    %v5255 = vld [vmem:[#allocation3 + $0x284] sm:$0xff]
    %v5256 = vld [vmem:[#allocation3 + $0x16d] sm:$0xff]
    %v5257 = vld [vmem:[#allocation3 + $0x175] sm:$0xff]
    %v5258 = vld [vmem:[#allocation3 + $0x17d] sm:$0xff]
    %v5259 = vld [vmem:[#allocation3 + $0x185] sm:$0xff]
    %v5260 = vld [vmem:[#allocation3 + $0x18d] sm:$0xff]
    %v5261 = vld [vmem:[#allocation3 + $0x195] sm:$0xff]
    %v5262 = vld [vmem:[#allocation3 + $0x19d] sm:$0xff]
    %v5263 = vld [vmem:[#allocation3 + $0x1a5] sm:$0xff]
    %v5264 = vld [vmem:[#allocation3 + $0x1ad] sm:$0xff]
    %v5265 = vld [vmem:[#allocation3 + $0x1b5] sm:$0xff]
    %v5266 = vld [vmem:[#allocation3 + $0x1bd] sm:$0xff]
    %v5267 = vld [vmem:[#allocation3 + $0x1c5] sm:$0xff]
    %v5268 = vld [vmem:[#allocation3 + $0x1cd] sm:$0xff]
    %v5269 = vld [vmem:[#allocation3 + $0x1d5] sm:$0xff]
    %v5270 = vld [vmem:[#allocation3 + $0x1dd] sm:$0xff]
    %v5271 = vld [vmem:[#allocation3 + $0x1e5] sm:$0xff]
    %v5272 = vld [vmem:[#allocation3 + $0x1ed] sm:$0xff]
    %v5273 = vld [vmem:[#allocation3 + $0x1f5] sm:$0xff]
    %v5274 = vld [vmem:[#allocation3 + $0x1fd] sm:$0xff]
    %v5275 = vld [vmem:[#allocation3 + $0x205] sm:$0xff]
    %v5276 = vld [vmem:[#allocation3 + $0x20d] sm:$0xff]
    %v5277 = vld [vmem:[#allocation3 + $0x215] sm:$0xff]
    %v5278 = vld [vmem:[#allocation3 + $0x21d] sm:$0xff]
    %v5279 = vld [vmem:[#allocation3 + $0x225] sm:$0xff]
    %v5280 = vld [vmem:[#allocation3 + $0x22d] sm:$0xff]
    %v5281 = vld [vmem:[#allocation3 + $0x235] sm:$0xff]
    %v5282 = vld [vmem:[#allocation3 + $0x23d] sm:$0xff]
    %v5283 = vld [vmem:[#allocation3 + $0x245] sm:$0xff]
    %v5284 = vld [vmem:[#allocation3 + $0x24d] sm:$0xff]
    %v5285 = vld [vmem:[#allocation3 + $0x255] sm:$0xff]
    %v5286 = vld [vmem:[#allocation3 + $0x25d] sm:$0xff]
    %v5287 = vld [vmem:[#allocation3 + $0x265] sm:$0xff]
    %v5288 = vld [vmem:[#allocation3 + $0x26d] sm:$0xff]
    %v5289 = vld [vmem:[#allocation3 + $0x275] sm:$0xff]
    %v5290 = vld [vmem:[#allocation3 + $0x27d] sm:$0xff]
    %v5291 = vld [vmem:[#allocation3 + $0x285] sm:$0xff]
    %v5292 = vld [vmem:[#allocation3 + $0x16e] sm:$0xff]
    %v5293 = vld [vmem:[#allocation3 + $0x176] sm:$0xff]
    %v5294 = vld [vmem:[#allocation3 + $0x17e] sm:$0xff]
    %v5295 = vld [vmem:[#allocation3 + $0x186] sm:$0xff]
    %v5296 = vld [vmem:[#allocation3 + $0x18e] sm:$0xff]
    %v5297 = vld [vmem:[#allocation3 + $0x196] sm:$0xff]
    %v5298 = vld [vmem:[#allocation3 + $0x19e] sm:$0xff]
    %v5299 = vld [vmem:[#allocation3 + $0x1a6] sm:$0xff]
    %v5300 = vld [vmem:[#allocation3 + $0x1ae] sm:$0xff]
    %v5301 = vld [vmem:[#allocation3 + $0x1b6] sm:$0xff]
    %v5302 = vld [vmem:[#allocation3 + $0x1be] sm:$0xff]
    %v5303 = vld [vmem:[#allocation3 + $0x1c6] sm:$0xff]
    %v5304 = vld [vmem:[#allocation3 + $0x1ce] sm:$0xff]
    %v5305 = vld [vmem:[#allocation3 + $0x1d6] sm:$0xff]
    %v5306 = vld [vmem:[#allocation3 + $0x1de] sm:$0xff]
    %v5307 = vld [vmem:[#allocation3 + $0x1e6] sm:$0xff]
    %v5308 = vld [vmem:[#allocation3 + $0x1ee] sm:$0xff]
    %v5309 = vld [vmem:[#allocation3 + $0x1f6] sm:$0xff]
    %v5310 = vld [vmem:[#allocation3 + $0x1fe] sm:$0xff]
    %v5311 = vld [vmem:[#allocation3 + $0x206] sm:$0xff]
    %v5312 = vld [vmem:[#allocation3 + $0x20e] sm:$0xff]
    %v5313 = vld [vmem:[#allocation3 + $0x216] sm:$0xff]
    %v5314 = vld [vmem:[#allocation3 + $0x21e] sm:$0xff]
    %v5315 = vld [vmem:[#allocation3 + $0x226] sm:$0xff]
    %v5316 = vld [vmem:[#allocation3 + $0x22e] sm:$0xff]
    %v5317 = vld [vmem:[#allocation3 + $0x236] sm:$0xff]
    %v5318 = vld [vmem:[#allocation3 + $0x23e] sm:$0xff]
    %v5319 = vld [vmem:[#allocation3 + $0x246] sm:$0xff]
    %v5320 = vld [vmem:[#allocation3 + $0x24e] sm:$0xff]
    %v5321 = vld [vmem:[#allocation3 + $0x256] sm:$0xff]
    %v5322 = vld [vmem:[#allocation3 + $0x25e] sm:$0xff]
    %v5323 = vld [vmem:[#allocation3 + $0x266] sm:$0xff]
    %v5324 = vld [vmem:[#allocation3 + $0x26e] sm:$0xff]
    %v5325 = vld [vmem:[#allocation3 + $0x276] sm:$0xff]
    %v5326 = vld [vmem:[#allocation3 + $0x27e] sm:$0xff]
    %v5327 = vld [vmem:[#allocation3 + $0x286] sm:$0xff]
    %5364 = vrot.lane.b32.xlu0 %v5108, 16
    %v5365 = vpop.permute.xlu0 %5364
    %5366 = vrot.lane.b32.xlu0 %v5109, 16
    %v5367 = vpop.permute.xlu0 %5366
    %5368 = vrot.lane.b32.xlu0 %v5110, 16
    %v5369 = vpop.permute.xlu0 %5368
    %5370 = vrot.lane.b32.xlu0 %v5111, 16
    %v5371 = vpop.permute.xlu0 %5370
    %5372 = vrot.lane.b32.xlu0 %v5112, 16
    %v5373 = vpop.permute.xlu0 %5372
    %5374 = vrot.lane.b32.xlu0 %v5113, 16
    %v5375 = vpop.permute.xlu0 %5374
    %5376 = vrot.lane.b32.xlu0 %v5114, 16
    %v5377 = vpop.permute.xlu0 %5376
    %5378 = vrot.lane.b32.xlu0 %v5115, 16
    %v5379 = vpop.permute.xlu0 %5378
    %5380 = vrot.lane.b32.xlu0 %v5116, 16
    %v5381 = vpop.permute.xlu0 %5380
    %5382 = vrot.lane.b32.xlu0 %v5117, 16
    %v5383 = vpop.permute.xlu0 %5382
    %5384 = vrot.lane.b32.xlu0 %v5118, 16
    %v5385 = vpop.permute.xlu0 %5384
    %5386 = vrot.lane.b32.xlu0 %v5119, 16
    %v5387 = vpop.permute.xlu0 %5386
    %5388 = vrot.lane.b32.xlu0 %v5120, 16
    %v5389 = vpop.permute.xlu0 %5388
    %5390 = vrot.lane.b32.xlu0 %v5121, 16
    %v5391 = vpop.permute.xlu0 %5390
    %5392 = vrot.lane.b32.xlu0 %v5122, 16
    %v5393 = vpop.permute.xlu0 %5392
    %5394 = vrot.lane.b32.xlu0 %v5123, 16
    %v5395 = vpop.permute.xlu0 %5394
    %5396 = vrot.lane.b32.xlu0 %v5124, 16
    %v5397 = vpop.permute.xlu0 %5396
    %5398 = vrot.lane.b32.xlu0 %v5125, 16
    %v5399 = vpop.permute.xlu0 %5398
    %5400 = vrot.lane.b32.xlu0 %v5126, 16
    %v5401 = vpop.permute.xlu0 %5400
    %5402 = vrot.lane.b32.xlu0 %v5127, 16
    %v5403 = vpop.permute.xlu0 %5402
    %5404 = vrot.lane.b32.xlu0 %v5128, 16
    %v5405 = vpop.permute.xlu0 %5404
    %5406 = vrot.lane.b32.xlu0 %v5129, 16
    %v5407 = vpop.permute.xlu0 %5406
    %5408 = vrot.lane.b32.xlu0 %v5130, 16
    %v5409 = vpop.permute.xlu0 %5408
    %5410 = vrot.lane.b32.xlu0 %v5131, 16
    %v5411 = vpop.permute.xlu0 %5410
    %5412 = vrot.lane.b32.xlu0 %v5132, 16
    %v5413 = vpop.permute.xlu0 %5412
    %5414 = vrot.lane.b32.xlu0 %v5133, 16
    %v5415 = vpop.permute.xlu0 %5414
    %5416 = vrot.lane.b32.xlu0 %v5134, 16
    %v5417 = vpop.permute.xlu0 %5416
    %5418 = vrot.lane.b32.xlu0 %v5135, 16
    %v5419 = vpop.permute.xlu0 %5418
    %5420 = vrot.lane.b32.xlu0 %v5136, 16
    %v5421 = vpop.permute.xlu0 %5420
    %5422 = vrot.lane.b32.xlu0 %v5137, 16
    %v5423 = vpop.permute.xlu0 %5422
    %5424 = vrot.lane.b32.xlu0 %v5138, 16
    %v5425 = vpop.permute.xlu0 %5424
    %5426 = vrot.lane.b32.xlu0 %v5139, 16
    %v5427 = vpop.permute.xlu0 %5426
    %5428 = vrot.lane.b32.xlu0 %v5140, 16
    %v5429 = vpop.permute.xlu0 %5428
    %5430 = vrot.lane.b32.xlu0 %v5141, 16
    %v5431 = vpop.permute.xlu0 %5430
    %5432 = vrot.lane.b32.xlu0 %v5142, 16
    %v5433 = vpop.permute.xlu0 %5432
    %5434 = vrot.lane.b32.xlu0 %v5143, 16
    %v5435 = vpop.permute.xlu0 %5434
    %5508 = vrot.lane.b32.xlu0 %v5144, 32
    %v5509 = vpop.permute.xlu0 %5508
    %5510 = vrot.lane.b32.xlu0 %v5145, 32
    %v5511 = vpop.permute.xlu0 %5510
    %5512 = vrot.lane.b32.xlu0 %v5146, 32
    %v5513 = vpop.permute.xlu0 %5512
    %5514 = vrot.lane.b32.xlu0 %v5147, 32
    %v5515 = vpop.permute.xlu0 %5514
    %5516 = vrot.lane.b32.xlu0 %v5148, 32
    %v5517 = vpop.permute.xlu0 %5516
    %5518 = vrot.lane.b32.xlu0 %v5149, 32
    %v5519 = vpop.permute.xlu0 %5518
    %5520 = vrot.lane.b32.xlu0 %v5150, 32
    %v5521 = vpop.permute.xlu0 %5520
    %5522 = vrot.lane.b32.xlu0 %v5151, 32
    %v5523 = vpop.permute.xlu0 %5522
    %5524 = vrot.lane.b32.xlu0 %v5152, 32
    %v5525 = vpop.permute.xlu0 %5524
    %5526 = vrot.lane.b32.xlu0 %v5153, 32
    %v5527 = vpop.permute.xlu0 %5526
    %5528 = vrot.lane.b32.xlu0 %v5154, 32
    %v5529 = vpop.permute.xlu0 %5528
    %5530 = vrot.lane.b32.xlu0 %v5155, 32
    %v5531 = vpop.permute.xlu0 %5530
    %5532 = vrot.lane.b32.xlu0 %v5156, 32
    %v5533 = vpop.permute.xlu0 %5532
    %5534 = vrot.lane.b32.xlu0 %v5157, 32
    %v5535 = vpop.permute.xlu0 %5534
    %5536 = vrot.lane.b32.xlu0 %v5158, 32
    %v5537 = vpop.permute.xlu0 %5536
    %5538 = vrot.lane.b32.xlu0 %v5159, 32
    %v5539 = vpop.permute.xlu0 %5538
    %5540 = vrot.lane.b32.xlu0 %v5160, 32
    %v5541 = vpop.permute.xlu0 %5540
    %5542 = vrot.lane.b32.xlu0 %v5161, 32
    %v5543 = vpop.permute.xlu0 %5542
    %5544 = vrot.lane.b32.xlu0 %v5162, 32
    %v5545 = vpop.permute.xlu0 %5544
    %5546 = vrot.lane.b32.xlu0 %v5163, 32
    %v5547 = vpop.permute.xlu0 %5546
    %5548 = vrot.lane.b32.xlu0 %v5164, 32
    %v5549 = vpop.permute.xlu0 %5548
    %5550 = vrot.lane.b32.xlu0 %v5165, 32
    %v5551 = vpop.permute.xlu0 %5550
    %5552 = vrot.lane.b32.xlu0 %v5166, 32
    %v5553 = vpop.permute.xlu0 %5552
    %5554 = vrot.lane.b32.xlu0 %v5167, 32
    %v5555 = vpop.permute.xlu0 %5554
    %5556 = vrot.lane.b32.xlu0 %v5168, 32
    %v5557 = vpop.permute.xlu0 %5556
    %5558 = vrot.lane.b32.xlu0 %v5169, 32
    %v5559 = vpop.permute.xlu0 %5558
    %5560 = vrot.lane.b32.xlu0 %v5170, 32
    %v5561 = vpop.permute.xlu0 %5560
    %5562 = vrot.lane.b32.xlu0 %v5171, 32
    %v5563 = vpop.permute.xlu0 %5562
    %5564 = vrot.lane.b32.xlu0 %v5172, 32
    %v5565 = vpop.permute.xlu0 %5564
    %5566 = vrot.lane.b32.xlu0 %v5173, 32
    %v5567 = vpop.permute.xlu0 %5566
    %5568 = vrot.lane.b32.xlu0 %v5174, 32
    %v5569 = vpop.permute.xlu0 %5568
    %5570 = vrot.lane.b32.xlu0 %v5175, 32
    %v5571 = vpop.permute.xlu0 %5570
    %5572 = vrot.lane.b32.xlu0 %v5176, 32
    %v5573 = vpop.permute.xlu0 %5572
    %5574 = vrot.lane.b32.xlu0 %v5177, 32
    %v5575 = vpop.permute.xlu0 %5574
    %5576 = vrot.lane.b32.xlu0 %v5178, 32
    %v5577 = vpop.permute.xlu0 %5576
    %5578 = vrot.lane.b32.xlu0 %v5179, 32
    %v5579 = vpop.permute.xlu0 %5578
    %5618 = vrot.lane.b32.xlu0 %v5146, 48
    %v5619 = vpop.permute.xlu0 %5618
    %5620 = vrot.lane.b32.xlu0 %v5147, 48
    %v5621 = vpop.permute.xlu0 %5620
    %5622 = vrot.lane.b32.xlu0 %v5148, 48
    %v5623 = vpop.permute.xlu0 %5622
    %5624 = vrot.lane.b32.xlu0 %v5149, 48
    %v5625 = vpop.permute.xlu0 %5624
    %5626 = vrot.lane.b32.xlu0 %v5150, 48
    %v5627 = vpop.permute.xlu0 %5626
    %5628 = vrot.lane.b32.xlu0 %v5151, 48
    %v5629 = vpop.permute.xlu0 %5628
    %5630 = vrot.lane.b32.xlu0 %v5152, 48
    %v5631 = vpop.permute.xlu0 %5630
    %5632 = vrot.lane.b32.xlu0 %v5153, 48
    %v5633 = vpop.permute.xlu0 %5632
    %5634 = vrot.lane.b32.xlu0 %v5154, 48
    %v5635 = vpop.permute.xlu0 %5634
    %5636 = vrot.lane.b32.xlu0 %v5155, 48
    %v5637 = vpop.permute.xlu0 %5636
    %5638 = vrot.lane.b32.xlu0 %v5156, 48
    %v5639 = vpop.permute.xlu0 %5638
    %5640 = vrot.lane.b32.xlu0 %v5157, 48
    %v5641 = vpop.permute.xlu0 %5640
    %5642 = vrot.lane.b32.xlu0 %v5158, 48
    %v5643 = vpop.permute.xlu0 %5642
    %5644 = vrot.lane.b32.xlu0 %v5159, 48
    %v5645 = vpop.permute.xlu0 %5644
    %5646 = vrot.lane.b32.xlu0 %v5160, 48
    %v5647 = vpop.permute.xlu0 %5646
    %5648 = vrot.lane.b32.xlu0 %v5161, 48
    %v5649 = vpop.permute.xlu0 %5648
    %5650 = vrot.lane.b32.xlu0 %v5162, 48
    %v5651 = vpop.permute.xlu0 %5650
    %5652 = vrot.lane.b32.xlu0 %v5163, 48
    %v5653 = vpop.permute.xlu0 %5652
    %5654 = vrot.lane.b32.xlu0 %v5164, 48
    %v5655 = vpop.permute.xlu0 %5654
    %5656 = vrot.lane.b32.xlu0 %v5165, 48
    %v5657 = vpop.permute.xlu0 %5656
    %5658 = vrot.lane.b32.xlu0 %v5166, 48
    %v5659 = vpop.permute.xlu0 %5658
    %5660 = vrot.lane.b32.xlu0 %v5167, 48
    %v5661 = vpop.permute.xlu0 %5660
    %5662 = vrot.lane.b32.xlu0 %v5168, 48
    %v5663 = vpop.permute.xlu0 %5662
    %5664 = vrot.lane.b32.xlu0 %v5169, 48
    %v5665 = vpop.permute.xlu0 %5664
    %5666 = vrot.lane.b32.xlu0 %v5170, 48
    %v5667 = vpop.permute.xlu0 %5666
    %5668 = vrot.lane.b32.xlu0 %v5171, 48
    %v5669 = vpop.permute.xlu0 %5668
    %5670 = vrot.lane.b32.xlu0 %v5172, 48
    %v5671 = vpop.permute.xlu0 %5670
    %5672 = vrot.lane.b32.xlu0 %v5173, 48
    %v5673 = vpop.permute.xlu0 %5672
    %5674 = vrot.lane.b32.xlu0 %v5174, 48
    %v5675 = vpop.permute.xlu0 %5674
    %5676 = vrot.lane.b32.xlu0 %v5175, 48
    %v5677 = vpop.permute.xlu0 %5676
    %5678 = vrot.lane.b32.xlu0 %v5176, 48
    %v5679 = vpop.permute.xlu0 %5678
    %5680 = vrot.lane.b32.xlu0 %v5177, 48
    %v5681 = vpop.permute.xlu0 %5680
    %5682 = vrot.lane.b32.xlu0 %v5178, 48
    %v5683 = vpop.permute.xlu0 %5682
    %5684 = vrot.lane.b32.xlu0 %v5179, 48
    %v5685 = vpop.permute.xlu0 %5684
    %5686 = vrot.lane.b32.xlu0 %v5180, 48
    %v5687 = vpop.permute.xlu0 %5686
    %5688 = vrot.lane.b32.xlu0 %v5181, 48
    %v5689 = vpop.permute.xlu0 %5688
    %5762 = vrot.lane.b32.xlu0 %v5182, 64
    %v5763 = vpop.permute.xlu0 %5762
    %5764 = vrot.lane.b32.xlu0 %v5183, 64
    %v5765 = vpop.permute.xlu0 %5764
    %5766 = vrot.lane.b32.xlu0 %v5184, 64
    %v5767 = vpop.permute.xlu0 %5766
    %5768 = vrot.lane.b32.xlu0 %v5185, 64
    %v5769 = vpop.permute.xlu0 %5768
    %5770 = vrot.lane.b32.xlu0 %v5186, 64
    %v5771 = vpop.permute.xlu0 %5770
    %5772 = vrot.lane.b32.xlu0 %v5187, 64
    %v5773 = vpop.permute.xlu0 %5772
    %5774 = vrot.lane.b32.xlu0 %v5188, 64
    %v5775 = vpop.permute.xlu0 %5774
    %5776 = vrot.lane.b32.xlu0 %v5189, 64
    %v5777 = vpop.permute.xlu0 %5776
    %5778 = vrot.lane.b32.xlu0 %v5190, 64
    %v5779 = vpop.permute.xlu0 %5778
    %5780 = vrot.lane.b32.xlu0 %v5191, 64
    %v5781 = vpop.permute.xlu0 %5780
    %5782 = vrot.lane.b32.xlu0 %v5192, 64
    %v5783 = vpop.permute.xlu0 %5782
    %5784 = vrot.lane.b32.xlu0 %v5193, 64
    %v5785 = vpop.permute.xlu0 %5784
    %5786 = vrot.lane.b32.xlu0 %v5194, 64
    %v5787 = vpop.permute.xlu0 %5786
    %5788 = vrot.lane.b32.xlu0 %v5195, 64
    %v5789 = vpop.permute.xlu0 %5788
    %5790 = vrot.lane.b32.xlu0 %v5196, 64
    %v5791 = vpop.permute.xlu0 %5790
    %5792 = vrot.lane.b32.xlu0 %v5197, 64
    %v5793 = vpop.permute.xlu0 %5792
    %5794 = vrot.lane.b32.xlu0 %v5198, 64
    %v5795 = vpop.permute.xlu0 %5794
    %5796 = vrot.lane.b32.xlu0 %v5199, 64
    %v5797 = vpop.permute.xlu0 %5796
    %5798 = vrot.lane.b32.xlu0 %v5200, 64
    %v5799 = vpop.permute.xlu0 %5798
    %5800 = vrot.lane.b32.xlu0 %v5201, 64
    %v5801 = vpop.permute.xlu0 %5800
    %5802 = vrot.lane.b32.xlu0 %v5202, 64
    %v5803 = vpop.permute.xlu0 %5802
    %5804 = vrot.lane.b32.xlu0 %v5203, 64
    %v5805 = vpop.permute.xlu0 %5804
    %5806 = vrot.lane.b32.xlu0 %v5204, 64
    %v5807 = vpop.permute.xlu0 %5806
    %5808 = vrot.lane.b32.xlu0 %v5205, 64
    %v5809 = vpop.permute.xlu0 %5808
    %5810 = vrot.lane.b32.xlu0 %v5206, 64
    %v5811 = vpop.permute.xlu0 %5810
    %5812 = vrot.lane.b32.xlu0 %v5207, 64
    %v5813 = vpop.permute.xlu0 %5812
    %5814 = vrot.lane.b32.xlu0 %v5208, 64
    %v5815 = vpop.permute.xlu0 %5814
    %5816 = vrot.lane.b32.xlu0 %v5209, 64
    %v5817 = vpop.permute.xlu0 %5816
    %5818 = vrot.lane.b32.xlu0 %v5210, 64
    %v5819 = vpop.permute.xlu0 %5818
    %5820 = vrot.lane.b32.xlu0 %v5211, 64
    %v5821 = vpop.permute.xlu0 %5820
    %5822 = vrot.lane.b32.xlu0 %v5212, 64
    %v5823 = vpop.permute.xlu0 %5822
    %5824 = vrot.lane.b32.xlu0 %v5213, 64
    %v5825 = vpop.permute.xlu0 %5824
    %5826 = vrot.lane.b32.xlu0 %v5214, 64
    %v5827 = vpop.permute.xlu0 %5826
    %5828 = vrot.lane.b32.xlu0 %v5215, 64
    %v5829 = vpop.permute.xlu0 %5828
    %5830 = vrot.lane.b32.xlu0 %v5216, 64
    %v5831 = vpop.permute.xlu0 %5830
    %5832 = vrot.lane.b32.xlu0 %v5217, 64
    %v5833 = vpop.permute.xlu0 %5832
    %5906 = vrot.lane.b32.xlu0 %v5218, 80
    %v5907 = vpop.permute.xlu0 %5906
    %5908 = vrot.lane.b32.xlu0 %v5219, 80
    %v5909 = vpop.permute.xlu0 %5908
    %5910 = vrot.lane.b32.xlu0 %v5220, 80
    %v5911 = vpop.permute.xlu0 %5910
    %5912 = vrot.lane.b32.xlu0 %v5221, 80
    %v5913 = vpop.permute.xlu0 %5912
    %5914 = vrot.lane.b32.xlu0 %v5222, 80
    %v5915 = vpop.permute.xlu0 %5914
    %5916 = vrot.lane.b32.xlu0 %v5223, 80
    %v5917 = vpop.permute.xlu0 %5916
    %5918 = vrot.lane.b32.xlu0 %v5224, 80
    %v5919 = vpop.permute.xlu0 %5918
    %5920 = vrot.lane.b32.xlu0 %v5225, 80
    %v5921 = vpop.permute.xlu0 %5920
    %5922 = vrot.lane.b32.xlu0 %v5226, 80
    %v5923 = vpop.permute.xlu0 %5922
    %5924 = vrot.lane.b32.xlu0 %v5227, 80
    %v5925 = vpop.permute.xlu0 %5924
    %5926 = vrot.lane.b32.xlu0 %v5228, 80
    %v5927 = vpop.permute.xlu0 %5926
    %5928 = vrot.lane.b32.xlu0 %v5229, 80
    %v5929 = vpop.permute.xlu0 %5928
    %5930 = vrot.lane.b32.xlu0 %v5230, 80
    %v5931 = vpop.permute.xlu0 %5930
    %5932 = vrot.lane.b32.xlu0 %v5231, 80
    %v5933 = vpop.permute.xlu0 %5932
    %5934 = vrot.lane.b32.xlu0 %v5232, 80
    %v5935 = vpop.permute.xlu0 %5934
    %5936 = vrot.lane.b32.xlu0 %v5233, 80
    %v5937 = vpop.permute.xlu0 %5936
    %5938 = vrot.lane.b32.xlu0 %v5234, 80
    %v5939 = vpop.permute.xlu0 %5938
    %5940 = vrot.lane.b32.xlu0 %v5235, 80
    %v5941 = vpop.permute.xlu0 %5940
    %5942 = vrot.lane.b32.xlu0 %v5236, 80
    %v5943 = vpop.permute.xlu0 %5942
    %5944 = vrot.lane.b32.xlu0 %v5237, 80
    %v5945 = vpop.permute.xlu0 %5944
    %5946 = vrot.lane.b32.xlu0 %v5238, 80
    %v5947 = vpop.permute.xlu0 %5946
    %5948 = vrot.lane.b32.xlu0 %v5239, 80
    %v5949 = vpop.permute.xlu0 %5948
    %5950 = vrot.lane.b32.xlu0 %v5240, 80
    %v5951 = vpop.permute.xlu0 %5950
    %5952 = vrot.lane.b32.xlu0 %v5241, 80
    %v5953 = vpop.permute.xlu0 %5952
    %5954 = vrot.lane.b32.xlu0 %v5242, 80
    %v5955 = vpop.permute.xlu0 %5954
    %5956 = vrot.lane.b32.xlu0 %v5243, 80
    %v5957 = vpop.permute.xlu0 %5956
    %5958 = vrot.lane.b32.xlu0 %v5244, 80
    %v5959 = vpop.permute.xlu0 %5958
    %5960 = vrot.lane.b32.xlu0 %v5245, 80
    %v5961 = vpop.permute.xlu0 %5960
    %5962 = vrot.lane.b32.xlu0 %v5246, 80
    %v5963 = vpop.permute.xlu0 %5962
    %5964 = vrot.lane.b32.xlu0 %v5247, 80
    %v5965 = vpop.permute.xlu0 %5964
    %5966 = vrot.lane.b32.xlu0 %v5248, 80
    %v5967 = vpop.permute.xlu0 %5966
    %5968 = vrot.lane.b32.xlu0 %v5249, 80
    %v5969 = vpop.permute.xlu0 %5968
    %5970 = vrot.lane.b32.xlu0 %v5250, 80
    %v5971 = vpop.permute.xlu0 %5970
    %5972 = vrot.lane.b32.xlu0 %v5251, 80
    %v5973 = vpop.permute.xlu0 %5972
    %5974 = vrot.lane.b32.xlu0 %v5252, 80
    %v5975 = vpop.permute.xlu0 %5974
    %5976 = vrot.lane.b32.xlu0 %v5253, 80
    %v5977 = vpop.permute.xlu0 %5976
    %6016 = vrot.lane.b32.xlu0 %v5220, 96
    %v6017 = vpop.permute.xlu0 %6016
    %6018 = vrot.lane.b32.xlu0 %v5221, 96
    %v6019 = vpop.permute.xlu0 %6018
    %6020 = vrot.lane.b32.xlu0 %v5222, 96
    %v6021 = vpop.permute.xlu0 %6020
    %6022 = vrot.lane.b32.xlu0 %v5223, 96
    %v6023 = vpop.permute.xlu0 %6022
    %6024 = vrot.lane.b32.xlu0 %v5224, 96
    %v6025 = vpop.permute.xlu0 %6024
    %6026 = vrot.lane.b32.xlu0 %v5225, 96
    %v6027 = vpop.permute.xlu0 %6026
    %6028 = vrot.lane.b32.xlu0 %v5226, 96
    %v6029 = vpop.permute.xlu0 %6028
    %6030 = vrot.lane.b32.xlu0 %v5227, 96
    %v6031 = vpop.permute.xlu0 %6030
    %6032 = vrot.lane.b32.xlu0 %v5228, 96
    %v6033 = vpop.permute.xlu0 %6032
    %6034 = vrot.lane.b32.xlu0 %v5229, 96
    %v6035 = vpop.permute.xlu0 %6034
    %6036 = vrot.lane.b32.xlu0 %v5230, 96
    %v6037 = vpop.permute.xlu0 %6036
    %6038 = vrot.lane.b32.xlu0 %v5231, 96
    %v6039 = vpop.permute.xlu0 %6038
    %6040 = vrot.lane.b32.xlu0 %v5232, 96
    %v6041 = vpop.permute.xlu0 %6040
    %6042 = vrot.lane.b32.xlu0 %v5233, 96
    %v6043 = vpop.permute.xlu0 %6042
    %6044 = vrot.lane.b32.xlu0 %v5234, 96
    %v6045 = vpop.permute.xlu0 %6044
    %6046 = vrot.lane.b32.xlu0 %v5235, 96
    %v6047 = vpop.permute.xlu0 %6046
    %6048 = vrot.lane.b32.xlu0 %v5236, 96
    %v6049 = vpop.permute.xlu0 %6048
    %6050 = vrot.lane.b32.xlu0 %v5237, 96
    %v6051 = vpop.permute.xlu0 %6050
    %6052 = vrot.lane.b32.xlu0 %v5238, 96
    %v6053 = vpop.permute.xlu0 %6052
    %6054 = vrot.lane.b32.xlu0 %v5239, 96
    %v6055 = vpop.permute.xlu0 %6054
    %6056 = vrot.lane.b32.xlu0 %v5240, 96
    %v6057 = vpop.permute.xlu0 %6056
    %6058 = vrot.lane.b32.xlu0 %v5241, 96
    %v6059 = vpop.permute.xlu0 %6058
    %6060 = vrot.lane.b32.xlu0 %v5242, 96
    %v6061 = vpop.permute.xlu0 %6060
    %6062 = vrot.lane.b32.xlu0 %v5243, 96
    %v6063 = vpop.permute.xlu0 %6062
    %6064 = vrot.lane.b32.xlu0 %v5244, 96
    %v6065 = vpop.permute.xlu0 %6064
    %6066 = vrot.lane.b32.xlu0 %v5245, 96
    %v6067 = vpop.permute.xlu0 %6066
    %6068 = vrot.lane.b32.xlu0 %v5246, 96
    %v6069 = vpop.permute.xlu0 %6068
    %6070 = vrot.lane.b32.xlu0 %v5247, 96
    %v6071 = vpop.permute.xlu0 %6070
    %6072 = vrot.lane.b32.xlu0 %v5248, 96
    %v6073 = vpop.permute.xlu0 %6072
    %6074 = vrot.lane.b32.xlu0 %v5249, 96
    %v6075 = vpop.permute.xlu0 %6074
    %6076 = vrot.lane.b32.xlu0 %v5250, 96
    %v6077 = vpop.permute.xlu0 %6076
    %6078 = vrot.lane.b32.xlu0 %v5251, 96
    %v6079 = vpop.permute.xlu0 %6078
    %6080 = vrot.lane.b32.xlu0 %v5252, 96
    %v6081 = vpop.permute.xlu0 %6080
    %6082 = vrot.lane.b32.xlu0 %v5253, 96
    %v6083 = vpop.permute.xlu0 %6082
    %6084 = vrot.lane.b32.xlu0 %v5254, 96
    %v6085 = vpop.permute.xlu0 %6084
    %6086 = vrot.lane.b32.xlu0 %v5255, 96
    %v6087 = vpop.permute.xlu0 %6086
    %6160 = vrot.lane.b32.xlu0 %v5256, 112
    %v6161 = vpop.permute.xlu0 %6160
    %6162 = vrot.lane.b32.xlu0 %v5257, 112
    %v6163 = vpop.permute.xlu0 %6162
    %6164 = vrot.lane.b32.xlu0 %v5258, 112
    %v6165 = vpop.permute.xlu0 %6164
    %6166 = vrot.lane.b32.xlu0 %v5259, 112
    %v6167 = vpop.permute.xlu0 %6166
    %6168 = vrot.lane.b32.xlu0 %v5260, 112
    %v6169 = vpop.permute.xlu0 %6168
    %6170 = vrot.lane.b32.xlu0 %v5261, 112
    %v6171 = vpop.permute.xlu0 %6170
    %6172 = vrot.lane.b32.xlu0 %v5262, 112
    %v6173 = vpop.permute.xlu0 %6172
    %6174 = vrot.lane.b32.xlu0 %v5263, 112
    %v6175 = vpop.permute.xlu0 %6174
    %6176 = vrot.lane.b32.xlu0 %v5264, 112
    %v6177 = vpop.permute.xlu0 %6176
    %6178 = vrot.lane.b32.xlu0 %v5265, 112
    %v6179 = vpop.permute.xlu0 %6178
    %6180 = vrot.lane.b32.xlu0 %v5266, 112
    %v6181 = vpop.permute.xlu0 %6180
    %6182 = vrot.lane.b32.xlu0 %v5267, 112
    %v6183 = vpop.permute.xlu0 %6182
    %6184 = vrot.lane.b32.xlu0 %v5268, 112
    %v6185 = vpop.permute.xlu0 %6184
    %6186 = vrot.lane.b32.xlu0 %v5269, 112
    %v6187 = vpop.permute.xlu0 %6186
    %6188 = vrot.lane.b32.xlu0 %v5270, 112
    %v6189 = vpop.permute.xlu0 %6188
    %6190 = vrot.lane.b32.xlu0 %v5271, 112
    %v6191 = vpop.permute.xlu0 %6190
    %6192 = vrot.lane.b32.xlu0 %v5272, 112
    %v6193 = vpop.permute.xlu0 %6192
    %6194 = vrot.lane.b32.xlu0 %v5273, 112
    %v6195 = vpop.permute.xlu0 %6194
    %6196 = vrot.lane.b32.xlu0 %v5274, 112
    %v6197 = vpop.permute.xlu0 %6196
    %6198 = vrot.lane.b32.xlu0 %v5275, 112
    %v6199 = vpop.permute.xlu0 %6198
    %6200 = vrot.lane.b32.xlu0 %v5276, 112
    %v6201 = vpop.permute.xlu0 %6200
    %6202 = vrot.lane.b32.xlu0 %v5277, 112
    %v6203 = vpop.permute.xlu0 %6202
    %6204 = vrot.lane.b32.xlu0 %v5278, 112
    %v6205 = vpop.permute.xlu0 %6204
    %6206 = vrot.lane.b32.xlu0 %v5279, 112
    %v6207 = vpop.permute.xlu0 %6206
    %6208 = vrot.lane.b32.xlu0 %v5280, 112
    %v6209 = vpop.permute.xlu0 %6208
    %6210 = vrot.lane.b32.xlu0 %v5281, 112
    %v6211 = vpop.permute.xlu0 %6210
    %6212 = vrot.lane.b32.xlu0 %v5282, 112
    %v6213 = vpop.permute.xlu0 %6212
    %6214 = vrot.lane.b32.xlu0 %v5283, 112
    %v6215 = vpop.permute.xlu0 %6214
    %6216 = vrot.lane.b32.xlu0 %v5284, 112
    %v6217 = vpop.permute.xlu0 %6216
    %6218 = vrot.lane.b32.xlu0 %v5285, 112
    %v6219 = vpop.permute.xlu0 %6218
    %6220 = vrot.lane.b32.xlu0 %v5286, 112
    %v6221 = vpop.permute.xlu0 %6220
    %6222 = vrot.lane.b32.xlu0 %v5287, 112
    %v6223 = vpop.permute.xlu0 %6222
    %6224 = vrot.lane.b32.xlu0 %v5288, 112
    %v6225 = vpop.permute.xlu0 %6224
    %6226 = vrot.lane.b32.xlu0 %v5289, 112
    %v6227 = vpop.permute.xlu0 %6226
    %6228 = vrot.lane.b32.xlu0 %v5290, 112
    %v6229 = vpop.permute.xlu0 %6228
    %6230 = vrot.lane.b32.xlu0 %v5291, 112
    %v6231 = vpop.permute.xlu0 %6230
    %v6268 = vsel %vm1953, %v5072, %v5365
    %v6269 = vsel %vm1953, %v5073, %v5367
    %v6270 = vsel %vm1953, %v5074, %v5369
    %v6271 = vsel %vm1953, %v5075, %v5371
    %v6272 = vsel %vm1953, %v5076, %v5373
    %v6273 = vsel %vm1953, %v5077, %v5375
    %v6274 = vsel %vm1953, %v5078, %v5377
    %v6275 = vsel %vm1953, %v5079, %v5379
    %v6276 = vsel %vm1953, %v5080, %v5381
    %v6277 = vsel %vm1953, %v5081, %v5383
    %v6278 = vsel %vm1953, %v5082, %v5385
    %v6279 = vsel %vm1953, %v5083, %v5387
    %v6280 = vsel %vm1953, %v5084, %v5389
    %v6281 = vsel %vm1953, %v5085, %v5391
    %v6282 = vsel %vm1953, %v5086, %v5393
    %v6283 = vsel %vm1953, %v5087, %v5395
    %v6284 = vsel %vm1953, %v5088, %v5397
    %v6285 = vsel %vm1953, %v5089, %v5399
    %v6286 = vsel %vm1953, %v5090, %v5401
    %v6287 = vsel %vm1953, %v5091, %v5403
    %v6288 = vsel %vm1953, %v5092, %v5405
    %v6289 = vsel %vm1953, %v5093, %v5407
    %v6290 = vsel %vm1953, %v5094, %v5409
    %v6291 = vsel %vm1953, %v5095, %v5411
    %v6292 = vsel %vm1953, %v5096, %v5413
    %v6293 = vsel %vm1953, %v5097, %v5415
    %v6294 = vsel %vm1953, %v5098, %v5417
    %v6295 = vsel %vm1953, %v5099, %v5419
    %v6296 = vsel %vm1953, %v5100, %v5421
    %v6297 = vsel %vm1953, %v5101, %v5423
    %v6298 = vsel %vm1953, %v5102, %v5425
    %v6299 = vsel %vm1953, %v5103, %v5427
    %v6300 = vsel %vm1953, %v5104, %v5429
    %v6301 = vsel %vm1953, %v5105, %v5431
    %v6302 = vsel %vm1953, %v5106, %v5433
    %v6303 = vsel %vm1953, %v5107, %v5435
    %v6304 = vsel %vm303, %v6268, %v5509
    %v6305 = vsel %vm303, %v6269, %v5511
    %v6306 = vsel %vm303, %v6270, %v5513
    %v6307 = vsel %vm303, %v6271, %v5515
    %v6308 = vsel %vm303, %v6272, %v5517
    %v6309 = vsel %vm303, %v6273, %v5519
    %v6310 = vsel %vm303, %v6274, %v5521
    %v6311 = vsel %vm303, %v6275, %v5523
    %v6312 = vsel %vm303, %v6276, %v5525
    %v6313 = vsel %vm303, %v6277, %v5527
    %v6314 = vsel %vm303, %v6278, %v5529
    %v6315 = vsel %vm303, %v6279, %v5531
    %v6316 = vsel %vm303, %v6280, %v5533
    %v6317 = vsel %vm303, %v6281, %v5535
    %v6318 = vsel %vm303, %v6282, %v5537
    %v6319 = vsel %vm303, %v6283, %v5539
    %v6320 = vsel %vm303, %v6284, %v5541
    %v6321 = vsel %vm303, %v6285, %v5543
    %v6322 = vsel %vm303, %v6286, %v5545
    %v6323 = vsel %vm303, %v6287, %v5547
    %v6324 = vsel %vm303, %v6288, %v5549
    %v6325 = vsel %vm303, %v6289, %v5551
    %v6326 = vsel %vm303, %v6290, %v5553
    %v6327 = vsel %vm303, %v6291, %v5555
    %v6328 = vsel %vm303, %v6292, %v5557
    %v6329 = vsel %vm303, %v6293, %v5559
    %v6330 = vsel %vm303, %v6294, %v5561
    %v6331 = vsel %vm303, %v6295, %v5563
    %v6332 = vsel %vm303, %v6296, %v5565
    %v6333 = vsel %vm303, %v6297, %v5567
    %v6334 = vsel %vm303, %v6298, %v5569
    %v6335 = vsel %vm303, %v6299, %v5571
    %v6336 = vsel %vm303, %v6300, %v5573
    %v6337 = vsel %vm303, %v6301, %v5575
    %v6338 = vsel %vm303, %v6302, %v5577
    %v6339 = vsel %vm303, %v6303, %v5579
    %v6340 = vsel %vm4475, %v6304, %v5619
    %v6341 = vsel %vm4475, %v6305, %v5621
    %v6342 = vsel %vm4475, %v6306, %v5623
    %v6343 = vsel %vm4475, %v6307, %v5625
    %v6344 = vsel %vm4475, %v6308, %v5627
    %v6345 = vsel %vm4475, %v6309, %v5629
    %v6346 = vsel %vm4475, %v6310, %v5631
    %v6347 = vsel %vm4475, %v6311, %v5633
    %v6348 = vsel %vm4475, %v6312, %v5635
    %v6349 = vsel %vm4475, %v6313, %v5637
    %v6350 = vsel %vm4475, %v6314, %v5639
    %v6351 = vsel %vm4475, %v6315, %v5641
    %v6352 = vsel %vm4475, %v6316, %v5643
    %v6353 = vsel %vm4475, %v6317, %v5645
    %v6354 = vsel %vm4475, %v6318, %v5647
    %v6355 = vsel %vm4475, %v6319, %v5649
    %v6356 = vsel %vm4475, %v6320, %v5651
    %v6357 = vsel %vm4475, %v6321, %v5653
    %v6358 = vsel %vm4475, %v6322, %v5655
    %v6359 = vsel %vm4475, %v6323, %v5657
    %v6360 = vsel %vm4475, %v6324, %v5659
    %v6361 = vsel %vm4475, %v6325, %v5661
    %v6362 = vsel %vm4475, %v6326, %v5663
    %v6363 = vsel %vm4475, %v6327, %v5665
    %v6364 = vsel %vm4475, %v6328, %v5667
    %v6365 = vsel %vm4475, %v6329, %v5669
    %v6366 = vsel %vm4475, %v6330, %v5671
    %v6367 = vsel %vm4475, %v6331, %v5673
    %v6368 = vsel %vm4475, %v6332, %v5675
    %v6369 = vsel %vm4475, %v6333, %v5677
    %v6370 = vsel %vm4475, %v6334, %v5679
    %v6371 = vsel %vm4475, %v6335, %v5681
    %v6372 = vsel %vm4475, %v6336, %v5683
    %v6373 = vsel %vm4475, %v6337, %v5685
    %v6374 = vsel %vm4475, %v6338, %v5687
    %v6375 = vsel %vm4475, %v6339, %v5689
    %v6376 = vsel %vm4512, %v6340, %v5763
    %v6377 = vsel %vm4512, %v6341, %v5765
    %v6378 = vsel %vm4512, %v6342, %v5767
    %v6379 = vsel %vm4512, %v6343, %v5769
    %v6380 = vsel %vm4512, %v6344, %v5771
    %v6381 = vsel %vm4512, %v6345, %v5773
    %v6382 = vsel %vm4512, %v6346, %v5775
    %v6383 = vsel %vm4512, %v6347, %v5777
    %v6384 = vsel %vm4512, %v6348, %v5779
    %v6385 = vsel %vm4512, %v6349, %v5781
    %v6386 = vsel %vm4512, %v6350, %v5783
    %v6387 = vsel %vm4512, %v6351, %v5785
    %v6388 = vsel %vm4512, %v6352, %v5787
    %v6389 = vsel %vm4512, %v6353, %v5789
    %v6390 = vsel %vm4512, %v6354, %v5791
    %v6391 = vsel %vm4512, %v6355, %v5793
    %v6392 = vsel %vm4512, %v6356, %v5795
    %v6393 = vsel %vm4512, %v6357, %v5797
    %v6394 = vsel %vm4512, %v6358, %v5799
    %v6395 = vsel %vm4512, %v6359, %v5801
    %v6396 = vsel %vm4512, %v6360, %v5803
    %v6397 = vsel %vm4512, %v6361, %v5805
    %v6398 = vsel %vm4512, %v6362, %v5807
    %v6399 = vsel %vm4512, %v6363, %v5809
    %v6400 = vsel %vm4512, %v6364, %v5811
    %v6401 = vsel %vm4512, %v6365, %v5813
    %v6402 = vsel %vm4512, %v6366, %v5815
    %v6403 = vsel %vm4512, %v6367, %v5817
    %v6404 = vsel %vm4512, %v6368, %v5819
    %v6405 = vsel %vm4512, %v6369, %v5821
    %v6406 = vsel %vm4512, %v6370, %v5823
    %v6407 = vsel %vm4512, %v6371, %v5825
    %v6408 = vsel %vm4512, %v6372, %v5827
    %v6409 = vsel %vm4512, %v6373, %v5829
    %v6410 = vsel %vm4512, %v6374, %v5831
    %v6411 = vsel %vm4512, %v6375, %v5833
    %v6412 = vsel %vm4549, %v6376, %v5907
    %v6413 = vsel %vm4549, %v6377, %v5909
    %v6414 = vsel %vm4549, %v6378, %v5911
    %v6415 = vsel %vm4549, %v6379, %v5913
    %v6416 = vsel %vm4549, %v6380, %v5915
    %v6417 = vsel %vm4549, %v6381, %v5917
    %v6418 = vsel %vm4549, %v6382, %v5919
    %v6419 = vsel %vm4549, %v6383, %v5921
    %v6420 = vsel %vm4549, %v6384, %v5923
    %v6421 = vsel %vm4549, %v6385, %v5925
    %v6422 = vsel %vm4549, %v6386, %v5927
    %v6423 = vsel %vm4549, %v6387, %v5929
    %v6424 = vsel %vm4549, %v6388, %v5931
    %v6425 = vsel %vm4549, %v6389, %v5933
    %v6426 = vsel %vm4549, %v6390, %v5935
    %v6427 = vsel %vm4549, %v6391, %v5937
    %v6428 = vsel %vm4549, %v6392, %v5939
    %v6429 = vsel %vm4549, %v6393, %v5941
    %v6430 = vsel %vm4549, %v6394, %v5943
    %v6431 = vsel %vm4549, %v6395, %v5945
    %v6432 = vsel %vm4549, %v6396, %v5947
    %v6433 = vsel %vm4549, %v6397, %v5949
    %v6434 = vsel %vm4549, %v6398, %v5951
    %v6435 = vsel %vm4549, %v6399, %v5953
    %v6436 = vsel %vm4549, %v6400, %v5955
    %v6437 = vsel %vm4549, %v6401, %v5957
    %v6438 = vsel %vm4549, %v6402, %v5959
    %v6439 = vsel %vm4549, %v6403, %v5961
    %v6440 = vsel %vm4549, %v6404, %v5963
    %v6441 = vsel %vm4549, %v6405, %v5965
    %v6442 = vsel %vm4549, %v6406, %v5967
    %v6443 = vsel %vm4549, %v6407, %v5969
    %v6444 = vsel %vm4549, %v6408, %v5971
    %v6445 = vsel %vm4549, %v6409, %v5973
    %v6446 = vsel %vm4549, %v6410, %v5975
    %v6447 = vsel %vm4549, %v6411, %v5977
    %v6448 = vsel %vm4586, %v6412, %v6017
    %v6449 = vsel %vm4586, %v6413, %v6019
    %v6450 = vsel %vm4586, %v6414, %v6021
    %v6451 = vsel %vm4586, %v6415, %v6023
    %v6452 = vsel %vm4586, %v6416, %v6025
    %v6453 = vsel %vm4586, %v6417, %v6027
    %v6454 = vsel %vm4586, %v6418, %v6029
    %v6455 = vsel %vm4586, %v6419, %v6031
    %v6456 = vsel %vm4586, %v6420, %v6033
    %v6457 = vsel %vm4586, %v6421, %v6035
    %v6458 = vsel %vm4586, %v6422, %v6037
    %v6459 = vsel %vm4586, %v6423, %v6039
    %v6460 = vsel %vm4586, %v6424, %v6041
    %v6461 = vsel %vm4586, %v6425, %v6043
    %v6462 = vsel %vm4586, %v6426, %v6045
    %v6463 = vsel %vm4586, %v6427, %v6047
    %v6464 = vsel %vm4586, %v6428, %v6049
    %v6465 = vsel %vm4586, %v6429, %v6051
    %v6466 = vsel %vm4586, %v6430, %v6053
    %v6467 = vsel %vm4586, %v6431, %v6055
    %v6468 = vsel %vm4586, %v6432, %v6057
    %v6469 = vsel %vm4586, %v6433, %v6059
    %v6470 = vsel %vm4586, %v6434, %v6061
    %v6471 = vsel %vm4586, %v6435, %v6063
    %v6472 = vsel %vm4586, %v6436, %v6065
    %v6473 = vsel %vm4586, %v6437, %v6067
    %v6474 = vsel %vm4586, %v6438, %v6069
    %v6475 = vsel %vm4586, %v6439, %v6071
    %v6476 = vsel %vm4586, %v6440, %v6073
    %v6477 = vsel %vm4586, %v6441, %v6075
    %v6478 = vsel %vm4586, %v6442, %v6077
    %v6479 = vsel %vm4586, %v6443, %v6079
    %v6480 = vsel %vm4586, %v6444, %v6081
    %v6481 = vsel %vm4586, %v6445, %v6083
    %v6482 = vsel %vm4586, %v6446, %v6085
    %v6483 = vsel %vm4586, %v6447, %v6087
    %v6484 = vsel %vm4623, %v6448, %v6161
    %v6485 = vsel %vm4623, %v6449, %v6163
    %v6486 = vsel %vm4623, %v6450, %v6165
    %v6487 = vsel %vm4623, %v6451, %v6167
    %v6488 = vsel %vm4623, %v6452, %v6169
    %v6489 = vsel %vm4623, %v6453, %v6171
    %v6490 = vsel %vm4623, %v6454, %v6173
    %v6491 = vsel %vm4623, %v6455, %v6175
    %v6492 = vsel %vm4623, %v6456, %v6177
    %v6493 = vsel %vm4623, %v6457, %v6179
    %v6494 = vsel %vm4623, %v6458, %v6181
    %v6495 = vsel %vm4623, %v6459, %v6183
    %v6496 = vsel %vm4623, %v6460, %v6185
    %v6497 = vsel %vm4623, %v6461, %v6187
    %v6498 = vsel %vm4623, %v6462, %v6189
    %v6499 = vsel %vm4623, %v6463, %v6191
    %v6500 = vsel %vm4623, %v6464, %v6193
    %v6501 = vsel %vm4623, %v6465, %v6195
    %v6502 = vsel %vm4623, %v6466, %v6197
    %v6503 = vsel %vm4623, %v6467, %v6199
    %v6504 = vsel %vm4623, %v6468, %v6201
    %v6505 = vsel %vm4623, %v6469, %v6203
    %v6506 = vsel %vm4623, %v6470, %v6205
    %v6507 = vsel %vm4623, %v6471, %v6207
    %v6508 = vsel %vm4623, %v6472, %v6209
    %v6509 = vsel %vm4623, %v6473, %v6211
    %v6510 = vsel %vm4623, %v6474, %v6213
    %v6511 = vsel %vm4623, %v6475, %v6215
    %v6512 = vsel %vm4623, %v6476, %v6217
    %v6513 = vsel %vm4623, %v6477, %v6219
    %v6514 = vsel %vm4623, %v6478, %v6221
    %v6515 = vsel %vm4623, %v6479, %v6223
    %v6516 = vsel %vm4623, %v6480, %v6225
    %v6517 = vsel %vm4623, %v6481, %v6227
    %v6518 = vsel %vm4623, %v6482, %v6229
    %v6519 = vsel %vm4623, %v6483, %v6231
    %v6520 = vld [vmem:[%s3] sm:$0xff]
    %v6521 = vld [vmem:[%s3 + $0x8] sm:$0xff]
    %v6522 = vld [vmem:[%s3 + $0x10] sm:$0xff]
    %v6523 = vld [vmem:[%s3 + $0x18] sm:$0xff]
    %v6524 = vld [vmem:[%s3 + $0x20] sm:$0xff]
    %v6525 = vld [vmem:[%s3 + $0x28] sm:$0xff]
    %v6526 = vld [vmem:[%s3 + $0x30] sm:$0xff]
    %v6527 = vld [vmem:[%s3 + $0x38] sm:$0xff]
    %v6528 = vld [vmem:[%s3 + $0x40] sm:$0xff]
    %v6529 = vld [vmem:[%s3 + $0x48] sm:$0xff]
    %v6530 = vld [vmem:[%s3 + $0x50] sm:$0xff]
    %v6531 = vld [vmem:[%s3 + $0x58] sm:$0xff]
    %v6532 = vld [vmem:[%s3 + $0x60] sm:$0xff]
    %v6533 = vld [vmem:[%s3 + $0x68] sm:$0xff]
    %v6534 = vld [vmem:[%s3 + $0x70] sm:$0xff]
    %v6535 = vld [vmem:[%s3 + $0x78] sm:$0xff]
    %v6536 = vld [vmem:[%s3 + $0x80] sm:$0xff]
    %v6537 = vld [vmem:[%s3 + $0x88] sm:$0xff]
    %v6539 = vsel %vm1953, %v5292, 0
    %v6542 = vsel %vm1953, %v5293, 0
    %v6545 = vsel %vm1953, %v5294, 0
    %v6548 = vsel %vm1953, %v5295, 0
    %v6551 = vsel %vm1953, %v5296, 0
    %v6554 = vsel %vm1953, %v5297, 0
    %v6557 = vsel %vm1953, %v5298, 0
    %v6560 = vsel %vm1953, %v5299, 0
    %v6563 = vsel %vm1953, %v5300, 0
    %v6566 = vsel %vm1953, %v5301, 0
    %v6569 = vsel %vm1953, %v5302, 0
    %v6572 = vsel %vm1953, %v5303, 0
    %v6575 = vsel %vm1953, %v5304, 0
    %v6578 = vsel %vm1953, %v5305, 0
    %v6581 = vsel %vm1953, %v5306, 0
    %v6584 = vsel %vm1953, %v5307, 0
    %v6587 = vsel %vm1953, %v5308, 0
    %v6590 = vsel %vm1953, %v5309, 0
    %v6593 = vsel %vm1953, %v5310, 0
    %v6596 = vsel %vm1953, %v5311, 0
    %v6599 = vsel %vm1953, %v5312, 0
    %v6602 = vsel %vm1953, %v5313, 0
    %v6605 = vsel %vm1953, %v5314, 0
    %v6608 = vsel %vm1953, %v5315, 0
    %v6611 = vsel %vm1953, %v5316, 0
    %v6614 = vsel %vm1953, %v5317, 0
    %v6617 = vsel %vm1953, %v5318, 0
    %v6620 = vsel %vm1953, %v5319, 0
    %v6623 = vsel %vm1953, %v5320, 0
    %v6626 = vsel %vm1953, %v5321, 0
    %v6629 = vsel %vm1953, %v5322, 0
    %v6632 = vsel %vm1953, %v5323, 0
    %v6635 = vsel %vm1953, %v5324, 0
    %v6638 = vsel %vm1953, %v5325, 0
    %v6641 = vsel %vm1953, %v5326, 0
    %v6644 = vsel %vm1953, %v5327, 0
    %6646 = vmatpush.msra.mxu0 %v6535
    %6647 = vmatpush.msra.mxu0 %v6534
    %6648 = vmatpush.msra.mxu0 %v6533
    %6649 = vmatpush.msra.mxu0 %v6532
    %6650 = vmatpush.msra.mxu0 %v6531
    %6651 = vmatpush.msra.mxu0 %v6530
    %6652 = vmatpush.msra.mxu0 %v6529
    %6653 = vmatpush.msra.mxu0 %v6528
    %6654 = vmatpush.msra.mxu0 %v6527
    %6655 = vmatpush.msra.mxu0 %v6526
    %6656 = vmatpush.msra.mxu0 %v6525
    %6657 = vmatpush.msra.mxu0 %v6524
    %6658 = vmatpush.msra.mxu0 %v6523
    %6659 = vmatpush.msra.mxu0 %v6522
    %6660 = vmatpush.msra.mxu0 %v6521
    %6661 = vmatpush.msra.mxu0 %v6520
    %6662 = vmatmul.f32.gmra.mxu0 %v6484
    %v6663 = vpop.f32.mrf.mxu0
    %v6664 = vadd.f32 0.0, %v6663
    %6665 = vmatmul.f32.gmra.mxu0 %v6485
    %v6666 = vpop.f32.mrf.mxu0
    %v6667 = vadd.f32 0.0, %v6666
    %6668 = vmatmul.f32.gmra.mxu0 %v6486
    %v6669 = vpop.f32.mrf.mxu0
    %v6670 = vadd.f32 0.0, %v6669
    %6671 = vmatmul.f32.gmra.mxu0 %v6487
    %v6672 = vpop.f32.mrf.mxu0
    %v6673 = vadd.f32 0.0, %v6672
    %6674 = vmatmul.f32.gmra.mxu0 %v6488
    %v6675 = vpop.f32.mrf.mxu0
    %v6676 = vadd.f32 0.0, %v6675
    %6677 = vmatmul.f32.gmra.mxu0 %v6489
    %v6678 = vpop.f32.mrf.mxu0
    %v6679 = vadd.f32 0.0, %v6678
    %6680 = vmatmul.f32.gmra.mxu0 %v6490
    %v6681 = vpop.f32.mrf.mxu0
    %v6682 = vadd.f32 0.0, %v6681
    %6683 = vmatmul.f32.gmra.mxu0 %v6491
    %v6684 = vpop.f32.mrf.mxu0
    %v6685 = vadd.f32 0.0, %v6684
    %6686 = vmatmul.f32.gmra.mxu0 %v6492
    %v6687 = vpop.f32.mrf.mxu0
    %v6688 = vadd.f32 0.0, %v6687
    %6689 = vmatmul.f32.gmra.mxu0 %v6493
    %v6690 = vpop.f32.mrf.mxu0
    %v6691 = vadd.f32 0.0, %v6690
    %6692 = vmatmul.f32.gmra.mxu0 %v6494
    %v6693 = vpop.f32.mrf.mxu0
    %v6694 = vadd.f32 0.0, %v6693
    %6695 = vmatmul.f32.gmra.mxu0 %v6495
    %v6696 = vpop.f32.mrf.mxu0
    %v6697 = vadd.f32 0.0, %v6696
    %6698 = vmatmul.f32.gmra.mxu0 %v6496
    %v6699 = vpop.f32.mrf.mxu0
    %v6700 = vadd.f32 0.0, %v6699
    %6701 = vmatmul.f32.gmra.mxu0 %v6497
    %v6702 = vpop.f32.mrf.mxu0
    %v6703 = vadd.f32 0.0, %v6702
    %6704 = vmatmul.f32.gmra.mxu0 %v6498
    %v6705 = vpop.f32.mrf.mxu0
    %v6706 = vadd.f32 0.0, %v6705
    %6707 = vmatmul.f32.gmra.mxu0 %v6499
    %v6708 = vpop.f32.mrf.mxu0
    %v6709 = vadd.f32 0.0, %v6708
    %6710 = vmatmul.f32.gmra.mxu0 %v6500
    %v6711 = vpop.f32.mrf.mxu0
    %v6712 = vadd.f32 0.0, %v6711
    %6713 = vmatmul.f32.gmra.mxu0 %v6501
    %v6714 = vpop.f32.mrf.mxu0
    %v6715 = vadd.f32 0.0, %v6714
    %6716 = vmatmul.f32.gmra.mxu0 %v6502
    %v6717 = vpop.f32.mrf.mxu0
    %v6718 = vadd.f32 0.0, %v6717
    %6719 = vmatmul.f32.gmra.mxu0 %v6503
    %v6720 = vpop.f32.mrf.mxu0
    %v6721 = vadd.f32 0.0, %v6720
    %6722 = vmatmul.f32.gmra.mxu0 %v6504
    %v6723 = vpop.f32.mrf.mxu0
    %v6724 = vadd.f32 0.0, %v6723
    %6725 = vmatmul.f32.gmra.mxu0 %v6505
    %v6726 = vpop.f32.mrf.mxu0
    %v6727 = vadd.f32 0.0, %v6726
    %6728 = vmatmul.f32.gmra.mxu0 %v6506
    %v6729 = vpop.f32.mrf.mxu0
    %v6730 = vadd.f32 0.0, %v6729
    %6731 = vmatmul.f32.gmra.mxu0 %v6507
    %v6732 = vpop.f32.mrf.mxu0
    %v6733 = vadd.f32 0.0, %v6732
    %6734 = vmatmul.f32.gmra.mxu0 %v6508
    %v6735 = vpop.f32.mrf.mxu0
    %v6736 = vadd.f32 0.0, %v6735
    %6737 = vmatmul.f32.gmra.mxu0 %v6509
    %v6738 = vpop.f32.mrf.mxu0
    %v6739 = vadd.f32 0.0, %v6738
    %6740 = vmatmul.f32.gmra.mxu0 %v6510
    %v6741 = vpop.f32.mrf.mxu0
    %v6742 = vadd.f32 0.0, %v6741
    %6743 = vmatmul.f32.gmra.mxu0 %v6511
    %v6744 = vpop.f32.mrf.mxu0
    %v6745 = vadd.f32 0.0, %v6744
    %6746 = vmatmul.f32.gmra.mxu0 %v6512
    %v6747 = vpop.f32.mrf.mxu0
    %v6748 = vadd.f32 0.0, %v6747
    %6749 = vmatmul.f32.gmra.mxu0 %v6513
    %v6750 = vpop.f32.mrf.mxu0
    %v6751 = vadd.f32 0.0, %v6750
    %6752 = vmatmul.f32.gmra.mxu0 %v6514
    %v6753 = vpop.f32.mrf.mxu0
    %v6754 = vadd.f32 0.0, %v6753
    %6755 = vmatmul.f32.gmra.mxu0 %v6515
    %v6756 = vpop.f32.mrf.mxu0
    %v6757 = vadd.f32 0.0, %v6756
    %6758 = vmatmul.f32.gmra.mxu0 %v6516
    %v6759 = vpop.f32.mrf.mxu0
    %v6760 = vadd.f32 0.0, %v6759
    %6761 = vmatmul.f32.gmra.mxu0 %v6517
    %v6762 = vpop.f32.mrf.mxu0
    %v6763 = vadd.f32 0.0, %v6762
    %6764 = vmatmul.f32.gmra.mxu0 %v6518
    %v6765 = vpop.f32.mrf.mxu0
    %v6766 = vadd.f32 0.0, %v6765
    %6767 = vmatmul.f32.gmra.mxu0 %v6519
    %v6768 = vpop.f32.mrf.mxu0
    %v6769 = vadd.f32 0.0, %v6768
    %6770 = vdwg.mxu0
    %6771 = vmatpush.msra.mxu0 0.0
    %6772 = vmatpush.msra.mxu0 0.0
    %6773 = vmatpush.msra.mxu0 0.0
    %6774 = vmatpush.msra.mxu0 0.0
    %6775 = vmatpush.msra.mxu0 0.0
    %6776 = vmatpush.msra.mxu0 0.0
    %6777 = vmatpush.msra.mxu0 0.0
    %6778 = vmatpush.msra.mxu0 0.0
    %6779 = vmatpush.msra.mxu0 0.0
    %6780 = vmatpush.msra.mxu0 0.0
    %6781 = vmatpush.msra.mxu0 0.0
    %6782 = vmatpush.msra.mxu0 0.0
    %6783 = vmatpush.msra.mxu0 0.0
    %6784 = vmatpush.msra.mxu0 0.0
    %6785 = vmatpush.msra.mxu0 %v6537
    %6786 = vmatpush.msra.mxu0 %v6536
    %6787 = vmatmul.f32.gmra.mxu0 %v6539
    %v6788 = vpop.f32.mrf.mxu0
    %v6789 = vadd.f32 %v6664, %v6788
    %6790 = vmatmul.f32.gmra.mxu0 %v6542
    %v6791 = vpop.f32.mrf.mxu0
    %v6792 = vadd.f32 %v6667, %v6791
    %6793 = vmatmul.f32.gmra.mxu0 %v6545
    %v6794 = vpop.f32.mrf.mxu0
    %v6795 = vadd.f32 %v6670, %v6794
    %6796 = vmatmul.f32.gmra.mxu0 %v6548
    %v6797 = vpop.f32.mrf.mxu0
    %v6798 = vadd.f32 %v6673, %v6797
    %6799 = vmatmul.f32.gmra.mxu0 %v6551
    %v6800 = vpop.f32.mrf.mxu0
    %v6801 = vadd.f32 %v6676, %v6800
    %6802 = vmatmul.f32.gmra.mxu0 %v6554
    %v6803 = vpop.f32.mrf.mxu0
    %v6804 = vadd.f32 %v6679, %v6803
    %6805 = vmatmul.f32.gmra.mxu0 %v6557
    %v6806 = vpop.f32.mrf.mxu0
    %v6807 = vadd.f32 %v6682, %v6806
    %6808 = vmatmul.f32.gmra.mxu0 %v6560
    %v6809 = vpop.f32.mrf.mxu0
    %v6810 = vadd.f32 %v6685, %v6809
    %6811 = vmatmul.f32.gmra.mxu0 %v6563
    %v6812 = vpop.f32.mrf.mxu0
    %v6813 = vadd.f32 %v6688, %v6812
    %6814 = vmatmul.f32.gmra.mxu0 %v6566
    %v6815 = vpop.f32.mrf.mxu0
    %v6816 = vadd.f32 %v6691, %v6815
    %6817 = vmatmul.f32.gmra.mxu0 %v6569
    %v6818 = vpop.f32.mrf.mxu0
    %v6819 = vadd.f32 %v6694, %v6818
    %6820 = vmatmul.f32.gmra.mxu0 %v6572
    %v6821 = vpop.f32.mrf.mxu0
    %v6822 = vadd.f32 %v6697, %v6821
    %6823 = vmatmul.f32.gmra.mxu0 %v6575
    %v6824 = vpop.f32.mrf.mxu0
    %v6825 = vadd.f32 %v6700, %v6824
    %6826 = vmatmul.f32.gmra.mxu0 %v6578
    %v6827 = vpop.f32.mrf.mxu0
    %v6828 = vadd.f32 %v6703, %v6827
    %6829 = vmatmul.f32.gmra.mxu0 %v6581
    %v6830 = vpop.f32.mrf.mxu0
    %v6831 = vadd.f32 %v6706, %v6830
    %6832 = vmatmul.f32.gmra.mxu0 %v6584
    %v6833 = vpop.f32.mrf.mxu0
    %v6834 = vadd.f32 %v6709, %v6833
    %6835 = vmatmul.f32.gmra.mxu0 %v6587
    %v6836 = vpop.f32.mrf.mxu0
    %v6837 = vadd.f32 %v6712, %v6836
    %6838 = vmatmul.f32.gmra.mxu0 %v6590
    %v6839 = vpop.f32.mrf.mxu0
    %v6840 = vadd.f32 %v6715, %v6839
    %6841 = vmatmul.f32.gmra.mxu0 %v6593
    %v6842 = vpop.f32.mrf.mxu0
    %v6843 = vadd.f32 %v6718, %v6842
    %6844 = vmatmul.f32.gmra.mxu0 %v6596
    %v6845 = vpop.f32.mrf.mxu0
    %v6846 = vadd.f32 %v6721, %v6845
    %6847 = vmatmul.f32.gmra.mxu0 %v6599
    %v6848 = vpop.f32.mrf.mxu0
    %v6849 = vadd.f32 %v6724, %v6848
    %6850 = vmatmul.f32.gmra.mxu0 %v6602
    %v6851 = vpop.f32.mrf.mxu0
    %v6852 = vadd.f32 %v6727, %v6851
    %6853 = vmatmul.f32.gmra.mxu0 %v6605
    %v6854 = vpop.f32.mrf.mxu0
    %v6855 = vadd.f32 %v6730, %v6854
    %6856 = vmatmul.f32.gmra.mxu0 %v6608
    %v6857 = vpop.f32.mrf.mxu0
    %v6858 = vadd.f32 %v6733, %v6857
    %6859 = vmatmul.f32.gmra.mxu0 %v6611
    %v6860 = vpop.f32.mrf.mxu0
    %v6861 = vadd.f32 %v6736, %v6860
    %6862 = vmatmul.f32.gmra.mxu0 %v6614
    %v6863 = vpop.f32.mrf.mxu0
    %v6864 = vadd.f32 %v6739, %v6863
    %6865 = vmatmul.f32.gmra.mxu0 %v6617
    %v6866 = vpop.f32.mrf.mxu0
    %v6867 = vadd.f32 %v6742, %v6866
    %6868 = vmatmul.f32.gmra.mxu0 %v6620
    %v6869 = vpop.f32.mrf.mxu0
    %v6870 = vadd.f32 %v6745, %v6869
    %6871 = vmatmul.f32.gmra.mxu0 %v6623
    %v6872 = vpop.f32.mrf.mxu0
    %v6873 = vadd.f32 %v6748, %v6872
    %6874 = vmatmul.f32.gmra.mxu0 %v6626
    %v6875 = vpop.f32.mrf.mxu0
    %v6876 = vadd.f32 %v6751, %v6875
    %6877 = vmatmul.f32.gmra.mxu0 %v6629
    %v6878 = vpop.f32.mrf.mxu0
    %v6879 = vadd.f32 %v6754, %v6878
    %6880 = vmatmul.f32.gmra.mxu0 %v6632
    %v6881 = vpop.f32.mrf.mxu0
    %v6882 = vadd.f32 %v6757, %v6881
    %6883 = vmatmul.f32.gmra.mxu0 %v6635
    %v6884 = vpop.f32.mrf.mxu0
    %v6885 = vadd.f32 %v6760, %v6884
    %6886 = vmatmul.f32.gmra.mxu0 %v6638
    %v6887 = vpop.f32.mrf.mxu0
    %v6888 = vadd.f32 %v6763, %v6887
    %6889 = vmatmul.f32.gmra.mxu0 %v6641
    %v6890 = vpop.f32.mrf.mxu0
    %v6891 = vadd.f32 %v6766, %v6890
    %6892 = vmatmul.f32.gmra.mxu0 %v6644
    %v6893 = vpop.f32.mrf.mxu0
    %v6894 = vadd.f32 %v6769, %v6893
    %6895 = vdwg.mxu0
    %6896 = vst.msk [vmem:[#allocation4 + $0x120] sm:$0xff] %vm303, %v6789
    %6897 = vst.msk [vmem:[#allocation4 + $0x128] sm:$0xff] %vm303, %v6792
    %6898 = vst.msk [vmem:[#allocation4 + $0x130] sm:$0xff] %vm303, %v6795
    %6899 = vst.msk [vmem:[#allocation4 + $0x138] sm:$0xff] %vm303, %v6798
    %6900 = vst.msk [vmem:[#allocation4 + $0x140] sm:$0xff] %vm303, %v6801
    %6901 = vst.msk [vmem:[#allocation4 + $0x148] sm:$0xff] %vm303, %v6804
    %6902 = vst.msk [vmem:[#allocation4 + $0x150] sm:$0xff] %vm303, %v6807
    %6903 = vst.msk [vmem:[#allocation4 + $0x158] sm:$0xff] %vm303, %v6810
    %6904 = vst.msk [vmem:[#allocation4 + $0x160] sm:$0xff] %vm303, %v6813
    %6905 = vst.msk [vmem:[#allocation4 + $0x168] sm:$0xff] %vm303, %v6816
    %6906 = vst.msk [vmem:[#allocation4 + $0x170] sm:$0xff] %vm303, %v6819
    %6907 = vst.msk [vmem:[#allocation4 + $0x178] sm:$0xff] %vm303, %v6822
    %6908 = vst.msk [vmem:[#allocation4 + $0x180] sm:$0xff] %vm303, %v6825
    %6909 = vst.msk [vmem:[#allocation4 + $0x188] sm:$0xff] %vm303, %v6828
    %6910 = vst.msk [vmem:[#allocation4 + $0x190] sm:$0xff] %vm303, %v6831
    %6911 = vst.msk [vmem:[#allocation4 + $0x198] sm:$0xff] %vm303, %v6834
    %6912 = vst.msk [vmem:[#allocation4 + $0x1a0] sm:$0xff] %vm303, %v6837
    %6913 = vst.msk [vmem:[#allocation4 + $0x1a8] sm:$0xff] %vm303, %v6840
    %6914 = vst.msk [vmem:[#allocation4 + $0x1b0] sm:$0xff] %vm303, %v6843
    %6915 = vst.msk [vmem:[#allocation4 + $0x1b8] sm:$0xff] %vm303, %v6846
    %6916 = vst.msk [vmem:[#allocation4 + $0x1c0] sm:$0xff] %vm303, %v6849
    %6917 = vst.msk [vmem:[#allocation4 + $0x1c8] sm:$0xff] %vm303, %v6852
    %6918 = vst.msk [vmem:[#allocation4 + $0x1d0] sm:$0xff] %vm303, %v6855
    %6919 = vst.msk [vmem:[#allocation4 + $0x1d8] sm:$0xff] %vm303, %v6858
    %6920 = vst.msk [vmem:[#allocation4 + $0x1e0] sm:$0xff] %vm303, %v6861
    %6921 = vst.msk [vmem:[#allocation4 + $0x1e8] sm:$0xff] %vm303, %v6864
    %6922 = vst.msk [vmem:[#allocation4 + $0x1f0] sm:$0xff] %vm303, %v6867
    %6923 = vst.msk [vmem:[#allocation4 + $0x1f8] sm:$0xff] %vm303, %v6870
    %6924 = vst.msk [vmem:[#allocation4 + $0x200] sm:$0xff] %vm303, %v6873
    %6925 = vst.msk [vmem:[#allocation4 + $0x208] sm:$0xff] %vm303, %v6876
    %6926 = vst.msk [vmem:[#allocation4 + $0x210] sm:$0xff] %vm303, %v6879
    %6927 = vst.msk [vmem:[#allocation4 + $0x218] sm:$0xff] %vm303, %v6882
    %6928 = vst.msk [vmem:[#allocation4 + $0x220] sm:$0xff] %vm303, %v6885
    %6929 = vst.msk [vmem:[#allocation4 + $0x228] sm:$0xff] %vm303, %v6888
    %6930 = vst.msk [vmem:[#allocation4 + $0x230] sm:$0xff] %vm303, %v6891
    %6931 = vst.msk [vmem:[#allocation4 + $0x238] sm:$0xff] %vm303, %v6894
    %v6932 = vld [vmem:[%s4] sm:$0x1]
    %v6934 = vperm.slane %v6932, 0
    %v6936 = vld [vmem:[#allocation4] ss:$2 sm:$0xff]
    %s6937 = scalar_lea.vmem [#allocation4], 1
    %v6938 = vld [vmem:[%s6937] ss:$2 sm:$0xff]
    %v6939 = vmax.f32 %v6936, %v6938
    %s6940 = scalar_lea.vmem [#allocation4], 18
    %v6941 = vld [vmem:[%s6940] ss:$2 sm:$0xff]
    %s6942 = scalar_lea.vmem [#allocation4], 19
    %v6943 = vld [vmem:[%s6942] ss:$2 sm:$0xff]
    %v6944 = vmax.f32 %v6941, %v6943
    %v6945 = vmax.f32 %v6939, %v6944
    %v6946 = vadd.f32 %v6945, %v6934
    %v6947 = vmax.f32 %v6946, 0.0
    %6948 = vst.msk [vmem:[#allocation5] sm:$0xff] %vm303, %v6947
    %s6949 = scalar_lea.vmem [#allocation4], 36
    %v6950 = vld [vmem:[%s6949] ss:$2 sm:$0xff]
    %s6951 = scalar_lea.vmem [#allocation4], 37
    %v6952 = vld [vmem:[%s6951] ss:$2 sm:$0xff]
    %v6953 = vmax.f32 %v6950, %v6952
    %s6954 = scalar_lea.vmem [#allocation4], 54
    %v6955 = vld [vmem:[%s6954] ss:$2 sm:$0xff]
    %s6956 = scalar_lea.vmem [#allocation4], 55
    %v6957 = vld [vmem:[%s6956] ss:$2 sm:$0xff]
    %v6958 = vmax.f32 %v6955, %v6957
    %v6959 = vmax.f32 %v6953, %v6958
    %v6960 = vadd.f32 %v6959, %v6934
    %v6961 = vmax.f32 %v6960, 0.0
    %6962 = vst.msk [vmem:[#allocation5 + $0x8] sm:$0xff] %vm303, %v6961
    %s6963 = scalar_lea.vmem [#allocation4], 72
    %v6964 = vld [vmem:[%s6963] ss:$2 sm:$0xff]
    %s6965 = scalar_lea.vmem [#allocation4], 73
    %v6966 = vld [vmem:[%s6965] ss:$2 sm:$0xff]
    %v6967 = vmax.f32 %v6964, %v6966
    %s6968 = scalar_lea.vmem [#allocation4], 90
    %v6969 = vld [vmem:[%s6968] ss:$2 sm:$0xff]
    %s6970 = scalar_lea.vmem [#allocation4], 91
    %v6971 = vld [vmem:[%s6970] ss:$2 sm:$0xff]
    %v6972 = vmax.f32 %v6969, %v6971
    %v6973 = vmax.f32 %v6967, %v6972
    %v6974 = vadd.f32 %v6973, %v6934
    %v6975 = vmax.f32 %v6974, 0.0
    %6976 = vst.msk [vmem:[#allocation5 + $0x10] sm:$0xff] %vm303, %v6975
    %s6977 = scalar_lea.vmem [#allocation4], 108
    %v6978 = vld [vmem:[%s6977] ss:$2 sm:$0xff]
    %s6979 = scalar_lea.vmem [#allocation4], 109
    %v6980 = vld [vmem:[%s6979] ss:$2 sm:$0xff]
    %v6981 = vmax.f32 %v6978, %v6980
    %s6982 = scalar_lea.vmem [#allocation4], 126
    %v6983 = vld [vmem:[%s6982] ss:$2 sm:$0xff]
    %s6984 = scalar_lea.vmem [#allocation4], 127
    %v6985 = vld [vmem:[%s6984] ss:$2 sm:$0xff]
    %v6986 = vmax.f32 %v6983, %v6985
    %v6987 = vmax.f32 %v6981, %v6986
    %v6988 = vadd.f32 %v6987, %v6934
    %v6989 = vmax.f32 %v6988, 0.0
    %6990 = vst.msk [vmem:[#allocation5 + $0x18] sm:$0xff] %vm303, %v6989
    %s6991 = scalar_lea.vmem [#allocation4], 144
    %v6992 = vld [vmem:[%s6991] ss:$2 sm:$0xff]
    %s6993 = scalar_lea.vmem [#allocation4], 145
    %v6994 = vld [vmem:[%s6993] ss:$2 sm:$0xff]
    %v6995 = vmax.f32 %v6992, %v6994
    %s6996 = scalar_lea.vmem [#allocation4], 162
    %v6997 = vld [vmem:[%s6996] ss:$2 sm:$0xff]
    %s6998 = scalar_lea.vmem [#allocation4], 163
    %v6999 = vld [vmem:[%s6998] ss:$2 sm:$0xff]
    %v7000 = vmax.f32 %v6997, %v6999
    %v7001 = vmax.f32 %v6995, %v7000
    %v7002 = vadd.f32 %v7001, %v6934
    %v7003 = vmax.f32 %v7002, 0.0
    %7004 = vst.msk [vmem:[#allocation5 + $0x20] sm:$0xff] %vm303, %v7003
    %s7005 = scalar_lea.vmem [#allocation4], 180
    %v7006 = vld [vmem:[%s7005] ss:$2 sm:$0xff]
    %s7007 = scalar_lea.vmem [#allocation4], 181
    %v7008 = vld [vmem:[%s7007] ss:$2 sm:$0xff]
    %v7009 = vmax.f32 %v7006, %v7008
    %s7010 = scalar_lea.vmem [#allocation4], 198
    %v7011 = vld [vmem:[%s7010] ss:$2 sm:$0xff]
    %s7012 = scalar_lea.vmem [#allocation4], 199
    %v7013 = vld [vmem:[%s7012] ss:$2 sm:$0xff]
    %v7014 = vmax.f32 %v7011, %v7013
    %v7015 = vmax.f32 %v7009, %v7014
    %v7016 = vadd.f32 %v7015, %v6934
    %v7017 = vmax.f32 %v7016, 0.0
    %7018 = vst.msk [vmem:[#allocation5 + $0x28] sm:$0xff] %vm303, %v7017
    %s7019 = scalar_lea.vmem [#allocation4], 216
    %v7020 = vld [vmem:[%s7019] ss:$2 sm:$0xff]
    %s7021 = scalar_lea.vmem [#allocation4], 217
    %v7022 = vld [vmem:[%s7021] ss:$2 sm:$0xff]
    %v7023 = vmax.f32 %v7020, %v7022
    %s7024 = scalar_lea.vmem [#allocation4], 234
    %v7025 = vld [vmem:[%s7024] ss:$2 sm:$0xff]
    %s7026 = scalar_lea.vmem [#allocation4], 235
    %v7027 = vld [vmem:[%s7026] ss:$2 sm:$0xff]
    %v7028 = vmax.f32 %v7025, %v7027
    %v7029 = vmax.f32 %v7023, %v7028
    %v7030 = vadd.f32 %v7029, %v6934
    %v7031 = vmax.f32 %v7030, 0.0
    %7032 = vst.msk [vmem:[#allocation5 + $0x30] sm:$0xff] %vm303, %v7031
    %s7033 = scalar_lea.vmem [#allocation4], 252
    %v7034 = vld [vmem:[%s7033] ss:$2 sm:$0xff]
    %s7035 = scalar_lea.vmem [#allocation4], 253
    %v7036 = vld [vmem:[%s7035] ss:$2 sm:$0xff]
    %v7037 = vmax.f32 %v7034, %v7036
    %s7038 = scalar_lea.vmem [#allocation4], 270
    %v7039 = vld [vmem:[%s7038] ss:$2 sm:$0xff]
    %s7040 = scalar_lea.vmem [#allocation4], 271
    %v7041 = vld [vmem:[%s7040] ss:$2 sm:$0xff]
    %v7042 = vmax.f32 %v7039, %v7041
    %v7043 = vmax.f32 %v7037, %v7042
    %v7044 = vadd.f32 %v7043, %v6934
    %v7045 = vmax.f32 %v7044, 0.0
    %7046 = vst.msk [vmem:[#allocation5 + $0x38] sm:$0xff] %vm303, %v7045
    %s7047 = scalar_lea.vmem [#allocation4], 288
    %v7048 = vld [vmem:[%s7047] ss:$2 sm:$0xff]
    %s7049 = scalar_lea.vmem [#allocation4], 289
    %v7050 = vld [vmem:[%s7049] ss:$2 sm:$0xff]
    %v7051 = vmax.f32 %v7048, %v7050
    %s7052 = scalar_lea.vmem [#allocation4], 306
    %v7053 = vld [vmem:[%s7052] ss:$2 sm:$0xff]
    %s7054 = scalar_lea.vmem [#allocation4], 307
    %v7055 = vld [vmem:[%s7054] ss:$2 sm:$0xff]
    %v7056 = vmax.f32 %v7053, %v7055
    %v7057 = vmax.f32 %v7051, %v7056
    %v7058 = vadd.f32 %v7057, %v6934
    %v7059 = vmax.f32 %v7058, 0.0
    %7060 = vst.msk [vmem:[#allocation5 + $0x40] sm:$0xff] %vm303, %v7059
    %s7061 = scalar_lea.vmem [#allocation4], 324
    %v7062 = vld [vmem:[%s7061] ss:$2 sm:$0xff]
    %s7063 = scalar_lea.vmem [#allocation4], 325
    %v7064 = vld [vmem:[%s7063] ss:$2 sm:$0xff]
    %v7065 = vmax.f32 %v7062, %v7064
    %s7066 = scalar_lea.vmem [#allocation4], 342
    %v7067 = vld [vmem:[%s7066] ss:$2 sm:$0xff]
    %s7068 = scalar_lea.vmem [#allocation4], 343
    %v7069 = vld [vmem:[%s7068] ss:$2 sm:$0xff]
    %v7070 = vmax.f32 %v7067, %v7069
    %v7071 = vmax.f32 %v7065, %v7070
    %v7072 = vadd.f32 %v7071, %v6934
    %v7073 = vmax.f32 %v7072, 0.0
    %7074 = vst.msk [vmem:[#allocation5 + $0x48] sm:$0xff] %vm303, %v7073
    %s7075 = scalar_lea.vmem [#allocation4], 360
    %v7076 = vld [vmem:[%s7075] ss:$2 sm:$0xff]
    %s7077 = scalar_lea.vmem [#allocation4], 361
    %v7078 = vld [vmem:[%s7077] ss:$2 sm:$0xff]
    %v7079 = vmax.f32 %v7076, %v7078
    %s7080 = scalar_lea.vmem [#allocation4], 378
    %v7081 = vld [vmem:[%s7080] ss:$2 sm:$0xff]
    %s7082 = scalar_lea.vmem [#allocation4], 379
    %v7083 = vld [vmem:[%s7082] ss:$2 sm:$0xff]
    %v7084 = vmax.f32 %v7081, %v7083
    %v7085 = vmax.f32 %v7079, %v7084
    %v7086 = vadd.f32 %v7085, %v6934
    %v7087 = vmax.f32 %v7086, 0.0
    %7088 = vst.msk [vmem:[#allocation5 + $0x50] sm:$0xff] %vm303, %v7087
    %s7089 = scalar_lea.vmem [#allocation4], 396
    %v7090 = vld [vmem:[%s7089] ss:$2 sm:$0xff]
    %s7091 = scalar_lea.vmem [#allocation4], 397
    %v7092 = vld [vmem:[%s7091] ss:$2 sm:$0xff]
    %v7093 = vmax.f32 %v7090, %v7092
    %s7094 = scalar_lea.vmem [#allocation4], 414
    %v7095 = vld [vmem:[%s7094] ss:$2 sm:$0xff]
    %s7096 = scalar_lea.vmem [#allocation4], 415
    %v7097 = vld [vmem:[%s7096] ss:$2 sm:$0xff]
    %v7098 = vmax.f32 %v7095, %v7097
    %v7099 = vmax.f32 %v7093, %v7098
    %v7100 = vadd.f32 %v7099, %v6934
    %v7101 = vmax.f32 %v7100, 0.0
    %7102 = vst.msk [vmem:[#allocation5 + $0x58] sm:$0xff] %vm303, %v7101
    %s7103 = scalar_lea.vmem [#allocation4], 432
    %v7104 = vld [vmem:[%s7103] ss:$2 sm:$0xff]
    %s7105 = scalar_lea.vmem [#allocation4], 433
    %v7106 = vld [vmem:[%s7105] ss:$2 sm:$0xff]
    %v7107 = vmax.f32 %v7104, %v7106
    %s7108 = scalar_lea.vmem [#allocation4], 450
    %v7109 = vld [vmem:[%s7108] ss:$2 sm:$0xff]
    %s7110 = scalar_lea.vmem [#allocation4], 451
    %v7111 = vld [vmem:[%s7110] ss:$2 sm:$0xff]
    %v7112 = vmax.f32 %v7109, %v7111
    %v7113 = vmax.f32 %v7107, %v7112
    %v7114 = vadd.f32 %v7113, %v6934
    %v7115 = vmax.f32 %v7114, 0.0
    %7116 = vst.msk [vmem:[#allocation5 + $0x60] sm:$0xff] %vm303, %v7115
    %s7117 = scalar_lea.vmem [#allocation4], 468
    %v7118 = vld [vmem:[%s7117] ss:$2 sm:$0xff]
    %s7119 = scalar_lea.vmem [#allocation4], 469
    %v7120 = vld [vmem:[%s7119] ss:$2 sm:$0xff]
    %v7121 = vmax.f32 %v7118, %v7120
    %s7122 = scalar_lea.vmem [#allocation4], 486
    %v7123 = vld [vmem:[%s7122] ss:$2 sm:$0xff]
    %s7124 = scalar_lea.vmem [#allocation4], 487
    %v7125 = vld [vmem:[%s7124] ss:$2 sm:$0xff]
    %v7126 = vmax.f32 %v7123, %v7125
    %v7127 = vmax.f32 %v7121, %v7126
    %v7128 = vadd.f32 %v7127, %v6934
    %v7129 = vmax.f32 %v7128, 0.0
    %7130 = vst.msk [vmem:[#allocation5 + $0x68] sm:$0xff] %vm303, %v7129
    %s7131 = scalar_lea.vmem [#allocation4], 504
    %v7132 = vld [vmem:[%s7131] ss:$2 sm:$0xff]
    %s7133 = scalar_lea.vmem [#allocation4], 505
    %v7134 = vld [vmem:[%s7133] ss:$2 sm:$0xff]
    %v7135 = vmax.f32 %v7132, %v7134
    %s7136 = scalar_lea.vmem [#allocation4], 522
    %v7137 = vld [vmem:[%s7136] ss:$2 sm:$0xff]
    %s7138 = scalar_lea.vmem [#allocation4], 523
    %v7139 = vld [vmem:[%s7138] ss:$2 sm:$0xff]
    %v7140 = vmax.f32 %v7137, %v7139
    %v7141 = vmax.f32 %v7135, %v7140
    %v7142 = vadd.f32 %v7141, %v6934
    %v7143 = vmax.f32 %v7142, 0.0
    %7144 = vst.msk [vmem:[#allocation5 + $0x70] sm:$0xff] %vm303, %v7143
    %s7145 = scalar_lea.vmem [#allocation4], 540
    %v7146 = vld [vmem:[%s7145] ss:$2 sm:$0xff]
    %s7147 = scalar_lea.vmem [#allocation4], 541
    %v7148 = vld [vmem:[%s7147] ss:$2 sm:$0xff]
    %v7149 = vmax.f32 %v7146, %v7148
    %s7150 = scalar_lea.vmem [#allocation4], 558
    %v7151 = vld [vmem:[%s7150] ss:$2 sm:$0xff]
    %s7152 = scalar_lea.vmem [#allocation4], 559
    %v7153 = vld [vmem:[%s7152] ss:$2 sm:$0xff]
    %v7154 = vmax.f32 %v7151, %v7153
    %v7155 = vmax.f32 %v7149, %v7154
    %v7156 = vadd.f32 %v7155, %v6934
    %v7157 = vmax.f32 %v7156, 0.0
    %7158 = vst.msk [vmem:[#allocation5 + $0x78] sm:$0xff] %vm303, %v7157
    %v7159 = vld [vmem:[#allocation5] ss:$64 sm:$0x1]
    %v7160 = vld [vmem:[#allocation5] ss:$64 sm:$0x2]
    %v7161 = vor.u32 %v7159, %v7160
    %v7162 = vld [vmem:[%s5] sm:$0xff]
    %v7163 = vld [vmem:[%s5 + $0x8] sm:$0xff]
    %v7164 = vld [vmem:[%s5 + $0x10] sm:$0xff]
    %v7165 = vld [vmem:[%s5 + $0x18] sm:$0xff]
    %s7166 = scalar_lea.vmem [#allocation5], 1
    %v7167 = vld [vmem:[%s7166] ss:$64 sm:$0x1]
    %v7168 = vld [vmem:[%s7166] ss:$64 sm:$0x2]
    %v7169 = vor.u32 %v7167, %v7168
    %s7170 = scalar_lea.vmem %s5, 32
    %v7171 = vld [vmem:[%s7170] sm:$0xff]
    %v7172 = vld [vmem:[%s7170 + $0x8] sm:$0xff]
    %v7173 = vld [vmem:[%s7170 + $0x10] sm:$0xff]
    %v7174 = vld [vmem:[%s7170 + $0x18] sm:$0xff]
    %v7176 = vsel %vm303, %v7169, 0
    %7178 = vmatpush.msra.mxu0 0.0
    %7179 = vmatpush.msra.mxu0 0.0
    %7180 = vmatpush.msra.mxu0 0.0
    %7181 = vmatpush.msra.mxu0 0.0
    %7182 = vmatpush.msra.mxu0 0.0
    %7183 = vmatpush.msra.mxu0 0.0
    %7184 = vmatpush.msra.mxu0 0.0
    %7185 = vmatpush.msra.mxu0 0.0
    %7186 = vmatpush.msra.mxu0 0.0
    %7187 = vmatpush.msra.mxu0 0.0
    %7188 = vmatpush.msra.mxu0 0.0
    %7189 = vmatpush.msra.mxu0 0.0
    %7190 = vmatpush.msra.mxu0 %v7174
    %7191 = vmatpush.msra.mxu0 %v7173
    %7192 = vmatpush.msra.mxu0 %v7172
    %7193 = vmatpush.msra.mxu0 %v7171
    %7194 = vmatmul.f32.gmra.mxu0 %v7176
    %v7195 = vpop.f32.mrf.mxu0
    %v7196 = vadd.f32 0.0, %v7195
    %7197 = vdwg.mxu0
    %v7199 = vsel %vm303, %v7161, 0
    %7201 = vmatpush.msra.mxu0 0.0
    %7202 = vmatpush.msra.mxu0 0.0
    %7203 = vmatpush.msra.mxu0 0.0
    %7204 = vmatpush.msra.mxu0 0.0
    %7205 = vmatpush.msra.mxu0 0.0
    %7206 = vmatpush.msra.mxu0 0.0
    %7207 = vmatpush.msra.mxu0 0.0
    %7208 = vmatpush.msra.mxu0 0.0
    %7209 = vmatpush.msra.mxu0 0.0
    %7210 = vmatpush.msra.mxu0 0.0
    %7211 = vmatpush.msra.mxu0 0.0
    %7212 = vmatpush.msra.mxu0 0.0
    %7213 = vmatpush.msra.mxu0 %v7165
    %7214 = vmatpush.msra.mxu0 %v7164
    %7215 = vmatpush.msra.mxu0 %v7163
    %7216 = vmatpush.msra.mxu0 %v7162
    %7217 = vmatmul.f32.gmra.mxu0 %v7199
    %v7218 = vpop.f32.mrf.mxu0
    %v7219 = vadd.f32 %v7196, %v7218
    %7220 = vdwg.mxu0
    %s7221 = scalar_lea.vmem [#allocation5], 2
    %v7222 = vld [vmem:[%s7221] ss:$64 sm:$0x1]
    %v7223 = vld [vmem:[%s7221] ss:$64 sm:$0x2]
    %v7224 = vor.u32 %v7222, %v7223
    %s7225 = scalar_lea.vmem %s5, 64
    %v7226 = vld [vmem:[%s7225] sm:$0xff]
    %v7227 = vld [vmem:[%s7225 + $0x8] sm:$0xff]
    %v7228 = vld [vmem:[%s7225 + $0x10] sm:$0xff]
    %v7229 = vld [vmem:[%s7225 + $0x18] sm:$0xff]
    %v7231 = vsel %vm303, %v7224, 0
    %7233 = vmatpush.msra.mxu0 0.0
    %7234 = vmatpush.msra.mxu0 0.0
    %7235 = vmatpush.msra.mxu0 0.0
    %7236 = vmatpush.msra.mxu0 0.0
    %7237 = vmatpush.msra.mxu0 0.0
    %7238 = vmatpush.msra.mxu0 0.0
    %7239 = vmatpush.msra.mxu0 0.0
    %7240 = vmatpush.msra.mxu0 0.0
    %7241 = vmatpush.msra.mxu0 0.0
    %7242 = vmatpush.msra.mxu0 0.0
    %7243 = vmatpush.msra.mxu0 0.0
    %7244 = vmatpush.msra.mxu0 0.0
    %7245 = vmatpush.msra.mxu0 %v7229
    %7246 = vmatpush.msra.mxu0 %v7228
    %7247 = vmatpush.msra.mxu0 %v7227
    %7248 = vmatpush.msra.mxu0 %v7226
    %7249 = vmatmul.f32.gmra.mxu0 %v7231
    %v7250 = vpop.f32.mrf.mxu0
    %v7251 = vadd.f32 0.0, %v7250
    %7252 = vdwg.mxu0
    %v7253 = vadd.f32 %v7219, %v7251
    %s7254 = scalar_lea.vmem [#allocation5], 3
    %v7255 = vld [vmem:[%s7254] ss:$64 sm:$0x1]
    %v7256 = vld [vmem:[%s7254] ss:$64 sm:$0x2]
    %v7257 = vor.u32 %v7255, %v7256
    %s7258 = scalar_lea.vmem %s5, 96
    %v7259 = vld [vmem:[%s7258] sm:$0xff]
    %v7260 = vld [vmem:[%s7258 + $0x8] sm:$0xff]
    %v7261 = vld [vmem:[%s7258 + $0x10] sm:$0xff]
    %v7262 = vld [vmem:[%s7258 + $0x18] sm:$0xff]
    %v7264 = vsel %vm303, %v7257, 0
    %7266 = vmatpush.msra.mxu0 0.0
    %7267 = vmatpush.msra.mxu0 0.0
    %7268 = vmatpush.msra.mxu0 0.0
    %7269 = vmatpush.msra.mxu0 0.0
    %7270 = vmatpush.msra.mxu0 0.0
    %7271 = vmatpush.msra.mxu0 0.0
    %7272 = vmatpush.msra.mxu0 0.0
    %7273 = vmatpush.msra.mxu0 0.0
    %7274 = vmatpush.msra.mxu0 0.0
    %7275 = vmatpush.msra.mxu0 0.0
    %7276 = vmatpush.msra.mxu0 0.0
    %7277 = vmatpush.msra.mxu0 0.0
    %7278 = vmatpush.msra.mxu0 %v7262
    %7279 = vmatpush.msra.mxu0 %v7261
    %7280 = vmatpush.msra.mxu0 %v7260
    %7281 = vmatpush.msra.mxu0 %v7259
    %7282 = vmatmul.f32.gmra.mxu0 %v7264
    %v7283 = vpop.f32.mrf.mxu0
    %v7284 = vadd.f32 0.0, %v7283
    %7285 = vdwg.mxu0
    %v7286 = vadd.f32 %v7253, %v7284
    %s7287 = scalar_lea.vmem [#allocation5], 4
    %v7288 = vld [vmem:[%s7287] ss:$64 sm:$0x1]
    %v7289 = vld [vmem:[%s7287] ss:$64 sm:$0x2]
    %v7290 = vor.u32 %v7288, %v7289
    %s7291 = scalar_lea.vmem %s5, 128
    %v7292 = vld [vmem:[%s7291] sm:$0xff]
    %v7293 = vld [vmem:[%s7291 + $0x8] sm:$0xff]
    %v7294 = vld [vmem:[%s7291 + $0x10] sm:$0xff]
    %v7295 = vld [vmem:[%s7291 + $0x18] sm:$0xff]
    %v7297 = vsel %vm303, %v7290, 0
    %7299 = vmatpush.msra.mxu0 0.0
    %7300 = vmatpush.msra.mxu0 0.0
    %7301 = vmatpush.msra.mxu0 0.0
    %7302 = vmatpush.msra.mxu0 0.0
    %7303 = vmatpush.msra.mxu0 0.0
    %7304 = vmatpush.msra.mxu0 0.0
    %7305 = vmatpush.msra.mxu0 0.0
    %7306 = vmatpush.msra.mxu0 0.0
    %7307 = vmatpush.msra.mxu0 0.0
    %7308 = vmatpush.msra.mxu0 0.0
    %7309 = vmatpush.msra.mxu0 0.0
    %7310 = vmatpush.msra.mxu0 0.0
    %7311 = vmatpush.msra.mxu0 %v7295
    %7312 = vmatpush.msra.mxu0 %v7294
    %7313 = vmatpush.msra.mxu0 %v7293
    %7314 = vmatpush.msra.mxu0 %v7292
    %7315 = vmatmul.f32.gmra.mxu0 %v7297
    %v7316 = vpop.f32.mrf.mxu0
    %v7317 = vadd.f32 0.0, %v7316
    %7318 = vdwg.mxu0
    %v7319 = vadd.f32 %v7286, %v7317
    %s7320 = scalar_lea.vmem [#allocation5], 5
    %v7321 = vld [vmem:[%s7320] ss:$64 sm:$0x1]
    %v7322 = vld [vmem:[%s7320] ss:$64 sm:$0x2]
    %v7323 = vor.u32 %v7321, %v7322
    %s7324 = scalar_lea.vmem %s5, 160
    %v7325 = vld [vmem:[%s7324] sm:$0xff]
    %v7326 = vld [vmem:[%s7324 + $0x8] sm:$0xff]
    %v7327 = vld [vmem:[%s7324 + $0x10] sm:$0xff]
    %v7328 = vld [vmem:[%s7324 + $0x18] sm:$0xff]
    %v7330 = vsel %vm303, %v7323, 0
    %7332 = vmatpush.msra.mxu0 0.0
    %7333 = vmatpush.msra.mxu0 0.0
    %7334 = vmatpush.msra.mxu0 0.0
    %7335 = vmatpush.msra.mxu0 0.0
    %7336 = vmatpush.msra.mxu0 0.0
    %7337 = vmatpush.msra.mxu0 0.0
    %7338 = vmatpush.msra.mxu0 0.0
    %7339 = vmatpush.msra.mxu0 0.0
    %7340 = vmatpush.msra.mxu0 0.0
    %7341 = vmatpush.msra.mxu0 0.0
    %7342 = vmatpush.msra.mxu0 0.0
    %7343 = vmatpush.msra.mxu0 0.0
    %7344 = vmatpush.msra.mxu0 %v7328
    %7345 = vmatpush.msra.mxu0 %v7327
    %7346 = vmatpush.msra.mxu0 %v7326
    %7347 = vmatpush.msra.mxu0 %v7325
    %7348 = vmatmul.f32.gmra.mxu0 %v7330
    %v7349 = vpop.f32.mrf.mxu0
    %v7350 = vadd.f32 0.0, %v7349
    %7351 = vdwg.mxu0
    %v7352 = vadd.f32 %v7319, %v7350
    %s7353 = scalar_lea.vmem [#allocation5], 6
    %v7354 = vld [vmem:[%s7353] ss:$64 sm:$0x1]
    %v7355 = vld [vmem:[%s7353] ss:$64 sm:$0x2]
    %v7356 = vor.u32 %v7354, %v7355
    %s7357 = scalar_lea.vmem %s5, 192
    %v7358 = vld [vmem:[%s7357] sm:$0xff]
    %v7359 = vld [vmem:[%s7357 + $0x8] sm:$0xff]
    %v7360 = vld [vmem:[%s7357 + $0x10] sm:$0xff]
    %v7361 = vld [vmem:[%s7357 + $0x18] sm:$0xff]
    %v7363 = vsel %vm303, %v7356, 0
    %7365 = vmatpush.msra.mxu0 0.0
    %7366 = vmatpush.msra.mxu0 0.0
    %7367 = vmatpush.msra.mxu0 0.0
    %7368 = vmatpush.msra.mxu0 0.0
    %7369 = vmatpush.msra.mxu0 0.0
    %7370 = vmatpush.msra.mxu0 0.0
    %7371 = vmatpush.msra.mxu0 0.0
    %7372 = vmatpush.msra.mxu0 0.0
    %7373 = vmatpush.msra.mxu0 0.0
    %7374 = vmatpush.msra.mxu0 0.0
    %7375 = vmatpush.msra.mxu0 0.0
    %7376 = vmatpush.msra.mxu0 0.0
    %7377 = vmatpush.msra.mxu0 %v7361
    %7378 = vmatpush.msra.mxu0 %v7360
    %7379 = vmatpush.msra.mxu0 %v7359
    %7380 = vmatpush.msra.mxu0 %v7358
    %7381 = vmatmul.f32.gmra.mxu0 %v7363
    %v7382 = vpop.f32.mrf.mxu0
    %v7383 = vadd.f32 0.0, %v7382
    %7384 = vdwg.mxu0
    %v7385 = vadd.f32 %v7352, %v7383
    %s7386 = scalar_lea.vmem [#allocation5], 7
    %v7387 = vld [vmem:[%s7386] ss:$64 sm:$0x1]
    %v7388 = vld [vmem:[%s7386] ss:$64 sm:$0x2]
    %v7389 = vor.u32 %v7387, %v7388
    %s7390 = scalar_lea.vmem %s5, 224
    %v7391 = vld [vmem:[%s7390] sm:$0xff]
    %v7392 = vld [vmem:[%s7390 + $0x8] sm:$0xff]
    %v7393 = vld [vmem:[%s7390 + $0x10] sm:$0xff]
    %v7394 = vld [vmem:[%s7390 + $0x18] sm:$0xff]
    %v7396 = vsel %vm303, %v7389, 0
    %7398 = vmatpush.msra.mxu0 0.0
    %7399 = vmatpush.msra.mxu0 0.0
    %7400 = vmatpush.msra.mxu0 0.0
    %7401 = vmatpush.msra.mxu0 0.0
    %7402 = vmatpush.msra.mxu0 0.0
    %7403 = vmatpush.msra.mxu0 0.0
    %7404 = vmatpush.msra.mxu0 0.0
    %7405 = vmatpush.msra.mxu0 0.0
    %7406 = vmatpush.msra.mxu0 0.0
    %7407 = vmatpush.msra.mxu0 0.0
    %7408 = vmatpush.msra.mxu0 0.0
    %7409 = vmatpush.msra.mxu0 0.0
    %7410 = vmatpush.msra.mxu0 %v7394
    %7411 = vmatpush.msra.mxu0 %v7393
    %7412 = vmatpush.msra.mxu0 %v7392
    %7413 = vmatpush.msra.mxu0 %v7391
    %7414 = vmatmul.f32.gmra.mxu0 %v7396
    %v7415 = vpop.f32.mrf.mxu0
    %v7416 = vadd.f32 0.0, %v7415
    %7417 = vdwg.mxu0
    %v7418 = vadd.f32 %v7385, %v7416
    %s7419 = scalar_lea.vmem [#allocation5], 8
    %v7420 = vld [vmem:[%s7419] ss:$64 sm:$0x1]
    %v7421 = vld [vmem:[%s7419] ss:$64 sm:$0x2]
    %v7422 = vor.u32 %v7420, %v7421
    %s7423 = scalar_lea.vmem %s5, 256
    %v7424 = vld [vmem:[%s7423] sm:$0xff]
    %v7425 = vld [vmem:[%s7423 + $0x8] sm:$0xff]
    %v7426 = vld [vmem:[%s7423 + $0x10] sm:$0xff]
    %v7427 = vld [vmem:[%s7423 + $0x18] sm:$0xff]
    %v7429 = vsel %vm303, %v7422, 0
    %7431 = vmatpush.msra.mxu0 0.0
    %7432 = vmatpush.msra.mxu0 0.0
    %7433 = vmatpush.msra.mxu0 0.0
    %7434 = vmatpush.msra.mxu0 0.0
    %7435 = vmatpush.msra.mxu0 0.0
    %7436 = vmatpush.msra.mxu0 0.0
    %7437 = vmatpush.msra.mxu0 0.0
    %7438 = vmatpush.msra.mxu0 0.0
    %7439 = vmatpush.msra.mxu0 0.0
    %7440 = vmatpush.msra.mxu0 0.0
    %7441 = vmatpush.msra.mxu0 0.0
    %7442 = vmatpush.msra.mxu0 0.0
    %7443 = vmatpush.msra.mxu0 %v7427
    %7444 = vmatpush.msra.mxu0 %v7426
    %7445 = vmatpush.msra.mxu0 %v7425
    %7446 = vmatpush.msra.mxu0 %v7424
    %7447 = vmatmul.f32.gmra.mxu0 %v7429
    %v7448 = vpop.f32.mrf.mxu0
    %v7449 = vadd.f32 0.0, %v7448
    %7450 = vdwg.mxu0
    %v7451 = vadd.f32 %v7418, %v7449
    %s7452 = scalar_lea.vmem [#allocation5], 9
    %v7453 = vld [vmem:[%s7452] ss:$64 sm:$0x1]
    %v7454 = vld [vmem:[%s7452] ss:$64 sm:$0x2]
    %v7455 = vor.u32 %v7453, %v7454
    %s7456 = scalar_lea.vmem %s5, 288
    %v7457 = vld [vmem:[%s7456] sm:$0xff]
    %v7458 = vld [vmem:[%s7456 + $0x8] sm:$0xff]
    %v7459 = vld [vmem:[%s7456 + $0x10] sm:$0xff]
    %v7460 = vld [vmem:[%s7456 + $0x18] sm:$0xff]
    %v7462 = vsel %vm303, %v7455, 0
    %7464 = vmatpush.msra.mxu0 0.0
    %7465 = vmatpush.msra.mxu0 0.0
    %7466 = vmatpush.msra.mxu0 0.0
    %7467 = vmatpush.msra.mxu0 0.0
    %7468 = vmatpush.msra.mxu0 0.0
    %7469 = vmatpush.msra.mxu0 0.0
    %7470 = vmatpush.msra.mxu0 0.0
    %7471 = vmatpush.msra.mxu0 0.0
    %7472 = vmatpush.msra.mxu0 0.0
    %7473 = vmatpush.msra.mxu0 0.0
    %7474 = vmatpush.msra.mxu0 0.0
    %7475 = vmatpush.msra.mxu0 0.0
    %7476 = vmatpush.msra.mxu0 %v7460
    %7477 = vmatpush.msra.mxu0 %v7459
    %7478 = vmatpush.msra.mxu0 %v7458
    %7479 = vmatpush.msra.mxu0 %v7457
    %7480 = vmatmul.f32.gmra.mxu0 %v7462
    %v7481 = vpop.f32.mrf.mxu0
    %v7482 = vadd.f32 0.0, %v7481
    %7483 = vdwg.mxu0
    %v7484 = vadd.f32 %v7451, %v7482
    %s7485 = scalar_lea.vmem [#allocation5], 10
    %v7486 = vld [vmem:[%s7485] ss:$64 sm:$0x1]
    %v7487 = vld [vmem:[%s7485] ss:$64 sm:$0x2]
    %v7488 = vor.u32 %v7486, %v7487
    %s7489 = scalar_lea.vmem %s5, 320
    %v7490 = vld [vmem:[%s7489] sm:$0xff]
    %v7491 = vld [vmem:[%s7489 + $0x8] sm:$0xff]
    %v7492 = vld [vmem:[%s7489 + $0x10] sm:$0xff]
    %v7493 = vld [vmem:[%s7489 + $0x18] sm:$0xff]
    %v7495 = vsel %vm303, %v7488, 0
    %7497 = vmatpush.msra.mxu0 0.0
    %7498 = vmatpush.msra.mxu0 0.0
    %7499 = vmatpush.msra.mxu0 0.0
    %7500 = vmatpush.msra.mxu0 0.0
    %7501 = vmatpush.msra.mxu0 0.0
    %7502 = vmatpush.msra.mxu0 0.0
    %7503 = vmatpush.msra.mxu0 0.0
    %7504 = vmatpush.msra.mxu0 0.0
    %7505 = vmatpush.msra.mxu0 0.0
    %7506 = vmatpush.msra.mxu0 0.0
    %7507 = vmatpush.msra.mxu0 0.0
    %7508 = vmatpush.msra.mxu0 0.0
    %7509 = vmatpush.msra.mxu0 %v7493
    %7510 = vmatpush.msra.mxu0 %v7492
    %7511 = vmatpush.msra.mxu0 %v7491
    %7512 = vmatpush.msra.mxu0 %v7490
    %7513 = vmatmul.f32.gmra.mxu0 %v7495
    %v7514 = vpop.f32.mrf.mxu0
    %v7515 = vadd.f32 0.0, %v7514
    %7516 = vdwg.mxu0
    %v7517 = vadd.f32 %v7484, %v7515
    %s7518 = scalar_lea.vmem [#allocation5], 11
    %v7519 = vld [vmem:[%s7518] ss:$64 sm:$0x1]
    %v7520 = vld [vmem:[%s7518] ss:$64 sm:$0x2]
    %v7521 = vor.u32 %v7519, %v7520
    %s7522 = scalar_lea.vmem %s5, 352
    %v7523 = vld [vmem:[%s7522] sm:$0xff]
    %v7524 = vld [vmem:[%s7522 + $0x8] sm:$0xff]
    %v7525 = vld [vmem:[%s7522 + $0x10] sm:$0xff]
    %v7526 = vld [vmem:[%s7522 + $0x18] sm:$0xff]
    %v7528 = vsel %vm303, %v7521, 0
    %7530 = vmatpush.msra.mxu0 0.0
    %7531 = vmatpush.msra.mxu0 0.0
    %7532 = vmatpush.msra.mxu0 0.0
    %7533 = vmatpush.msra.mxu0 0.0
    %7534 = vmatpush.msra.mxu0 0.0
    %7535 = vmatpush.msra.mxu0 0.0
    %7536 = vmatpush.msra.mxu0 0.0
    %7537 = vmatpush.msra.mxu0 0.0
    %7538 = vmatpush.msra.mxu0 0.0
    %7539 = vmatpush.msra.mxu0 0.0
    %7540 = vmatpush.msra.mxu0 0.0
    %7541 = vmatpush.msra.mxu0 0.0
    %7542 = vmatpush.msra.mxu0 %v7526
    %7543 = vmatpush.msra.mxu0 %v7525
    %7544 = vmatpush.msra.mxu0 %v7524
    %7545 = vmatpush.msra.mxu0 %v7523
    %7546 = vmatmul.f32.gmra.mxu0 %v7528
    %v7547 = vpop.f32.mrf.mxu0
    %v7548 = vadd.f32 0.0, %v7547
    %7549 = vdwg.mxu0
    %v7550 = vadd.f32 %v7517, %v7548
    %s7551 = scalar_lea.vmem [#allocation5], 12
    %v7552 = vld [vmem:[%s7551] ss:$64 sm:$0x1]
    %v7553 = vld [vmem:[%s7551] ss:$64 sm:$0x2]
    %v7554 = vor.u32 %v7552, %v7553
    %s7555 = scalar_lea.vmem %s5, 384
    %v7556 = vld [vmem:[%s7555] sm:$0xff]
    %v7557 = vld [vmem:[%s7555 + $0x8] sm:$0xff]
    %v7558 = vld [vmem:[%s7555 + $0x10] sm:$0xff]
    %v7559 = vld [vmem:[%s7555 + $0x18] sm:$0xff]
    %v7561 = vsel %vm303, %v7554, 0
    %7563 = vmatpush.msra.mxu0 0.0
    %7564 = vmatpush.msra.mxu0 0.0
    %7565 = vmatpush.msra.mxu0 0.0
    %7566 = vmatpush.msra.mxu0 0.0
    %7567 = vmatpush.msra.mxu0 0.0
    %7568 = vmatpush.msra.mxu0 0.0
    %7569 = vmatpush.msra.mxu0 0.0
    %7570 = vmatpush.msra.mxu0 0.0
    %7571 = vmatpush.msra.mxu0 0.0
    %7572 = vmatpush.msra.mxu0 0.0
    %7573 = vmatpush.msra.mxu0 0.0
    %7574 = vmatpush.msra.mxu0 0.0
    %7575 = vmatpush.msra.mxu0 %v7559
    %7576 = vmatpush.msra.mxu0 %v7558
    %7577 = vmatpush.msra.mxu0 %v7557
    %7578 = vmatpush.msra.mxu0 %v7556
    %7579 = vmatmul.f32.gmra.mxu0 %v7561
    %v7580 = vpop.f32.mrf.mxu0
    %v7581 = vadd.f32 0.0, %v7580
    %7582 = vdwg.mxu0
    %v7583 = vadd.f32 %v7550, %v7581
    %s7584 = scalar_lea.vmem [#allocation5], 13
    %v7585 = vld [vmem:[%s7584] ss:$64 sm:$0x1]
    %v7586 = vld [vmem:[%s7584] ss:$64 sm:$0x2]
    %v7587 = vor.u32 %v7585, %v7586
    %s7588 = scalar_lea.vmem %s5, 416
    %v7589 = vld [vmem:[%s7588] sm:$0xff]
    %v7590 = vld [vmem:[%s7588 + $0x8] sm:$0xff]
    %v7591 = vld [vmem:[%s7588 + $0x10] sm:$0xff]
    %v7592 = vld [vmem:[%s7588 + $0x18] sm:$0xff]
    %v7594 = vsel %vm303, %v7587, 0
    %7596 = vmatpush.msra.mxu0 0.0
    %7597 = vmatpush.msra.mxu0 0.0
    %7598 = vmatpush.msra.mxu0 0.0
    %7599 = vmatpush.msra.mxu0 0.0
    %7600 = vmatpush.msra.mxu0 0.0
    %7601 = vmatpush.msra.mxu0 0.0
    %7602 = vmatpush.msra.mxu0 0.0
    %7603 = vmatpush.msra.mxu0 0.0
    %7604 = vmatpush.msra.mxu0 0.0
    %7605 = vmatpush.msra.mxu0 0.0
    %7606 = vmatpush.msra.mxu0 0.0
    %7607 = vmatpush.msra.mxu0 0.0
    %7608 = vmatpush.msra.mxu0 %v7592
    %7609 = vmatpush.msra.mxu0 %v7591
    %7610 = vmatpush.msra.mxu0 %v7590
    %7611 = vmatpush.msra.mxu0 %v7589
    %7612 = vmatmul.f32.gmra.mxu0 %v7594
    %v7613 = vpop.f32.mrf.mxu0
    %v7614 = vadd.f32 0.0, %v7613
    %7615 = vdwg.mxu0
    %v7616 = vadd.f32 %v7583, %v7614
    %s7617 = scalar_lea.vmem [#allocation5], 14
    %v7618 = vld [vmem:[%s7617] ss:$64 sm:$0x1]
    %v7619 = vld [vmem:[%s7617] ss:$64 sm:$0x2]
    %v7620 = vor.u32 %v7618, %v7619
    %s7621 = scalar_lea.vmem %s5, 448
    %v7622 = vld [vmem:[%s7621] sm:$0xff]
    %v7623 = vld [vmem:[%s7621 + $0x8] sm:$0xff]
    %v7624 = vld [vmem:[%s7621 + $0x10] sm:$0xff]
    %v7625 = vld [vmem:[%s7621 + $0x18] sm:$0xff]
    %v7627 = vsel %vm303, %v7620, 0
    %7629 = vmatpush.msra.mxu0 0.0
    %7630 = vmatpush.msra.mxu0 0.0
    %7631 = vmatpush.msra.mxu0 0.0
    %7632 = vmatpush.msra.mxu0 0.0
    %7633 = vmatpush.msra.mxu0 0.0
    %7634 = vmatpush.msra.mxu0 0.0
    %7635 = vmatpush.msra.mxu0 0.0
    %7636 = vmatpush.msra.mxu0 0.0
    %7637 = vmatpush.msra.mxu0 0.0
    %7638 = vmatpush.msra.mxu0 0.0
    %7639 = vmatpush.msra.mxu0 0.0
    %7640 = vmatpush.msra.mxu0 0.0
    %7641 = vmatpush.msra.mxu0 %v7625
    %7642 = vmatpush.msra.mxu0 %v7624
    %7643 = vmatpush.msra.mxu0 %v7623
    %7644 = vmatpush.msra.mxu0 %v7622
    %7645 = vmatmul.f32.gmra.mxu0 %v7627
    %v7646 = vpop.f32.mrf.mxu0
    %v7647 = vadd.f32 0.0, %v7646
    %7648 = vdwg.mxu0
    %v7649 = vadd.f32 %v7616, %v7647
    %s7650 = scalar_lea.vmem [#allocation5], 15
    %v7651 = vld [vmem:[%s7650] ss:$64 sm:$0x1]
    %v7652 = vld [vmem:[%s7650] ss:$64 sm:$0x2]
    %v7653 = vor.u32 %v7651, %v7652
    %s7654 = scalar_lea.vmem %s5, 480
    %v7655 = vld [vmem:[%s7654] sm:$0xff]
    %v7656 = vld [vmem:[%s7654 + $0x8] sm:$0xff]
    %v7657 = vld [vmem:[%s7654 + $0x10] sm:$0xff]
    %v7658 = vld [vmem:[%s7654 + $0x18] sm:$0xff]
    %v7660 = vsel %vm303, %v7653, 0
    %7662 = vmatpush.msra.mxu0 0.0
    %7663 = vmatpush.msra.mxu0 0.0
    %7664 = vmatpush.msra.mxu0 0.0
    %7665 = vmatpush.msra.mxu0 0.0
    %7666 = vmatpush.msra.mxu0 0.0
    %7667 = vmatpush.msra.mxu0 0.0
    %7668 = vmatpush.msra.mxu0 0.0
    %7669 = vmatpush.msra.mxu0 0.0
    %7670 = vmatpush.msra.mxu0 0.0
    %7671 = vmatpush.msra.mxu0 0.0
    %7672 = vmatpush.msra.mxu0 0.0
    %7673 = vmatpush.msra.mxu0 0.0
    %7674 = vmatpush.msra.mxu0 %v7658
    %7675 = vmatpush.msra.mxu0 %v7657
    %7676 = vmatpush.msra.mxu0 %v7656
    %7677 = vmatpush.msra.mxu0 %v7655
    %7678 = vmatmul.f32.gmra.mxu0 %v7660
    %v7679 = vpop.f32.mrf.mxu0
    %v7680 = vadd.f32 0.0, %v7679
    %7681 = vdwg.mxu0
    %v7682 = vadd.f32 %v7649, %v7680
    %s7683 = scalar_lea.vmem [#allocation5], 16
    %v7684 = vld [vmem:[%s7683] ss:$64 sm:$0x1]
    %v7685 = vld [vmem:[%s7683] ss:$64 sm:$0x2]
    %v7686 = vor.u32 %v7684, %v7685
    %s7687 = scalar_lea.vmem %s5, 512
    %v7688 = vld [vmem:[%s7687] sm:$0xff]
    %v7689 = vld [vmem:[%s7687 + $0x8] sm:$0xff]
    %v7690 = vld [vmem:[%s7687 + $0x10] sm:$0xff]
    %v7691 = vld [vmem:[%s7687 + $0x18] sm:$0xff]
    %v7693 = vsel %vm303, %v7686, 0
    %7695 = vmatpush.msra.mxu0 0.0
    %7696 = vmatpush.msra.mxu0 0.0
    %7697 = vmatpush.msra.mxu0 0.0
    %7698 = vmatpush.msra.mxu0 0.0
    %7699 = vmatpush.msra.mxu0 0.0
    %7700 = vmatpush.msra.mxu0 0.0
    %7701 = vmatpush.msra.mxu0 0.0
    %7702 = vmatpush.msra.mxu0 0.0
    %7703 = vmatpush.msra.mxu0 0.0
    %7704 = vmatpush.msra.mxu0 0.0
    %7705 = vmatpush.msra.mxu0 0.0
    %7706 = vmatpush.msra.mxu0 0.0
    %7707 = vmatpush.msra.mxu0 %v7691
    %7708 = vmatpush.msra.mxu0 %v7690
    %7709 = vmatpush.msra.mxu0 %v7689
    %7710 = vmatpush.msra.mxu0 %v7688
    %7711 = vmatmul.f32.gmra.mxu0 %v7693
    %v7712 = vpop.f32.mrf.mxu0
    %v7713 = vadd.f32 0.0, %v7712
    %7714 = vdwg.mxu0
    %v7715 = vadd.f32 %v7682, %v7713
    %s7716 = scalar_lea.vmem [#allocation5], 17
    %v7717 = vld [vmem:[%s7716] ss:$64 sm:$0x1]
    %v7718 = vld [vmem:[%s7716] ss:$64 sm:$0x2]
    %v7719 = vor.u32 %v7717, %v7718
    %s7720 = scalar_lea.vmem %s5, 544
    %v7721 = vld [vmem:[%s7720] sm:$0xff]
    %v7722 = vld [vmem:[%s7720 + $0x8] sm:$0xff]
    %v7723 = vld [vmem:[%s7720 + $0x10] sm:$0xff]
    %v7724 = vld [vmem:[%s7720 + $0x18] sm:$0xff]
    %v7726 = vsel %vm303, %v7719, 0
    %7728 = vmatpush.msra.mxu0 0.0
    %7729 = vmatpush.msra.mxu0 0.0
    %7730 = vmatpush.msra.mxu0 0.0
    %7731 = vmatpush.msra.mxu0 0.0
    %7732 = vmatpush.msra.mxu0 0.0
    %7733 = vmatpush.msra.mxu0 0.0
    %7734 = vmatpush.msra.mxu0 0.0
    %7735 = vmatpush.msra.mxu0 0.0
    %7736 = vmatpush.msra.mxu0 0.0
    %7737 = vmatpush.msra.mxu0 0.0
    %7738 = vmatpush.msra.mxu0 0.0
    %7739 = vmatpush.msra.mxu0 0.0
    %7740 = vmatpush.msra.mxu0 %v7724
    %7741 = vmatpush.msra.mxu0 %v7723
    %7742 = vmatpush.msra.mxu0 %v7722
    %7743 = vmatpush.msra.mxu0 %v7721
    %7744 = vmatmul.f32.gmra.mxu0 %v7726
    %v7745 = vpop.f32.mrf.mxu0
    %v7746 = vadd.f32 0.0, %v7745
    %7747 = vdwg.mxu0
    %v7748 = vadd.f32 %v7715, %v7746
    %s7749 = scalar_lea.vmem [#allocation5], 18
    %v7750 = vld [vmem:[%s7749] ss:$64 sm:$0x1]
    %v7751 = vld [vmem:[%s7749] ss:$64 sm:$0x2]
    %v7752 = vor.u32 %v7750, %v7751
    %s7753 = scalar_lea.vmem %s5, 576
    %v7754 = vld [vmem:[%s7753] sm:$0xff]
    %v7755 = vld [vmem:[%s7753 + $0x8] sm:$0xff]
    %v7756 = vld [vmem:[%s7753 + $0x10] sm:$0xff]
    %v7757 = vld [vmem:[%s7753 + $0x18] sm:$0xff]
    %v7759 = vsel %vm303, %v7752, 0
    %7761 = vmatpush.msra.mxu0 0.0
    %7762 = vmatpush.msra.mxu0 0.0
    %7763 = vmatpush.msra.mxu0 0.0
    %7764 = vmatpush.msra.mxu0 0.0
    %7765 = vmatpush.msra.mxu0 0.0
    %7766 = vmatpush.msra.mxu0 0.0
    %7767 = vmatpush.msra.mxu0 0.0
    %7768 = vmatpush.msra.mxu0 0.0
    %7769 = vmatpush.msra.mxu0 0.0
    %7770 = vmatpush.msra.mxu0 0.0
    %7771 = vmatpush.msra.mxu0 0.0
    %7772 = vmatpush.msra.mxu0 0.0
    %7773 = vmatpush.msra.mxu0 %v7757
    %7774 = vmatpush.msra.mxu0 %v7756
    %7775 = vmatpush.msra.mxu0 %v7755
    %7776 = vmatpush.msra.mxu0 %v7754
    %7777 = vmatmul.f32.gmra.mxu0 %v7759
    %v7778 = vpop.f32.mrf.mxu0
    %v7779 = vadd.f32 0.0, %v7778
    %7780 = vdwg.mxu0
    %v7781 = vadd.f32 %v7748, %v7779
    %s7782 = scalar_lea.vmem [#allocation5], 19
    %v7783 = vld [vmem:[%s7782] ss:$64 sm:$0x1]
    %v7784 = vld [vmem:[%s7782] ss:$64 sm:$0x2]
    %v7785 = vor.u32 %v7783, %v7784
    %s7786 = scalar_lea.vmem %s5, 608
    %v7787 = vld [vmem:[%s7786] sm:$0xff]
    %v7788 = vld [vmem:[%s7786 + $0x8] sm:$0xff]
    %v7789 = vld [vmem:[%s7786 + $0x10] sm:$0xff]
    %v7790 = vld [vmem:[%s7786 + $0x18] sm:$0xff]
    %v7792 = vsel %vm303, %v7785, 0
    %7794 = vmatpush.msra.mxu0 0.0
    %7795 = vmatpush.msra.mxu0 0.0
    %7796 = vmatpush.msra.mxu0 0.0
    %7797 = vmatpush.msra.mxu0 0.0
    %7798 = vmatpush.msra.mxu0 0.0
    %7799 = vmatpush.msra.mxu0 0.0
    %7800 = vmatpush.msra.mxu0 0.0
    %7801 = vmatpush.msra.mxu0 0.0
    %7802 = vmatpush.msra.mxu0 0.0
    %7803 = vmatpush.msra.mxu0 0.0
    %7804 = vmatpush.msra.mxu0 0.0
    %7805 = vmatpush.msra.mxu0 0.0
    %7806 = vmatpush.msra.mxu0 %v7790
    %7807 = vmatpush.msra.mxu0 %v7789
    %7808 = vmatpush.msra.mxu0 %v7788
    %7809 = vmatpush.msra.mxu0 %v7787
    %7810 = vmatmul.f32.gmra.mxu0 %v7792
    %v7811 = vpop.f32.mrf.mxu0
    %v7812 = vadd.f32 0.0, %v7811
    %7813 = vdwg.mxu0
    %v7814 = vadd.f32 %v7781, %v7812
    %s7815 = scalar_lea.vmem [#allocation5], 20
    %v7816 = vld [vmem:[%s7815] ss:$64 sm:$0x1]
    %v7817 = vld [vmem:[%s7815] ss:$64 sm:$0x2]
    %v7818 = vor.u32 %v7816, %v7817
    %s7819 = scalar_lea.vmem %s5, 640
    %v7820 = vld [vmem:[%s7819] sm:$0xff]
    %v7821 = vld [vmem:[%s7819 + $0x8] sm:$0xff]
    %v7822 = vld [vmem:[%s7819 + $0x10] sm:$0xff]
    %v7823 = vld [vmem:[%s7819 + $0x18] sm:$0xff]
    %v7825 = vsel %vm303, %v7818, 0
    %7827 = vmatpush.msra.mxu0 0.0
    %7828 = vmatpush.msra.mxu0 0.0
    %7829 = vmatpush.msra.mxu0 0.0
    %7830 = vmatpush.msra.mxu0 0.0
    %7831 = vmatpush.msra.mxu0 0.0
    %7832 = vmatpush.msra.mxu0 0.0
    %7833 = vmatpush.msra.mxu0 0.0
    %7834 = vmatpush.msra.mxu0 0.0
    %7835 = vmatpush.msra.mxu0 0.0
    %7836 = vmatpush.msra.mxu0 0.0
    %7837 = vmatpush.msra.mxu0 0.0
    %7838 = vmatpush.msra.mxu0 0.0
    %7839 = vmatpush.msra.mxu0 %v7823
    %7840 = vmatpush.msra.mxu0 %v7822
    %7841 = vmatpush.msra.mxu0 %v7821
    %7842 = vmatpush.msra.mxu0 %v7820
    %7843 = vmatmul.f32.gmra.mxu0 %v7825
    %v7844 = vpop.f32.mrf.mxu0
    %v7845 = vadd.f32 0.0, %v7844
    %7846 = vdwg.mxu0
    %v7847 = vadd.f32 %v7814, %v7845
    %s7848 = scalar_lea.vmem [#allocation5], 21
    %v7849 = vld [vmem:[%s7848] ss:$64 sm:$0x1]
    %v7850 = vld [vmem:[%s7848] ss:$64 sm:$0x2]
    %v7851 = vor.u32 %v7849, %v7850
    %s7852 = scalar_lea.vmem %s5, 672
    %v7853 = vld [vmem:[%s7852] sm:$0xff]
    %v7854 = vld [vmem:[%s7852 + $0x8] sm:$0xff]
    %v7855 = vld [vmem:[%s7852 + $0x10] sm:$0xff]
    %v7856 = vld [vmem:[%s7852 + $0x18] sm:$0xff]
    %v7858 = vsel %vm303, %v7851, 0
    %7860 = vmatpush.msra.mxu0 0.0
    %7861 = vmatpush.msra.mxu0 0.0
    %7862 = vmatpush.msra.mxu0 0.0
    %7863 = vmatpush.msra.mxu0 0.0
    %7864 = vmatpush.msra.mxu0 0.0
    %7865 = vmatpush.msra.mxu0 0.0
    %7866 = vmatpush.msra.mxu0 0.0
    %7867 = vmatpush.msra.mxu0 0.0
    %7868 = vmatpush.msra.mxu0 0.0
    %7869 = vmatpush.msra.mxu0 0.0
    %7870 = vmatpush.msra.mxu0 0.0
    %7871 = vmatpush.msra.mxu0 0.0
    %7872 = vmatpush.msra.mxu0 %v7856
    %7873 = vmatpush.msra.mxu0 %v7855
    %7874 = vmatpush.msra.mxu0 %v7854
    %7875 = vmatpush.msra.mxu0 %v7853
    %7876 = vmatmul.f32.gmra.mxu0 %v7858
    %v7877 = vpop.f32.mrf.mxu0
    %v7878 = vadd.f32 0.0, %v7877
    %7879 = vdwg.mxu0
    %v7880 = vadd.f32 %v7847, %v7878
    %s7881 = scalar_lea.vmem [#allocation5], 22
    %v7882 = vld [vmem:[%s7881] ss:$64 sm:$0x1]
    %v7883 = vld [vmem:[%s7881] ss:$64 sm:$0x2]
    %v7884 = vor.u32 %v7882, %v7883
    %s7885 = scalar_lea.vmem %s5, 704
    %v7886 = vld [vmem:[%s7885] sm:$0xff]
    %v7887 = vld [vmem:[%s7885 + $0x8] sm:$0xff]
    %v7888 = vld [vmem:[%s7885 + $0x10] sm:$0xff]
    %v7889 = vld [vmem:[%s7885 + $0x18] sm:$0xff]
    %v7891 = vsel %vm303, %v7884, 0
    %7893 = vmatpush.msra.mxu0 0.0
    %7894 = vmatpush.msra.mxu0 0.0
    %7895 = vmatpush.msra.mxu0 0.0
    %7896 = vmatpush.msra.mxu0 0.0
    %7897 = vmatpush.msra.mxu0 0.0
    %7898 = vmatpush.msra.mxu0 0.0
    %7899 = vmatpush.msra.mxu0 0.0
    %7900 = vmatpush.msra.mxu0 0.0
    %7901 = vmatpush.msra.mxu0 0.0
    %7902 = vmatpush.msra.mxu0 0.0
    %7903 = vmatpush.msra.mxu0 0.0
    %7904 = vmatpush.msra.mxu0 0.0
    %7905 = vmatpush.msra.mxu0 %v7889
    %7906 = vmatpush.msra.mxu0 %v7888
    %7907 = vmatpush.msra.mxu0 %v7887
    %7908 = vmatpush.msra.mxu0 %v7886
    %7909 = vmatmul.f32.gmra.mxu0 %v7891
    %v7910 = vpop.f32.mrf.mxu0
    %v7911 = vadd.f32 0.0, %v7910
    %7912 = vdwg.mxu0
    %v7913 = vadd.f32 %v7880, %v7911
    %s7914 = scalar_lea.vmem [#allocation5], 23
    %v7915 = vld [vmem:[%s7914] ss:$64 sm:$0x1]
    %v7916 = vld [vmem:[%s7914] ss:$64 sm:$0x2]
    %v7917 = vor.u32 %v7915, %v7916
    %s7918 = scalar_lea.vmem %s5, 736
    %v7919 = vld [vmem:[%s7918] sm:$0xff]
    %v7920 = vld [vmem:[%s7918 + $0x8] sm:$0xff]
    %v7921 = vld [vmem:[%s7918 + $0x10] sm:$0xff]
    %v7922 = vld [vmem:[%s7918 + $0x18] sm:$0xff]
    %v7924 = vsel %vm303, %v7917, 0
    %7926 = vmatpush.msra.mxu0 0.0
    %7927 = vmatpush.msra.mxu0 0.0
    %7928 = vmatpush.msra.mxu0 0.0
    %7929 = vmatpush.msra.mxu0 0.0
    %7930 = vmatpush.msra.mxu0 0.0
    %7931 = vmatpush.msra.mxu0 0.0
    %7932 = vmatpush.msra.mxu0 0.0
    %7933 = vmatpush.msra.mxu0 0.0
    %7934 = vmatpush.msra.mxu0 0.0
    %7935 = vmatpush.msra.mxu0 0.0
    %7936 = vmatpush.msra.mxu0 0.0
    %7937 = vmatpush.msra.mxu0 0.0
    %7938 = vmatpush.msra.mxu0 %v7922
    %7939 = vmatpush.msra.mxu0 %v7921
    %7940 = vmatpush.msra.mxu0 %v7920
    %7941 = vmatpush.msra.mxu0 %v7919
    %7942 = vmatmul.f32.gmra.mxu0 %v7924
    %v7943 = vpop.f32.mrf.mxu0
    %v7944 = vadd.f32 0.0, %v7943
    %7945 = vdwg.mxu0
    %v7946 = vadd.f32 %v7913, %v7944
    %s7947 = scalar_lea.vmem [#allocation5], 24
    %v7948 = vld [vmem:[%s7947] ss:$64 sm:$0x1]
    %v7949 = vld [vmem:[%s7947] ss:$64 sm:$0x2]
    %v7950 = vor.u32 %v7948, %v7949
    %s7951 = scalar_lea.vmem %s5, 768
    %v7952 = vld [vmem:[%s7951] sm:$0xff]
    %v7953 = vld [vmem:[%s7951 + $0x8] sm:$0xff]
    %v7954 = vld [vmem:[%s7951 + $0x10] sm:$0xff]
    %v7955 = vld [vmem:[%s7951 + $0x18] sm:$0xff]
    %v7957 = vsel %vm303, %v7950, 0
    %7959 = vmatpush.msra.mxu0 0.0
    %7960 = vmatpush.msra.mxu0 0.0
    %7961 = vmatpush.msra.mxu0 0.0
    %7962 = vmatpush.msra.mxu0 0.0
    %7963 = vmatpush.msra.mxu0 0.0
    %7964 = vmatpush.msra.mxu0 0.0
    %7965 = vmatpush.msra.mxu0 0.0
    %7966 = vmatpush.msra.mxu0 0.0
    %7967 = vmatpush.msra.mxu0 0.0
    %7968 = vmatpush.msra.mxu0 0.0
    %7969 = vmatpush.msra.mxu0 0.0
    %7970 = vmatpush.msra.mxu0 0.0
    %7971 = vmatpush.msra.mxu0 %v7955
    %7972 = vmatpush.msra.mxu0 %v7954
    %7973 = vmatpush.msra.mxu0 %v7953
    %7974 = vmatpush.msra.mxu0 %v7952
    %7975 = vmatmul.f32.gmra.mxu0 %v7957
    %v7976 = vpop.f32.mrf.mxu0
    %v7977 = vadd.f32 0.0, %v7976
    %7978 = vdwg.mxu0
    %v7979 = vadd.f32 %v7946, %v7977
    %s7980 = scalar_lea.vmem [#allocation5], 25
    %v7981 = vld [vmem:[%s7980] ss:$64 sm:$0x1]
    %v7982 = vld [vmem:[%s7980] ss:$64 sm:$0x2]
    %v7983 = vor.u32 %v7981, %v7982
    %s7984 = scalar_lea.vmem %s5, 800
    %v7985 = vld [vmem:[%s7984] sm:$0xff]
    %v7986 = vld [vmem:[%s7984 + $0x8] sm:$0xff]
    %v7987 = vld [vmem:[%s7984 + $0x10] sm:$0xff]
    %v7988 = vld [vmem:[%s7984 + $0x18] sm:$0xff]
    %v7990 = vsel %vm303, %v7983, 0
    %7992 = vmatpush.msra.mxu0 0.0
    %7993 = vmatpush.msra.mxu0 0.0
    %7994 = vmatpush.msra.mxu0 0.0
    %7995 = vmatpush.msra.mxu0 0.0
    %7996 = vmatpush.msra.mxu0 0.0
    %7997 = vmatpush.msra.mxu0 0.0
    %7998 = vmatpush.msra.mxu0 0.0
    %7999 = vmatpush.msra.mxu0 0.0
    %8000 = vmatpush.msra.mxu0 0.0
    %8001 = vmatpush.msra.mxu0 0.0
    %8002 = vmatpush.msra.mxu0 0.0
    %8003 = vmatpush.msra.mxu0 0.0
    %8004 = vmatpush.msra.mxu0 %v7988
    %8005 = vmatpush.msra.mxu0 %v7987
    %8006 = vmatpush.msra.mxu0 %v7986
    %8007 = vmatpush.msra.mxu0 %v7985
    %8008 = vmatmul.f32.gmra.mxu0 %v7990
    %v8009 = vpop.f32.mrf.mxu0
    %v8010 = vadd.f32 0.0, %v8009
    %8011 = vdwg.mxu0
    %v8012 = vadd.f32 %v7979, %v8010
    %s8013 = scalar_lea.vmem [#allocation5], 26
    %v8014 = vld [vmem:[%s8013] ss:$64 sm:$0x1]
    %v8015 = vld [vmem:[%s8013] ss:$64 sm:$0x2]
    %v8016 = vor.u32 %v8014, %v8015
    %s8017 = scalar_lea.vmem %s5, 832
    %v8018 = vld [vmem:[%s8017] sm:$0xff]
    %v8019 = vld [vmem:[%s8017 + $0x8] sm:$0xff]
    %v8020 = vld [vmem:[%s8017 + $0x10] sm:$0xff]
    %v8021 = vld [vmem:[%s8017 + $0x18] sm:$0xff]
    %v8023 = vsel %vm303, %v8016, 0
    %8025 = vmatpush.msra.mxu0 0.0
    %8026 = vmatpush.msra.mxu0 0.0
    %8027 = vmatpush.msra.mxu0 0.0
    %8028 = vmatpush.msra.mxu0 0.0
    %8029 = vmatpush.msra.mxu0 0.0
    %8030 = vmatpush.msra.mxu0 0.0
    %8031 = vmatpush.msra.mxu0 0.0
    %8032 = vmatpush.msra.mxu0 0.0
    %8033 = vmatpush.msra.mxu0 0.0
    %8034 = vmatpush.msra.mxu0 0.0
    %8035 = vmatpush.msra.mxu0 0.0
    %8036 = vmatpush.msra.mxu0 0.0
    %8037 = vmatpush.msra.mxu0 %v8021
    %8038 = vmatpush.msra.mxu0 %v8020
    %8039 = vmatpush.msra.mxu0 %v8019
    %8040 = vmatpush.msra.mxu0 %v8018
    %8041 = vmatmul.f32.gmra.mxu0 %v8023
    %v8042 = vpop.f32.mrf.mxu0
    %v8043 = vadd.f32 0.0, %v8042
    %8044 = vdwg.mxu0
    %v8045 = vadd.f32 %v8012, %v8043
    %s8046 = scalar_lea.vmem [#allocation5], 27
    %v8047 = vld [vmem:[%s8046] ss:$64 sm:$0x1]
    %v8048 = vld [vmem:[%s8046] ss:$64 sm:$0x2]
    %v8049 = vor.u32 %v8047, %v8048
    %s8050 = scalar_lea.vmem %s5, 864
    %v8051 = vld [vmem:[%s8050] sm:$0xff]
    %v8052 = vld [vmem:[%s8050 + $0x8] sm:$0xff]
    %v8053 = vld [vmem:[%s8050 + $0x10] sm:$0xff]
    %v8054 = vld [vmem:[%s8050 + $0x18] sm:$0xff]
    %v8056 = vsel %vm303, %v8049, 0
    %8058 = vmatpush.msra.mxu0 0.0
    %8059 = vmatpush.msra.mxu0 0.0
    %8060 = vmatpush.msra.mxu0 0.0
    %8061 = vmatpush.msra.mxu0 0.0
    %8062 = vmatpush.msra.mxu0 0.0
    %8063 = vmatpush.msra.mxu0 0.0
    %8064 = vmatpush.msra.mxu0 0.0
    %8065 = vmatpush.msra.mxu0 0.0
    %8066 = vmatpush.msra.mxu0 0.0
    %8067 = vmatpush.msra.mxu0 0.0
    %8068 = vmatpush.msra.mxu0 0.0
    %8069 = vmatpush.msra.mxu0 0.0
    %8070 = vmatpush.msra.mxu0 %v8054
    %8071 = vmatpush.msra.mxu0 %v8053
    %8072 = vmatpush.msra.mxu0 %v8052
    %8073 = vmatpush.msra.mxu0 %v8051
    %8074 = vmatmul.f32.gmra.mxu0 %v8056
    %v8075 = vpop.f32.mrf.mxu0
    %v8076 = vadd.f32 0.0, %v8075
    %8077 = vdwg.mxu0
    %v8078 = vadd.f32 %v8045, %v8076
    %s8079 = scalar_lea.vmem [#allocation5], 28
    %v8080 = vld [vmem:[%s8079] ss:$64 sm:$0x1]
    %v8081 = vld [vmem:[%s8079] ss:$64 sm:$0x2]
    %v8082 = vor.u32 %v8080, %v8081
    %s8083 = scalar_lea.vmem %s5, 896
    %v8084 = vld [vmem:[%s8083] sm:$0xff]
    %v8085 = vld [vmem:[%s8083 + $0x8] sm:$0xff]
    %v8086 = vld [vmem:[%s8083 + $0x10] sm:$0xff]
    %v8087 = vld [vmem:[%s8083 + $0x18] sm:$0xff]
    %v8089 = vsel %vm303, %v8082, 0
    %8091 = vmatpush.msra.mxu0 0.0
    %8092 = vmatpush.msra.mxu0 0.0
    %8093 = vmatpush.msra.mxu0 0.0
    %8094 = vmatpush.msra.mxu0 0.0
    %8095 = vmatpush.msra.mxu0 0.0
    %8096 = vmatpush.msra.mxu0 0.0
    %8097 = vmatpush.msra.mxu0 0.0
    %8098 = vmatpush.msra.mxu0 0.0
    %8099 = vmatpush.msra.mxu0 0.0
    %8100 = vmatpush.msra.mxu0 0.0
    %8101 = vmatpush.msra.mxu0 0.0
    %8102 = vmatpush.msra.mxu0 0.0
    %8103 = vmatpush.msra.mxu0 %v8087
    %8104 = vmatpush.msra.mxu0 %v8086
    %8105 = vmatpush.msra.mxu0 %v8085
    %8106 = vmatpush.msra.mxu0 %v8084
    %8107 = vmatmul.f32.gmra.mxu0 %v8089
    %v8108 = vpop.f32.mrf.mxu0
    %v8109 = vadd.f32 0.0, %v8108
    %8110 = vdwg.mxu0
    %v8111 = vadd.f32 %v8078, %v8109
    %s8112 = scalar_lea.vmem [#allocation5], 29
    %v8113 = vld [vmem:[%s8112] ss:$64 sm:$0x1]
    %v8114 = vld [vmem:[%s8112] ss:$64 sm:$0x2]
    %v8115 = vor.u32 %v8113, %v8114
    %s8116 = scalar_lea.vmem %s5, 928
    %v8117 = vld [vmem:[%s8116] sm:$0xff]
    %v8118 = vld [vmem:[%s8116 + $0x8] sm:$0xff]
    %v8119 = vld [vmem:[%s8116 + $0x10] sm:$0xff]
    %v8120 = vld [vmem:[%s8116 + $0x18] sm:$0xff]
    %v8122 = vsel %vm303, %v8115, 0
    %8124 = vmatpush.msra.mxu0 0.0
    %8125 = vmatpush.msra.mxu0 0.0
    %8126 = vmatpush.msra.mxu0 0.0
    %8127 = vmatpush.msra.mxu0 0.0
    %8128 = vmatpush.msra.mxu0 0.0
    %8129 = vmatpush.msra.mxu0 0.0
    %8130 = vmatpush.msra.mxu0 0.0
    %8131 = vmatpush.msra.mxu0 0.0
    %8132 = vmatpush.msra.mxu0 0.0
    %8133 = vmatpush.msra.mxu0 0.0
    %8134 = vmatpush.msra.mxu0 0.0
    %8135 = vmatpush.msra.mxu0 0.0
    %8136 = vmatpush.msra.mxu0 %v8120
    %8137 = vmatpush.msra.mxu0 %v8119
    %8138 = vmatpush.msra.mxu0 %v8118
    %8139 = vmatpush.msra.mxu0 %v8117
    %8140 = vmatmul.f32.gmra.mxu0 %v8122
    %v8141 = vpop.f32.mrf.mxu0
    %v8142 = vadd.f32 0.0, %v8141
    %8143 = vdwg.mxu0
    %v8144 = vadd.f32 %v8111, %v8142
    %s8145 = scalar_lea.vmem [#allocation5], 30
    %v8146 = vld [vmem:[%s8145] ss:$64 sm:$0x1]
    %v8147 = vld [vmem:[%s8145] ss:$64 sm:$0x2]
    %v8148 = vor.u32 %v8146, %v8147
    %s8149 = scalar_lea.vmem %s5, 960
    %v8150 = vld [vmem:[%s8149] sm:$0xff]
    %v8151 = vld [vmem:[%s8149 + $0x8] sm:$0xff]
    %v8152 = vld [vmem:[%s8149 + $0x10] sm:$0xff]
    %v8153 = vld [vmem:[%s8149 + $0x18] sm:$0xff]
    %v8155 = vsel %vm303, %v8148, 0
    %8157 = vmatpush.msra.mxu0 0.0
    %8158 = vmatpush.msra.mxu0 0.0
    %8159 = vmatpush.msra.mxu0 0.0
    %8160 = vmatpush.msra.mxu0 0.0
    %8161 = vmatpush.msra.mxu0 0.0
    %8162 = vmatpush.msra.mxu0 0.0
    %8163 = vmatpush.msra.mxu0 0.0
    %8164 = vmatpush.msra.mxu0 0.0
    %8165 = vmatpush.msra.mxu0 0.0
    %8166 = vmatpush.msra.mxu0 0.0
    %8167 = vmatpush.msra.mxu0 0.0
    %8168 = vmatpush.msra.mxu0 0.0
    %8169 = vmatpush.msra.mxu0 %v8153
    %8170 = vmatpush.msra.mxu0 %v8152
    %8171 = vmatpush.msra.mxu0 %v8151
    %8172 = vmatpush.msra.mxu0 %v8150
    %8173 = vmatmul.f32.gmra.mxu0 %v8155
    %v8174 = vpop.f32.mrf.mxu0
    %v8175 = vadd.f32 0.0, %v8174
    %8176 = vdwg.mxu0
    %v8177 = vadd.f32 %v8144, %v8175
    %s8178 = scalar_lea.vmem [#allocation5], 31
    %v8179 = vld [vmem:[%s8178] ss:$64 sm:$0x1]
    %v8180 = vld [vmem:[%s8178] ss:$64 sm:$0x2]
    %v8181 = vor.u32 %v8179, %v8180
    %s8182 = scalar_lea.vmem %s5, 992
    %v8183 = vld [vmem:[%s8182] sm:$0xff]
    %v8184 = vld [vmem:[%s8182 + $0x8] sm:$0xff]
    %v8185 = vld [vmem:[%s8182 + $0x10] sm:$0xff]
    %v8186 = vld [vmem:[%s8182 + $0x18] sm:$0xff]
    %v8188 = vsel %vm303, %v8181, 0
    %8190 = vmatpush.msra.mxu0 0.0
    %8191 = vmatpush.msra.mxu0 0.0
    %8192 = vmatpush.msra.mxu0 0.0
    %8193 = vmatpush.msra.mxu0 0.0
    %8194 = vmatpush.msra.mxu0 0.0
    %8195 = vmatpush.msra.mxu0 0.0
    %8196 = vmatpush.msra.mxu0 0.0
    %8197 = vmatpush.msra.mxu0 0.0
    %8198 = vmatpush.msra.mxu0 0.0
    %8199 = vmatpush.msra.mxu0 0.0
    %8200 = vmatpush.msra.mxu0 0.0
    %8201 = vmatpush.msra.mxu0 0.0
    %8202 = vmatpush.msra.mxu0 %v8186
    %8203 = vmatpush.msra.mxu0 %v8185
    %8204 = vmatpush.msra.mxu0 %v8184
    %8205 = vmatpush.msra.mxu0 %v8183
    %8206 = vmatmul.f32.gmra.mxu0 %v8188
    %v8207 = vpop.f32.mrf.mxu0
    %v8208 = vadd.f32 0.0, %v8207
    %8209 = vdwg.mxu0
    %v8210 = vadd.f32 %v8177, %v8208
    %s8211 = scalar_lea.vmem [#allocation5], 32
    %v8212 = vld [vmem:[%s8211] ss:$64 sm:$0x1]
    %v8213 = vld [vmem:[%s8211] ss:$64 sm:$0x2]
    %v8214 = vor.u32 %v8212, %v8213
    %s8215 = scalar_lea.vmem %s5, 1024
    %v8216 = vld [vmem:[%s8215] sm:$0xff]
    %v8217 = vld [vmem:[%s8215 + $0x8] sm:$0xff]
    %v8218 = vld [vmem:[%s8215 + $0x10] sm:$0xff]
    %v8219 = vld [vmem:[%s8215 + $0x18] sm:$0xff]
    %v8221 = vsel %vm303, %v8214, 0
    %8223 = vmatpush.msra.mxu0 0.0
    %8224 = vmatpush.msra.mxu0 0.0
    %8225 = vmatpush.msra.mxu0 0.0
    %8226 = vmatpush.msra.mxu0 0.0
    %8227 = vmatpush.msra.mxu0 0.0
    %8228 = vmatpush.msra.mxu0 0.0
    %8229 = vmatpush.msra.mxu0 0.0
    %8230 = vmatpush.msra.mxu0 0.0
    %8231 = vmatpush.msra.mxu0 0.0
    %8232 = vmatpush.msra.mxu0 0.0
    %8233 = vmatpush.msra.mxu0 0.0
    %8234 = vmatpush.msra.mxu0 0.0
    %8235 = vmatpush.msra.mxu0 %v8219
    %8236 = vmatpush.msra.mxu0 %v8218
    %8237 = vmatpush.msra.mxu0 %v8217
    %8238 = vmatpush.msra.mxu0 %v8216
    %8239 = vmatmul.f32.gmra.mxu0 %v8221
    %v8240 = vpop.f32.mrf.mxu0
    %v8241 = vadd.f32 0.0, %v8240
    %8242 = vdwg.mxu0
    %v8243 = vadd.f32 %v8210, %v8241
    %s8244 = scalar_lea.vmem [#allocation5], 33
    %v8245 = vld [vmem:[%s8244] ss:$64 sm:$0x1]
    %v8246 = vld [vmem:[%s8244] ss:$64 sm:$0x2]
    %v8247 = vor.u32 %v8245, %v8246
    %s8248 = scalar_lea.vmem %s5, 1056
    %v8249 = vld [vmem:[%s8248] sm:$0xff]
    %v8250 = vld [vmem:[%s8248 + $0x8] sm:$0xff]
    %v8251 = vld [vmem:[%s8248 + $0x10] sm:$0xff]
    %v8252 = vld [vmem:[%s8248 + $0x18] sm:$0xff]
    %v8254 = vsel %vm303, %v8247, 0
    %8256 = vmatpush.msra.mxu0 0.0
    %8257 = vmatpush.msra.mxu0 0.0
    %8258 = vmatpush.msra.mxu0 0.0
    %8259 = vmatpush.msra.mxu0 0.0
    %8260 = vmatpush.msra.mxu0 0.0
    %8261 = vmatpush.msra.mxu0 0.0
    %8262 = vmatpush.msra.mxu0 0.0
    %8263 = vmatpush.msra.mxu0 0.0
    %8264 = vmatpush.msra.mxu0 0.0
    %8265 = vmatpush.msra.mxu0 0.0
    %8266 = vmatpush.msra.mxu0 0.0
    %8267 = vmatpush.msra.mxu0 0.0
    %8268 = vmatpush.msra.mxu0 %v8252
    %8269 = vmatpush.msra.mxu0 %v8251
    %8270 = vmatpush.msra.mxu0 %v8250
    %8271 = vmatpush.msra.mxu0 %v8249
    %8272 = vmatmul.f32.gmra.mxu0 %v8254
    %v8273 = vpop.f32.mrf.mxu0
    %v8274 = vadd.f32 0.0, %v8273
    %8275 = vdwg.mxu0
    %v8276 = vadd.f32 %v8243, %v8274
    %s8277 = scalar_lea.vmem [#allocation5], 34
    %v8278 = vld [vmem:[%s8277] ss:$64 sm:$0x1]
    %v8279 = vld [vmem:[%s8277] ss:$64 sm:$0x2]
    %v8280 = vor.u32 %v8278, %v8279
    %s8281 = scalar_lea.vmem %s5, 1088
    %v8282 = vld [vmem:[%s8281] sm:$0xff]
    %v8283 = vld [vmem:[%s8281 + $0x8] sm:$0xff]
    %v8284 = vld [vmem:[%s8281 + $0x10] sm:$0xff]
    %v8285 = vld [vmem:[%s8281 + $0x18] sm:$0xff]
    %v8287 = vsel %vm303, %v8280, 0
    %8289 = vmatpush.msra.mxu0 0.0
    %8290 = vmatpush.msra.mxu0 0.0
    %8291 = vmatpush.msra.mxu0 0.0
    %8292 = vmatpush.msra.mxu0 0.0
    %8293 = vmatpush.msra.mxu0 0.0
    %8294 = vmatpush.msra.mxu0 0.0
    %8295 = vmatpush.msra.mxu0 0.0
    %8296 = vmatpush.msra.mxu0 0.0
    %8297 = vmatpush.msra.mxu0 0.0
    %8298 = vmatpush.msra.mxu0 0.0
    %8299 = vmatpush.msra.mxu0 0.0
    %8300 = vmatpush.msra.mxu0 0.0
    %8301 = vmatpush.msra.mxu0 %v8285
    %8302 = vmatpush.msra.mxu0 %v8284
    %8303 = vmatpush.msra.mxu0 %v8283
    %8304 = vmatpush.msra.mxu0 %v8282
    %8305 = vmatmul.f32.gmra.mxu0 %v8287
    %v8306 = vpop.f32.mrf.mxu0
    %v8307 = vadd.f32 0.0, %v8306
    %8308 = vdwg.mxu0
    %v8309 = vadd.f32 %v8276, %v8307
    %s8310 = scalar_lea.vmem [#allocation5], 35
    %v8311 = vld [vmem:[%s8310] ss:$64 sm:$0x1]
    %v8312 = vld [vmem:[%s8310] ss:$64 sm:$0x2]
    %v8313 = vor.u32 %v8311, %v8312
    %s8314 = scalar_lea.vmem %s5, 1120
    %v8315 = vld [vmem:[%s8314] sm:$0xff]
    %v8316 = vld [vmem:[%s8314 + $0x8] sm:$0xff]
    %v8317 = vld [vmem:[%s8314 + $0x10] sm:$0xff]
    %v8318 = vld [vmem:[%s8314 + $0x18] sm:$0xff]
    %v8320 = vsel %vm303, %v8313, 0
    %8322 = vmatpush.msra.mxu0 0.0
    %8323 = vmatpush.msra.mxu0 0.0
    %8324 = vmatpush.msra.mxu0 0.0
    %8325 = vmatpush.msra.mxu0 0.0
    %8326 = vmatpush.msra.mxu0 0.0
    %8327 = vmatpush.msra.mxu0 0.0
    %8328 = vmatpush.msra.mxu0 0.0
    %8329 = vmatpush.msra.mxu0 0.0
    %8330 = vmatpush.msra.mxu0 0.0
    %8331 = vmatpush.msra.mxu0 0.0
    %8332 = vmatpush.msra.mxu0 0.0
    %8333 = vmatpush.msra.mxu0 0.0
    %8334 = vmatpush.msra.mxu0 %v8318
    %8335 = vmatpush.msra.mxu0 %v8317
    %8336 = vmatpush.msra.mxu0 %v8316
    %8337 = vmatpush.msra.mxu0 %v8315
    %8338 = vmatmul.f32.gmra.mxu0 %v8320
    %v8339 = vpop.f32.mrf.mxu0
    %v8340 = vadd.f32 0.0, %v8339
    %8341 = vdwg.mxu0
    %v8342 = vadd.f32 %v8309, %v8340
    %s8343 = scalar_lea.vmem [#allocation5], 36
    %v8344 = vld [vmem:[%s8343] ss:$64 sm:$0x1]
    %v8345 = vld [vmem:[%s8343] ss:$64 sm:$0x2]
    %v8346 = vor.u32 %v8344, %v8345
    %s8347 = scalar_lea.vmem %s5, 1152
    %v8348 = vld [vmem:[%s8347] sm:$0xff]
    %v8349 = vld [vmem:[%s8347 + $0x8] sm:$0xff]
    %v8350 = vld [vmem:[%s8347 + $0x10] sm:$0xff]
    %v8351 = vld [vmem:[%s8347 + $0x18] sm:$0xff]
    %v8353 = vsel %vm303, %v8346, 0
    %8355 = vmatpush.msra.mxu0 0.0
    %8356 = vmatpush.msra.mxu0 0.0
    %8357 = vmatpush.msra.mxu0 0.0
    %8358 = vmatpush.msra.mxu0 0.0
    %8359 = vmatpush.msra.mxu0 0.0
    %8360 = vmatpush.msra.mxu0 0.0
    %8361 = vmatpush.msra.mxu0 0.0
    %8362 = vmatpush.msra.mxu0 0.0
    %8363 = vmatpush.msra.mxu0 0.0
    %8364 = vmatpush.msra.mxu0 0.0
    %8365 = vmatpush.msra.mxu0 0.0
    %8366 = vmatpush.msra.mxu0 0.0
    %8367 = vmatpush.msra.mxu0 %v8351
    %8368 = vmatpush.msra.mxu0 %v8350
    %8369 = vmatpush.msra.mxu0 %v8349
    %8370 = vmatpush.msra.mxu0 %v8348
    %8371 = vmatmul.f32.gmra.mxu0 %v8353
    %v8372 = vpop.f32.mrf.mxu0
    %v8373 = vadd.f32 0.0, %v8372
    %8374 = vdwg.mxu0
    %v8375 = vadd.f32 %v8342, %v8373
    %s8376 = scalar_lea.vmem [#allocation5], 37
    %v8377 = vld [vmem:[%s8376] ss:$64 sm:$0x1]
    %v8378 = vld [vmem:[%s8376] ss:$64 sm:$0x2]
    %v8379 = vor.u32 %v8377, %v8378
    %s8380 = scalar_lea.vmem %s5, 1184
    %v8381 = vld [vmem:[%s8380] sm:$0xff]
    %v8382 = vld [vmem:[%s8380 + $0x8] sm:$0xff]
    %v8383 = vld [vmem:[%s8380 + $0x10] sm:$0xff]
    %v8384 = vld [vmem:[%s8380 + $0x18] sm:$0xff]
    %v8386 = vsel %vm303, %v8379, 0
    %8388 = vmatpush.msra.mxu0 0.0
    %8389 = vmatpush.msra.mxu0 0.0
    %8390 = vmatpush.msra.mxu0 0.0
    %8391 = vmatpush.msra.mxu0 0.0
    %8392 = vmatpush.msra.mxu0 0.0
    %8393 = vmatpush.msra.mxu0 0.0
    %8394 = vmatpush.msra.mxu0 0.0
    %8395 = vmatpush.msra.mxu0 0.0
    %8396 = vmatpush.msra.mxu0 0.0
    %8397 = vmatpush.msra.mxu0 0.0
    %8398 = vmatpush.msra.mxu0 0.0
    %8399 = vmatpush.msra.mxu0 0.0
    %8400 = vmatpush.msra.mxu0 %v8384
    %8401 = vmatpush.msra.mxu0 %v8383
    %8402 = vmatpush.msra.mxu0 %v8382
    %8403 = vmatpush.msra.mxu0 %v8381
    %8404 = vmatmul.f32.gmra.mxu0 %v8386
    %v8405 = vpop.f32.mrf.mxu0
    %v8406 = vadd.f32 0.0, %v8405
    %8407 = vdwg.mxu0
    %v8408 = vadd.f32 %v8375, %v8406
    %s8409 = scalar_lea.vmem [#allocation5], 38
    %v8410 = vld [vmem:[%s8409] ss:$64 sm:$0x1]
    %v8411 = vld [vmem:[%s8409] ss:$64 sm:$0x2]
    %v8412 = vor.u32 %v8410, %v8411
    %s8413 = scalar_lea.vmem %s5, 1216
    %v8414 = vld [vmem:[%s8413] sm:$0xff]
    %v8415 = vld [vmem:[%s8413 + $0x8] sm:$0xff]
    %v8416 = vld [vmem:[%s8413 + $0x10] sm:$0xff]
    %v8417 = vld [vmem:[%s8413 + $0x18] sm:$0xff]
    %v8419 = vsel %vm303, %v8412, 0
    %8421 = vmatpush.msra.mxu0 0.0
    %8422 = vmatpush.msra.mxu0 0.0
    %8423 = vmatpush.msra.mxu0 0.0
    %8424 = vmatpush.msra.mxu0 0.0
    %8425 = vmatpush.msra.mxu0 0.0
    %8426 = vmatpush.msra.mxu0 0.0
    %8427 = vmatpush.msra.mxu0 0.0
    %8428 = vmatpush.msra.mxu0 0.0
    %8429 = vmatpush.msra.mxu0 0.0
    %8430 = vmatpush.msra.mxu0 0.0
    %8431 = vmatpush.msra.mxu0 0.0
    %8432 = vmatpush.msra.mxu0 0.0
    %8433 = vmatpush.msra.mxu0 %v8417
    %8434 = vmatpush.msra.mxu0 %v8416
    %8435 = vmatpush.msra.mxu0 %v8415
    %8436 = vmatpush.msra.mxu0 %v8414
    %8437 = vmatmul.f32.gmra.mxu0 %v8419
    %v8438 = vpop.f32.mrf.mxu0
    %v8439 = vadd.f32 0.0, %v8438
    %8440 = vdwg.mxu0
    %v8441 = vadd.f32 %v8408, %v8439
    %s8442 = scalar_lea.vmem [#allocation5], 39
    %v8443 = vld [vmem:[%s8442] ss:$64 sm:$0x1]
    %v8444 = vld [vmem:[%s8442] ss:$64 sm:$0x2]
    %v8445 = vor.u32 %v8443, %v8444
    %s8446 = scalar_lea.vmem %s5, 1248
    %v8447 = vld [vmem:[%s8446] sm:$0xff]
    %v8448 = vld [vmem:[%s8446 + $0x8] sm:$0xff]
    %v8449 = vld [vmem:[%s8446 + $0x10] sm:$0xff]
    %v8450 = vld [vmem:[%s8446 + $0x18] sm:$0xff]
    %v8452 = vsel %vm303, %v8445, 0
    %8454 = vmatpush.msra.mxu0 0.0
    %8455 = vmatpush.msra.mxu0 0.0
    %8456 = vmatpush.msra.mxu0 0.0
    %8457 = vmatpush.msra.mxu0 0.0
    %8458 = vmatpush.msra.mxu0 0.0
    %8459 = vmatpush.msra.mxu0 0.0
    %8460 = vmatpush.msra.mxu0 0.0
    %8461 = vmatpush.msra.mxu0 0.0
    %8462 = vmatpush.msra.mxu0 0.0
    %8463 = vmatpush.msra.mxu0 0.0
    %8464 = vmatpush.msra.mxu0 0.0
    %8465 = vmatpush.msra.mxu0 0.0
    %8466 = vmatpush.msra.mxu0 %v8450
    %8467 = vmatpush.msra.mxu0 %v8449
    %8468 = vmatpush.msra.mxu0 %v8448
    %8469 = vmatpush.msra.mxu0 %v8447
    %8470 = vmatmul.f32.gmra.mxu0 %v8452
    %v8471 = vpop.f32.mrf.mxu0
    %v8472 = vadd.f32 0.0, %v8471
    %8473 = vdwg.mxu0
    %v8474 = vadd.f32 %v8441, %v8472
    %s8475 = scalar_lea.vmem [#allocation5], 40
    %v8476 = vld [vmem:[%s8475] ss:$64 sm:$0x1]
    %v8477 = vld [vmem:[%s8475] ss:$64 sm:$0x2]
    %v8478 = vor.u32 %v8476, %v8477
    %s8479 = scalar_lea.vmem %s5, 1280
    %v8480 = vld [vmem:[%s8479] sm:$0xff]
    %v8481 = vld [vmem:[%s8479 + $0x8] sm:$0xff]
    %v8482 = vld [vmem:[%s8479 + $0x10] sm:$0xff]
    %v8483 = vld [vmem:[%s8479 + $0x18] sm:$0xff]
    %v8485 = vsel %vm303, %v8478, 0
    %8487 = vmatpush.msra.mxu0 0.0
    %8488 = vmatpush.msra.mxu0 0.0
    %8489 = vmatpush.msra.mxu0 0.0
    %8490 = vmatpush.msra.mxu0 0.0
    %8491 = vmatpush.msra.mxu0 0.0
    %8492 = vmatpush.msra.mxu0 0.0
    %8493 = vmatpush.msra.mxu0 0.0
    %8494 = vmatpush.msra.mxu0 0.0
    %8495 = vmatpush.msra.mxu0 0.0
    %8496 = vmatpush.msra.mxu0 0.0
    %8497 = vmatpush.msra.mxu0 0.0
    %8498 = vmatpush.msra.mxu0 0.0
    %8499 = vmatpush.msra.mxu0 %v8483
    %8500 = vmatpush.msra.mxu0 %v8482
    %8501 = vmatpush.msra.mxu0 %v8481
    %8502 = vmatpush.msra.mxu0 %v8480
    %8503 = vmatmul.f32.gmra.mxu0 %v8485
    %v8504 = vpop.f32.mrf.mxu0
    %v8505 = vadd.f32 0.0, %v8504
    %8506 = vdwg.mxu0
    %v8507 = vadd.f32 %v8474, %v8505
    %s8508 = scalar_lea.vmem [#allocation5], 41
    %v8509 = vld [vmem:[%s8508] ss:$64 sm:$0x1]
    %v8510 = vld [vmem:[%s8508] ss:$64 sm:$0x2]
    %v8511 = vor.u32 %v8509, %v8510
    %s8512 = scalar_lea.vmem %s5, 1312
    %v8513 = vld [vmem:[%s8512] sm:$0xff]
    %v8514 = vld [vmem:[%s8512 + $0x8] sm:$0xff]
    %v8515 = vld [vmem:[%s8512 + $0x10] sm:$0xff]
    %v8516 = vld [vmem:[%s8512 + $0x18] sm:$0xff]
    %v8518 = vsel %vm303, %v8511, 0
    %8520 = vmatpush.msra.mxu0 0.0
    %8521 = vmatpush.msra.mxu0 0.0
    %8522 = vmatpush.msra.mxu0 0.0
    %8523 = vmatpush.msra.mxu0 0.0
    %8524 = vmatpush.msra.mxu0 0.0
    %8525 = vmatpush.msra.mxu0 0.0
    %8526 = vmatpush.msra.mxu0 0.0
    %8527 = vmatpush.msra.mxu0 0.0
    %8528 = vmatpush.msra.mxu0 0.0
    %8529 = vmatpush.msra.mxu0 0.0
    %8530 = vmatpush.msra.mxu0 0.0
    %8531 = vmatpush.msra.mxu0 0.0
    %8532 = vmatpush.msra.mxu0 %v8516
    %8533 = vmatpush.msra.mxu0 %v8515
    %8534 = vmatpush.msra.mxu0 %v8514
    %8535 = vmatpush.msra.mxu0 %v8513
    %8536 = vmatmul.f32.gmra.mxu0 %v8518
    %v8537 = vpop.f32.mrf.mxu0
    %v8538 = vadd.f32 0.0, %v8537
    %8539 = vdwg.mxu0
    %v8540 = vadd.f32 %v8507, %v8538
    %s8541 = scalar_lea.vmem [#allocation5], 42
    %v8542 = vld [vmem:[%s8541] ss:$64 sm:$0x1]
    %v8543 = vld [vmem:[%s8541] ss:$64 sm:$0x2]
    %v8544 = vor.u32 %v8542, %v8543
    %s8545 = scalar_lea.vmem %s5, 1344
    %v8546 = vld [vmem:[%s8545] sm:$0xff]
    %v8547 = vld [vmem:[%s8545 + $0x8] sm:$0xff]
    %v8548 = vld [vmem:[%s8545 + $0x10] sm:$0xff]
    %v8549 = vld [vmem:[%s8545 + $0x18] sm:$0xff]
    %v8551 = vsel %vm303, %v8544, 0
    %8553 = vmatpush.msra.mxu0 0.0
    %8554 = vmatpush.msra.mxu0 0.0
    %8555 = vmatpush.msra.mxu0 0.0
    %8556 = vmatpush.msra.mxu0 0.0
    %8557 = vmatpush.msra.mxu0 0.0
    %8558 = vmatpush.msra.mxu0 0.0
    %8559 = vmatpush.msra.mxu0 0.0
    %8560 = vmatpush.msra.mxu0 0.0
    %8561 = vmatpush.msra.mxu0 0.0
    %8562 = vmatpush.msra.mxu0 0.0
    %8563 = vmatpush.msra.mxu0 0.0
    %8564 = vmatpush.msra.mxu0 0.0
    %8565 = vmatpush.msra.mxu0 %v8549
    %8566 = vmatpush.msra.mxu0 %v8548
    %8567 = vmatpush.msra.mxu0 %v8547
    %8568 = vmatpush.msra.mxu0 %v8546
    %8569 = vmatmul.f32.gmra.mxu0 %v8551
    %v8570 = vpop.f32.mrf.mxu0
    %v8571 = vadd.f32 0.0, %v8570
    %8572 = vdwg.mxu0
    %v8573 = vadd.f32 %v8540, %v8571
    %s8574 = scalar_lea.vmem [#allocation5], 43
    %v8575 = vld [vmem:[%s8574] ss:$64 sm:$0x1]
    %v8576 = vld [vmem:[%s8574] ss:$64 sm:$0x2]
    %v8577 = vor.u32 %v8575, %v8576
    %s8578 = scalar_lea.vmem %s5, 1376
    %v8579 = vld [vmem:[%s8578] sm:$0xff]
    %v8580 = vld [vmem:[%s8578 + $0x8] sm:$0xff]
    %v8581 = vld [vmem:[%s8578 + $0x10] sm:$0xff]
    %v8582 = vld [vmem:[%s8578 + $0x18] sm:$0xff]
    %v8584 = vsel %vm303, %v8577, 0
    %8586 = vmatpush.msra.mxu0 0.0
    %8587 = vmatpush.msra.mxu0 0.0
    %8588 = vmatpush.msra.mxu0 0.0
    %8589 = vmatpush.msra.mxu0 0.0
    %8590 = vmatpush.msra.mxu0 0.0
    %8591 = vmatpush.msra.mxu0 0.0
    %8592 = vmatpush.msra.mxu0 0.0
    %8593 = vmatpush.msra.mxu0 0.0
    %8594 = vmatpush.msra.mxu0 0.0
    %8595 = vmatpush.msra.mxu0 0.0
    %8596 = vmatpush.msra.mxu0 0.0
    %8597 = vmatpush.msra.mxu0 0.0
    %8598 = vmatpush.msra.mxu0 %v8582
    %8599 = vmatpush.msra.mxu0 %v8581
    %8600 = vmatpush.msra.mxu0 %v8580
    %8601 = vmatpush.msra.mxu0 %v8579
    %8602 = vmatmul.f32.gmra.mxu0 %v8584
    %v8603 = vpop.f32.mrf.mxu0
    %v8604 = vadd.f32 0.0, %v8603
    %8605 = vdwg.mxu0
    %v8606 = vadd.f32 %v8573, %v8604
    %s8607 = scalar_lea.vmem [#allocation5], 44
    %v8608 = vld [vmem:[%s8607] ss:$64 sm:$0x1]
    %v8609 = vld [vmem:[%s8607] ss:$64 sm:$0x2]
    %v8610 = vor.u32 %v8608, %v8609
    %s8611 = scalar_lea.vmem %s5, 1408
    %v8612 = vld [vmem:[%s8611] sm:$0xff]
    %v8613 = vld [vmem:[%s8611 + $0x8] sm:$0xff]
    %v8614 = vld [vmem:[%s8611 + $0x10] sm:$0xff]
    %v8615 = vld [vmem:[%s8611 + $0x18] sm:$0xff]
    %v8617 = vsel %vm303, %v8610, 0
    %8619 = vmatpush.msra.mxu0 0.0
    %8620 = vmatpush.msra.mxu0 0.0
    %8621 = vmatpush.msra.mxu0 0.0
    %8622 = vmatpush.msra.mxu0 0.0
    %8623 = vmatpush.msra.mxu0 0.0
    %8624 = vmatpush.msra.mxu0 0.0
    %8625 = vmatpush.msra.mxu0 0.0
    %8626 = vmatpush.msra.mxu0 0.0
    %8627 = vmatpush.msra.mxu0 0.0
    %8628 = vmatpush.msra.mxu0 0.0
    %8629 = vmatpush.msra.mxu0 0.0
    %8630 = vmatpush.msra.mxu0 0.0
    %8631 = vmatpush.msra.mxu0 %v8615
    %8632 = vmatpush.msra.mxu0 %v8614
    %8633 = vmatpush.msra.mxu0 %v8613
    %8634 = vmatpush.msra.mxu0 %v8612
    %8635 = vmatmul.f32.gmra.mxu0 %v8617
    %v8636 = vpop.f32.mrf.mxu0
    %v8637 = vadd.f32 0.0, %v8636
    %8638 = vdwg.mxu0
    %v8639 = vadd.f32 %v8606, %v8637
    %s8640 = scalar_lea.vmem [#allocation5], 45
    %v8641 = vld [vmem:[%s8640] ss:$64 sm:$0x1]
    %v8642 = vld [vmem:[%s8640] ss:$64 sm:$0x2]
    %v8643 = vor.u32 %v8641, %v8642
    %s8644 = scalar_lea.vmem %s5, 1440
    %v8645 = vld [vmem:[%s8644] sm:$0xff]
    %v8646 = vld [vmem:[%s8644 + $0x8] sm:$0xff]
    %v8647 = vld [vmem:[%s8644 + $0x10] sm:$0xff]
    %v8648 = vld [vmem:[%s8644 + $0x18] sm:$0xff]
    %v8650 = vsel %vm303, %v8643, 0
    %8652 = vmatpush.msra.mxu0 0.0
    %8653 = vmatpush.msra.mxu0 0.0
    %8654 = vmatpush.msra.mxu0 0.0
    %8655 = vmatpush.msra.mxu0 0.0
    %8656 = vmatpush.msra.mxu0 0.0
    %8657 = vmatpush.msra.mxu0 0.0
    %8658 = vmatpush.msra.mxu0 0.0
    %8659 = vmatpush.msra.mxu0 0.0
    %8660 = vmatpush.msra.mxu0 0.0
    %8661 = vmatpush.msra.mxu0 0.0
    %8662 = vmatpush.msra.mxu0 0.0
    %8663 = vmatpush.msra.mxu0 0.0
    %8664 = vmatpush.msra.mxu0 %v8648
    %8665 = vmatpush.msra.mxu0 %v8647
    %8666 = vmatpush.msra.mxu0 %v8646
    %8667 = vmatpush.msra.mxu0 %v8645
    %8668 = vmatmul.f32.gmra.mxu0 %v8650
    %v8669 = vpop.f32.mrf.mxu0
    %v8670 = vadd.f32 0.0, %v8669
    %8671 = vdwg.mxu0
    %v8672 = vadd.f32 %v8639, %v8670
    %s8673 = scalar_lea.vmem [#allocation5], 46
    %v8674 = vld [vmem:[%s8673] ss:$64 sm:$0x1]
    %v8675 = vld [vmem:[%s8673] ss:$64 sm:$0x2]
    %v8676 = vor.u32 %v8674, %v8675
    %s8677 = scalar_lea.vmem %s5, 1472
    %v8678 = vld [vmem:[%s8677] sm:$0xff]
    %v8679 = vld [vmem:[%s8677 + $0x8] sm:$0xff]
    %v8680 = vld [vmem:[%s8677 + $0x10] sm:$0xff]
    %v8681 = vld [vmem:[%s8677 + $0x18] sm:$0xff]
    %v8683 = vsel %vm303, %v8676, 0
    %8685 = vmatpush.msra.mxu0 0.0
    %8686 = vmatpush.msra.mxu0 0.0
    %8687 = vmatpush.msra.mxu0 0.0
    %8688 = vmatpush.msra.mxu0 0.0
    %8689 = vmatpush.msra.mxu0 0.0
    %8690 = vmatpush.msra.mxu0 0.0
    %8691 = vmatpush.msra.mxu0 0.0
    %8692 = vmatpush.msra.mxu0 0.0
    %8693 = vmatpush.msra.mxu0 0.0
    %8694 = vmatpush.msra.mxu0 0.0
    %8695 = vmatpush.msra.mxu0 0.0
    %8696 = vmatpush.msra.mxu0 0.0
    %8697 = vmatpush.msra.mxu0 %v8681
    %8698 = vmatpush.msra.mxu0 %v8680
    %8699 = vmatpush.msra.mxu0 %v8679
    %8700 = vmatpush.msra.mxu0 %v8678
    %8701 = vmatmul.f32.gmra.mxu0 %v8683
    %v8702 = vpop.f32.mrf.mxu0
    %v8703 = vadd.f32 0.0, %v8702
    %8704 = vdwg.mxu0
    %v8705 = vadd.f32 %v8672, %v8703
    %s8706 = scalar_lea.vmem [#allocation5], 47
    %v8707 = vld [vmem:[%s8706] ss:$64 sm:$0x1]
    %v8708 = vld [vmem:[%s8706] ss:$64 sm:$0x2]
    %v8709 = vor.u32 %v8707, %v8708
    %s8710 = scalar_lea.vmem %s5, 1504
    %v8711 = vld [vmem:[%s8710] sm:$0xff]
    %v8712 = vld [vmem:[%s8710 + $0x8] sm:$0xff]
    %v8713 = vld [vmem:[%s8710 + $0x10] sm:$0xff]
    %v8714 = vld [vmem:[%s8710 + $0x18] sm:$0xff]
    %v8716 = vsel %vm303, %v8709, 0
    %8718 = vmatpush.msra.mxu0 0.0
    %8719 = vmatpush.msra.mxu0 0.0
    %8720 = vmatpush.msra.mxu0 0.0
    %8721 = vmatpush.msra.mxu0 0.0
    %8722 = vmatpush.msra.mxu0 0.0
    %8723 = vmatpush.msra.mxu0 0.0
    %8724 = vmatpush.msra.mxu0 0.0
    %8725 = vmatpush.msra.mxu0 0.0
    %8726 = vmatpush.msra.mxu0 0.0
    %8727 = vmatpush.msra.mxu0 0.0
    %8728 = vmatpush.msra.mxu0 0.0
    %8729 = vmatpush.msra.mxu0 0.0
    %8730 = vmatpush.msra.mxu0 %v8714
    %8731 = vmatpush.msra.mxu0 %v8713
    %8732 = vmatpush.msra.mxu0 %v8712
    %8733 = vmatpush.msra.mxu0 %v8711
    %8734 = vmatmul.f32.gmra.mxu0 %v8716
    %v8735 = vpop.f32.mrf.mxu0
    %v8736 = vadd.f32 0.0, %v8735
    %8737 = vdwg.mxu0
    %v8738 = vadd.f32 %v8705, %v8736
    %s8739 = scalar_lea.vmem [#allocation5], 48
    %v8740 = vld [vmem:[%s8739] ss:$64 sm:$0x1]
    %v8741 = vld [vmem:[%s8739] ss:$64 sm:$0x2]
    %v8742 = vor.u32 %v8740, %v8741
    %s8743 = scalar_lea.vmem %s5, 1536
    %v8744 = vld [vmem:[%s8743] sm:$0xff]
    %v8745 = vld [vmem:[%s8743 + $0x8] sm:$0xff]
    %v8746 = vld [vmem:[%s8743 + $0x10] sm:$0xff]
    %v8747 = vld [vmem:[%s8743 + $0x18] sm:$0xff]
    %v8749 = vsel %vm303, %v8742, 0
    %8751 = vmatpush.msra.mxu0 0.0
    %8752 = vmatpush.msra.mxu0 0.0
    %8753 = vmatpush.msra.mxu0 0.0
    %8754 = vmatpush.msra.mxu0 0.0
    %8755 = vmatpush.msra.mxu0 0.0
    %8756 = vmatpush.msra.mxu0 0.0
    %8757 = vmatpush.msra.mxu0 0.0
    %8758 = vmatpush.msra.mxu0 0.0
    %8759 = vmatpush.msra.mxu0 0.0
    %8760 = vmatpush.msra.mxu0 0.0
    %8761 = vmatpush.msra.mxu0 0.0
    %8762 = vmatpush.msra.mxu0 0.0
    %8763 = vmatpush.msra.mxu0 %v8747
    %8764 = vmatpush.msra.mxu0 %v8746
    %8765 = vmatpush.msra.mxu0 %v8745
    %8766 = vmatpush.msra.mxu0 %v8744
    %8767 = vmatmul.f32.gmra.mxu0 %v8749
    %v8768 = vpop.f32.mrf.mxu0
    %v8769 = vadd.f32 0.0, %v8768
    %8770 = vdwg.mxu0
    %v8771 = vadd.f32 %v8738, %v8769
    %s8772 = scalar_lea.vmem [#allocation5], 49
    %v8773 = vld [vmem:[%s8772] ss:$64 sm:$0x1]
    %v8774 = vld [vmem:[%s8772] ss:$64 sm:$0x2]
    %v8775 = vor.u32 %v8773, %v8774
    %s8776 = scalar_lea.vmem %s5, 1568
    %v8777 = vld [vmem:[%s8776] sm:$0xff]
    %v8778 = vld [vmem:[%s8776 + $0x8] sm:$0xff]
    %v8779 = vld [vmem:[%s8776 + $0x10] sm:$0xff]
    %v8780 = vld [vmem:[%s8776 + $0x18] sm:$0xff]
    %v8782 = vsel %vm303, %v8775, 0
    %8784 = vmatpush.msra.mxu0 0.0
    %8785 = vmatpush.msra.mxu0 0.0
    %8786 = vmatpush.msra.mxu0 0.0
    %8787 = vmatpush.msra.mxu0 0.0
    %8788 = vmatpush.msra.mxu0 0.0
    %8789 = vmatpush.msra.mxu0 0.0
    %8790 = vmatpush.msra.mxu0 0.0
    %8791 = vmatpush.msra.mxu0 0.0
    %8792 = vmatpush.msra.mxu0 0.0
    %8793 = vmatpush.msra.mxu0 0.0
    %8794 = vmatpush.msra.mxu0 0.0
    %8795 = vmatpush.msra.mxu0 0.0
    %8796 = vmatpush.msra.mxu0 %v8780
    %8797 = vmatpush.msra.mxu0 %v8779
    %8798 = vmatpush.msra.mxu0 %v8778
    %8799 = vmatpush.msra.mxu0 %v8777
    %8800 = vmatmul.f32.gmra.mxu0 %v8782
    %v8801 = vpop.f32.mrf.mxu0
    %v8802 = vadd.f32 0.0, %v8801
    %8803 = vdwg.mxu0
    %v8804 = vadd.f32 %v8771, %v8802
    %s8805 = scalar_lea.vmem [#allocation5], 50
    %v8806 = vld [vmem:[%s8805] ss:$64 sm:$0x1]
    %v8807 = vld [vmem:[%s8805] ss:$64 sm:$0x2]
    %v8808 = vor.u32 %v8806, %v8807
    %s8809 = scalar_lea.vmem %s5, 1600
    %v8810 = vld [vmem:[%s8809] sm:$0xff]
    %v8811 = vld [vmem:[%s8809 + $0x8] sm:$0xff]
    %v8812 = vld [vmem:[%s8809 + $0x10] sm:$0xff]
    %v8813 = vld [vmem:[%s8809 + $0x18] sm:$0xff]
    %v8815 = vsel %vm303, %v8808, 0
    %8817 = vmatpush.msra.mxu0 0.0
    %8818 = vmatpush.msra.mxu0 0.0
    %8819 = vmatpush.msra.mxu0 0.0
    %8820 = vmatpush.msra.mxu0 0.0
    %8821 = vmatpush.msra.mxu0 0.0
    %8822 = vmatpush.msra.mxu0 0.0
    %8823 = vmatpush.msra.mxu0 0.0
    %8824 = vmatpush.msra.mxu0 0.0
    %8825 = vmatpush.msra.mxu0 0.0
    %8826 = vmatpush.msra.mxu0 0.0
    %8827 = vmatpush.msra.mxu0 0.0
    %8828 = vmatpush.msra.mxu0 0.0
    %8829 = vmatpush.msra.mxu0 %v8813
    %8830 = vmatpush.msra.mxu0 %v8812
    %8831 = vmatpush.msra.mxu0 %v8811
    %8832 = vmatpush.msra.mxu0 %v8810
    %8833 = vmatmul.f32.gmra.mxu0 %v8815
    %v8834 = vpop.f32.mrf.mxu0
    %v8835 = vadd.f32 0.0, %v8834
    %8836 = vdwg.mxu0
    %v8837 = vadd.f32 %v8804, %v8835
    %s8838 = scalar_lea.vmem [#allocation5], 51
    %v8839 = vld [vmem:[%s8838] ss:$64 sm:$0x1]
    %v8840 = vld [vmem:[%s8838] ss:$64 sm:$0x2]
    %v8841 = vor.u32 %v8839, %v8840
    %s8842 = scalar_lea.vmem %s5, 1632
    %v8843 = vld [vmem:[%s8842] sm:$0xff]
    %v8844 = vld [vmem:[%s8842 + $0x8] sm:$0xff]
    %v8845 = vld [vmem:[%s8842 + $0x10] sm:$0xff]
    %v8846 = vld [vmem:[%s8842 + $0x18] sm:$0xff]
    %v8848 = vsel %vm303, %v8841, 0
    %8850 = vmatpush.msra.mxu0 0.0
    %8851 = vmatpush.msra.mxu0 0.0
    %8852 = vmatpush.msra.mxu0 0.0
    %8853 = vmatpush.msra.mxu0 0.0
    %8854 = vmatpush.msra.mxu0 0.0
    %8855 = vmatpush.msra.mxu0 0.0
    %8856 = vmatpush.msra.mxu0 0.0
    %8857 = vmatpush.msra.mxu0 0.0
    %8858 = vmatpush.msra.mxu0 0.0
    %8859 = vmatpush.msra.mxu0 0.0
    %8860 = vmatpush.msra.mxu0 0.0
    %8861 = vmatpush.msra.mxu0 0.0
    %8862 = vmatpush.msra.mxu0 %v8846
    %8863 = vmatpush.msra.mxu0 %v8845
    %8864 = vmatpush.msra.mxu0 %v8844
    %8865 = vmatpush.msra.mxu0 %v8843
    %8866 = vmatmul.f32.gmra.mxu0 %v8848
    %v8867 = vpop.f32.mrf.mxu0
    %v8868 = vadd.f32 0.0, %v8867
    %8869 = vdwg.mxu0
    %v8870 = vadd.f32 %v8837, %v8868
    %s8871 = scalar_lea.vmem [#allocation5], 52
    %v8872 = vld [vmem:[%s8871] ss:$64 sm:$0x1]
    %v8873 = vld [vmem:[%s8871] ss:$64 sm:$0x2]
    %v8874 = vor.u32 %v8872, %v8873
    %s8875 = scalar_lea.vmem %s5, 1664
    %v8876 = vld [vmem:[%s8875] sm:$0xff]
    %v8877 = vld [vmem:[%s8875 + $0x8] sm:$0xff]
    %v8878 = vld [vmem:[%s8875 + $0x10] sm:$0xff]
    %v8879 = vld [vmem:[%s8875 + $0x18] sm:$0xff]
    %v8881 = vsel %vm303, %v8874, 0
    %8883 = vmatpush.msra.mxu0 0.0
    %8884 = vmatpush.msra.mxu0 0.0
    %8885 = vmatpush.msra.mxu0 0.0
    %8886 = vmatpush.msra.mxu0 0.0
    %8887 = vmatpush.msra.mxu0 0.0
    %8888 = vmatpush.msra.mxu0 0.0
    %8889 = vmatpush.msra.mxu0 0.0
    %8890 = vmatpush.msra.mxu0 0.0
    %8891 = vmatpush.msra.mxu0 0.0
    %8892 = vmatpush.msra.mxu0 0.0
    %8893 = vmatpush.msra.mxu0 0.0
    %8894 = vmatpush.msra.mxu0 0.0
    %8895 = vmatpush.msra.mxu0 %v8879
    %8896 = vmatpush.msra.mxu0 %v8878
    %8897 = vmatpush.msra.mxu0 %v8877
    %8898 = vmatpush.msra.mxu0 %v8876
    %8899 = vmatmul.f32.gmra.mxu0 %v8881
    %v8900 = vpop.f32.mrf.mxu0
    %v8901 = vadd.f32 0.0, %v8900
    %8902 = vdwg.mxu0
    %v8903 = vadd.f32 %v8870, %v8901
    %s8904 = scalar_lea.vmem [#allocation5], 53
    %v8905 = vld [vmem:[%s8904] ss:$64 sm:$0x1]
    %v8906 = vld [vmem:[%s8904] ss:$64 sm:$0x2]
    %v8907 = vor.u32 %v8905, %v8906
    %s8908 = scalar_lea.vmem %s5, 1696
    %v8909 = vld [vmem:[%s8908] sm:$0xff]
    %v8910 = vld [vmem:[%s8908 + $0x8] sm:$0xff]
    %v8911 = vld [vmem:[%s8908 + $0x10] sm:$0xff]
    %v8912 = vld [vmem:[%s8908 + $0x18] sm:$0xff]
    %v8914 = vsel %vm303, %v8907, 0
    %8916 = vmatpush.msra.mxu0 0.0
    %8917 = vmatpush.msra.mxu0 0.0
    %8918 = vmatpush.msra.mxu0 0.0
    %8919 = vmatpush.msra.mxu0 0.0
    %8920 = vmatpush.msra.mxu0 0.0
    %8921 = vmatpush.msra.mxu0 0.0
    %8922 = vmatpush.msra.mxu0 0.0
    %8923 = vmatpush.msra.mxu0 0.0
    %8924 = vmatpush.msra.mxu0 0.0
    %8925 = vmatpush.msra.mxu0 0.0
    %8926 = vmatpush.msra.mxu0 0.0
    %8927 = vmatpush.msra.mxu0 0.0
    %8928 = vmatpush.msra.mxu0 %v8912
    %8929 = vmatpush.msra.mxu0 %v8911
    %8930 = vmatpush.msra.mxu0 %v8910
    %8931 = vmatpush.msra.mxu0 %v8909
    %8932 = vmatmul.f32.gmra.mxu0 %v8914
    %v8933 = vpop.f32.mrf.mxu0
    %v8934 = vadd.f32 0.0, %v8933
    %8935 = vdwg.mxu0
    %v8936 = vadd.f32 %v8903, %v8934
    %s8937 = scalar_lea.vmem [#allocation5], 54
    %v8938 = vld [vmem:[%s8937] ss:$64 sm:$0x1]
    %v8939 = vld [vmem:[%s8937] ss:$64 sm:$0x2]
    %v8940 = vor.u32 %v8938, %v8939
    %s8941 = scalar_lea.vmem %s5, 1728
    %v8942 = vld [vmem:[%s8941] sm:$0xff]
    %v8943 = vld [vmem:[%s8941 + $0x8] sm:$0xff]
    %v8944 = vld [vmem:[%s8941 + $0x10] sm:$0xff]
    %v8945 = vld [vmem:[%s8941 + $0x18] sm:$0xff]
    %v8947 = vsel %vm303, %v8940, 0
    %8949 = vmatpush.msra.mxu0 0.0
    %8950 = vmatpush.msra.mxu0 0.0
    %8951 = vmatpush.msra.mxu0 0.0
    %8952 = vmatpush.msra.mxu0 0.0
    %8953 = vmatpush.msra.mxu0 0.0
    %8954 = vmatpush.msra.mxu0 0.0
    %8955 = vmatpush.msra.mxu0 0.0
    %8956 = vmatpush.msra.mxu0 0.0
    %8957 = vmatpush.msra.mxu0 0.0
    %8958 = vmatpush.msra.mxu0 0.0
    %8959 = vmatpush.msra.mxu0 0.0
    %8960 = vmatpush.msra.mxu0 0.0
    %8961 = vmatpush.msra.mxu0 %v8945
    %8962 = vmatpush.msra.mxu0 %v8944
    %8963 = vmatpush.msra.mxu0 %v8943
    %8964 = vmatpush.msra.mxu0 %v8942
    %8965 = vmatmul.f32.gmra.mxu0 %v8947
    %v8966 = vpop.f32.mrf.mxu0
    %v8967 = vadd.f32 0.0, %v8966
    %8968 = vdwg.mxu0
    %v8969 = vadd.f32 %v8936, %v8967
    %s8970 = scalar_lea.vmem [#allocation5], 55
    %v8971 = vld [vmem:[%s8970] ss:$64 sm:$0x1]
    %v8972 = vld [vmem:[%s8970] ss:$64 sm:$0x2]
    %v8973 = vor.u32 %v8971, %v8972
    %s8974 = scalar_lea.vmem %s5, 1760
    %v8975 = vld [vmem:[%s8974] sm:$0xff]
    %v8976 = vld [vmem:[%s8974 + $0x8] sm:$0xff]
    %v8977 = vld [vmem:[%s8974 + $0x10] sm:$0xff]
    %v8978 = vld [vmem:[%s8974 + $0x18] sm:$0xff]
    %v8980 = vsel %vm303, %v8973, 0
    %8982 = vmatpush.msra.mxu0 0.0
    %8983 = vmatpush.msra.mxu0 0.0
    %8984 = vmatpush.msra.mxu0 0.0
    %8985 = vmatpush.msra.mxu0 0.0
    %8986 = vmatpush.msra.mxu0 0.0
    %8987 = vmatpush.msra.mxu0 0.0
    %8988 = vmatpush.msra.mxu0 0.0
    %8989 = vmatpush.msra.mxu0 0.0
    %8990 = vmatpush.msra.mxu0 0.0
    %8991 = vmatpush.msra.mxu0 0.0
    %8992 = vmatpush.msra.mxu0 0.0
    %8993 = vmatpush.msra.mxu0 0.0
    %8994 = vmatpush.msra.mxu0 %v8978
    %8995 = vmatpush.msra.mxu0 %v8977
    %8996 = vmatpush.msra.mxu0 %v8976
    %8997 = vmatpush.msra.mxu0 %v8975
    %8998 = vmatmul.f32.gmra.mxu0 %v8980
    %v8999 = vpop.f32.mrf.mxu0
    %v9000 = vadd.f32 0.0, %v8999
    %9001 = vdwg.mxu0
    %v9002 = vadd.f32 %v8969, %v9000
    %s9003 = scalar_lea.vmem [#allocation5], 56
    %v9004 = vld [vmem:[%s9003] ss:$64 sm:$0x1]
    %v9005 = vld [vmem:[%s9003] ss:$64 sm:$0x2]
    %v9006 = vor.u32 %v9004, %v9005
    %s9007 = scalar_lea.vmem %s5, 1792
    %v9008 = vld [vmem:[%s9007] sm:$0xff]
    %v9009 = vld [vmem:[%s9007 + $0x8] sm:$0xff]
    %v9010 = vld [vmem:[%s9007 + $0x10] sm:$0xff]
    %v9011 = vld [vmem:[%s9007 + $0x18] sm:$0xff]
    %v9013 = vsel %vm303, %v9006, 0
    %9015 = vmatpush.msra.mxu0 0.0
    %9016 = vmatpush.msra.mxu0 0.0
    %9017 = vmatpush.msra.mxu0 0.0
    %9018 = vmatpush.msra.mxu0 0.0
    %9019 = vmatpush.msra.mxu0 0.0
    %9020 = vmatpush.msra.mxu0 0.0
    %9021 = vmatpush.msra.mxu0 0.0
    %9022 = vmatpush.msra.mxu0 0.0
    %9023 = vmatpush.msra.mxu0 0.0
    %9024 = vmatpush.msra.mxu0 0.0
    %9025 = vmatpush.msra.mxu0 0.0
    %9026 = vmatpush.msra.mxu0 0.0
    %9027 = vmatpush.msra.mxu0 %v9011
    %9028 = vmatpush.msra.mxu0 %v9010
    %9029 = vmatpush.msra.mxu0 %v9009
    %9030 = vmatpush.msra.mxu0 %v9008
    %9031 = vmatmul.f32.gmra.mxu0 %v9013
    %v9032 = vpop.f32.mrf.mxu0
    %v9033 = vadd.f32 0.0, %v9032
    %9034 = vdwg.mxu0
    %v9035 = vadd.f32 %v9002, %v9033
    %s9036 = scalar_lea.vmem [#allocation5], 57
    %v9037 = vld [vmem:[%s9036] ss:$64 sm:$0x1]
    %v9038 = vld [vmem:[%s9036] ss:$64 sm:$0x2]
    %v9039 = vor.u32 %v9037, %v9038
    %s9040 = scalar_lea.vmem %s5, 1824
    %v9041 = vld [vmem:[%s9040] sm:$0xff]
    %v9042 = vld [vmem:[%s9040 + $0x8] sm:$0xff]
    %v9043 = vld [vmem:[%s9040 + $0x10] sm:$0xff]
    %v9044 = vld [vmem:[%s9040 + $0x18] sm:$0xff]
    %v9046 = vsel %vm303, %v9039, 0
    %9048 = vmatpush.msra.mxu0 0.0
    %9049 = vmatpush.msra.mxu0 0.0
    %9050 = vmatpush.msra.mxu0 0.0
    %9051 = vmatpush.msra.mxu0 0.0
    %9052 = vmatpush.msra.mxu0 0.0
    %9053 = vmatpush.msra.mxu0 0.0
    %9054 = vmatpush.msra.mxu0 0.0
    %9055 = vmatpush.msra.mxu0 0.0
    %9056 = vmatpush.msra.mxu0 0.0
    %9057 = vmatpush.msra.mxu0 0.0
    %9058 = vmatpush.msra.mxu0 0.0
    %9059 = vmatpush.msra.mxu0 0.0
    %9060 = vmatpush.msra.mxu0 %v9044
    %9061 = vmatpush.msra.mxu0 %v9043
    %9062 = vmatpush.msra.mxu0 %v9042
    %9063 = vmatpush.msra.mxu0 %v9041
    %9064 = vmatmul.f32.gmra.mxu0 %v9046
    %v9065 = vpop.f32.mrf.mxu0
    %v9066 = vadd.f32 0.0, %v9065
    %9067 = vdwg.mxu0
    %v9068 = vadd.f32 %v9035, %v9066
    %s9069 = scalar_lea.vmem [#allocation5], 58
    %v9070 = vld [vmem:[%s9069] ss:$64 sm:$0x1]
    %v9071 = vld [vmem:[%s9069] ss:$64 sm:$0x2]
    %v9072 = vor.u32 %v9070, %v9071
    %s9073 = scalar_lea.vmem %s5, 1856
    %v9074 = vld [vmem:[%s9073] sm:$0xff]
    %v9075 = vld [vmem:[%s9073 + $0x8] sm:$0xff]
    %v9076 = vld [vmem:[%s9073 + $0x10] sm:$0xff]
    %v9077 = vld [vmem:[%s9073 + $0x18] sm:$0xff]
    %v9079 = vsel %vm303, %v9072, 0
    %9081 = vmatpush.msra.mxu0 0.0
    %9082 = vmatpush.msra.mxu0 0.0
    %9083 = vmatpush.msra.mxu0 0.0
    %9084 = vmatpush.msra.mxu0 0.0
    %9085 = vmatpush.msra.mxu0 0.0
    %9086 = vmatpush.msra.mxu0 0.0
    %9087 = vmatpush.msra.mxu0 0.0
    %9088 = vmatpush.msra.mxu0 0.0
    %9089 = vmatpush.msra.mxu0 0.0
    %9090 = vmatpush.msra.mxu0 0.0
    %9091 = vmatpush.msra.mxu0 0.0
    %9092 = vmatpush.msra.mxu0 0.0
    %9093 = vmatpush.msra.mxu0 %v9077
    %9094 = vmatpush.msra.mxu0 %v9076
    %9095 = vmatpush.msra.mxu0 %v9075
    %9096 = vmatpush.msra.mxu0 %v9074
    %9097 = vmatmul.f32.gmra.mxu0 %v9079
    %v9098 = vpop.f32.mrf.mxu0
    %v9099 = vadd.f32 0.0, %v9098
    %9100 = vdwg.mxu0
    %v9101 = vadd.f32 %v9068, %v9099
    %s9102 = scalar_lea.vmem [#allocation5], 59
    %v9103 = vld [vmem:[%s9102] ss:$64 sm:$0x1]
    %v9104 = vld [vmem:[%s9102] ss:$64 sm:$0x2]
    %v9105 = vor.u32 %v9103, %v9104
    %s9106 = scalar_lea.vmem %s5, 1888
    %v9107 = vld [vmem:[%s9106] sm:$0xff]
    %v9108 = vld [vmem:[%s9106 + $0x8] sm:$0xff]
    %v9109 = vld [vmem:[%s9106 + $0x10] sm:$0xff]
    %v9110 = vld [vmem:[%s9106 + $0x18] sm:$0xff]
    %v9112 = vsel %vm303, %v9105, 0
    %9114 = vmatpush.msra.mxu0 0.0
    %9115 = vmatpush.msra.mxu0 0.0
    %9116 = vmatpush.msra.mxu0 0.0
    %9117 = vmatpush.msra.mxu0 0.0
    %9118 = vmatpush.msra.mxu0 0.0
    %9119 = vmatpush.msra.mxu0 0.0
    %9120 = vmatpush.msra.mxu0 0.0
    %9121 = vmatpush.msra.mxu0 0.0
    %9122 = vmatpush.msra.mxu0 0.0
    %9123 = vmatpush.msra.mxu0 0.0
    %9124 = vmatpush.msra.mxu0 0.0
    %9125 = vmatpush.msra.mxu0 0.0
    %9126 = vmatpush.msra.mxu0 %v9110
    %9127 = vmatpush.msra.mxu0 %v9109
    %9128 = vmatpush.msra.mxu0 %v9108
    %9129 = vmatpush.msra.mxu0 %v9107
    %9130 = vmatmul.f32.gmra.mxu0 %v9112
    %v9131 = vpop.f32.mrf.mxu0
    %v9132 = vadd.f32 0.0, %v9131
    %9133 = vdwg.mxu0
    %v9134 = vadd.f32 %v9101, %v9132
    %s9135 = scalar_lea.vmem [#allocation5], 60
    %v9136 = vld [vmem:[%s9135] ss:$64 sm:$0x1]
    %v9137 = vld [vmem:[%s9135] ss:$64 sm:$0x2]
    %v9138 = vor.u32 %v9136, %v9137
    %s9139 = scalar_lea.vmem %s5, 1920
    %v9140 = vld [vmem:[%s9139] sm:$0xff]
    %v9141 = vld [vmem:[%s9139 + $0x8] sm:$0xff]
    %v9142 = vld [vmem:[%s9139 + $0x10] sm:$0xff]
    %v9143 = vld [vmem:[%s9139 + $0x18] sm:$0xff]
    %v9145 = vsel %vm303, %v9138, 0
    %9147 = vmatpush.msra.mxu0 0.0
    %9148 = vmatpush.msra.mxu0 0.0
    %9149 = vmatpush.msra.mxu0 0.0
    %9150 = vmatpush.msra.mxu0 0.0
    %9151 = vmatpush.msra.mxu0 0.0
    %9152 = vmatpush.msra.mxu0 0.0
    %9153 = vmatpush.msra.mxu0 0.0
    %9154 = vmatpush.msra.mxu0 0.0
    %9155 = vmatpush.msra.mxu0 0.0
    %9156 = vmatpush.msra.mxu0 0.0
    %9157 = vmatpush.msra.mxu0 0.0
    %9158 = vmatpush.msra.mxu0 0.0
    %9159 = vmatpush.msra.mxu0 %v9143
    %9160 = vmatpush.msra.mxu0 %v9142
    %9161 = vmatpush.msra.mxu0 %v9141
    %9162 = vmatpush.msra.mxu0 %v9140
    %9163 = vmatmul.f32.gmra.mxu0 %v9145
    %v9164 = vpop.f32.mrf.mxu0
    %v9165 = vadd.f32 0.0, %v9164
    %9166 = vdwg.mxu0
    %v9167 = vadd.f32 %v9134, %v9165
    %s9168 = scalar_lea.vmem [#allocation5], 61
    %v9169 = vld [vmem:[%s9168] ss:$64 sm:$0x1]
    %v9170 = vld [vmem:[%s9168] ss:$64 sm:$0x2]
    %v9171 = vor.u32 %v9169, %v9170
    %s9172 = scalar_lea.vmem %s5, 1952
    %v9173 = vld [vmem:[%s9172] sm:$0xff]
    %v9174 = vld [vmem:[%s9172 + $0x8] sm:$0xff]
    %v9175 = vld [vmem:[%s9172 + $0x10] sm:$0xff]
    %v9176 = vld [vmem:[%s9172 + $0x18] sm:$0xff]
    %v9178 = vsel %vm303, %v9171, 0
    %9180 = vmatpush.msra.mxu0 0.0
    %9181 = vmatpush.msra.mxu0 0.0
    %9182 = vmatpush.msra.mxu0 0.0
    %9183 = vmatpush.msra.mxu0 0.0
    %9184 = vmatpush.msra.mxu0 0.0
    %9185 = vmatpush.msra.mxu0 0.0
    %9186 = vmatpush.msra.mxu0 0.0
    %9187 = vmatpush.msra.mxu0 0.0
    %9188 = vmatpush.msra.mxu0 0.0
    %9189 = vmatpush.msra.mxu0 0.0
    %9190 = vmatpush.msra.mxu0 0.0
    %9191 = vmatpush.msra.mxu0 0.0
    %9192 = vmatpush.msra.mxu0 %v9176
    %9193 = vmatpush.msra.mxu0 %v9175
    %9194 = vmatpush.msra.mxu0 %v9174
    %9195 = vmatpush.msra.mxu0 %v9173
    %9196 = vmatmul.f32.gmra.mxu0 %v9178
    %v9197 = vpop.f32.mrf.mxu0
    %v9198 = vadd.f32 0.0, %v9197
    %9199 = vdwg.mxu0
    %v9200 = vadd.f32 %v9167, %v9198
    %s9201 = scalar_lea.vmem [#allocation5], 62
    %v9202 = vld [vmem:[%s9201] ss:$64 sm:$0x1]
    %v9203 = vld [vmem:[%s9201] ss:$64 sm:$0x2]
    %v9204 = vor.u32 %v9202, %v9203
    %s9205 = scalar_lea.vmem %s5, 1984
    %v9206 = vld [vmem:[%s9205] sm:$0xff]
    %v9207 = vld [vmem:[%s9205 + $0x8] sm:$0xff]
    %v9208 = vld [vmem:[%s9205 + $0x10] sm:$0xff]
    %v9209 = vld [vmem:[%s9205 + $0x18] sm:$0xff]
    %v9211 = vsel %vm303, %v9204, 0
    %9213 = vmatpush.msra.mxu0 0.0
    %9214 = vmatpush.msra.mxu0 0.0
    %9215 = vmatpush.msra.mxu0 0.0
    %9216 = vmatpush.msra.mxu0 0.0
    %9217 = vmatpush.msra.mxu0 0.0
    %9218 = vmatpush.msra.mxu0 0.0
    %9219 = vmatpush.msra.mxu0 0.0
    %9220 = vmatpush.msra.mxu0 0.0
    %9221 = vmatpush.msra.mxu0 0.0
    %9222 = vmatpush.msra.mxu0 0.0
    %9223 = vmatpush.msra.mxu0 0.0
    %9224 = vmatpush.msra.mxu0 0.0
    %9225 = vmatpush.msra.mxu0 %v9209
    %9226 = vmatpush.msra.mxu0 %v9208
    %9227 = vmatpush.msra.mxu0 %v9207
    %9228 = vmatpush.msra.mxu0 %v9206
    %9229 = vmatmul.f32.gmra.mxu0 %v9211
    %v9230 = vpop.f32.mrf.mxu0
    %v9231 = vadd.f32 0.0, %v9230
    %9232 = vdwg.mxu0
    %v9233 = vadd.f32 %v9200, %v9231
    %s9234 = scalar_lea.vmem [#allocation5], 63
    %v9235 = vld [vmem:[%s9234] ss:$64 sm:$0x1]
    %v9236 = vld [vmem:[%s9234] ss:$64 sm:$0x2]
    %v9237 = vor.u32 %v9235, %v9236
    %s9238 = scalar_lea.vmem %s5, 2016
    %v9239 = vld [vmem:[%s9238] sm:$0xff]
    %v9240 = vld [vmem:[%s9238 + $0x8] sm:$0xff]
    %v9241 = vld [vmem:[%s9238 + $0x10] sm:$0xff]
    %v9242 = vld [vmem:[%s9238 + $0x18] sm:$0xff]
    %v9244 = vsel %vm303, %v9237, 0
    %9246 = vmatpush.msra.mxu0 0.0
    %9247 = vmatpush.msra.mxu0 0.0
    %9248 = vmatpush.msra.mxu0 0.0
    %9249 = vmatpush.msra.mxu0 0.0
    %9250 = vmatpush.msra.mxu0 0.0
    %9251 = vmatpush.msra.mxu0 0.0
    %9252 = vmatpush.msra.mxu0 0.0
    %9253 = vmatpush.msra.mxu0 0.0
    %9254 = vmatpush.msra.mxu0 0.0
    %9255 = vmatpush.msra.mxu0 0.0
    %9256 = vmatpush.msra.mxu0 0.0
    %9257 = vmatpush.msra.mxu0 0.0
    %9258 = vmatpush.msra.mxu0 %v9242
    %9259 = vmatpush.msra.mxu0 %v9241
    %9260 = vmatpush.msra.mxu0 %v9240
    %9261 = vmatpush.msra.mxu0 %v9239
    %9262 = vmatmul.f32.gmra.mxu0 %v9244
    %v9263 = vpop.f32.mrf.mxu0
    %v9264 = vadd.f32 0.0, %v9263
    %9265 = vdwg.mxu0
    %v9266 = vadd.f32 %v9233, %v9264
    %v9267 = vld [vmem:[%s6] sm:$0x1]
    %v9269 = vperm.slane %v9267, 0
    %v9271 = vadd.f32 %v9266, %v9269
    %9272 = vst [vmem:[#allocation6] sm:$0x3] %v9271
    // Predicated region
    $region30: #{basic_cnn_forward.1} parent=1 // pred_check
      _
    $region31: #{basic_cnn_forward.1} parent=1 // pred_check_branch
      %9274 = sbr.rel (0) target = $region33
    $region32: #{basic_cnn_forward.1} parent=1 // pred_region
      %9276 = vsyncadd [#allocation7], 0
      %s9278 = sshll.u32 [#allocation6], 4
      %s9279 = int_to_ptr.vmem [resolvable:$true] %s9278
      %s9280 = sshll.u32 %s7, 4
      %s9281 = int_to_ptr.hbm [resolvable:$true] %s9280
      %9283 = dma.vmem_to_hbm [thread:$0]  %s9279, 32, %s9281, [#allocation7]
    $region33: #{basic_cnn_forward.1} parent=1 // pred_fallthru
      _
    // Predicated region
    $region34: #{basic_cnn_forward.1} parent=1 // pred_check
      _
    $region35: #{basic_cnn_forward.1} parent=1 // pred_check_branch
      %9285 = sbr.rel (0) target = $region37
    $region36: #{basic_cnn_forward.1} parent=1 // pred_region
      %9287 = dma.done [#allocation7], 32
    $region37: #{basic_cnn_forward.1} parent=1 // pred_fallthru
      _
    %9288 = vsyncpa [#allocation7], 1

</llo_original>
